<compile_context>
chip_gen: v7x
topology: tpu7x:2x2x1
jax: 0.10.0
libtpu: 0.0.40
codegen_flags: <defaults>
</compile_context>

<pallas_src>
import functools

import jax
import jax.numpy as jnp
from jax.experimental import pallas as pl
from jax.experimental.pallas import tpu as pltpu

NUM_TYPES = 4      # NUM_TYPES global from the original file (chosen here)
NUM_FILTERS = 8    # num_filters (small for the example; torch default was 64)
IMG = 96           # spatial size implied by the fc layer (8*6*6*num_filters)
NEG_SLOPE = 0.01   # nn.LeakyReLU() default negative_slope


# ---------------------------------------------------------------------------
# Tile selection helpers
# ---------------------------------------------------------------------------
def _divisor_tile(dim, cap, align, prefer_even_extent=False):
    """Largest divisor of `dim` that is a multiple of `align` and <= cap.
    If prefer_even_extent, prefer (largest) candidates whose grid extent
    dim // t is even (>=2) so v7x's two TensorCores both get work.
    Returns None if no aligned divisor exists (caller falls back to full dim,
    which is exempt from the (8,128) block rule)."""
    cap = min(cap, dim)
    cands = [t for t in range(align, cap + 1, align) if dim % t == 0]
    if not cands:
        return None
    if prefer_even_extent:
        even = [t for t in cands if (dim // t) % 2 == 0]
        if even:
            return max(even)
    return max(cands)


# ---------------------------------------------------------------------------
# Pallas kernel 1: tiled matmul + bias + LeakyReLU, K grid axis + f32 acc
# ---------------------------------------------------------------------------
def _mm_bias_act_kernel(a_ref, w_ref, b_ref, o_ref, acc_ref, *, apply_act):
    k = pl.program_id(2)

    @pl.when(k == 0)
    def _init():
        acc_ref[...] = jnp.zeros_like(acc_ref)

    acc_ref[...] += jnp.dot(a_ref[...], w_ref[...],
                            preferred_element_type=jnp.float32)

    @pl.when(k == pl.num_programs(2) - 1)
    def _finalize():
        y = acc_ref[...] + b_ref[...]
        if apply_act:
            y = jnp.where(y >= 0.0, y, NEG_SLOPE * y)
        o_ref[...] = y.astype(o_ref.dtype)


def matmul_bias_act(a, w, b, *, apply_act=True, out_dtype=jnp.bfloat16):
    """y = leaky_relu(a @ w + b) (act optional).  bf16 MXU, f32 accumulation."""
    M, K = a.shape
    K2, N = w.shape
    assert K == K2, (K, K2)

    a = a.astype(jnp.bfloat16)
    w = w.astype(jnp.bfloat16)
    b = b.reshape(1, N).astype(jnp.float32)

    # Lane-dense N tile.
    TN = _divisor_tile(N, 512, 128) or N
    # Byte-bounded K tile (double-buffered W block <= ~4 MiB); full K if it fits.
    tk_cap = max(128, (4 * 2 ** 20) // (4 * TN))
    TK = _divisor_tile(K, tk_cap, 128) or K
    # Byte-bounded M tile: multiple of 16 (bf16 packing) if possible, prefer an
    # even grid extent for v7x megacore; fall back to 8-aligned, then full M.
    tm_cap = min(2048, max(16, (8 * 2 ** 20) // (4 * TK)))
    TM = (_divisor_tile(M, tm_cap, 16, prefer_even_extent=True)
          or _divisor_tile(M, tm_cap, 8, prefer_even_extent=True)
          or M)
    grid = (M // TM, N // TN, K // TK)

    out_bytes = jnp.dtype(out_dtype).itemsize
    need = (2 * (TM * TK + TK * TN) * 2 + 2 * TN * 4
            + 2 * TM * TN * out_bytes + TM * TN * 4)
    vmem_limit = int(min(max(2 * need, 32 * 2 ** 20), 64 * 2 ** 20))

    return pl.pallas_call(
        functools.partial(_mm_bias_act_kernel, apply_act=apply_act),
        out_shape=jax.ShapeDtypeStruct((M, N), out_dtype),
        grid=grid,
        in_specs=[
            pl.BlockSpec((TM, TK), lambda i, j, k: (i, k)),
            pl.BlockSpec((TK, TN), lambda i, j, k: (k, j)),
            pl.BlockSpec((1, TN), lambda i, j, k: (0, j)),
        ],
        out_specs=pl.BlockSpec((TM, TN), lambda i, j, k: (i, j)),
        scratch_shapes=[pltpu.VMEM((TM, TN), jnp.float32)],
        compiler_params=pltpu.CompilerParams(
            dimension_semantics=("parallel", "parallel", "arbitrary"),
            vmem_limit_bytes=vmem_limit),
    )(a, w, b)


# ---------------------------------------------------------------------------
# Pallas kernel 2: fused fc head  out = leaky_relu(a @ W1 + b1) @ W2 + b2
#   Grid axis j runs over fc1's output (hidden) dim; each step applies
#   bias+LeakyReLU to its hidden tile in-register and accumulates the fc2
#   partial reduction, so the hidden never touches HBM.
# ---------------------------------------------------------------------------
def _fc_head_kernel(a_ref, w1_ref, b1_ref, w2_ref, b2_ref, o_ref, acc_ref):
    j = pl.program_id(1)

    @pl.when(j == 0)
    def _init():
        acc_ref[...] = jnp.zeros_like(acc_ref)

    h = jnp.dot(a_ref[...], w1_ref[...], preferred_element_type=jnp.float32)
    h = h + b1_ref[...]
    h = jnp.where(h >= 0.0, h, NEG_SLOPE * h)
    # fc2 partial: (TM,TN)*(1,TN) lane-reduce -> (TM,1)
    acc_ref[...] += jnp.sum(h * w2_ref[...], axis=1, keepdims=True)

    @pl.when(j == pl.num_programs(1) - 1)
    def _finalize():
        o_ref[...] = acc_ref[...] + b2_ref[...]


def fc_head(a, w1, b1, w2_row, b2):
    """Fused fc1(+LeakyReLU)+fc2.  a:(M,K), w1:(K,N), w2_row:(1,N) -> (M,1)."""
    M, K = a.shape
    K2, N = w1.shape
    assert K == K2, (K, K2)

    a = a.astype(jnp.bfloat16)
    w1 = w1.astype(jnp.bfloat16)
    b1 = b1.reshape(1, N).astype(jnp.float32)
    w2_row = w2_row.reshape(1, N).astype(jnp.float32)
    b2 = b2.reshape(1, 1).astype(jnp.float32)

    TN = _divisor_tile(N, 512, 128) or N
    TM = _divisor_tile(M, 256, 8) or M
    grid = (M // TM, N // TN)
    # TODO(synk): at torch-default nf=64 the full-K a/W1 blocks grow 8x; add a K
    # split (second accumulator stage) before scaling nf on v7x's 64 MiB VMEM.

    need = 2 * (TM * K * 2 + K * TN * 2 + 2 * TN * 4 + TM * 4) + TM * 4 + 64
    vmem_limit = int(min(max(2 * need, 32 * 2 ** 20), 64 * 2 ** 20))

    return pl.pallas_call(
        _fc_head_kernel,
        out_shape=jax.ShapeDtypeStruct((M, 1), jnp.float32),
        grid=grid,
        in_specs=[
            pl.BlockSpec((TM, K), lambda i, j: (i, 0)),
            pl.BlockSpec((K, TN), lambda i, j: (0, j)),
            pl.BlockSpec((1, TN), lambda i, j: (0, j)),
            pl.BlockSpec((1, TN), lambda i, j: (0, j)),
            pl.BlockSpec((1, 1), lambda i, j: (0, 0)),
        ],
        out_specs=pl.BlockSpec((TM, 1), lambda i, j: (i, 0)),
        scratch_shapes=[pltpu.VMEM((TM, 1), jnp.float32)],
        compiler_params=pltpu.CompilerParams(
            dimension_semantics=("parallel", "arbitrary"),
            vmem_limit_bytes=vmem_limit),
    )(a, w1, b1, w2_row, b2)


# ---------------------------------------------------------------------------
# Conv2d(k=4, stride=2, pad=1) + LeakyReLU (NHWC) via the lane-dense folded
# matmul.  w_big/b_big are the block-diagonal folded weight/bias from
# prepare_params; g output rows are folded into one >=128-lane matmul row.
# ---------------------------------------------------------------------------
def conv_layer(x_nhwc, w_big, b_big, *, k=4, stride=2, pad=1):
    # TODO(synk): patch extraction (im2col) stays in XLA; fusing the overlapping
    # strided windows into the Pallas kernel needs manual / element-offset DMA.
    B, H, W, C = x_nhwc.shape
    patches = jax.lax.conv_general_dilated_patches(
        x_nhwc, filter_shape=(k, k), window_strides=(stride, stride),
        padding=((pad, pad), (pad, pad)),
        dimension_numbers=("NHWC", "HWIO", "NHWC"))  # (B,Ho,Wo,C*k*k), cols (c,kh,kw)
    Ho = (H + 2 * pad - k) // stride + 1
    Wo = (W + 2 * pad - k) // stride + 1
    K = C * k * k
    g = w_big.shape[0] // K            # fold factor baked into the weight
    cout = w_big.shape[1] // g
    a = patches.reshape((B * Ho * Wo) // g, g * K)     # free row-major refold
    y = matmul_bias_act(a, w_big, b_big, apply_act=True, out_dtype=jnp.bfloat16)
    return y.reshape(B, Ho, Wo, cout)                  # row-major identical to (M, cout)


# ---------------------------------------------------------------------------
# Parameters (deterministic, synthetic) + spectral norm + one-time layout prep
# ---------------------------------------------------------------------------
def spectral_normalize(w, n_iter=30):
    # torch.nn.utils.spectral_norm reparametrizes weight := weight / sigma(weight).
    mat = w.reshape(w.shape[0], -1)
    u = jnp.ones((mat.shape[0],), jnp.float32)
    u = u / jnp.linalg.norm(u)
    v = None
    for _ in range(n_iter):
        v = mat.T @ u
        v = v / (jnp.linalg.norm(v) + 1e-12)
        u = mat @ v
        u = u / (jnp.linalg.norm(u) + 1e-12)
    sigma = u @ (mat @ v)
    return w / sigma


def init_params(key):
    nf, nt = NUM_FILTERS, NUM_TYPES
    ks = jax.random.split(key, 14)

    def w(k, shape, scale=0.05):
        return scale * jax.random.normal(k, shape, jnp.float32)

    return {
        "conv_img_w": spectral_normalize(w(ks[0], (nf, 3, 4, 4))),
        "conv_img_b": w(ks[1], (nf,)),
        "conv_l_w": w(ks[2], (nt, nt, 48, 48)),        # ConvTranspose2d (in,out,48,48)
        "conv_l_b": w(ks[3], (nt,)),
        "tc1_w": spectral_normalize(w(ks[4], (2 * nf, nf + nt, 4, 4))),
        "tc1_b": w(ks[5], (2 * nf,)),
        "tc2_w": spectral_normalize(w(ks[6], (4 * nf, 2 * nf, 4, 4))),
        "tc2_b": w(ks[7], (4 * nf,)),
        "tc3_w": spectral_normalize(w(ks[8], (8 * nf, 4 * nf, 4, 4))),
        "tc3_b": w(ks[9], (8 * nf,)),
        "fc1_w": spectral_normalize(w(ks[10], (1024, 8 * 6 * 6 * nf))),
        "fc1_b": w(ks[11], (1024,)),
        "fc2_w": spectral_normalize(w(ks[12], (1, 1024))),
        "fc2_b": w(ks[13], (1,)),
    }


def prepare_params(params):
    """One-time weight layout prep (hoisted out of the forward path)."""
    nf = NUM_FILTERS

    def conv_mat(w_oihw):
        # (O,I,kh,kw) -> (I*kh*kw, O); rows ordered (c,kh,kw) to match
        # conv_general_dilated_patches' feature ordering.
        o = w_oihw.shape[0]
        return jnp.transpose(w_oihw, (1, 2, 3, 0)).reshape(-1, o)

    def fold(w_mat, bias, out_rows):
        # Fold g = 128//Cout output rows into one lane-dense matmul row via a
        # block-diagonal weight: (K,C) -> (g*K, g*C).  Row-major identical result.
        K, C = w_mat.shape
        g = 128 // C if (C < 128 and 128 % C == 0) else 1
        while g > 1 and out_rows % g != 0:
            g //= 2
        eye = jnp.eye(g, dtype=w_mat.dtype)
        w_big = jnp.einsum("gh,kc->gkhc", eye, w_mat).reshape(g * K, g * C)
        b_big = jnp.tile(bias.reshape(1, C), (1, g))
        return w_big.astype(jnp.bfloat16), b_big.astype(jnp.float32)

    prep = {}
    sp = IMG // 2   # output spatial size of each conv layer: 48, 24, 12, 6
    for name, wk, bk in [("conv_img", "conv_img_w", "conv_img_b"),
                         ("tc1", "tc1_w", "tc1_b"),
                         ("tc2", "tc2_w", "tc2_b"),
                         ("tc3", "tc3_w", "tc3_b")]:
        w_big, b_big = fold(conv_mat(params[wk]), params[bk], sp * sp)
        prep[name + "_w"] = w_big
        prep[name + "_b"] = b_big
        sp //= 2

    # ConvTranspose2d weight (in,out,48,48) -> (in,48,48,out) for the NHWC einsum.
    prep["conv_l_w"] = jnp.transpose(params["conv_l_w"], (0, 2, 3, 1)).astype(jnp.float32)
    prep["conv_l_b"] = params["conv_l_b"].astype(jnp.float32)

    # fc1: permute input features from torch's (c,h,w) flatten order to our NHWC
    # (h,w,c) flatten order -> removes the NHWC->NCHW transpose from the forward.
    c8 = 8 * nf
    w1 = params["fc1_w"].reshape(1024, c8, 6, 6)
    w1 = jnp.transpose(w1, (0, 2, 3, 1)).reshape(1024, -1)
    prep["fc1_wT"] = w1.T.astype(jnp.bfloat16)                 # (288*nf, 1024)
    prep["fc1_b"] = params["fc1_b"].reshape(1, -1).astype(jnp.float32)
    prep["fc2_w_row"] = params["fc2_w"].astype(jnp.float32)    # (1, 1024)
    prep["fc2_b"] = params["fc2_b"].reshape(1, 1).astype(jnp.float32)
    return prep


# ---------------------------------------------------------------------------
# Forward pass (matches DiscriminatorImage.forward)
# ---------------------------------------------------------------------------
def discriminator_image(prep, x, y):
    # x: (B, 3, 96, 96) NCHW;  y: (B, NUM_TYPES)
    B = x.shape[0]

    # Enter NHWC / bf16 once.
    x_nhwc = jnp.transpose(x, (0, 2, 3, 1)).astype(jnp.bfloat16)

    # conv_img(x): spectral-normed Conv2d + LeakyReLU (fused Pallas matmul).
    conv_img = conv_layer(x_nhwc, prep["conv_img_w"], prep["conv_img_b"])   # (B,48,48,nf)

    # conv_l(y[...,None,None]): ConvTranspose2d on a 1x1 input is a degenerate
    # (K=NUM_TYPES) einsum -> plain XLA, then LeakyReLU.
    conv_l = jnp.einsum("bi,ihwo->bhwo", y.astype(jnp.float32), prep["conv_l_w"])
    conv_l = jax.nn.leaky_relu(conv_l + prep["conv_l_b"], NEG_SLOPE).astype(jnp.bfloat16)

    # Channel concat on the NHWC last axis == torch.cat(dim=1) in NCHW.
    h = jnp.concatenate([conv_img, conv_l], axis=-1)          # (B,48,48,nf+nt)

    h = conv_layer(h, prep["tc1_w"], prep["tc1_b"])           # (B,24,24,2nf)
    h = conv_layer(h, prep["tc2_w"], prep["tc2_b"])           # (B,12,12,4nf)
    h = conv_layer(h, prep["tc3_w"], prep["tc3_b"])           # (B, 6, 6,8nf)

    # Flatten directly in (h,w,c) order; fc1's weight rows were permuted to match.
    flat = h.reshape(B, -1)                                   # (B, 8nf*6*6)

    # Fused fc1(+LeakyReLU)+fc2 in a single Pallas kernel.
    out = fc_head(flat, prep["fc1_wT"], prep["fc1_b"],
                  prep["fc2_w_row"], prep["fc2_b"])           # (B, 1)
    return jnp.squeeze(out)                                   # (B,)


# ---------------------------------------------------------------------------
# Pure-XLA f32 reference (mirrors the PyTorch module) for a tolerance check.
# ---------------------------------------------------------------------------
def reference_forward(params, x, y):
    hp = jax.lax.Precision.HIGHEST
    lrelu = lambda v: jnp.where(v >= 0, v, NEG_SLOPE * v)

    def conv(v, w, b):
        o = jax.lax.conv_general_dilated(
            v, w, window_strides=(2, 2), padding=((1, 1), (1, 1)),
            dimension_numbers=("NCHW", "OIHW", "NCHW"), precision=hp)
        return lrelu(o + b.reshape(1, -1, 1, 1))

    ci = conv(x, params["conv_img_w"], params["conv_img_b"])
    cl = jnp.einsum("bi,iohw->bohw", y, params["conv_l_w"], precision=hp)
    cl = lrelu(cl + params["conv_l_b"].reshape(1, -1, 1, 1))
    h = jnp.concatenate([ci, cl], axis=1)
    h = conv(h, params["tc1_w"], params["tc1_b"])
    h = conv(h, params["tc2_w"], params["tc2_b"])
    h = conv(h, params["tc3_w"], params["tc3_b"])
    flat = h.reshape(x.shape[0], -1)
    h1 = lrelu(jnp.dot(flat, params["fc1_w"].T, precision=hp) + params["fc1_b"])
    out = jnp.dot(h1, params["fc2_w"].T, precision=hp) + params["fc2_b"]
    return jnp.squeeze(out)


if __name__ == "__main__":
    key = jax.random.PRNGKey(0)
    kp, kx, ky = jax.random.split(key, 3)
    params = init_params(kp)
    prep = prepare_params(params)      # one-time weight prep, outside the forward

    B = 2
    x = jax.random.normal(kx, (B, 3, IMG, IMG), jnp.float32)
    y = jax.random.normal(ky, (B, NUM_TYPES), jnp.float32)

    fwd = jax.jit(discriminator_image)
    out = jax.block_until_ready(fwd(prep, x, y))
    assert out.shape == (B,), out.shape
    assert bool(jnp.all(jnp.isfinite(out)))

    # Tolerance check vs. the f32 XLA reference (bf16 MXU path => loose tol).
    ref = jax.block_until_ready(jax.jit(reference_forward)(params, x, y))
    err = float(jnp.max(jnp.abs(out - ref)))
    scale = float(jnp.max(jnp.abs(ref)))
    assert err <= 0.1 * scale + 0.05, ("bf16 Pallas path diverged from reference",
                                       err, scale)

    print("KERNEL_OK")
</pallas_src>

<mosaic_0001>
module attributes {stable_mosaic.version = 11 : i64} {
  func.func @_mm_bias_act_kernel(%arg0: i32, %arg1: i32, %arg2: i32, %arg3: memref<144x768xbf16, #tpu.memory_space<vmem>>, %arg4: memref<768x128xbf16, #tpu.memory_space<vmem>>, %arg5: memref<1x128xf32, #tpu.memory_space<vmem>>, %arg6: memref<144x128xbf16, #tpu.memory_space<vmem>>, %arg7: memref<144x128xf32, #tpu.memory_space<vmem>>) attributes {dimension_semantics = [#tpu.dimension_semantics<parallel>, #tpu.dimension_semantics<parallel>, #tpu.dimension_semantics<arbitrary>], iteration_bounds = array<i64: 2, 1, 1>, scalar_prefetch = 0 : i64, scratch_operands = 1 : i64, tpu.core_type = #tpu.core_type<tc>, window_params = [{transform_indices = @transform_0, window_bounds = array<i64: 144, 768>}, {transform_indices = @transform_1, window_bounds = array<i64: 768, 128>}, {transform_indices = @transform_2, window_bounds = array<i64: 1, 128>}, {transform_indices = @transform_3, window_bounds = array<i64: 144, 128>}]} {
    %c0_i32 = arith.constant 0 : i32
    %0 = arith.cmpi eq, %arg2, %c0_i32 : i32
    %1 = arith.extui %0 : i1 to i32
    %c0_i32_0 = arith.constant 0 : i32
    %2 = arith.cmpi ne, %1, %c0_i32_0 : i32
    scf.if %2 {
      %cst_10 = arith.constant 0.000000e+00 : f32
      %12 = vector.broadcast %cst_10 : f32 to vector<144x128xf32>
      %c0_11 = arith.constant 0 : index
      %c0_12 = arith.constant 0 : index
      %13 = vector.load %arg7[%c0_11, %c0_12] : memref<144x128xf32, #tpu.memory_space<vmem>>, vector<144x128xf32>
      tpu.vector_store %arg7[%c0_11, %c0_12], %12 {strides = array<i32>} : memref<144x128xf32, #tpu.memory_space<vmem>>, vector<144x128xf32>,
    } else {
    }
    %c0 = arith.constant 0 : index
    %c0_1 = arith.constant 0 : index
    %3 = vector.load %arg7[%c0, %c0_1] : memref<144x128xf32, #tpu.memory_space<vmem>>, vector<144x128xf32>
    %c0_2 = arith.constant 0 : index
    %c0_3 = arith.constant 0 : index
    %4 = vector.load %arg3[%c0_2, %c0_3] : memref<144x768xbf16, #tpu.memory_space<vmem>>, vector<144x768xbf16>
    %c0_4 = arith.constant 0 : index
    %c0_5 = arith.constant 0 : index
    %5 = vector.load %arg4[%c0_4, %c0_5] : memref<768x128xbf16, #tpu.memory_space<vmem>>, vector<768x128xbf16>
    %cst = arith.constant dense<0.000000e+00> : vector<144x128xf32>
    %6 = tpu.matmul %4, %5, %cst {dimension_numbers = #tpu.dot_dimension_numbers<[1], [0], [0], [1], [0, 0, 1, 1], [], []>} : vector<144x768xbf16>, vector<768x128xbf16>, vector<144x128xf32> -> vector<144x128xf32>
    %7 = arith.addf %3, %6 : vector<144x128xf32>
    %c0_6 = arith.constant 0 : index
    %c0_7 = arith.constant 0 : index
    %8 = vector.load %arg7[%c0_6, %c0_7] : memref<144x128xf32, #tpu.memory_space<vmem>>, vector<144x128xf32>
    tpu.vector_store %arg7[%c0_6, %c0_7], %7 {strides = array<i32>} : memref<144x128xf32, #tpu.memory_space<vmem>>, vector<144x128xf32>,
    %c0_i32_8 = arith.constant 0 : i32
    %9 = arith.cmpi eq, %arg2, %c0_i32_8 : i32
    %10 = arith.extui %9 : i1 to i32
    %c0_i32_9 = arith.constant 0 : i32
    %11 = arith.cmpi ne, %10, %c0_i32_9 : i32
    scf.if %11 {
      %c0_10 = arith.constant 0 : index
      %c0_11 = arith.constant 0 : index
      %12 = vector.load %arg7[%c0_10, %c0_11] : memref<144x128xf32, #tpu.memory_space<vmem>>, vector<144x128xf32>
      %c0_12 = arith.constant 0 : index
      %c0_13 = arith.constant 0 : index
      %13 = vector.load %arg5[%c0_12, %c0_13] : memref<1x128xf32, #tpu.memory_space<vmem>>, vector<1x128xf32>
      %14 = vector.broadcast %13 : vector<1x128xf32> to vector<144x128xf32>
      %15 = arith.addf %12, %14 : vector<144x128xf32>
      %cst_14 = arith.constant 0.000000e+00 : f32
      %16 = vector.broadcast %cst_14 : f32 to vector<144x128xf32>
      %17 = arith.cmpf oge, %15, %16 : vector<144x128xf32>
      %cst_15 = arith.constant 0.00999999977 : f32
      %18 = vector.broadcast %cst_15 : f32 to vector<144x128xf32>
      %19 = arith.mulf %18, %15 : vector<144x128xf32>
      %20 = arith.select %17, %15, %19 : vector<144x128xi1>, vector<144x128xf32>
      %21 = arith.truncf %20 : vector<144x128xf32> to vector<144x128xbf16>
      %c0_16 = arith.constant 0 : index
      %c0_17 = arith.constant 0 : index
      %22 = vector.load %arg6[%c0_16, %c0_17] : memref<144x128xbf16, #tpu.memory_space<vmem>>, vector<144x128xbf16>
      tpu.vector_store %arg6[%c0_16, %c0_17], %21 {strides = array<i32>} : memref<144x128xbf16, #tpu.memory_space<vmem>>, vector<144x128xbf16>,
    } else {
    }
    return
  }
  func.func @transform_0(%arg0: i32, %arg1: i32, %arg2: i32) -> (i32, i32) {
    %c0_i32 = arith.constant 0 : i32
    return %arg0, %arg2 : i32, i32
  }
  func.func @transform_1(%arg0: i32, %arg1: i32, %arg2: i32) -> (i32, i32) {
    %c0_i32 = arith.constant 0 : i32
    return %arg2, %arg1 : i32, i32
  }
  func.func @transform_2(%arg0: i32, %arg1: i32, %arg2: i32) -> (i32, i32) {
    %c0_i32 = arith.constant 0 : i32
    %c0_i32_0 = arith.constant 0 : i32
    return %c0_i32, %arg1 : i32, i32
  }
  func.func @transform_3(%arg0: i32, %arg1: i32, %arg2: i32) -> (i32, i32) {
    %c0_i32 = arith.constant 0 : i32
    return %arg0, %arg1 : i32, i32
  }
}

module attributes {stable_mosaic.version = 11 : i64} {
  func.func @_mm_bias_act_kernel(%arg0: i32, %arg1: i32, %arg2: i32, %arg3: memref<144x1536xbf16, #tpu.memory_space<vmem>>, %arg4: memref<1536x128xbf16, #tpu.memory_space<vmem>>, %arg5: memref<1x128xf32, #tpu.memory_space<vmem>>, %arg6: memref<144x128xbf16, #tpu.memory_space<vmem>>, %arg7: memref<144x128xf32, #tpu.memory_space<vmem>>) attributes {dimension_semantics = [#tpu.dimension_semantics<parallel>, #tpu.dimension_semantics<parallel>, #tpu.dimension_semantics<arbitrary>], iteration_bounds = array<i64: 1, 1, 1>, scalar_prefetch = 0 : i64, scratch_operands = 1 : i64, tpu.core_type = #tpu.core_type<tc>, window_params = [{transform_indices = @transform_0, window_bounds = array<i64: 144, 1536>}, {transform_indices = @transform_1, window_bounds = array<i64: 1536, 128>}, {transform_indices = @transform_2, window_bounds = array<i64: 1, 128>}, {transform_indices = @transform_3, window_bounds = array<i64: 144, 128>}]} {
    %c0_i32 = arith.constant 0 : i32
    %0 = arith.cmpi eq, %arg2, %c0_i32 : i32
    %1 = arith.extui %0 : i1 to i32
    %c0_i32_0 = arith.constant 0 : i32
    %2 = arith.cmpi ne, %1, %c0_i32_0 : i32
    scf.if %2 {
      %cst_10 = arith.constant 0.000000e+00 : f32
      %12 = vector.broadcast %cst_10 : f32 to vector<144x128xf32>
      %c0_11 = arith.constant 0 : index
      %c0_12 = arith.constant 0 : index
      %13 = vector.load %arg7[%c0_11, %c0_12] : memref<144x128xf32, #tpu.memory_space<vmem>>, vector<144x128xf32>
      tpu.vector_store %arg7[%c0_11, %c0_12], %12 {strides = array<i32>} : memref<144x128xf32, #tpu.memory_space<vmem>>, vector<144x128xf32>,
    } else {
    }
    %c0 = arith.constant 0 : index
    %c0_1 = arith.constant 0 : index
    %3 = vector.load %arg7[%c0, %c0_1] : memref<144x128xf32, #tpu.memory_space<vmem>>, vector<144x128xf32>
    %c0_2 = arith.constant 0 : index
    %c0_3 = arith.constant 0 : index
    %4 = vector.load %arg3[%c0_2, %c0_3] : memref<144x1536xbf16, #tpu.memory_space<vmem>>, vector<144x1536xbf16>
    %c0_4 = arith.constant 0 : index
    %c0_5 = arith.constant 0 : index
    %5 = vector.load %arg4[%c0_4, %c0_5] : memref<1536x128xbf16, #tpu.memory_space<vmem>>, vector<1536x128xbf16>
    %cst = arith.constant dense<0.000000e+00> : vector<144x128xf32>
    %6 = tpu.matmul %4, %5, %cst {dimension_numbers = #tpu.dot_dimension_numbers<[1], [0], [0], [1], [0, 0, 1, 1], [], []>} : vector<144x1536xbf16>, vector<1536x128xbf16>, vector<144x128xf32> -> vector<144x128xf32>
    %7 = arith.addf %3, %6 : vector<144x128xf32>
    %c0_6 = arith.constant 0 : index
    %c0_7 = arith.constant 0 : index
    %8 = vector.load %arg7[%c0_6, %c0_7] : memref<144x128xf32, #tpu.memory_space<vmem>>, vector<144x128xf32>
    tpu.vector_store %arg7[%c0_6, %c0_7], %7 {strides = array<i32>} : memref<144x128xf32, #tpu.memory_space<vmem>>, vector<144x128xf32>,
    %c0_i32_8 = arith.constant 0 : i32
    %9 = arith.cmpi eq, %arg2, %c0_i32_8 : i32
    %10 = arith.extui %9 : i1 to i32
    %c0_i32_9 = arith.constant 0 : i32
    %11 = arith.cmpi ne, %10, %c0_i32_9 : i32
    scf.if %11 {
      %c0_10 = arith.constant 0 : index
      %c0_11 = arith.constant 0 : index
      %12 = vector.load %arg7[%c0_10, %c0_11] : memref<144x128xf32, #tpu.memory_space<vmem>>, vector<144x128xf32>
      %c0_12 = arith.constant 0 : index
      %c0_13 = arith.constant 0 : index
      %13 = vector.load %arg5[%c0_12, %c0_13] : memref<1x128xf32, #tpu.memory_space<vmem>>, vector<1x128xf32>
      %14 = vector.broadcast %13 : vector<1x128xf32> to vector<144x128xf32>
      %15 = arith.addf %12, %14 : vector<144x128xf32>
      %cst_14 = arith.constant 0.000000e+00 : f32
      %16 = vector.broadcast %cst_14 : f32 to vector<144x128xf32>
      %17 = arith.cmpf oge, %15, %16 : vector<144x128xf32>
      %cst_15 = arith.constant 0.00999999977 : f32
      %18 = vector.broadcast %cst_15 : f32 to vector<144x128xf32>
      %19 = arith.mulf %18, %15 : vector<144x128xf32>
      %20 = arith.select %17, %15, %19 : vector<144x128xi1>, vector<144x128xf32>
      %21 = arith.truncf %20 : vector<144x128xf32> to vector<144x128xbf16>
      %c0_16 = arith.constant 0 : index
      %c0_17 = arith.constant 0 : index
      %22 = vector.load %arg6[%c0_16, %c0_17] : memref<144x128xbf16, #tpu.memory_space<vmem>>, vector<144x128xbf16>
      tpu.vector_store %arg6[%c0_16, %c0_17], %21 {strides = array<i32>} : memref<144x128xbf16, #tpu.memory_space<vmem>>, vector<144x128xbf16>,
    } else {
    }
    return
  }
  func.func @transform_0(%arg0: i32, %arg1: i32, %arg2: i32) -> (i32, i32) {
    %c0_i32 = arith.constant 0 : i32
    return %arg0, %arg2 : i32, i32
  }
  func.func @transform_1(%arg0: i32, %arg1: i32, %arg2: i32) -> (i32, i32) {
    %c0_i32 = arith.constant 0 : i32
    return %arg2, %arg1 : i32, i32
  }
  func.func @transform_2(%arg0: i32, %arg1: i32, %arg2: i32) -> (i32, i32) {
    %c0_i32 = arith.constant 0 : i32
    %c0_i32_0 = arith.constant 0 : i32
    return %c0_i32, %arg1 : i32, i32
  }
  func.func @transform_3(%arg0: i32, %arg1: i32, %arg2: i32) -> (i32, i32) {
    %c0_i32 = arith.constant 0 : i32
    return %arg0, %arg1 : i32, i32
  }
}

module attributes {stable_mosaic.version = 11 : i64} {
  func.func @_mm_bias_act_kernel(%arg0: i32, %arg1: i32, %arg2: i32, %arg3: memref<72x1024xbf16, #tpu.memory_space<vmem>>, %arg4: memref<1024x128xbf16, #tpu.memory_space<vmem>>, %arg5: memref<1x128xf32, #tpu.memory_space<vmem>>, %arg6: memref<72x128xbf16, #tpu.memory_space<vmem>>, %arg7: memref<72x128xf32, #tpu.memory_space<vmem>>) attributes {dimension_semantics = [#tpu.dimension_semantics<parallel>, #tpu.dimension_semantics<parallel>, #tpu.dimension_semantics<arbitrary>], iteration_bounds = array<i64: 1, 1, 1>, scalar_prefetch = 0 : i64, scratch_operands = 1 : i64, tpu.core_type = #tpu.core_type<tc>, window_params = [{transform_indices = @transform_0, window_bounds = array<i64: 72, 1024>}, {transform_indices = @transform_1, window_bounds = array<i64: 1024, 128>}, {transform_indices = @transform_2, window_bounds = array<i64: 1, 128>}, {transform_indices = @transform_3, window_bounds = array<i64: 72, 128>}]} {
    %c0_i32 = arith.constant 0 : i32
    %0 = arith.cmpi eq, %arg2, %c0_i32 : i32
    %1 = arith.extui %0 : i1 to i32
    %c0_i32_0 = arith.constant 0 : i32
    %2 = arith.cmpi ne, %1, %c0_i32_0 : i32
    scf.if %2 {
      %cst_10 = arith.constant 0.000000e+00 : f32
      %12 = vector.broadcast %cst_10 : f32 to vector<72x128xf32>
      %c0_11 = arith.constant 0 : index
      %c0_12 = arith.constant 0 : index
      %13 = vector.load %arg7[%c0_11, %c0_12] : memref<72x128xf32, #tpu.memory_space<vmem>>, vector<72x128xf32>
      tpu.vector_store %arg7[%c0_11, %c0_12], %12 {strides = array<i32>} : memref<72x128xf32, #tpu.memory_space<vmem>>, vector<72x128xf32>,
    } else {
    }
    %c0 = arith.constant 0 : index
    %c0_1 = arith.constant 0 : index
    %3 = vector.load %arg7[%c0, %c0_1] : memref<72x128xf32, #tpu.memory_space<vmem>>, vector<72x128xf32>
    %c0_2 = arith.constant 0 : index
    %c0_3 = arith.constant 0 : index
    %4 = vector.load %arg3[%c0_2, %c0_3] : memref<72x1024xbf16, #tpu.memory_space<vmem>>, vector<72x1024xbf16>
    %c0_4 = arith.constant 0 : index
    %c0_5 = arith.constant 0 : index
    %5 = vector.load %arg4[%c0_4, %c0_5] : memref<1024x128xbf16, #tpu.memory_space<vmem>>, vector<1024x128xbf16>
    %cst = arith.constant dense<0.000000e+00> : vector<72x128xf32>
    %6 = tpu.matmul %4, %5, %cst {dimension_numbers = #tpu.dot_dimension_numbers<[1], [0], [0], [1], [0, 0, 1, 1], [], []>} : vector<72x1024xbf16>, vector<1024x128xbf16>, vector<72x128xf32> -> vector<72x128xf32>
    %7 = arith.addf %3, %6 : vector<72x128xf32>
    %c0_6 = arith.constant 0 : index
    %c0_7 = arith.constant 0 : index
    %8 = vector.load %arg7[%c0_6, %c0_7] : memref<72x128xf32, #tpu.memory_space<vmem>>, vector<72x128xf32>
    tpu.vector_store %arg7[%c0_6, %c0_7], %7 {strides = array<i32>} : memref<72x128xf32, #tpu.memory_space<vmem>>, vector<72x128xf32>,
    %c0_i32_8 = arith.constant 0 : i32
    %9 = arith.cmpi eq, %arg2, %c0_i32_8 : i32
    %10 = arith.extui %9 : i1 to i32
    %c0_i32_9 = arith.constant 0 : i32
    %11 = arith.cmpi ne, %10, %c0_i32_9 : i32
    scf.if %11 {
      %c0_10 = arith.constant 0 : index
      %c0_11 = arith.constant 0 : index
      %12 = vector.load %arg7[%c0_10, %c0_11] : memref<72x128xf32, #tpu.memory_space<vmem>>, vector<72x128xf32>
      %c0_12 = arith.constant 0 : index
      %c0_13 = arith.constant 0 : index
      %13 = vector.load %arg5[%c0_12, %c0_13] : memref<1x128xf32, #tpu.memory_space<vmem>>, vector<1x128xf32>
      %14 = vector.broadcast %13 : vector<1x128xf32> to vector<72x128xf32>
      %15 = arith.addf %12, %14 : vector<72x128xf32>
      %cst_14 = arith.constant 0.000000e+00 : f32
      %16 = vector.broadcast %cst_14 : f32 to vector<72x128xf32>
      %17 = arith.cmpf oge, %15, %16 : vector<72x128xf32>
      %cst_15 = arith.constant 0.00999999977 : f32
      %18 = vector.broadcast %cst_15 : f32 to vector<72x128xf32>
      %19 = arith.mulf %18, %15 : vector<72x128xf32>
      %20 = arith.select %17, %15, %19 : vector<72x128xi1>, vector<72x128xf32>
      %21 = arith.truncf %20 : vector<72x128xf32> to vector<72x128xbf16>
      %c0_16 = arith.constant 0 : index
      %c0_17 = arith.constant 0 : index
      %22 = vector.load %arg6[%c0_16, %c0_17] : memref<72x128xbf16, #tpu.memory_space<vmem>>, vector<72x128xbf16>
      tpu.vector_store %arg6[%c0_16, %c0_17], %21 {strides = array<i32>} : memref<72x128xbf16, #tpu.memory_space<vmem>>, vector<72x128xbf16>,
    } else {
    }
    return
  }
  func.func @transform_0(%arg0: i32, %arg1: i32, %arg2: i32) -> (i32, i32) {
    %c0_i32 = arith.constant 0 : i32
    return %arg0, %arg2 : i32, i32
  }
  func.func @transform_1(%arg0: i32, %arg1: i32, %arg2: i32) -> (i32, i32) {
    %c0_i32 = arith.constant 0 : i32
    return %arg2, %arg1 : i32, i32
  }
  func.func @transform_2(%arg0: i32, %arg1: i32, %arg2: i32) -> (i32, i32) {
    %c0_i32 = arith.constant 0 : i32
    %c0_i32_0 = arith.constant 0 : i32
    return %c0_i32, %arg1 : i32, i32
  }
  func.func @transform_3(%arg0: i32, %arg1: i32, %arg2: i32) -> (i32, i32) {
    %c0_i32 = arith.constant 0 : i32
    return %arg0, %arg1 : i32, i32
  }
}

module attributes {stable_mosaic.version = 11 : i64} {
  func.func @_mm_bias_act_kernel(%arg0: i32, %arg1: i32, %arg2: i32, %arg3: memref<36x1024xbf16, #tpu.memory_space<vmem>>, %arg4: memref<1024x128xbf16, #tpu.memory_space<vmem>>, %arg5: memref<1x128xf32, #tpu.memory_space<vmem>>, %arg6: memref<36x128xbf16, #tpu.memory_space<vmem>>, %arg7: memref<36x128xf32, #tpu.memory_space<vmem>>) attributes {dimension_semantics = [#tpu.dimension_semantics<parallel>, #tpu.dimension_semantics<parallel>, #tpu.dimension_semantics<arbitrary>], iteration_bounds = array<i64: 1, 1, 1>, scalar_prefetch = 0 : i64, scratch_operands = 1 : i64, tpu.core_type = #tpu.core_type<tc>, window_params = [{transform_indices = @transform_0, window_bounds = array<i64: 36, 1024>}, {transform_indices = @transform_1, window_bounds = array<i64: 1024, 128>}, {transform_indices = @transform_2, window_bounds = array<i64: 1, 128>}, {transform_indices = @transform_3, window_bounds = array<i64: 36, 128>}]} {
    %c0_i32 = arith.constant 0 : i32
    %0 = arith.cmpi eq, %arg2, %c0_i32 : i32
    %1 = arith.extui %0 : i1 to i32
    %c0_i32_0 = arith.constant 0 : i32
    %2 = arith.cmpi ne, %1, %c0_i32_0 : i32
    scf.if %2 {
      %cst_10 = arith.constant 0.000000e+00 : f32
      %12 = vector.broadcast %cst_10 : f32 to vector<36x128xf32>
      %c0_11 = arith.constant 0 : index
      %c0_12 = arith.constant 0 : index
      %13 = vector.load %arg7[%c0_11, %c0_12] : memref<36x128xf32, #tpu.memory_space<vmem>>, vector<36x128xf32>
      tpu.vector_store %arg7[%c0_11, %c0_12], %12 {strides = array<i32>} : memref<36x128xf32, #tpu.memory_space<vmem>>, vector<36x128xf32>,
    } else {
    }
    %c0 = arith.constant 0 : index
    %c0_1 = arith.constant 0 : index
    %3 = vector.load %arg7[%c0, %c0_1] : memref<36x128xf32, #tpu.memory_space<vmem>>, vector<36x128xf32>
    %c0_2 = arith.constant 0 : index
    %c0_3 = arith.constant 0 : index
    %4 = vector.load %arg3[%c0_2, %c0_3] : memref<36x1024xbf16, #tpu.memory_space<vmem>>, vector<36x1024xbf16>
    %c0_4 = arith.constant 0 : index
    %c0_5 = arith.constant 0 : index
    %5 = vector.load %arg4[%c0_4, %c0_5] : memref<1024x128xbf16, #tpu.memory_space<vmem>>, vector<1024x128xbf16>
    %cst = arith.constant dense<0.000000e+00> : vector<36x128xf32>
    %6 = tpu.matmul %4, %5, %cst {dimension_numbers = #tpu.dot_dimension_numbers<[1], [0], [0], [1], [0, 0, 1, 1], [], []>} : vector<36x1024xbf16>, vector<1024x128xbf16>, vector<36x128xf32> -> vector<36x128xf32>
    %7 = arith.addf %3, %6 : vector<36x128xf32>
    %c0_6 = arith.constant 0 : index
    %c0_7 = arith.constant 0 : index
    %8 = vector.load %arg7[%c0_6, %c0_7] : memref<36x128xf32, #tpu.memory_space<vmem>>, vector<36x128xf32>
    tpu.vector_store %arg7[%c0_6, %c0_7], %7 {strides = array<i32>} : memref<36x128xf32, #tpu.memory_space<vmem>>, vector<36x128xf32>,
    %c0_i32_8 = arith.constant 0 : i32
    %9 = arith.cmpi eq, %arg2, %c0_i32_8 : i32
    %10 = arith.extui %9 : i1 to i32
    %c0_i32_9 = arith.constant 0 : i32
    %11 = arith.cmpi ne, %10, %c0_i32_9 : i32
    scf.if %11 {
      %c0_10 = arith.constant 0 : index
      %c0_11 = arith.constant 0 : index
      %12 = vector.load %arg7[%c0_10, %c0_11] : memref<36x128xf32, #tpu.memory_space<vmem>>, vector<36x128xf32>
      %c0_12 = arith.constant 0 : index
      %c0_13 = arith.constant 0 : index
      %13 = vector.load %arg5[%c0_12, %c0_13] : memref<1x128xf32, #tpu.memory_space<vmem>>, vector<1x128xf32>
      %14 = vector.broadcast %13 : vector<1x128xf32> to vector<36x128xf32>
      %15 = arith.addf %12, %14 : vector<36x128xf32>
      %cst_14 = arith.constant 0.000000e+00 : f32
      %16 = vector.broadcast %cst_14 : f32 to vector<36x128xf32>
      %17 = arith.cmpf oge, %15, %16 : vector<36x128xf32>
      %cst_15 = arith.constant 0.00999999977 : f32
      %18 = vector.broadcast %cst_15 : f32 to vector<36x128xf32>
      %19 = arith.mulf %18, %15 : vector<36x128xf32>
      %20 = arith.select %17, %15, %19 : vector<36x128xi1>, vector<36x128xf32>
      %21 = arith.truncf %20 : vector<36x128xf32> to vector<36x128xbf16>
      %c0_16 = arith.constant 0 : index
      %c0_17 = arith.constant 0 : index
      %22 = vector.load %arg6[%c0_16, %c0_17] : memref<36x128xbf16, #tpu.memory_space<vmem>>, vector<36x128xbf16>
      tpu.vector_store %arg6[%c0_16, %c0_17], %21 {strides = array<i32>} : memref<36x128xbf16, #tpu.memory_space<vmem>>, vector<36x128xbf16>,
    } else {
    }
    return
  }
  func.func @transform_0(%arg0: i32, %arg1: i32, %arg2: i32) -> (i32, i32) {
    %c0_i32 = arith.constant 0 : i32
    return %arg0, %arg2 : i32, i32
  }
  func.func @transform_1(%arg0: i32, %arg1: i32, %arg2: i32) -> (i32, i32) {
    %c0_i32 = arith.constant 0 : i32
    return %arg2, %arg1 : i32, i32
  }
  func.func @transform_2(%arg0: i32, %arg1: i32, %arg2: i32) -> (i32, i32) {
    %c0_i32 = arith.constant 0 : i32
    %c0_i32_0 = arith.constant 0 : i32
    return %c0_i32, %arg1 : i32, i32
  }
  func.func @transform_3(%arg0: i32, %arg1: i32, %arg2: i32) -> (i32, i32) {
    %c0_i32 = arith.constant 0 : i32
    return %arg0, %arg1 : i32, i32
  }
}

module attributes {stable_mosaic.version = 11 : i64} {
  func.func @_fc_head_kernel(%arg0: i32, %arg1: i32, %arg2: memref<2x2304xbf16, #tpu.memory_space<vmem>>, %arg3: memref<2304x512xbf16, #tpu.memory_space<vmem>>, %arg4: memref<1x512xf32, #tpu.memory_space<vmem>>, %arg5: memref<1x512xf32, #tpu.memory_space<vmem>>, %arg6: memref<1x1xf32, #tpu.memory_space<vmem>>, %arg7: memref<2x1xf32, #tpu.memory_space<vmem>>, %arg8: memref<2x1xf32, #tpu.memory_space<vmem>>) attributes {dimension_semantics = [#tpu.dimension_semantics<parallel>, #tpu.dimension_semantics<arbitrary>], iteration_bounds = array<i64: 1, 2>, scalar_prefetch = 0 : i64, scratch_operands = 1 : i64, tpu.core_type = #tpu.core_type<tc>, window_params = [{transform_indices = @transform_0, window_bounds = array<i64: 2, 2304>}, {transform_indices = @transform_1, window_bounds = array<i64: 2304, 512>}, {transform_indices = @transform_2, window_bounds = array<i64: 1, 512>}, {transform_indices = @transform_3, window_bounds = array<i64: 1, 512>}, {pipeline_mode = #tpu.pipeline_mode<synchronous>, transform_indices = @transform_4, window_bounds = array<i64: 1, 1>}, {transform_indices = @transform_5, window_bounds = array<i64: 2, 1>}]} {
    %c0_i32 = arith.constant 0 : i32
    %0 = arith.cmpi eq, %arg1, %c0_i32 : i32
    %1 = arith.extui %0 : i1 to i32
    %c0_i32_0 = arith.constant 0 : i32
    %2 = arith.cmpi ne, %1, %c0_i32_0 : i32
    scf.if %2 {
      %cst_16 = arith.constant 0.000000e+00 : f32
      %25 = vector.broadcast %cst_16 : f32 to vector<2x1xf32>
      %c0_17 = arith.constant 0 : index
      %c0_18 = arith.constant 0 : index
      %26 = vector.load %arg8[%c0_17, %c0_18] : memref<2x1xf32, #tpu.memory_space<vmem>>, vector<2x1xf32>
      tpu.vector_store %arg8[%c0_17, %c0_18], %25 {strides = array<i32>} : memref<2x1xf32, #tpu.memory_space<vmem>>, vector<2x1xf32>,
    } else {
    }
    %c0 = arith.constant 0 : index
    %c0_1 = arith.constant 0 : index
    %3 = vector.load %arg2[%c0, %c0_1] : memref<2x2304xbf16, #tpu.memory_space<vmem>>, vector<2x2304xbf16>
    %c0_2 = arith.constant 0 : index
    %c0_3 = arith.constant 0 : index
    %4 = vector.load %arg3[%c0_2, %c0_3] : memref<2304x512xbf16, #tpu.memory_space<vmem>>, vector<2304x512xbf16>
    %cst = arith.constant dense<0.000000e+00> : vector<2x512xf32>
    %5 = tpu.matmul %3, %4, %cst {dimension_numbers = #tpu.dot_dimension_numbers<[1], [0], [0], [1], [0, 0, 1, 1], [], []>} : vector<2x2304xbf16>, vector<2304x512xbf16>, vector<2x512xf32> -> vector<2x512xf32>
    %c0_4 = arith.constant 0 : index
    %c0_5 = arith.constant 0 : index
    %6 = vector.load %arg4[%c0_4, %c0_5] : memref<1x512xf32, #tpu.memory_space<vmem>>, vector<1x512xf32>
    %7 = vector.broadcast %6 : vector<1x512xf32> to vector<2x512xf32>
    %8 = arith.addf %5, %7 : vector<2x512xf32>
    %cst_6 = arith.constant 0.000000e+00 : f32
    %9 = vector.broadcast %cst_6 : f32 to vector<2x512xf32>
    %10 = arith.cmpf oge, %8, %9 : vector<2x512xf32>
    %cst_7 = arith.constant 0.00999999977 : f32
    %11 = vector.broadcast %cst_7 : f32 to vector<2x512xf32>
    %12 = arith.mulf %11, %8 : vector<2x512xf32>
    %13 = arith.select %10, %8, %12 : vector<2x512xi1>, vector<2x512xf32>
    %c0_8 = arith.constant 0 : index
    %c0_9 = arith.constant 0 : index
    %14 = vector.load %arg8[%c0_8, %c0_9] : memref<2x1xf32, #tpu.memory_space<vmem>>, vector<2x1xf32>
    %c0_10 = arith.constant 0 : index
    %c0_11 = arith.constant 0 : index
    %15 = vector.load %arg5[%c0_10, %c0_11] : memref<1x512xf32, #tpu.memory_space<vmem>>, vector<1x512xf32>
    %16 = vector.broadcast %15 : vector<1x512xf32> to vector<2x512xf32>
    %17 = arith.mulf %13, %16 : vector<2x512xf32>
    %cst_12 = arith.constant dense<0.000000e+00> : vector<2xf32>
    %18 = vector.multi_reduction <add>, %17, %cst_12 [1] : vector<2x512xf32> to vector<2xf32>
    %19 = vector.shape_cast %18 : vector<2xf32> to vector<2x1xf32>
    %20 = arith.addf %14, %19 : vector<2x1xf32>
    %c0_13 = arith.constant 0 : index
    %c0_14 = arith.constant 0 : index
    %21 = vector.load %arg8[%c0_13, %c0_14] : memref<2x1xf32, #tpu.memory_space<vmem>>, vector<2x1xf32>
    tpu.vector_store %arg8[%c0_13, %c0_14], %20 {strides = array<i32>} : memref<2x1xf32, #tpu.memory_space<vmem>>, vector<2x1xf32>,
    %c1_i32 = arith.constant 1 : i32
    %22 = arith.cmpi eq, %arg1, %c1_i32 : i32
    %23 = arith.extui %22 : i1 to i32
    %c0_i32_15 = arith.constant 0 : i32
    %24 = arith.cmpi ne, %23, %c0_i32_15 : i32
    scf.if %24 {
      %c0_16 = arith.constant 0 : index
      %c0_17 = arith.constant 0 : index
      %25 = vector.load %arg8[%c0_16, %c0_17] : memref<2x1xf32, #tpu.memory_space<vmem>>, vector<2x1xf32>
      %c0_18 = arith.constant 0 : index
      %c0_19 = arith.constant 0 : index
      %26 = vector.load %arg6[%c0_18, %c0_19] : memref<1x1xf32, #tpu.memory_space<vmem>>, vector<1x1xf32>
      %27 = vector.broadcast %26 : vector<1x1xf32> to vector<2x1xf32>
      %28 = arith.addf %25, %27 : vector<2x1xf32>
      %c0_20 = arith.constant 0 : index
      %c0_21 = arith.constant 0 : index
      %29 = vector.load %arg7[%c0_20, %c0_21] : memref<2x1xf32, #tpu.memory_space<vmem>>, vector<2x1xf32>
      tpu.vector_store %arg7[%c0_20, %c0_21], %28 {strides = array<i32>} : memref<2x1xf32, #tpu.memory_space<vmem>>, vector<2x1xf32>,
    } else {
    }
    return
  }
  func.func @transform_0(%arg0: i32, %arg1: i32) -> (i32, i32) {
    %c0_i32 = arith.constant 0 : i32
    %c0_i32_0 = arith.constant 0 : i32
    return %arg0, %c0_i32 : i32, i32
  }
  func.func @transform_1(%arg0: i32, %arg1: i32) -> (i32, i32) {
    %c0_i32 = arith.constant 0 : i32
    %c0_i32_0 = arith.constant 0 : i32
    return %c0_i32, %arg1 : i32, i32
  }
  func.func @transform_2(%arg0: i32, %arg1: i32) -> (i32, i32) {
    %c0_i32 = arith.constant 0 : i32
    %c0_i32_0 = arith.constant 0 : i32
    return %c0_i32, %arg1 : i32, i32
  }
  func.func @transform_3(%arg0: i32, %arg1: i32) -> (i32, i32) {
    %c0_i32 = arith.constant 0 : i32
    %c0_i32_0 = arith.constant 0 : i32
    return %c0_i32, %arg1 : i32, i32
  }
  func.func @transform_4(%arg0: i32, %arg1: i32) -> (i32, i32) {
    %c0_i32 = arith.constant 0 : i32
    %c0_i32_0 = arith.constant 0 : i32
    %c0_i32_1 = arith.constant 0 : i32
    return %c0_i32, %c0_i32_0 : i32, i32
  }
  func.func @transform_5(%arg0: i32, %arg1: i32) -> (i32, i32) {
    %c0_i32 = arith.constant 0 : i32
    %c0_i32_0 = arith.constant 0 : i32
    return %arg0, %c0_i32 : i32, i32
  }
}

</mosaic_0001>

<llo_original>
// kernel: discriminator_image.5
$region0: #{discriminator_image.5}
  #allocation0 [shape = 'u32[]', space=smem, size = 0x4, offset = 0x4, fixed_abs, tag = 'smem constant byte address 0x4 - core index']
  #allocation1 [shape = 'u32[144,128]{1,0:T(1,128)}', space=vmem, size = 0x12000, scoped, tag = 'internal scratch']
  #allocation2 [shape = 'f32[144,128]{1,0:T(8,128)}', space=vmem, size = 0x12000, scoped, tag = 'scratch operand']
  %s0 = inlined_call_operand.vmem [shape: bf16[288,768], index: 0, kind: input, shape index: {}]
  %s1 = inlined_call_operand.vmem [shape: bf16[768,128], index: 1, kind: input, shape index: {}]
  %s2 = inlined_call_operand.vmem [shape: f32[1,128], index: 2, kind: input, shape index: {}]
  %s3 = inlined_call_operand.vmem [shape: bf16[288,128], index: 3, kind: output, shape index: {}]
  %s4 = sld [smem:[#allocation0]]
  $region53: #{discriminator_image.5} parent=0
    _
  %s6 = ssub.s32 1, %s4
  %s7 = scalar_select 0, %s6, %s4
  loop: start=0, step=1, limit=4
  $region2: #{discriminator_image.5} parent=0 // loop_pre_header
    _
  $region3: #{discriminator_image.5} parent=0 // loop_header
    %s9 = sphi 0, %s13
    %p10 = scmp.ge.s32.totalorder %s9, 4
    %s16 = sphi 0, %s35
    %s17 = sphi 0, %s31
    %s18 = sphi 0, %s27
    %s19 = sphi 0, %s16
    %s20 = sphi 0, %s17
    %s21 = sphi 0, %s18
    %s22 = sphi 0, %s19
    %s23 = sphi 0, %s20
    %s24 = sphi 0, %s21
    %s40 = sphi 0, %s42
    %s43 = sphi 0, %s40
    %s44 = sphi 0, %s43
    %s60 = sphi 0, %s44
    %s68 = sphi 0, %s70
    %s71 = sphi 0, %s68
    %s72 = sphi 0, %s71
    %s88 = sphi 0, %s72
    %s94 = sphi 0, %s96
    %s97 = sphi 0, %s94
    %s98 = sphi 0, %s97
    %s114 = sphi 0, %s98
    %s122 = sphi 0, %s124
    %s125 = sphi 0, %s122
    %s126 = sphi 0, %s125
    %s142 = sphi 0, %s126
  $region4: #{discriminator_image.5} parent=0 // loop_header_branch
    %12 = sbr.rel (%p10) target = $region8
  $region5: #{discriminator_image.5} parent=0 // loop_body
    %s14 = ssub.s32 %s9, 1
    %s15 = ssub.s32 %s9, 2
    %s25 = sadd.s32 1, %s18
    %p26 = scmp.ge.s32.totalorder %s25, 1
    %s27 = scalar_select %p26, 0, %s25
    %s28 = sadd.s32 1, %s17
    %s29 = scalar_select %p26, %s28, %s17
    %p30 = scmp.ge.s32.totalorder %s29, 1
    %s31 = scalar_select %p30, 0, %s29
    %s32 = sadd.s32 1, %s16
    %s33 = scalar_select %p30, %s32, %s16
    %p34 = scmp.ge.s32.totalorder %s33, 2
    %s35 = scalar_select %p34, 0, %s33
    %s36 = ssub.s32 %s16, %s35
    %s37 = ssub.s32 %s18, %s27
    %s38 = sor.u32 %s36, %s37
    %p39 = scmp.eq.s32.totalorder %s38, 0
    %s41 = sadd.s32 %s40, 1
    %s42 = scalar_select %p39, %s40, %s41
    %p45 = pneg %p39
    %p46 = scmp.eq.s32.totalorder %s9, 1
    %p47 = por %p45, %p46
    %p48 = scmp.ne.s32.totalorder %s40, %s43
    %p49 = scmp.eq.s32.totalorder %s9, 0
    %p50 = por %p48, %p49
    %p51 = scmp.ne.s32.totalorder %s40, %s43
    %p52 = scmp.eq.s32.totalorder %s14, 1
    %p53 = por %p51, %p52
    %p54 = scmp.ne.s32.totalorder %s43, %s44
    %p55 = scmp.eq.s32.totalorder %s14, 0
    %p56 = por %p54, %p55
    %p57 = scmp.ne.s32.totalorder %s43, %s44
    %p58 = scmp.eq.s32.totalorder %s15, 1
    %p59 = por %p57, %p58
    %p61 = scmp.ne.s32.totalorder %s44, %s60
    %p62 = scmp.eq.s32.totalorder %s15, 0
    %p63 = por %p61, %p62
    %s64 = ssub.s32 %s18, %s27
    %s65 = ssub.s32 %s17, %s31
    %s66 = sor.u32 %s64, %s65
    %p67 = scmp.eq.s32.totalorder %s66, 0
    %s69 = sadd.s32 %s68, 1
    %s70 = scalar_select %p67, %s68, %s69
    %p73 = pneg %p67
    %p74 = scmp.eq.s32.totalorder %s9, 1
    %p75 = por %p73, %p74
    %p76 = scmp.ne.s32.totalorder %s68, %s71
    %p77 = scmp.eq.s32.totalorder %s9, 0
    %p78 = por %p76, %p77
    %p79 = scmp.ne.s32.totalorder %s68, %s71
    %p80 = scmp.eq.s32.totalorder %s14, 1
    %p81 = por %p79, %p80
    %p82 = scmp.ne.s32.totalorder %s71, %s72
    %p83 = scmp.eq.s32.totalorder %s14, 0
    %p84 = por %p82, %p83
    %p85 = scmp.ne.s32.totalorder %s71, %s72
    %p86 = scmp.eq.s32.totalorder %s15, 1
    %p87 = por %p85, %p86
    %p89 = scmp.ne.s32.totalorder %s72, %s88
    %p90 = scmp.eq.s32.totalorder %s15, 0
    %p91 = por %p89, %p90
    %s92 = ssub.s32 %s17, %s31
    %p93 = scmp.eq.s32.totalorder %s92, 0
    %s95 = sadd.s32 %s94, 1
    %s96 = scalar_select %p93, %s94, %s95
    %p99 = pneg %p93
    %p100 = scmp.eq.s32.totalorder %s9, 1
    %p101 = por %p99, %p100
    %p102 = scmp.ne.s32.totalorder %s94, %s97
    %p103 = scmp.eq.s32.totalorder %s9, 0
    %p104 = por %p102, %p103
    %p105 = scmp.ne.s32.totalorder %s94, %s97
    %p106 = scmp.eq.s32.totalorder %s14, 1
    %p107 = por %p105, %p106
    %p108 = scmp.ne.s32.totalorder %s97, %s98
    %p109 = scmp.eq.s32.totalorder %s14, 0
    %p110 = por %p108, %p109
    %p111 = scmp.ne.s32.totalorder %s97, %s98
    %p112 = scmp.eq.s32.totalorder %s15, 1
    %p113 = por %p111, %p112
    %p115 = scmp.ne.s32.totalorder %s98, %s114
    %p116 = scmp.eq.s32.totalorder %s15, 0
    %p117 = por %p115, %p116
    %s118 = ssub.s32 %s16, %s35
    %s119 = ssub.s32 %s17, %s31
    %s120 = sor.u32 %s118, %s119
    %p121 = scmp.eq.s32.totalorder %s120, 0
    %s123 = sadd.s32 %s122, 1
    %s124 = scalar_select %p121, %s122, %s123
    %p127 = pneg %p121
    %p128 = scmp.eq.s32.totalorder %s9, 1
    %p129 = por %p127, %p128
    %p130 = scmp.ne.s32.totalorder %s122, %s125
    %p131 = scmp.eq.s32.totalorder %s9, 0
    %p132 = por %p130, %p131
    %p133 = scmp.ne.s32.totalorder %s122, %s125
    %p134 = scmp.eq.s32.totalorder %s14, 1
    %p135 = por %p133, %p134
    %p136 = scmp.ne.s32.totalorder %s125, %s126
    %p137 = scmp.eq.s32.totalorder %s14, 0
    %p138 = por %p136, %p137
    %p139 = scmp.ne.s32.totalorder %s125, %s126
    %p140 = scmp.eq.s32.totalorder %s15, 1
    %p141 = por %p139, %p140
    %p143 = scmp.ne.s32.totalorder %s126, %s142
    %p144 = scmp.eq.s32.totalorder %s15, 0
    %p145 = por %p143, %p144
    %p146 = scmp.le.s32.totalorder 1, %s9
    %p147 = scmp.lt.s32.totalorder %s9, 3
    %p148 = pnand %p146, %p147
    %p149 = pneg %p148
    // Predicated region
    $region9: #{discriminator_image.5} parent=5 // pred_check
      _
    $region10: #{discriminator_image.5} parent=5 // pred_check_branch
      %151 = sbr.rel (%p148) target = $region12
    $region11: #{discriminator_image.5} parent=5 // pred_region
      %s152 = ssub.s32 %s9, 1
      // Predicated region
      $region13: #{discriminator_image.5} parent=11 // pred_check
        %p153 = pneg %p84
      $region14: #{discriminator_image.5} parent=11 // pred_check_branch
        %155 = sbr.rel (%p153) target = $region16
      $region15: #{discriminator_image.5} parent=11 // pred_region
        %s156 = smul.u32 96, %s21
        %p157 = scmp.lt.s32.totalorder %s156, 95
        %s158 = scalar_select %p157, %s156, 95
        %p159 = scmp.lt.s32.totalorder %s20, 0
        %s160 = scalar_select %p159, %s20, 0
        %s161 = sadd.s32 %s160, %s158
        %s162 = smul.addr %s161, 4
        %s163 = scalar_lea.vmem %s1, %s162
        %s164 = smul.u32 96, %s21
      $region16: #{discriminator_image.5} parent=11 // pred_fallthru
        _
      // Predicated region
      $region17: #{discriminator_image.5} parent=11 // pred_check
        %p165 = pneg %p110
      $region18: #{discriminator_image.5} parent=11 // pred_check_branch
        %167 = sbr.rel (%p165) target = $region20
      $region19: #{discriminator_image.5} parent=11 // pred_region
        %p168 = scmp.lt.s32.totalorder %s20, 0
        %s169 = scalar_select %p168, %s20, 0
        %s170 = scalar_lea.vmem %s2, %s169
      $region20: #{discriminator_image.5} parent=11 // pred_fallthru
        _
    $region12: #{discriminator_image.5} parent=5 // pred_fallthru
      _
    %p171 = scmp.lt.s32.totalorder %s9, 2
    // Predicated region
    $region21: #{discriminator_image.5} parent=5 // pred_check
      %p172 = pneg %p171
    $region22: #{discriminator_image.5} parent=5 // pred_check_branch
      %174 = sbr.rel (%p172) target = $region24
    $region23: #{discriminator_image.5} parent=5 // pred_region
      // Predicated region
      $region25: #{discriminator_image.5} parent=23 // pred_check
        %p175 = pneg %p50
      $region26: #{discriminator_image.5} parent=23 // pred_check_branch
        %177 = sbr.rel (%p175) target = $region28
      $region27: #{discriminator_image.5} parent=23 // pred_region
        %s178 = smul.u32 18, %s16
        %s179 = smul.u32 6, %s18
        %p180 = scmp.lt.s32.totalorder %s178, 35
        %s181 = scalar_select %p180, %s178, 35
        %p182 = scmp.lt.s32.totalorder %s179, 5
        %s183 = scalar_select %p182, %s179, 5
        %s184 = smul.addr %s181, 6
        %s185 = sadd.s32 %s183, %s184
        %s186 = smul.addr %s185, 4
        %s187 = scalar_lea.vmem %s0, %s186
        %s188 = smul.u32 18, %s16
        %s189 = smul.u32 6, %s18
      $region28: #{discriminator_image.5} parent=23 // pred_fallthru
        _
    $region24: #{discriminator_image.5} parent=5 // pred_fallthru
      _
    %p190 = scmp.le.s32.totalorder 1, %s9
    %p191 = scmp.lt.s32.totalorder %s9, 3
    %p192 = pnand %p190, %p191
    %p193 = pneg %p192
    // Predicated region
    $region29: #{discriminator_image.5} parent=5 // pred_check
      _
    $region30: #{discriminator_image.5} parent=5 // pred_check_branch
      %195 = sbr.rel (%p192) target = $region32
    $region31: #{discriminator_image.5} parent=5 // pred_region
      %s196 = ssub.s32 %s9, 1
      %s197 = smul.u32 18, %s19
      %s198 = smul.u32 6, %s21
      %p199 = scmp.lt.s32.totalorder %s197, 35
      %s200 = scalar_select %p199, %s197, 35
      %p201 = scmp.lt.s32.totalorder %s198, 5
      %s202 = scalar_select %p201, %s198, 5
      %s203 = smul.addr %s200, 6
      %s204 = sadd.s32 %s202, %s203
      %s205 = smul.addr %s204, 4
      %s206 = scalar_lea.vmem %s0, %s205
      %p207 = pneg %p56
      %p208 = pneg %p53
      %s209 = smul.u32 96, %s21
      %p210 = scmp.lt.s32.totalorder %s209, 95
      %s211 = scalar_select %p210, %s209, 95
      %p212 = scmp.lt.s32.totalorder %s20, 0
      %s213 = scalar_select %p212, %s20, 0
      %s214 = sadd.s32 %s213, %s211
      %s215 = smul.addr %s214, 4
      %s216 = scalar_lea.vmem %s1, %s215
      %p217 = pneg %p84
      %p218 = pneg %p81
      %p219 = scmp.lt.s32.totalorder %s20, 0
      %s220 = scalar_select %p219, %s20, 0
      %s221 = scalar_lea.vmem %s2, %s220
      %p222 = pneg %p110
      %p223 = pneg %p107
      %p224 = pneg %p138
      %p225 = pneg %p135
      %s226 = smul.u32 18, %s19
      %p227 = scmp.lt.s32.totalorder %s226, 35
      %s228 = scalar_select %p227, %s226, 35
      %p229 = scmp.lt.s32.totalorder %s20, 0
      %s230 = scalar_select %p229, %s20, 0
      %s231 = sadd.s32 %s230, %s228
      %s232 = smul.addr %s231, 4
      %s233 = scalar_lea.vmem %s3, %s232
      %s234 = smul.u32 18, %s19
      %s235 = smul.u32 6, %s21
      %p236 = scmp.lt.s32.totalorder %s234, 35
      %s237 = scalar_select %p236, %s234, 35
      %p238 = scmp.lt.s32.totalorder %s235, 5
      %s239 = scalar_select %p238, %s235, 5
      %s240 = smul.addr %s237, 6
      %s241 = sadd.s32 %s239, %s240
      %s242 = smul.addr %s241, 4
      %s243 = scalar_lea.vmem %s0, %s242
      %s244 = smul.u32 18, %s19
      %s245 = smul.u32 6, %s21
      %s246 = smul.u32 96, %s21
      %p247 = scmp.lt.s32.totalorder %s246, 95
      %s248 = scalar_select %p247, %s246, 95
      %p249 = scmp.lt.s32.totalorder %s20, 0
      %s250 = scalar_select %p249, %s20, 0
      %s251 = sadd.s32 %s250, %s248
      %s252 = smul.addr %s251, 4
      %s253 = scalar_lea.vmem %s1, %s252
      %s254 = smul.u32 96, %s21
      %p255 = scmp.lt.s32.totalorder %s20, 0
      %s256 = scalar_select %p255, %s20, 0
      %s257 = scalar_lea.vmem %s2, %s256
      %s258 = smul.u32 18, %s19
      %p259 = scmp.lt.s32.totalorder %s258, 35
      %s260 = scalar_select %p259, %s258, 35
      %p261 = scmp.lt.s32.totalorder %s20, 0
      %s262 = scalar_select %p261, %s20, 0
      %s263 = sadd.s32 %s262, %s260
      %s264 = smul.addr %s263, 4
      %s265 = scalar_lea.vmem %s3, %s264
      %s266 = smul.u32 18, %s19
      %p268 = scmp.eq.s32.totalorder %s21, 0
      // Predicated region
      $region33: #{discriminator_image.5} parent=31 // pred_check
        %p269 = pneg %p268
      $region34: #{discriminator_image.5} parent=31 // pred_check_branch
        %271 = sbr.rel (%p269) target = $region36
      $region35: #{discriminator_image.5} parent=31 // pred_region
        %272 = vst [vmem:[#allocation2] sm:$0xff] 0.0
        %273 = vst [vmem:[#allocation2 + $0x8] sm:$0xff] 0.0
        %274 = vst [vmem:[#allocation2 + $0x10] sm:$0xff] 0.0
        %275 = vst [vmem:[#allocation2 + $0x18] sm:$0xff] 0.0
        %276 = vst [vmem:[#allocation2 + $0x20] sm:$0xff] 0.0
        %277 = vst [vmem:[#allocation2 + $0x28] sm:$0xff] 0.0
        %278 = vst [vmem:[#allocation2 + $0x30] sm:$0xff] 0.0
        %279 = vst [vmem:[#allocation2 + $0x38] sm:$0xff] 0.0
        %280 = vst [vmem:[#allocation2 + $0x40] sm:$0xff] 0.0
        %281 = vst [vmem:[#allocation2 + $0x48] sm:$0xff] 0.0
        %282 = vst [vmem:[#allocation2 + $0x50] sm:$0xff] 0.0
        %283 = vst [vmem:[#allocation2 + $0x58] sm:$0xff] 0.0
        %284 = vst [vmem:[#allocation2 + $0x60] sm:$0xff] 0.0
        %285 = vst [vmem:[#allocation2 + $0x68] sm:$0xff] 0.0
        %286 = vst [vmem:[#allocation2 + $0x70] sm:$0xff] 0.0
        %287 = vst [vmem:[#allocation2 + $0x78] sm:$0xff] 0.0
        %288 = vst [vmem:[#allocation2 + $0x80] sm:$0xff] 0.0
        %289 = vst [vmem:[#allocation2 + $0x88] sm:$0xff] 0.0
      $region36: #{discriminator_image.5} parent=31 // pred_fallthru
        _
      %v290 = vld [vmem:[#allocation2] sm:$0xff]
      %v291 = vld [vmem:[#allocation2 + $0x8] sm:$0xff]
      %v292 = vld [vmem:[#allocation2 + $0x10] sm:$0xff]
      %v293 = vld [vmem:[#allocation2 + $0x18] sm:$0xff]
      %v294 = vld [vmem:[#allocation2 + $0x20] sm:$0xff]
      %v295 = vld [vmem:[#allocation2 + $0x28] sm:$0xff]
      %v296 = vld [vmem:[#allocation2 + $0x30] sm:$0xff]
      %v297 = vld [vmem:[#allocation2 + $0x38] sm:$0xff]
      %v298 = vld [vmem:[#allocation2 + $0x40] sm:$0xff]
      %v299 = vld [vmem:[#allocation2 + $0x48] sm:$0xff]
      %v300 = vld [vmem:[#allocation2 + $0x50] sm:$0xff]
      %v301 = vld [vmem:[#allocation2 + $0x58] sm:$0xff]
      %v302 = vld [vmem:[#allocation2 + $0x60] sm:$0xff]
      %v303 = vld [vmem:[#allocation2 + $0x68] sm:$0xff]
      %v304 = vld [vmem:[#allocation2 + $0x70] sm:$0xff]
      %v305 = vld [vmem:[#allocation2 + $0x78] sm:$0xff]
      %v306 = vld [vmem:[#allocation2 + $0x80] sm:$0xff]
      %v307 = vld [vmem:[#allocation2 + $0x88] sm:$0xff]
      %v308 = vld [vmem:[%s243] sm:$0xff]
      %v309 = vld [vmem:[%s243 + $0x8] sm:$0xff]
      %v310 = vld [vmem:[%s243 + $0x10] sm:$0xff]
      %v311 = vld [vmem:[%s243 + $0x18] sm:$0xff]
      %v312 = vld [vmem:[%s243 + $0x20] sm:$0xff]
      %v313 = vld [vmem:[%s243 + $0x28] sm:$0xff]
      %v314 = vld [vmem:[%s243 + $0x30] sm:$0xff]
      %v315 = vld [vmem:[%s243 + $0x38] sm:$0xff]
      %v316 = vld [vmem:[%s243 + $0x40] sm:$0xff]
      %v317 = vld [vmem:[%s243 + $0x48] sm:$0xff]
      %v318 = vld [vmem:[%s243 + $0x50] sm:$0xff]
      %v319 = vld [vmem:[%s243 + $0x58] sm:$0xff]
      %v320 = vld [vmem:[%s243 + $0x60] sm:$0xff]
      %v321 = vld [vmem:[%s243 + $0x68] sm:$0xff]
      %v322 = vld [vmem:[%s243 + $0x70] sm:$0xff]
      %v323 = vld [vmem:[%s243 + $0x78] sm:$0xff]
      %v324 = vld [vmem:[%s243 + $0x80] sm:$0xff]
      %v325 = vld [vmem:[%s243 + $0x88] sm:$0xff]
      %v326 = vld [vmem:[%s243 + $0x90] sm:$0xff]
      %v327 = vld [vmem:[%s243 + $0x98] sm:$0xff]
      %v328 = vld [vmem:[%s243 + $0xa0] sm:$0xff]
      %v329 = vld [vmem:[%s243 + $0xa8] sm:$0xff]
      %v330 = vld [vmem:[%s243 + $0xb0] sm:$0xff]
      %v331 = vld [vmem:[%s243 + $0xb8] sm:$0xff]
      %v332 = vld [vmem:[%s243 + $0xc0] sm:$0xff]
      %v333 = vld [vmem:[%s243 + $0xc8] sm:$0xff]
      %v334 = vld [vmem:[%s243 + $0xd0] sm:$0xff]
      %v335 = vld [vmem:[%s243 + $0xd8] sm:$0xff]
      %v336 = vld [vmem:[%s243 + $0xe0] sm:$0xff]
      %v337 = vld [vmem:[%s243 + $0xe8] sm:$0xff]
      %v338 = vld [vmem:[%s243 + $0xf0] sm:$0xff]
      %v339 = vld [vmem:[%s243 + $0xf8] sm:$0xff]
      %v340 = vld [vmem:[%s243 + $0x100] sm:$0xff]
      %v341 = vld [vmem:[%s243 + $0x108] sm:$0xff]
      %v342 = vld [vmem:[%s243 + $0x110] sm:$0xff]
      %v343 = vld [vmem:[%s243 + $0x118] sm:$0xff]
      %v344 = vld [vmem:[%s243 + $0x120] sm:$0xff]
      %v345 = vld [vmem:[%s243 + $0x128] sm:$0xff]
      %v346 = vld [vmem:[%s243 + $0x130] sm:$0xff]
      %v347 = vld [vmem:[%s243 + $0x138] sm:$0xff]
      %v348 = vld [vmem:[%s243 + $0x140] sm:$0xff]
      %v349 = vld [vmem:[%s243 + $0x148] sm:$0xff]
      %v350 = vld [vmem:[%s243 + $0x150] sm:$0xff]
      %v351 = vld [vmem:[%s243 + $0x158] sm:$0xff]
      %v352 = vld [vmem:[%s243 + $0x160] sm:$0xff]
      %v353 = vld [vmem:[%s243 + $0x168] sm:$0xff]
      %v354 = vld [vmem:[%s243 + $0x170] sm:$0xff]
      %v355 = vld [vmem:[%s243 + $0x178] sm:$0xff]
      %v356 = vld [vmem:[%s243 + $0x180] sm:$0xff]
      %v357 = vld [vmem:[%s243 + $0x188] sm:$0xff]
      %v358 = vld [vmem:[%s243 + $0x190] sm:$0xff]
      %v359 = vld [vmem:[%s243 + $0x198] sm:$0xff]
      %v360 = vld [vmem:[%s243 + $0x1a0] sm:$0xff]
      %v361 = vld [vmem:[%s243 + $0x1a8] sm:$0xff]
      %v362 = vld [vmem:[%s253] sm:$0xf]
      %v363 = vld [vmem:[%s253 + $0x4] sm:$0xf]
      %v364 = vld [vmem:[%s253 + $0x8] sm:$0xf]
      %v365 = vld [vmem:[%s253 + $0xc] sm:$0xf]
      %v366 = vld [vmem:[%s253 + $0x10] sm:$0xf]
      %v367 = vld [vmem:[%s253 + $0x14] sm:$0xf]
      %v368 = vld [vmem:[%s253 + $0x18] sm:$0xf]
      %v369 = vld [vmem:[%s253 + $0x1c] sm:$0xf]
      %v370 = vld [vmem:[%s253 + $0x20] sm:$0xf]
      %v371 = vld [vmem:[%s253 + $0x24] sm:$0xf]
      %v372 = vld [vmem:[%s253 + $0x28] sm:$0xf]
      %v373 = vld [vmem:[%s253 + $0x2c] sm:$0xf]
      %v374 = vld [vmem:[%s253 + $0x30] sm:$0xf]
      %v375 = vld [vmem:[%s253 + $0x34] sm:$0xf]
      %v376 = vld [vmem:[%s253 + $0x38] sm:$0xf]
      %v377 = vld [vmem:[%s253 + $0x3c] sm:$0xf]
      %v378 = vld [vmem:[%s253 + $0x40] sm:$0xf]
      %v379 = vld [vmem:[%s253 + $0x44] sm:$0xf]
      %v380 = vld [vmem:[%s253 + $0x48] sm:$0xf]
      %v381 = vld [vmem:[%s253 + $0x4c] sm:$0xf]
      %v382 = vld [vmem:[%s253 + $0x50] sm:$0xf]
      %v383 = vld [vmem:[%s253 + $0x54] sm:$0xf]
      %v384 = vld [vmem:[%s253 + $0x58] sm:$0xf]
      %v385 = vld [vmem:[%s253 + $0x5c] sm:$0xf]
      %v386 = vld [vmem:[%s253 + $0x60] sm:$0xf]
      %v387 = vld [vmem:[%s253 + $0x64] sm:$0xf]
      %v388 = vld [vmem:[%s253 + $0x68] sm:$0xf]
      %v389 = vld [vmem:[%s253 + $0x6c] sm:$0xf]
      %v390 = vld [vmem:[%s253 + $0x70] sm:$0xf]
      %v391 = vld [vmem:[%s253 + $0x74] sm:$0xf]
      %v392 = vld [vmem:[%s253 + $0x78] sm:$0xf]
      %v393 = vld [vmem:[%s253 + $0x7c] sm:$0xf]
      %v394 = vld [vmem:[%s253 + $0x80] sm:$0xf]
      %v395 = vld [vmem:[%s253 + $0x84] sm:$0xf]
      %v396 = vld [vmem:[%s253 + $0x88] sm:$0xf]
      %v397 = vld [vmem:[%s253 + $0x8c] sm:$0xf]
      %v398 = vld [vmem:[%s253 + $0x90] sm:$0xf]
      %v399 = vld [vmem:[%s253 + $0x94] sm:$0xf]
      %v400 = vld [vmem:[%s253 + $0x98] sm:$0xf]
      %v401 = vld [vmem:[%s253 + $0x9c] sm:$0xf]
      %v402 = vld [vmem:[%s253 + $0xa0] sm:$0xf]
      %v403 = vld [vmem:[%s253 + $0xa4] sm:$0xf]
      %v404 = vld [vmem:[%s253 + $0xa8] sm:$0xf]
      %v405 = vld [vmem:[%s253 + $0xac] sm:$0xf]
      %v406 = vld [vmem:[%s253 + $0xb0] sm:$0xf]
      %v407 = vld [vmem:[%s253 + $0xb4] sm:$0xf]
      %v408 = vld [vmem:[%s253 + $0xb8] sm:$0xf]
      %v409 = vld [vmem:[%s253 + $0xbc] sm:$0xf]
      %v410 = vld [vmem:[%s253 + $0xc0] sm:$0xf]
      %v411 = vld [vmem:[%s253 + $0xc4] sm:$0xf]
      %v412 = vld [vmem:[%s253 + $0xc8] sm:$0xf]
      %v413 = vld [vmem:[%s253 + $0xcc] sm:$0xf]
      %v414 = vld [vmem:[%s253 + $0xd0] sm:$0xf]
      %v415 = vld [vmem:[%s253 + $0xd4] sm:$0xf]
      %v416 = vld [vmem:[%s253 + $0xd8] sm:$0xf]
      %v417 = vld [vmem:[%s253 + $0xdc] sm:$0xf]
      %v418 = vld [vmem:[%s253 + $0xe0] sm:$0xf]
      %v419 = vld [vmem:[%s253 + $0xe4] sm:$0xf]
      %v420 = vld [vmem:[%s253 + $0xe8] sm:$0xf]
      %v421 = vld [vmem:[%s253 + $0xec] sm:$0xf]
      %v422 = vld [vmem:[%s253 + $0xf0] sm:$0xf]
      %v423 = vld [vmem:[%s253 + $0xf4] sm:$0xf]
      %v424 = vld [vmem:[%s253 + $0xf8] sm:$0xf]
      %v425 = vld [vmem:[%s253 + $0xfc] sm:$0xf]
      %v426 = vld [vmem:[%s253 + $0x100] sm:$0xf]
      %v427 = vld [vmem:[%s253 + $0x104] sm:$0xf]
      %v428 = vld [vmem:[%s253 + $0x108] sm:$0xf]
      %v429 = vld [vmem:[%s253 + $0x10c] sm:$0xf]
      %v430 = vld [vmem:[%s253 + $0x110] sm:$0xf]
      %v431 = vld [vmem:[%s253 + $0x114] sm:$0xf]
      %v432 = vld [vmem:[%s253 + $0x118] sm:$0xf]
      %v433 = vld [vmem:[%s253 + $0x11c] sm:$0xf]
      %v434 = vld [vmem:[%s253 + $0x120] sm:$0xf]
      %v435 = vld [vmem:[%s253 + $0x124] sm:$0xf]
      %v436 = vld [vmem:[%s253 + $0x128] sm:$0xf]
      %v437 = vld [vmem:[%s253 + $0x12c] sm:$0xf]
      %v438 = vld [vmem:[%s253 + $0x130] sm:$0xf]
      %v439 = vld [vmem:[%s253 + $0x134] sm:$0xf]
      %v440 = vld [vmem:[%s253 + $0x138] sm:$0xf]
      %v441 = vld [vmem:[%s253 + $0x13c] sm:$0xf]
      %v442 = vld [vmem:[%s253 + $0x140] sm:$0xf]
      %v443 = vld [vmem:[%s253 + $0x144] sm:$0xf]
      %v444 = vld [vmem:[%s253 + $0x148] sm:$0xf]
      %v445 = vld [vmem:[%s253 + $0x14c] sm:$0xf]
      %v446 = vld [vmem:[%s253 + $0x150] sm:$0xf]
      %v447 = vld [vmem:[%s253 + $0x154] sm:$0xf]
      %v448 = vld [vmem:[%s253 + $0x158] sm:$0xf]
      %v449 = vld [vmem:[%s253 + $0x15c] sm:$0xf]
      %v450 = vld [vmem:[%s253 + $0x160] sm:$0xf]
      %v451 = vld [vmem:[%s253 + $0x164] sm:$0xf]
      %v452 = vld [vmem:[%s253 + $0x168] sm:$0xf]
      %v453 = vld [vmem:[%s253 + $0x16c] sm:$0xf]
      %v454 = vld [vmem:[%s253 + $0x170] sm:$0xf]
      %v455 = vld [vmem:[%s253 + $0x174] sm:$0xf]
      %v456 = vld [vmem:[%s253 + $0x178] sm:$0xf]
      %v457 = vld [vmem:[%s253 + $0x17c] sm:$0xf]
      %v512 = vunpack.c.l.b16 %v308
      %v513 = vunpack.c.h.b16 %v308
      %v514 = vunpack.c.l.b16 %v309
      %v515 = vunpack.c.h.b16 %v309
      %v516 = vunpack.c.l.b16 %v310
      %v517 = vunpack.c.h.b16 %v310
      %v518 = vunpack.c.l.b16 %v311
      %v519 = vunpack.c.h.b16 %v311
      %v520 = vunpack.c.l.b16 %v312
      %v521 = vunpack.c.h.b16 %v312
      %v522 = vunpack.c.l.b16 %v313
      %v523 = vunpack.c.h.b16 %v313
      %v524 = vunpack.c.l.b16 %v314
      %v525 = vunpack.c.h.b16 %v314
      %v526 = vunpack.c.l.b16 %v315
      %v527 = vunpack.c.h.b16 %v315
      %v528 = vunpack.c.l.b16 %v316
      %v529 = vunpack.c.h.b16 %v316
      %v530 = vunpack.c.l.b16 %v317
      %v531 = vunpack.c.h.b16 %v317
      %v532 = vunpack.c.l.b16 %v318
      %v533 = vunpack.c.h.b16 %v318
      %v534 = vunpack.c.l.b16 %v319
      %v535 = vunpack.c.h.b16 %v319
      %v536 = vunpack.c.l.b16 %v320
      %v537 = vunpack.c.h.b16 %v320
      %v538 = vunpack.c.l.b16 %v321
      %v539 = vunpack.c.h.b16 %v321
      %v540 = vunpack.c.l.b16 %v322
      %v541 = vunpack.c.h.b16 %v322
      %v542 = vunpack.c.l.b16 %v323
      %v543 = vunpack.c.h.b16 %v323
      %v544 = vunpack.c.l.b16 %v324
      %v545 = vunpack.c.h.b16 %v324
      %v546 = vunpack.c.l.b16 %v325
      %v547 = vunpack.c.h.b16 %v325
      %v548 = vunpack.c.l.b16 %v326
      %v549 = vunpack.c.h.b16 %v326
      %v550 = vunpack.c.l.b16 %v327
      %v551 = vunpack.c.h.b16 %v327
      %v552 = vunpack.c.l.b16 %v328
      %v553 = vunpack.c.h.b16 %v328
      %v554 = vunpack.c.l.b16 %v329
      %v555 = vunpack.c.h.b16 %v329
      %v556 = vunpack.c.l.b16 %v330
      %v557 = vunpack.c.h.b16 %v330
      %v558 = vunpack.c.l.b16 %v331
      %v559 = vunpack.c.h.b16 %v331
      %v560 = vunpack.c.l.b16 %v332
      %v561 = vunpack.c.h.b16 %v332
      %v562 = vunpack.c.l.b16 %v333
      %v563 = vunpack.c.h.b16 %v333
      %v564 = vunpack.c.l.b16 %v334
      %v565 = vunpack.c.h.b16 %v334
      %v566 = vunpack.c.l.b16 %v335
      %v567 = vunpack.c.h.b16 %v335
      %v568 = vunpack.c.l.b16 %v336
      %v569 = vunpack.c.h.b16 %v336
      %v570 = vunpack.c.l.b16 %v337
      %v571 = vunpack.c.h.b16 %v337
      %v572 = vunpack.c.l.b16 %v338
      %v573 = vunpack.c.h.b16 %v338
      %v574 = vunpack.c.l.b16 %v339
      %v575 = vunpack.c.h.b16 %v339
      %v576 = vunpack.c.l.b16 %v340
      %v577 = vunpack.c.h.b16 %v340
      %v578 = vunpack.c.l.b16 %v341
      %v579 = vunpack.c.h.b16 %v341
      %v580 = vunpack.c.l.b16 %v342
      %v581 = vunpack.c.h.b16 %v342
      %v582 = vunpack.c.l.b16 %v343
      %v583 = vunpack.c.h.b16 %v343
      %v584 = vunpack.c.l.b16 %v344
      %v585 = vunpack.c.h.b16 %v344
      %v586 = vunpack.c.l.b16 %v345
      %v587 = vunpack.c.h.b16 %v345
      %v588 = vunpack.c.l.b16 %v346
      %v589 = vunpack.c.h.b16 %v346
      %v590 = vunpack.c.l.b16 %v347
      %v591 = vunpack.c.h.b16 %v347
      %v592 = vunpack.c.l.b16 %v348
      %v593 = vunpack.c.h.b16 %v348
      %v594 = vunpack.c.l.b16 %v349
      %v595 = vunpack.c.h.b16 %v349
      %v596 = vunpack.c.l.b16 %v350
      %v597 = vunpack.c.h.b16 %v350
      %v598 = vunpack.c.l.b16 %v351
      %v599 = vunpack.c.h.b16 %v351
      %v600 = vunpack.c.l.b16 %v352
      %v601 = vunpack.c.h.b16 %v352
      %v602 = vunpack.c.l.b16 %v353
      %v603 = vunpack.c.h.b16 %v353
      %v604 = vunpack.c.l.b16 %v354
      %v605 = vunpack.c.h.b16 %v354
      %v606 = vunpack.c.l.b16 %v355
      %v607 = vunpack.c.h.b16 %v355
      %v608 = vunpack.c.l.b16 %v356
      %v609 = vunpack.c.h.b16 %v356
      %v610 = vunpack.c.l.b16 %v357
      %v611 = vunpack.c.h.b16 %v357
      %v612 = vunpack.c.l.b16 %v358
      %v613 = vunpack.c.h.b16 %v358
      %v614 = vunpack.c.l.b16 %v359
      %v615 = vunpack.c.h.b16 %v359
      %v616 = vunpack.c.l.b16 %v360
      %v617 = vunpack.c.h.b16 %v360
      %v618 = vunpack.c.l.b16 %v361
      %v619 = vunpack.c.h.b16 %v361
      %v620 = vpack.c.b16 %v518, %v512
      %v621 = vpack.c.b16 %v519, %v513
      %v622 = vpack.c.b16 %v520, %v514
      %v623 = vpack.c.b16 %v521, %v515
      %v624 = vpack.c.b16 %v522, %v516
      %v625 = vpack.c.b16 %v523, %v517
      %v626 = vpack.c.b16 %v530, %v524
      %v627 = vpack.c.b16 %v531, %v525
      %v628 = vpack.c.b16 %v532, %v526
      %v629 = vpack.c.b16 %v533, %v527
      %v630 = vpack.c.b16 %v534, %v528
      %v631 = vpack.c.b16 %v535, %v529
      %v632 = vpack.c.b16 %v542, %v536
      %v633 = vpack.c.b16 %v543, %v537
      %v634 = vpack.c.b16 %v544, %v538
      %v635 = vpack.c.b16 %v545, %v539
      %v636 = vpack.c.b16 %v546, %v540
      %v637 = vpack.c.b16 %v547, %v541
      %v638 = vpack.c.b16 %v554, %v548
      %v639 = vpack.c.b16 %v555, %v549
      %v640 = vpack.c.b16 %v556, %v550
      %v641 = vpack.c.b16 %v557, %v551
      %v642 = vpack.c.b16 %v558, %v552
      %v643 = vpack.c.b16 %v559, %v553
      %v644 = vpack.c.b16 %v566, %v560
      %v645 = vpack.c.b16 %v567, %v561
      %v646 = vpack.c.b16 %v568, %v562
      %v647 = vpack.c.b16 %v569, %v563
      %v648 = vpack.c.b16 %v570, %v564
      %v649 = vpack.c.b16 %v571, %v565
      %v650 = vpack.c.b16 %v578, %v572
      %v651 = vpack.c.b16 %v579, %v573
      %v652 = vpack.c.b16 %v580, %v574
      %v653 = vpack.c.b16 %v581, %v575
      %v654 = vpack.c.b16 %v582, %v576
      %v655 = vpack.c.b16 %v583, %v577
      %v656 = vpack.c.b16 %v590, %v584
      %v657 = vpack.c.b16 %v591, %v585
      %v658 = vpack.c.b16 %v592, %v586
      %v659 = vpack.c.b16 %v593, %v587
      %v660 = vpack.c.b16 %v594, %v588
      %v661 = vpack.c.b16 %v595, %v589
      %v662 = vpack.c.b16 %v602, %v596
      %v663 = vpack.c.b16 %v603, %v597
      %v664 = vpack.c.b16 %v604, %v598
      %v665 = vpack.c.b16 %v605, %v599
      %v666 = vpack.c.b16 %v606, %v600
      %v667 = vpack.c.b16 %v607, %v601
      %v668 = vpack.c.b16 %v614, %v608
      %v669 = vpack.c.b16 %v615, %v609
      %v670 = vpack.c.b16 %v616, %v610
      %v671 = vpack.c.b16 %v617, %v611
      %v672 = vpack.c.b16 %v618, %v612
      %v673 = vpack.c.b16 %v619, %v613
      %v824 = vunpack.c.l.b16 %v362
      %v825 = vunpack.c.l.b16 %v363
      %v826 = vunpack.c.l.b16 %v364
      %v827 = vunpack.c.l.b16 %v365
      %v828 = vunpack.c.l.b16 %v366
      %v829 = vunpack.c.l.b16 %v367
      %v830 = vunpack.c.l.b16 %v368
      %v831 = vunpack.c.l.b16 %v369
      %v832 = vunpack.c.l.b16 %v370
      %v833 = vunpack.c.l.b16 %v371
      %v834 = vunpack.c.l.b16 %v372
      %v835 = vunpack.c.l.b16 %v373
      %v836 = vunpack.c.l.b16 %v374
      %v837 = vunpack.c.l.b16 %v375
      %v838 = vunpack.c.l.b16 %v376
      %v839 = vunpack.c.l.b16 %v377
      %v840 = vunpack.c.l.b16 %v378
      %v841 = vunpack.c.l.b16 %v379
      %v842 = vunpack.c.l.b16 %v380
      %v843 = vunpack.c.l.b16 %v381
      %v844 = vunpack.c.l.b16 %v382
      %v845 = vunpack.c.l.b16 %v383
      %v846 = vunpack.c.l.b16 %v384
      %v847 = vunpack.c.l.b16 %v385
      %v848 = vunpack.c.l.b16 %v386
      %v849 = vunpack.c.l.b16 %v387
      %v850 = vunpack.c.l.b16 %v388
      %v851 = vunpack.c.l.b16 %v389
      %v852 = vunpack.c.l.b16 %v390
      %v853 = vunpack.c.l.b16 %v391
      %v854 = vunpack.c.l.b16 %v392
      %v855 = vunpack.c.l.b16 %v393
      %v856 = vunpack.c.l.b16 %v394
      %v857 = vunpack.c.l.b16 %v395
      %v858 = vunpack.c.l.b16 %v396
      %v859 = vunpack.c.l.b16 %v397
      %v860 = vunpack.c.l.b16 %v398
      %v861 = vunpack.c.l.b16 %v399
      %v862 = vunpack.c.l.b16 %v400
      %v863 = vunpack.c.l.b16 %v401
      %v864 = vunpack.c.l.b16 %v402
      %v865 = vunpack.c.l.b16 %v403
      %v866 = vunpack.c.l.b16 %v404
      %v867 = vunpack.c.l.b16 %v405
      %v868 = vunpack.c.l.b16 %v406
      %v869 = vunpack.c.l.b16 %v407
      %v870 = vunpack.c.l.b16 %v408
      %v871 = vunpack.c.l.b16 %v409
      %v872 = vunpack.c.l.b16 %v410
      %v873 = vunpack.c.l.b16 %v411
      %v874 = vunpack.c.l.b16 %v412
      %v875 = vunpack.c.l.b16 %v413
      %v876 = vunpack.c.l.b16 %v414
      %v877 = vunpack.c.l.b16 %v415
      %v878 = vunpack.c.l.b16 %v416
      %v879 = vunpack.c.l.b16 %v417
      %v880 = vunpack.c.l.b16 %v418
      %v881 = vunpack.c.l.b16 %v419
      %v882 = vunpack.c.l.b16 %v420
      %v883 = vunpack.c.l.b16 %v421
      %v884 = vunpack.c.l.b16 %v422
      %v885 = vunpack.c.l.b16 %v423
      %v886 = vunpack.c.l.b16 %v424
      %v887 = vunpack.c.l.b16 %v425
      %v888 = vunpack.c.l.b16 %v426
      %v889 = vunpack.c.l.b16 %v427
      %v890 = vunpack.c.l.b16 %v428
      %v891 = vunpack.c.l.b16 %v429
      %v892 = vunpack.c.l.b16 %v430
      %v893 = vunpack.c.l.b16 %v431
      %v894 = vunpack.c.l.b16 %v432
      %v895 = vunpack.c.l.b16 %v433
      %v896 = vunpack.c.l.b16 %v434
      %v897 = vunpack.c.l.b16 %v435
      %v898 = vunpack.c.l.b16 %v436
      %v899 = vunpack.c.l.b16 %v437
      %v900 = vunpack.c.l.b16 %v438
      %v901 = vunpack.c.l.b16 %v439
      %v902 = vunpack.c.l.b16 %v440
      %v903 = vunpack.c.l.b16 %v441
      %v904 = vunpack.c.l.b16 %v442
      %v905 = vunpack.c.l.b16 %v443
      %v906 = vunpack.c.l.b16 %v444
      %v907 = vunpack.c.l.b16 %v445
      %v908 = vunpack.c.l.b16 %v446
      %v909 = vunpack.c.l.b16 %v447
      %v910 = vunpack.c.l.b16 %v448
      %v911 = vunpack.c.l.b16 %v449
      %v912 = vunpack.c.l.b16 %v450
      %v913 = vunpack.c.l.b16 %v451
      %v914 = vunpack.c.l.b16 %v452
      %v915 = vunpack.c.l.b16 %v453
      %v916 = vunpack.c.l.b16 %v454
      %v917 = vunpack.c.l.b16 %v455
      %v918 = vunpack.c.l.b16 %v456
      %v919 = vunpack.c.l.b16 %v457
      %v920 = vpack.c.b16 %v825, %v824
      %v921 = vpack.c.b16 %v827, %v826
      %v922 = vpack.c.b16 %v829, %v828
      %v923 = vpack.c.b16 %v831, %v830
      %v924 = vpack.c.b16 %v833, %v832
      %v925 = vpack.c.b16 %v835, %v834
      %v926 = vpack.c.b16 %v837, %v836
      %v927 = vpack.c.b16 %v839, %v838
      %v928 = vpack.c.b16 %v841, %v840
      %v929 = vpack.c.b16 %v843, %v842
      %v930 = vpack.c.b16 %v845, %v844
      %v931 = vpack.c.b16 %v847, %v846
      %v932 = vpack.c.b16 %v849, %v848
      %v933 = vpack.c.b16 %v851, %v850
      %v934 = vpack.c.b16 %v853, %v852
      %v935 = vpack.c.b16 %v855, %v854
      %v936 = vpack.c.b16 %v857, %v856
      %v937 = vpack.c.b16 %v859, %v858
      %v938 = vpack.c.b16 %v861, %v860
      %v939 = vpack.c.b16 %v863, %v862
      %v940 = vpack.c.b16 %v865, %v864
      %v941 = vpack.c.b16 %v867, %v866
      %v942 = vpack.c.b16 %v869, %v868
      %v943 = vpack.c.b16 %v871, %v870
      %v944 = vpack.c.b16 %v873, %v872
      %v945 = vpack.c.b16 %v875, %v874
      %v946 = vpack.c.b16 %v877, %v876
      %v947 = vpack.c.b16 %v879, %v878
      %v948 = vpack.c.b16 %v881, %v880
      %v949 = vpack.c.b16 %v883, %v882
      %v950 = vpack.c.b16 %v885, %v884
      %v951 = vpack.c.b16 %v887, %v886
      %v952 = vpack.c.b16 %v889, %v888
      %v953 = vpack.c.b16 %v891, %v890
      %v954 = vpack.c.b16 %v893, %v892
      %v955 = vpack.c.b16 %v895, %v894
      %v956 = vpack.c.b16 %v897, %v896
      %v957 = vpack.c.b16 %v899, %v898
      %v958 = vpack.c.b16 %v901, %v900
      %v959 = vpack.c.b16 %v903, %v902
      %v960 = vpack.c.b16 %v905, %v904
      %v961 = vpack.c.b16 %v907, %v906
      %v962 = vpack.c.b16 %v909, %v908
      %v963 = vpack.c.b16 %v911, %v910
      %v964 = vpack.c.b16 %v913, %v912
      %v965 = vpack.c.b16 %v915, %v914
      %v966 = vpack.c.b16 %v917, %v916
      %v967 = vpack.c.b16 %v919, %v918
      %1016 = vmatprep.subr.bf16.mxu0 0
      %1017 = vmatpush1.bf16.msra.mxu0 %v920
      %1018 = vmatprep.subr.bf16.mxu0 0
      %1019 = vmatpush1.bf16.msra.mxu0 %v921
      %1020 = vmatprep.subr.bf16.mxu0 0
      %1021 = vmatpush1.bf16.msra.mxu0 %v922
      %1022 = vmatprep.subr.bf16.mxu0 0
      %1023 = vmatpush1.bf16.msra.mxu0 %v923
      %1024 = vmatprep.subr.bf16.mxu0 0
      %1025 = vmatpush1.bf16.msra.mxu0 %v924
      %1026 = vmatprep.subr.bf16.mxu0 0
      %1027 = vmatpush1.bf16.msra.mxu0 %v925
      %1028 = vmatprep.subr.bf16.mxu0 0
      %1029 = vmatpush1.bf16.msra.mxu0 %v926
      %1030 = vmatprep.subr.bf16.mxu0 0
      %1031 = vmatpush1.bf16.msra.mxu0 %v927
      %1032 = vmatprep.subr.bf16.mxu0 0
      %1033 = vmatpush1.bf16.msra.mxu0 %v928
      %1034 = vmatprep.subr.bf16.mxu0 0
      %1035 = vmatpush1.bf16.msra.mxu0 %v929
      %1036 = vmatprep.subr.bf16.mxu0 0
      %1037 = vmatpush1.bf16.msra.mxu0 %v930
      %1038 = vmatprep.subr.bf16.mxu0 0
      %1039 = vmatpush1.bf16.msra.mxu0 %v931
      %1040 = vmatprep.subr.bf16.mxu0 0
      %1041 = vmatpush1.bf16.msra.mxu0 %v932
      %1042 = vmatprep.subr.bf16.mxu0 0
      %1043 = vmatpush1.bf16.msra.mxu0 %v933
      %1044 = vmatprep.subr.bf16.mxu0 0
      %1045 = vmatpush1.bf16.msra.mxu0 %v934
      %1046 = vmatprep.subr.bf16.mxu0 0
      %1047 = vmatpush1.bf16.msra.mxu0 %v935
      %1048 = vmatprep.mubr.bf16.mxu0 %v621
      %1049 = vmatmul.mubr.bf16.gmra.mrb[0].mxu0 %v620
      %v1050 = vpop.f32.mrb[0].mxu0
      %v1051 = vadd.f32 0.0, %v1050
      %v1052 = vpop.f32.mrb[0].mxu0
      %v1053 = vpop.f32.mrb[0].mxu0
      %v1054 = vadd.f32 0.0, %v1053
      %v1055 = vpop.f32.mrb[0].mxu0
      %1056 = vmatprep.mubr.bf16.mxu0 %v627
      %1057 = vmatmul.mubr.bf16.gmra.mrb[0].mxu0 %v626
      %v1058 = vpop.f32.mrb[0].mxu0
      %v1059 = vadd.f32 0.0, %v1058
      %v1060 = vpop.f32.mrb[0].mxu0
      %v1061 = vpop.f32.mrb[0].mxu0
      %v1062 = vadd.f32 0.0, %v1061
      %v1063 = vpop.f32.mrb[0].mxu0
      %1064 = vmatprep.mubr.bf16.mxu0 %v633
      %1065 = vmatmul.mubr.bf16.gmra.mrb[0].mxu0 %v632
      %v1066 = vpop.f32.mrb[0].mxu0
      %v1067 = vadd.f32 0.0, %v1066
      %v1068 = vpop.f32.mrb[0].mxu0
      %v1069 = vpop.f32.mrb[0].mxu0
      %v1070 = vadd.f32 0.0, %v1069
      %v1071 = vpop.f32.mrb[0].mxu0
      %1072 = vmatprep.mubr.bf16.mxu0 %v639
      %1073 = vmatmul.mubr.bf16.gmra.mrb[0].mxu0 %v638
      %v1074 = vpop.f32.mrb[0].mxu0
      %v1075 = vadd.f32 0.0, %v1074
      %v1076 = vpop.f32.mrb[0].mxu0
      %v1077 = vpop.f32.mrb[0].mxu0
      %v1078 = vadd.f32 0.0, %v1077
      %v1079 = vpop.f32.mrb[0].mxu0
      %1080 = vmatprep.mubr.bf16.mxu0 %v645
      %1081 = vmatmul.mubr.bf16.gmra.mrb[0].mxu0 %v644
      %v1082 = vpop.f32.mrb[0].mxu0
      %v1083 = vadd.f32 0.0, %v1082
      %v1084 = vpop.f32.mrb[0].mxu0
      %v1085 = vpop.f32.mrb[0].mxu0
      %v1086 = vadd.f32 0.0, %v1085
      %v1087 = vpop.f32.mrb[0].mxu0
      %1088 = vmatprep.mubr.bf16.mxu0 %v651
      %1089 = vmatmul.mubr.bf16.gmra.mrb[0].mxu0 %v650
      %v1090 = vpop.f32.mrb[0].mxu0
      %v1091 = vadd.f32 0.0, %v1090
      %v1092 = vpop.f32.mrb[0].mxu0
      %v1093 = vpop.f32.mrb[0].mxu0
      %v1094 = vadd.f32 0.0, %v1093
      %v1095 = vpop.f32.mrb[0].mxu0
      %1096 = vmatprep.mubr.bf16.mxu0 %v657
      %1097 = vmatmul.mubr.bf16.gmra.mrb[0].mxu0 %v656
      %v1098 = vpop.f32.mrb[0].mxu0
      %v1099 = vadd.f32 0.0, %v1098
      %v1100 = vpop.f32.mrb[0].mxu0
      %v1101 = vpop.f32.mrb[0].mxu0
      %v1102 = vadd.f32 0.0, %v1101
      %v1103 = vpop.f32.mrb[0].mxu0
      %1104 = vmatprep.mubr.bf16.mxu0 %v663
      %1105 = vmatmul.mubr.bf16.gmra.mrb[0].mxu0 %v662
      %v1106 = vpop.f32.mrb[0].mxu0
      %v1107 = vadd.f32 0.0, %v1106
      %v1108 = vpop.f32.mrb[0].mxu0
      %v1109 = vpop.f32.mrb[0].mxu0
      %v1110 = vadd.f32 0.0, %v1109
      %v1111 = vpop.f32.mrb[0].mxu0
      %1112 = vmatprep.mubr.bf16.mxu0 %v669
      %1113 = vmatmul.mubr.bf16.gmra.mrb[0].mxu0 %v668
      %v1114 = vpop.f32.mrb[0].mxu0
      %v1115 = vadd.f32 0.0, %v1114
      %v1116 = vpop.f32.mrb[0].mxu0
      %v1117 = vpop.f32.mrb[0].mxu0
      %v1118 = vadd.f32 0.0, %v1117
      %v1119 = vpop.f32.mrb[0].mxu0
      %1120 = vdwg.mxu0
      %1121 = vmatprep.subr.bf16.mxu0 0
      %1122 = vmatpush1.bf16.msra.mxu0 %v936
      %1123 = vmatprep.subr.bf16.mxu0 0
      %1124 = vmatpush1.bf16.msra.mxu0 %v937
      %1125 = vmatprep.subr.bf16.mxu0 0
      %1126 = vmatpush1.bf16.msra.mxu0 %v938
      %1127 = vmatprep.subr.bf16.mxu0 0
      %1128 = vmatpush1.bf16.msra.mxu0 %v939
      %1129 = vmatprep.subr.bf16.mxu0 0
      %1130 = vmatpush1.bf16.msra.mxu0 %v940
      %1131 = vmatprep.subr.bf16.mxu0 0
      %1132 = vmatpush1.bf16.msra.mxu0 %v941
      %1133 = vmatprep.subr.bf16.mxu0 0
      %1134 = vmatpush1.bf16.msra.mxu0 %v942
      %1135 = vmatprep.subr.bf16.mxu0 0
      %1136 = vmatpush1.bf16.msra.mxu0 %v943
      %1137 = vmatprep.subr.bf16.mxu0 0
      %1138 = vmatpush1.bf16.msra.mxu0 %v944
      %1139 = vmatprep.subr.bf16.mxu0 0
      %1140 = vmatpush1.bf16.msra.mxu0 %v945
      %1141 = vmatprep.subr.bf16.mxu0 0
      %1142 = vmatpush1.bf16.msra.mxu0 %v946
      %1143 = vmatprep.subr.bf16.mxu0 0
      %1144 = vmatpush1.bf16.msra.mxu0 %v947
      %1145 = vmatprep.subr.bf16.mxu0 0
      %1146 = vmatpush1.bf16.msra.mxu0 %v948
      %1147 = vmatprep.subr.bf16.mxu0 0
      %1148 = vmatpush1.bf16.msra.mxu0 %v949
      %1149 = vmatprep.subr.bf16.mxu0 0
      %1150 = vmatpush1.bf16.msra.mxu0 %v950
      %1151 = vmatprep.subr.bf16.mxu0 0
      %1152 = vmatpush1.bf16.msra.mxu0 %v951
      %1153 = vmatprep.mubr.bf16.mxu0 %v623
      %1154 = vmatmul.mubr.bf16.gmra.mrb[0].mxu0 %v622
      %v1155 = vpop.f32.mrb[0].mxu0
      %v1156 = vadd.f32 %v1051, %v1155
      %v1157 = vpop.f32.mrb[0].mxu0
      %v1158 = vpop.f32.mrb[0].mxu0
      %v1159 = vadd.f32 %v1054, %v1158
      %v1160 = vpop.f32.mrb[0].mxu0
      %1161 = vmatprep.mubr.bf16.mxu0 %v629
      %1162 = vmatmul.mubr.bf16.gmra.mrb[0].mxu0 %v628
      %v1163 = vpop.f32.mrb[0].mxu0
      %v1164 = vadd.f32 %v1059, %v1163
      %v1165 = vpop.f32.mrb[0].mxu0
      %v1166 = vpop.f32.mrb[0].mxu0
      %v1167 = vadd.f32 %v1062, %v1166
      %v1168 = vpop.f32.mrb[0].mxu0
      %1169 = vmatprep.mubr.bf16.mxu0 %v635
      %1170 = vmatmul.mubr.bf16.gmra.mrb[0].mxu0 %v634
      %v1171 = vpop.f32.mrb[0].mxu0
      %v1172 = vadd.f32 %v1067, %v1171
      %v1173 = vpop.f32.mrb[0].mxu0
      %v1174 = vpop.f32.mrb[0].mxu0
      %v1175 = vadd.f32 %v1070, %v1174
      %v1176 = vpop.f32.mrb[0].mxu0
      %1177 = vmatprep.mubr.bf16.mxu0 %v641
      %1178 = vmatmul.mubr.bf16.gmra.mrb[0].mxu0 %v640
      %v1179 = vpop.f32.mrb[0].mxu0
      %v1180 = vadd.f32 %v1075, %v1179
      %v1181 = vpop.f32.mrb[0].mxu0
      %v1182 = vpop.f32.mrb[0].mxu0
      %v1183 = vadd.f32 %v1078, %v1182
      %v1184 = vpop.f32.mrb[0].mxu0
      %1185 = vmatprep.mubr.bf16.mxu0 %v647
      %1186 = vmatmul.mubr.bf16.gmra.mrb[0].mxu0 %v646
      %v1187 = vpop.f32.mrb[0].mxu0
      %v1188 = vadd.f32 %v1083, %v1187
      %v1189 = vpop.f32.mrb[0].mxu0
      %v1190 = vpop.f32.mrb[0].mxu0
      %v1191 = vadd.f32 %v1086, %v1190
      %v1192 = vpop.f32.mrb[0].mxu0
      %1193 = vmatprep.mubr.bf16.mxu0 %v653
      %1194 = vmatmul.mubr.bf16.gmra.mrb[0].mxu0 %v652
      %v1195 = vpop.f32.mrb[0].mxu0
      %v1196 = vadd.f32 %v1091, %v1195
      %v1197 = vpop.f32.mrb[0].mxu0
      %v1198 = vpop.f32.mrb[0].mxu0
      %v1199 = vadd.f32 %v1094, %v1198
      %v1200 = vpop.f32.mrb[0].mxu0
      %1201 = vmatprep.mubr.bf16.mxu0 %v659
      %1202 = vmatmul.mubr.bf16.gmra.mrb[0].mxu0 %v658
      %v1203 = vpop.f32.mrb[0].mxu0
      %v1204 = vadd.f32 %v1099, %v1203
      %v1205 = vpop.f32.mrb[0].mxu0
      %v1206 = vpop.f32.mrb[0].mxu0
      %v1207 = vadd.f32 %v1102, %v1206
      %v1208 = vpop.f32.mrb[0].mxu0
      %1209 = vmatprep.mubr.bf16.mxu0 %v665
      %1210 = vmatmul.mubr.bf16.gmra.mrb[0].mxu0 %v664
      %v1211 = vpop.f32.mrb[0].mxu0
      %v1212 = vadd.f32 %v1107, %v1211
      %v1213 = vpop.f32.mrb[0].mxu0
      %v1214 = vpop.f32.mrb[0].mxu0
      %v1215 = vadd.f32 %v1110, %v1214
      %v1216 = vpop.f32.mrb[0].mxu0
      %1217 = vmatprep.mubr.bf16.mxu0 %v671
      %1218 = vmatmul.mubr.bf16.gmra.mrb[0].mxu0 %v670
      %v1219 = vpop.f32.mrb[0].mxu0
      %v1220 = vadd.f32 %v1115, %v1219
      %v1221 = vpop.f32.mrb[0].mxu0
      %v1222 = vpop.f32.mrb[0].mxu0
      %v1223 = vadd.f32 %v1118, %v1222
      %v1224 = vpop.f32.mrb[0].mxu0
      %1225 = vdwg.mxu0
      %1226 = vmatprep.subr.bf16.mxu0 0
      %1227 = vmatpush1.bf16.msra.mxu0 %v952
      %1228 = vmatprep.subr.bf16.mxu0 0
      %1229 = vmatpush1.bf16.msra.mxu0 %v953
      %1230 = vmatprep.subr.bf16.mxu0 0
      %1231 = vmatpush1.bf16.msra.mxu0 %v954
      %1232 = vmatprep.subr.bf16.mxu0 0
      %1233 = vmatpush1.bf16.msra.mxu0 %v955
      %1234 = vmatprep.subr.bf16.mxu0 0
      %1235 = vmatpush1.bf16.msra.mxu0 %v956
      %1236 = vmatprep.subr.bf16.mxu0 0
      %1237 = vmatpush1.bf16.msra.mxu0 %v957
      %1238 = vmatprep.subr.bf16.mxu0 0
      %1239 = vmatpush1.bf16.msra.mxu0 %v958
      %1240 = vmatprep.subr.bf16.mxu0 0
      %1241 = vmatpush1.bf16.msra.mxu0 %v959
      %1242 = vmatprep.subr.bf16.mxu0 0
      %1243 = vmatpush1.bf16.msra.mxu0 %v960
      %1244 = vmatprep.subr.bf16.mxu0 0
      %1245 = vmatpush1.bf16.msra.mxu0 %v961
      %1246 = vmatprep.subr.bf16.mxu0 0
      %1247 = vmatpush1.bf16.msra.mxu0 %v962
      %1248 = vmatprep.subr.bf16.mxu0 0
      %1249 = vmatpush1.bf16.msra.mxu0 %v963
      %1250 = vmatprep.subr.bf16.mxu0 0
      %1251 = vmatpush1.bf16.msra.mxu0 %v964
      %1252 = vmatprep.subr.bf16.mxu0 0
      %1253 = vmatpush1.bf16.msra.mxu0 %v965
      %1254 = vmatprep.subr.bf16.mxu0 0
      %1255 = vmatpush1.bf16.msra.mxu0 %v966
      %1256 = vmatprep.subr.bf16.mxu0 0
      %1257 = vmatpush1.bf16.msra.mxu0 %v967
      %1258 = vmatprep.mubr.bf16.mxu0 %v625
      %1259 = vmatmul.mubr.bf16.gmra.mrb[0].mxu0 %v624
      %v1260 = vpop.f32.mrb[0].mxu0
      %v1261 = vadd.f32 %v1156, %v1260
      %v1262 = vpop.f32.mrb[0].mxu0
      %v1263 = vpop.f32.mrb[0].mxu0
      %v1264 = vadd.f32 %v1159, %v1263
      %v1265 = vpop.f32.mrb[0].mxu0
      %1266 = vmatprep.mubr.bf16.mxu0 %v631
      %1267 = vmatmul.mubr.bf16.gmra.mrb[0].mxu0 %v630
      %v1268 = vpop.f32.mrb[0].mxu0
      %v1269 = vadd.f32 %v1164, %v1268
      %v1270 = vpop.f32.mrb[0].mxu0
      %v1271 = vpop.f32.mrb[0].mxu0
      %v1272 = vadd.f32 %v1167, %v1271
      %v1273 = vpop.f32.mrb[0].mxu0
      %1274 = vmatprep.mubr.bf16.mxu0 %v637
      %1275 = vmatmul.mubr.bf16.gmra.mrb[0].mxu0 %v636
      %v1276 = vpop.f32.mrb[0].mxu0
      %v1277 = vadd.f32 %v1172, %v1276
      %v1278 = vpop.f32.mrb[0].mxu0
      %v1279 = vpop.f32.mrb[0].mxu0
      %v1280 = vadd.f32 %v1175, %v1279
      %v1281 = vpop.f32.mrb[0].mxu0
      %1282 = vmatprep.mubr.bf16.mxu0 %v643
      %1283 = vmatmul.mubr.bf16.gmra.mrb[0].mxu0 %v642
      %v1284 = vpop.f32.mrb[0].mxu0
      %v1285 = vadd.f32 %v1180, %v1284
      %v1286 = vpop.f32.mrb[0].mxu0
      %v1287 = vpop.f32.mrb[0].mxu0
      %v1288 = vadd.f32 %v1183, %v1287
      %v1289 = vpop.f32.mrb[0].mxu0
      %1290 = vmatprep.mubr.bf16.mxu0 %v649
      %1291 = vmatmul.mubr.bf16.gmra.mrb[0].mxu0 %v648
      %v1292 = vpop.f32.mrb[0].mxu0
      %v1293 = vadd.f32 %v1188, %v1292
      %v1294 = vpop.f32.mrb[0].mxu0
      %v1295 = vpop.f32.mrb[0].mxu0
      %v1296 = vadd.f32 %v1191, %v1295
      %v1297 = vpop.f32.mrb[0].mxu0
      %1298 = vmatprep.mubr.bf16.mxu0 %v655
      %1299 = vmatmul.mubr.bf16.gmra.mrb[0].mxu0 %v654
      %v1300 = vpop.f32.mrb[0].mxu0
      %v1301 = vadd.f32 %v1196, %v1300
      %v1302 = vpop.f32.mrb[0].mxu0
      %v1303 = vpop.f32.mrb[0].mxu0
      %v1304 = vadd.f32 %v1199, %v1303
      %v1305 = vpop.f32.mrb[0].mxu0
      %1306 = vmatprep.mubr.bf16.mxu0 %v661
      %1307 = vmatmul.mubr.bf16.gmra.mrb[0].mxu0 %v660
      %v1308 = vpop.f32.mrb[0].mxu0
      %v1309 = vadd.f32 %v1204, %v1308
      %v1310 = vpop.f32.mrb[0].mxu0
      %v1311 = vpop.f32.mrb[0].mxu0
      %v1312 = vadd.f32 %v1207, %v1311
      %v1313 = vpop.f32.mrb[0].mxu0
      %1314 = vmatprep.mubr.bf16.mxu0 %v667
      %1315 = vmatmul.mubr.bf16.gmra.mrb[0].mxu0 %v666
      %v1316 = vpop.f32.mrb[0].mxu0
      %v1317 = vadd.f32 %v1212, %v1316
      %v1318 = vpop.f32.mrb[0].mxu0
      %v1319 = vpop.f32.mrb[0].mxu0
      %v1320 = vadd.f32 %v1215, %v1319
      %v1321 = vpop.f32.mrb[0].mxu0
      %1322 = vmatprep.mubr.bf16.mxu0 %v673
      %1323 = vmatmul.mubr.bf16.gmra.mrb[0].mxu0 %v672
      %v1324 = vpop.f32.mrb[0].mxu0
      %v1325 = vadd.f32 %v1220, %v1324
      %v1326 = vpop.f32.mrb[0].mxu0
      %v1327 = vpop.f32.mrb[0].mxu0
      %v1328 = vadd.f32 %v1223, %v1327
      %v1329 = vpop.f32.mrb[0].mxu0
      %1330 = vdwg.mxu0
      %v1331 = vadd.f32 %v290, %v1261
      %v1332 = vadd.f32 %v291, %v1264
      %v1333 = vadd.f32 %v292, %v1269
      %v1334 = vadd.f32 %v293, %v1272
      %v1335 = vadd.f32 %v294, %v1277
      %v1336 = vadd.f32 %v295, %v1280
      %v1337 = vadd.f32 %v296, %v1285
      %v1338 = vadd.f32 %v297, %v1288
      %v1339 = vadd.f32 %v298, %v1293
      %v1340 = vadd.f32 %v299, %v1296
      %v1341 = vadd.f32 %v300, %v1301
      %v1342 = vadd.f32 %v301, %v1304
      %v1343 = vadd.f32 %v302, %v1309
      %v1344 = vadd.f32 %v303, %v1312
      %v1345 = vadd.f32 %v304, %v1317
      %v1346 = vadd.f32 %v305, %v1320
      %v1347 = vadd.f32 %v306, %v1325
      %v1348 = vadd.f32 %v307, %v1328
      %1349 = vst [vmem:[#allocation2] sm:$0xff] %v1331
      %1350 = vst [vmem:[#allocation2 + $0x8] sm:$0xff] %v1332
      %1351 = vst [vmem:[#allocation2 + $0x10] sm:$0xff] %v1333
      %1352 = vst [vmem:[#allocation2 + $0x18] sm:$0xff] %v1334
      %1353 = vst [vmem:[#allocation2 + $0x20] sm:$0xff] %v1335
      %1354 = vst [vmem:[#allocation2 + $0x28] sm:$0xff] %v1336
      %1355 = vst [vmem:[#allocation2 + $0x30] sm:$0xff] %v1337
      %1356 = vst [vmem:[#allocation2 + $0x38] sm:$0xff] %v1338
      %1357 = vst [vmem:[#allocation2 + $0x40] sm:$0xff] %v1339
      %1358 = vst [vmem:[#allocation2 + $0x48] sm:$0xff] %v1340
      %1359 = vst [vmem:[#allocation2 + $0x50] sm:$0xff] %v1341
      %1360 = vst [vmem:[#allocation2 + $0x58] sm:$0xff] %v1342
      %1361 = vst [vmem:[#allocation2 + $0x60] sm:$0xff] %v1343
      %1362 = vst [vmem:[#allocation2 + $0x68] sm:$0xff] %v1344
      %1363 = vst [vmem:[#allocation2 + $0x70] sm:$0xff] %v1345
      %1364 = vst [vmem:[#allocation2 + $0x78] sm:$0xff] %v1346
      %1365 = vst [vmem:[#allocation2 + $0x80] sm:$0xff] %v1347
      %1366 = vst [vmem:[#allocation2 + $0x88] sm:$0xff] %v1348
      // Predicated region
      $region37: #{discriminator_image.5} parent=31 // pred_check
        %p1367 = pneg %p268
      $region38: #{discriminator_image.5} parent=31 // pred_check_branch
        %1369 = sbr.rel (%p1367) target = $region40
      $region39: #{discriminator_image.5} parent=31 // pred_region
        %v1370 = vld [vmem:[#allocation2] sm:$0xff]
        %v1371 = vld [vmem:[#allocation2 + $0x8] sm:$0xff]
        %v1372 = vld [vmem:[#allocation2 + $0x10] sm:$0xff]
        %v1373 = vld [vmem:[#allocation2 + $0x18] sm:$0xff]
        %v1374 = vld [vmem:[#allocation2 + $0x20] sm:$0xff]
        %v1375 = vld [vmem:[#allocation2 + $0x28] sm:$0xff]
        %v1376 = vld [vmem:[#allocation2 + $0x30] sm:$0xff]
        %v1377 = vld [vmem:[#allocation2 + $0x38] sm:$0xff]
        %v1378 = vld [vmem:[#allocation2 + $0x40] sm:$0xff]
        %v1379 = vld [vmem:[#allocation2 + $0x48] sm:$0xff]
        %v1380 = vld [vmem:[#allocation2 + $0x50] sm:$0xff]
        %v1381 = vld [vmem:[#allocation2 + $0x58] sm:$0xff]
        %v1382 = vld [vmem:[#allocation2 + $0x60] sm:$0xff]
        %v1383 = vld [vmem:[#allocation2 + $0x68] sm:$0xff]
        %v1384 = vld [vmem:[#allocation2 + $0x70] sm:$0xff]
        %v1385 = vld [vmem:[#allocation2 + $0x78] sm:$0xff]
        %v1386 = vld [vmem:[#allocation2 + $0x80] sm:$0xff]
        %v1387 = vld [vmem:[#allocation2 + $0x88] sm:$0xff]
        %v1388 = vld [vmem:[%s257] sm:$0x1]
        %v1390 = vlaneseq
        %v1391 = vshrl.u32 %v1390, 7
        %v1392 = vsub.s32 0, %v1391
        %v1393 = vrot.slane %v1388, %v1392
        %v1395 = vadd.f32 %v1370, %v1393
        %v1396 = vadd.f32 %v1371, %v1393
        %v1397 = vadd.f32 %v1372, %v1393
        %v1398 = vadd.f32 %v1373, %v1393
        %v1399 = vadd.f32 %v1374, %v1393
        %v1400 = vadd.f32 %v1375, %v1393
        %v1401 = vadd.f32 %v1376, %v1393
        %v1402 = vadd.f32 %v1377, %v1393
        %v1403 = vadd.f32 %v1378, %v1393
        %v1404 = vadd.f32 %v1379, %v1393
        %v1405 = vadd.f32 %v1380, %v1393
        %v1406 = vadd.f32 %v1381, %v1393
        %v1407 = vadd.f32 %v1382, %v1393
        %v1408 = vadd.f32 %v1383, %v1393
        %v1409 = vadd.f32 %v1384, %v1393
        %v1410 = vadd.f32 %v1385, %v1393
        %v1411 = vadd.f32 %v1386, %v1393
        %v1412 = vadd.f32 %v1387, %v1393
        %vm1413 = vcmp.ge.f32.partialorder %v1395, 0.0
        %vm1414 = vcmp.ge.f32.partialorder %v1396, 0.0
        %vm1415 = vcmp.ge.f32.partialorder %v1397, 0.0
        %vm1416 = vcmp.ge.f32.partialorder %v1398, 0.0
        %vm1417 = vcmp.ge.f32.partialorder %v1399, 0.0
        %vm1418 = vcmp.ge.f32.partialorder %v1400, 0.0
        %vm1419 = vcmp.ge.f32.partialorder %v1401, 0.0
        %vm1420 = vcmp.ge.f32.partialorder %v1402, 0.0
        %vm1421 = vcmp.ge.f32.partialorder %v1403, 0.0
        %vm1422 = vcmp.ge.f32.partialorder %v1404, 0.0
        %vm1423 = vcmp.ge.f32.partialorder %v1405, 0.0
        %vm1424 = vcmp.ge.f32.partialorder %v1406, 0.0
        %vm1425 = vcmp.ge.f32.partialorder %v1407, 0.0
        %vm1426 = vcmp.ge.f32.partialorder %v1408, 0.0
        %vm1427 = vcmp.ge.f32.partialorder %v1409, 0.0
        %vm1428 = vcmp.ge.f32.partialorder %v1410, 0.0
        %vm1429 = vcmp.ge.f32.partialorder %v1411, 0.0
        %vm1430 = vcmp.ge.f32.partialorder %v1412, 0.0
        %v1431 = vmul.f32 %v1395, 0.01
        %v1432 = vmul.f32 %v1396, 0.01
        %v1433 = vmul.f32 %v1397, 0.01
        %v1434 = vmul.f32 %v1398, 0.01
        %v1435 = vmul.f32 %v1399, 0.01
        %v1436 = vmul.f32 %v1400, 0.01
        %v1437 = vmul.f32 %v1401, 0.01
        %v1438 = vmul.f32 %v1402, 0.01
        %v1439 = vmul.f32 %v1403, 0.01
        %v1440 = vmul.f32 %v1404, 0.01
        %v1441 = vmul.f32 %v1405, 0.01
        %v1442 = vmul.f32 %v1406, 0.01
        %v1443 = vmul.f32 %v1407, 0.01
        %v1444 = vmul.f32 %v1408, 0.01
        %v1445 = vmul.f32 %v1409, 0.01
        %v1446 = vmul.f32 %v1410, 0.01
        %v1447 = vmul.f32 %v1411, 0.01
        %v1448 = vmul.f32 %v1412, 0.01
        %v1449 = vsel %vm1413, %v1395, %v1431
        %v1450 = vsel %vm1414, %v1396, %v1432
        %v1451 = vsel %vm1415, %v1397, %v1433
        %v1452 = vsel %vm1416, %v1398, %v1434
        %v1453 = vsel %vm1417, %v1399, %v1435
        %v1454 = vsel %vm1418, %v1400, %v1436
        %v1455 = vsel %vm1419, %v1401, %v1437
        %v1456 = vsel %vm1420, %v1402, %v1438
        %v1457 = vsel %vm1421, %v1403, %v1439
        %v1458 = vsel %vm1422, %v1404, %v1440
        %v1459 = vsel %vm1423, %v1405, %v1441
        %v1460 = vsel %vm1424, %v1406, %v1442
        %v1461 = vsel %vm1425, %v1407, %v1443
        %v1462 = vsel %vm1426, %v1408, %v1444
        %v1463 = vsel %vm1427, %v1409, %v1445
        %v1464 = vsel %vm1428, %v1410, %v1446
        %v1465 = vsel %vm1429, %v1411, %v1447
        %v1466 = vsel %vm1430, %v1412, %v1448
        %v1467 = vpack.c.bf16 %v1450, %v1449
        %v1468 = vpack.c.bf16 %v1452, %v1451
        %v1469 = vpack.c.bf16 %v1454, %v1453
        %v1470 = vpack.c.bf16 %v1456, %v1455
        %v1471 = vpack.c.bf16 %v1458, %v1457
        %v1472 = vpack.c.bf16 %v1460, %v1459
        %v1473 = vpack.c.bf16 %v1462, %v1461
        %v1474 = vpack.c.bf16 %v1464, %v1463
        %v1475 = vpack.c.bf16 %v1466, %v1465
        %v1485 = vunpack.c.l.b16 %v1467
        %v1486 = vunpack.c.h.b16 %v1467
        %v1487 = vunpack.c.l.b16 %v1468
        %v1488 = vunpack.c.h.b16 %v1468
        %v1489 = vunpack.c.l.b16 %v1469
        %v1490 = vunpack.c.h.b16 %v1469
        %v1491 = vunpack.c.l.b16 %v1470
        %v1492 = vunpack.c.h.b16 %v1470
        %v1493 = vunpack.c.l.b16 %v1471
        %v1494 = vunpack.c.h.b16 %v1471
        %v1495 = vunpack.c.l.b16 %v1472
        %v1496 = vunpack.c.h.b16 %v1472
        %v1497 = vunpack.c.l.b16 %v1473
        %v1498 = vunpack.c.h.b16 %v1473
        %v1499 = vunpack.c.l.b16 %v1474
        %v1500 = vunpack.c.h.b16 %v1474
        %v1501 = vunpack.c.l.b16 %v1475
        %v1502 = vunpack.c.h.b16 %v1475
        %v1503 = vpack.c.b16 %v1485, %v1485
        %v1504 = vpack.c.b16 %v1486, %v1486
        %v1505 = vpack.c.b16 %v1487, %v1487
        %v1506 = vpack.c.b16 %v1488, %v1488
        %v1507 = vpack.c.b16 %v1489, %v1489
        %v1508 = vpack.c.b16 %v1490, %v1490
        %v1509 = vpack.c.b16 %v1491, %v1491
        %v1510 = vpack.c.b16 %v1492, %v1492
        %v1511 = vpack.c.b16 %v1493, %v1493
        %v1512 = vpack.c.b16 %v1494, %v1494
        %v1513 = vpack.c.b16 %v1495, %v1495
        %v1514 = vpack.c.b16 %v1496, %v1496
        %v1515 = vpack.c.b16 %v1497, %v1497
        %v1516 = vpack.c.b16 %v1498, %v1498
        %v1517 = vpack.c.b16 %v1499, %v1499
        %v1518 = vpack.c.b16 %v1500, %v1500
        %v1519 = vpack.c.b16 %v1501, %v1501
        %v1520 = vpack.c.b16 %v1502, %v1502
        %1539 = vst [vmem:[%s265] sm:$0xf] %v1503
        %1540 = vst [vmem:[%s265 + $0x4] sm:$0xf] %v1504
        %1541 = vst [vmem:[%s265 + $0x8] sm:$0xf] %v1505
        %1542 = vst [vmem:[%s265 + $0xc] sm:$0xf] %v1506
        %1543 = vst [vmem:[%s265 + $0x10] sm:$0xf] %v1507
        %1544 = vst [vmem:[%s265 + $0x14] sm:$0xf] %v1508
        %1545 = vst [vmem:[%s265 + $0x18] sm:$0xf] %v1509
        %1546 = vst [vmem:[%s265 + $0x1c] sm:$0xf] %v1510
        %1547 = vst [vmem:[%s265 + $0x20] sm:$0xf] %v1511
        %1548 = vst [vmem:[%s265 + $0x24] sm:$0xf] %v1512
        %1549 = vst [vmem:[%s265 + $0x28] sm:$0xf] %v1513
        %1550 = vst [vmem:[%s265 + $0x2c] sm:$0xf] %v1514
        %1551 = vst [vmem:[%s265 + $0x30] sm:$0xf] %v1515
        %1552 = vst [vmem:[%s265 + $0x34] sm:$0xf] %v1516
        %1553 = vst [vmem:[%s265 + $0x38] sm:$0xf] %v1517
        %1554 = vst [vmem:[%s265 + $0x3c] sm:$0xf] %v1518
        %1555 = vst [vmem:[%s265 + $0x40] sm:$0xf] %v1519
        %1556 = vst [vmem:[%s265 + $0x44] sm:$0xf] %v1520
      $region40: #{discriminator_image.5} parent=31 // pred_fallthru
        _
      %s1557 = smul.u32 18, %s19
      %p1558 = scmp.lt.s32.totalorder %s1557, 35
      %s1559 = scalar_select %p1558, %s1557, 35
      %p1560 = scmp.lt.s32.totalorder %s20, 0
      %s1561 = scalar_select %p1560, %s20, 0
      %s1562 = sadd.s32 %s1561, %s1559
      %s1563 = smul.addr %s1562, 4
      %s1564 = scalar_lea.vmem %s3, %s1563
      // Predicated region
      $region41: #{discriminator_image.5} parent=31 // pred_check
        %p1565 = pneg %p135
      $region42: #{discriminator_image.5} parent=31 // pred_check_branch
        %1567 = sbr.rel (%p1565) target = $region44
      $region43: #{discriminator_image.5} parent=31 // pred_region
        %s1568 = smul.u32 18, %s19
      $region44: #{discriminator_image.5} parent=31 // pred_fallthru
        _
    $region32: #{discriminator_image.5} parent=5 // pred_fallthru
      _
    %p1569 = scmp.le.s32.totalorder 2, %s9
    // Predicated region
    $region45: #{discriminator_image.5} parent=5 // pred_check
      %p1570 = pneg %p1569
    $region46: #{discriminator_image.5} parent=5 // pred_check_branch
      %1572 = sbr.rel (%p1570) target = $region48
    $region47: #{discriminator_image.5} parent=5 // pred_region
      %s1573 = ssub.s32 %s9, 2
      // Predicated region
      $region49: #{discriminator_image.5} parent=47 // pred_check
        %p1574 = pneg %p141
      $region50: #{discriminator_image.5} parent=47 // pred_check_branch
        %1576 = sbr.rel (%p1574) target = $region52
      $region51: #{discriminator_image.5} parent=47 // pred_region
        %s1577 = smul.u32 18, %s22
        %p1578 = scmp.lt.s32.totalorder %s1577, 35
        %s1579 = scalar_select %p1578, %s1577, 35
        %p1580 = scmp.lt.s32.totalorder %s23, 0
        %s1581 = scalar_select %p1580, %s23, 0
        %s1582 = sadd.s32 %s1581, %s1579
        %s1583 = smul.addr %s1582, 4
        %s1584 = scalar_lea.vmem %s3, %s1583
      $region52: #{discriminator_image.5} parent=47 // pred_fallthru
        _
    $region48: #{discriminator_image.5} parent=5 // pred_fallthru
      _
  $region6: #{discriminator_image.5} parent=0 // loop_footer
    %s13 = sadd.s32 1, %s9
  $region7: #{discriminator_image.5} parent=0 // loop_footer_branch
    %8 = sbr.rel target = $region3
  $region8: #{discriminator_image.5} parent=0 // loop_exit
    _

// kernel: discriminator_image.6
$region0: #{discriminator_image.6}
  #allocation0 [shape = 'u32[]', space=smem, size = 0x4, offset = 0x4, fixed_abs, tag = 'smem constant byte address 0x4 - core index']
  #allocation1 [shape = 'u32[144,128]{1,0:T(1,128)}', space=vmem, size = 0x12000, scoped, tag = 'internal scratch']
  #allocation2 [shape = 'f32[144,128]{1,0:T(8,128)}', space=vmem, size = 0x12000, scoped, tag = 'scratch operand']
  %s0 = inlined_call_operand.vmem [shape: bf16[144,1536], index: 0, kind: input, shape index: {}]
  %s1 = inlined_call_operand.vmem [shape: bf16[1536,128], index: 1, kind: input, shape index: {}]
  %s2 = inlined_call_operand.vmem [shape: f32[1,128], index: 2, kind: input, shape index: {}]
  %s3 = inlined_call_operand.vmem [shape: bf16[144,128], index: 3, kind: output, shape index: {}]
  %s4 = sld [smem:[#allocation0]]
  $region30: #{discriminator_image.6} parent=0
    _
  %s6 = ssub.s32 1, %s4
  %s7 = scalar_select 0, %s6, %s4
  // Predicated region
  $region2: #{discriminator_image.6} parent=0 // pred_check
    _
  $region3: #{discriminator_image.6} parent=0 // pred_check_branch
    %9 = sbr.rel (0) target = $region5
  $region4: #{discriminator_image.6} parent=0 // pred_region
    _
  $region5: #{discriminator_image.6} parent=0 // pred_fallthru
    _
  // Predicated region
  $region6: #{discriminator_image.6} parent=0 // pred_check
    _
  $region7: #{discriminator_image.6} parent=0 // pred_check_branch
    %11 = sbr.rel (0) target = $region9
  $region8: #{discriminator_image.6} parent=0 // pred_region
    _
  $region9: #{discriminator_image.6} parent=0 // pred_fallthru
    _
  // Predicated region
  $region10: #{discriminator_image.6} parent=0 // pred_check
    _
  $region11: #{discriminator_image.6} parent=0 // pred_check_branch
    %13 = sbr.rel (0) target = $region13
  $region12: #{discriminator_image.6} parent=0 // pred_region
    _
  $region13: #{discriminator_image.6} parent=0 // pred_fallthru
    _
  %p15 = scmp.eq.s32.totalorder 0, 0
  // Predicated region
  $region14: #{discriminator_image.6} parent=0 // pred_check
    %p16 = pneg %p15
  $region15: #{discriminator_image.6} parent=0 // pred_check_branch
    %18 = sbr.rel (%p16) target = $region17
  $region16: #{discriminator_image.6} parent=0 // pred_region
    %19 = vst [vmem:[#allocation2] sm:$0xff] 0.0
    %20 = vst [vmem:[#allocation2 + $0x8] sm:$0xff] 0.0
    %21 = vst [vmem:[#allocation2 + $0x10] sm:$0xff] 0.0
    %22 = vst [vmem:[#allocation2 + $0x18] sm:$0xff] 0.0
    %23 = vst [vmem:[#allocation2 + $0x20] sm:$0xff] 0.0
    %24 = vst [vmem:[#allocation2 + $0x28] sm:$0xff] 0.0
    %25 = vst [vmem:[#allocation2 + $0x30] sm:$0xff] 0.0
    %26 = vst [vmem:[#allocation2 + $0x38] sm:$0xff] 0.0
    %27 = vst [vmem:[#allocation2 + $0x40] sm:$0xff] 0.0
    %28 = vst [vmem:[#allocation2 + $0x48] sm:$0xff] 0.0
    %29 = vst [vmem:[#allocation2 + $0x50] sm:$0xff] 0.0
    %30 = vst [vmem:[#allocation2 + $0x58] sm:$0xff] 0.0
    %31 = vst [vmem:[#allocation2 + $0x60] sm:$0xff] 0.0
    %32 = vst [vmem:[#allocation2 + $0x68] sm:$0xff] 0.0
    %33 = vst [vmem:[#allocation2 + $0x70] sm:$0xff] 0.0
    %34 = vst [vmem:[#allocation2 + $0x78] sm:$0xff] 0.0
    %35 = vst [vmem:[#allocation2 + $0x80] sm:$0xff] 0.0
    %36 = vst [vmem:[#allocation2 + $0x88] sm:$0xff] 0.0
  $region17: #{discriminator_image.6} parent=0 // pred_fallthru
    _
  %v37 = vld [vmem:[#allocation2] sm:$0xff]
  %v38 = vld [vmem:[#allocation2 + $0x8] sm:$0xff]
  %v39 = vld [vmem:[#allocation2 + $0x10] sm:$0xff]
  %v40 = vld [vmem:[#allocation2 + $0x18] sm:$0xff]
  %v41 = vld [vmem:[#allocation2 + $0x20] sm:$0xff]
  %v42 = vld [vmem:[#allocation2 + $0x28] sm:$0xff]
  %v43 = vld [vmem:[#allocation2 + $0x30] sm:$0xff]
  %v44 = vld [vmem:[#allocation2 + $0x38] sm:$0xff]
  %v45 = vld [vmem:[#allocation2 + $0x40] sm:$0xff]
  %v46 = vld [vmem:[#allocation2 + $0x48] sm:$0xff]
  %v47 = vld [vmem:[#allocation2 + $0x50] sm:$0xff]
  %v48 = vld [vmem:[#allocation2 + $0x58] sm:$0xff]
  %v49 = vld [vmem:[#allocation2 + $0x60] sm:$0xff]
  %v50 = vld [vmem:[#allocation2 + $0x68] sm:$0xff]
  %v51 = vld [vmem:[#allocation2 + $0x70] sm:$0xff]
  %v52 = vld [vmem:[#allocation2 + $0x78] sm:$0xff]
  %v53 = vld [vmem:[#allocation2 + $0x80] sm:$0xff]
  %v54 = vld [vmem:[#allocation2 + $0x88] sm:$0xff]
  %v55 = vld [vmem:[%s0] sm:$0xff]
  %v56 = vld [vmem:[%s0 + $0x8] sm:$0xff]
  %v57 = vld [vmem:[%s0 + $0x10] sm:$0xff]
  %v58 = vld [vmem:[%s0 + $0x18] sm:$0xff]
  %v59 = vld [vmem:[%s0 + $0x20] sm:$0xff]
  %v60 = vld [vmem:[%s0 + $0x28] sm:$0xff]
  %v61 = vld [vmem:[%s0 + $0x30] sm:$0xff]
  %v62 = vld [vmem:[%s0 + $0x38] sm:$0xff]
  %v63 = vld [vmem:[%s0 + $0x40] sm:$0xff]
  %v64 = vld [vmem:[%s0 + $0x48] sm:$0xff]
  %v65 = vld [vmem:[%s0 + $0x50] sm:$0xff]
  %v66 = vld [vmem:[%s0 + $0x58] sm:$0xff]
  %v67 = vld [vmem:[%s0 + $0x60] sm:$0xff]
  %v68 = vld [vmem:[%s0 + $0x68] sm:$0xff]
  %v69 = vld [vmem:[%s0 + $0x70] sm:$0xff]
  %v70 = vld [vmem:[%s0 + $0x78] sm:$0xff]
  %v71 = vld [vmem:[%s0 + $0x80] sm:$0xff]
  %v72 = vld [vmem:[%s0 + $0x88] sm:$0xff]
  %v73 = vld [vmem:[%s0 + $0x90] sm:$0xff]
  %v74 = vld [vmem:[%s0 + $0x98] sm:$0xff]
  %v75 = vld [vmem:[%s0 + $0xa0] sm:$0xff]
  %v76 = vld [vmem:[%s0 + $0xa8] sm:$0xff]
  %v77 = vld [vmem:[%s0 + $0xb0] sm:$0xff]
  %v78 = vld [vmem:[%s0 + $0xb8] sm:$0xff]
  %v79 = vld [vmem:[%s0 + $0xc0] sm:$0xff]
  %v80 = vld [vmem:[%s0 + $0xc8] sm:$0xff]
  %v81 = vld [vmem:[%s0 + $0xd0] sm:$0xff]
  %v82 = vld [vmem:[%s0 + $0xd8] sm:$0xff]
  %v83 = vld [vmem:[%s0 + $0xe0] sm:$0xff]
  %v84 = vld [vmem:[%s0 + $0xe8] sm:$0xff]
  %v85 = vld [vmem:[%s0 + $0xf0] sm:$0xff]
  %v86 = vld [vmem:[%s0 + $0xf8] sm:$0xff]
  %v87 = vld [vmem:[%s0 + $0x100] sm:$0xff]
  %v88 = vld [vmem:[%s0 + $0x108] sm:$0xff]
  %v89 = vld [vmem:[%s0 + $0x110] sm:$0xff]
  %v90 = vld [vmem:[%s0 + $0x118] sm:$0xff]
  %v91 = vld [vmem:[%s0 + $0x120] sm:$0xff]
  %v92 = vld [vmem:[%s0 + $0x128] sm:$0xff]
  %v93 = vld [vmem:[%s0 + $0x130] sm:$0xff]
  %v94 = vld [vmem:[%s0 + $0x138] sm:$0xff]
  %v95 = vld [vmem:[%s0 + $0x140] sm:$0xff]
  %v96 = vld [vmem:[%s0 + $0x148] sm:$0xff]
  %v97 = vld [vmem:[%s0 + $0x150] sm:$0xff]
  %v98 = vld [vmem:[%s0 + $0x158] sm:$0xff]
  %v99 = vld [vmem:[%s0 + $0x160] sm:$0xff]
  %v100 = vld [vmem:[%s0 + $0x168] sm:$0xff]
  %v101 = vld [vmem:[%s0 + $0x170] sm:$0xff]
  %v102 = vld [vmem:[%s0 + $0x178] sm:$0xff]
  %v103 = vld [vmem:[%s0 + $0x180] sm:$0xff]
  %v104 = vld [vmem:[%s0 + $0x188] sm:$0xff]
  %v105 = vld [vmem:[%s0 + $0x190] sm:$0xff]
  %v106 = vld [vmem:[%s0 + $0x198] sm:$0xff]
  %v107 = vld [vmem:[%s0 + $0x1a0] sm:$0xff]
  %v108 = vld [vmem:[%s0 + $0x1a8] sm:$0xff]
  %v109 = vld [vmem:[%s0 + $0x1b0] sm:$0xff]
  %v110 = vld [vmem:[%s0 + $0x1b8] sm:$0xff]
  %v111 = vld [vmem:[%s0 + $0x1c0] sm:$0xff]
  %v112 = vld [vmem:[%s0 + $0x1c8] sm:$0xff]
  %v113 = vld [vmem:[%s0 + $0x1d0] sm:$0xff]
  %v114 = vld [vmem:[%s0 + $0x1d8] sm:$0xff]
  %v115 = vld [vmem:[%s0 + $0x1e0] sm:$0xff]
  %v116 = vld [vmem:[%s0 + $0x1e8] sm:$0xff]
  %v117 = vld [vmem:[%s0 + $0x1f0] sm:$0xff]
  %v118 = vld [vmem:[%s0 + $0x1f8] sm:$0xff]
  %v119 = vld [vmem:[%s0 + $0x200] sm:$0xff]
  %v120 = vld [vmem:[%s0 + $0x208] sm:$0xff]
  %v121 = vld [vmem:[%s0 + $0x210] sm:$0xff]
  %v122 = vld [vmem:[%s0 + $0x218] sm:$0xff]
  %v123 = vld [vmem:[%s0 + $0x220] sm:$0xff]
  %v124 = vld [vmem:[%s0 + $0x228] sm:$0xff]
  %v125 = vld [vmem:[%s0 + $0x230] sm:$0xff]
  %v126 = vld [vmem:[%s0 + $0x238] sm:$0xff]
  %v127 = vld [vmem:[%s0 + $0x240] sm:$0xff]
  %v128 = vld [vmem:[%s0 + $0x248] sm:$0xff]
  %v129 = vld [vmem:[%s0 + $0x250] sm:$0xff]
  %v130 = vld [vmem:[%s0 + $0x258] sm:$0xff]
  %v131 = vld [vmem:[%s0 + $0x260] sm:$0xff]
  %v132 = vld [vmem:[%s0 + $0x268] sm:$0xff]
  %v133 = vld [vmem:[%s0 + $0x270] sm:$0xff]
  %v134 = vld [vmem:[%s0 + $0x278] sm:$0xff]
  %v135 = vld [vmem:[%s0 + $0x280] sm:$0xff]
  %v136 = vld [vmem:[%s0 + $0x288] sm:$0xff]
  %v137 = vld [vmem:[%s0 + $0x290] sm:$0xff]
  %v138 = vld [vmem:[%s0 + $0x298] sm:$0xff]
  %v139 = vld [vmem:[%s0 + $0x2a0] sm:$0xff]
  %v140 = vld [vmem:[%s0 + $0x2a8] sm:$0xff]
  %v141 = vld [vmem:[%s0 + $0x2b0] sm:$0xff]
  %v142 = vld [vmem:[%s0 + $0x2b8] sm:$0xff]
  %v143 = vld [vmem:[%s0 + $0x2c0] sm:$0xff]
  %v144 = vld [vmem:[%s0 + $0x2c8] sm:$0xff]
  %v145 = vld [vmem:[%s0 + $0x2d0] sm:$0xff]
  %v146 = vld [vmem:[%s0 + $0x2d8] sm:$0xff]
  %v147 = vld [vmem:[%s0 + $0x2e0] sm:$0xff]
  %v148 = vld [vmem:[%s0 + $0x2e8] sm:$0xff]
  %v149 = vld [vmem:[%s0 + $0x2f0] sm:$0xff]
  %v150 = vld [vmem:[%s0 + $0x2f8] sm:$0xff]
  %v151 = vld [vmem:[%s0 + $0x300] sm:$0xff]
  %v152 = vld [vmem:[%s0 + $0x308] sm:$0xff]
  %v153 = vld [vmem:[%s0 + $0x310] sm:$0xff]
  %v154 = vld [vmem:[%s0 + $0x318] sm:$0xff]
  %v155 = vld [vmem:[%s0 + $0x320] sm:$0xff]
  %v156 = vld [vmem:[%s0 + $0x328] sm:$0xff]
  %v157 = vld [vmem:[%s0 + $0x330] sm:$0xff]
  %v158 = vld [vmem:[%s0 + $0x338] sm:$0xff]
  %v159 = vld [vmem:[%s0 + $0x340] sm:$0xff]
  %v160 = vld [vmem:[%s0 + $0x348] sm:$0xff]
  %v161 = vld [vmem:[%s0 + $0x350] sm:$0xff]
  %v162 = vld [vmem:[%s0 + $0x358] sm:$0xff]
  %v163 = vld [vmem:[%s1] sm:$0xf]
  %v164 = vld [vmem:[%s1 + $0x4] sm:$0xf]
  %v165 = vld [vmem:[%s1 + $0x8] sm:$0xf]
  %v166 = vld [vmem:[%s1 + $0xc] sm:$0xf]
  %v167 = vld [vmem:[%s1 + $0x10] sm:$0xf]
  %v168 = vld [vmem:[%s1 + $0x14] sm:$0xf]
  %v169 = vld [vmem:[%s1 + $0x18] sm:$0xf]
  %v170 = vld [vmem:[%s1 + $0x1c] sm:$0xf]
  %v171 = vld [vmem:[%s1 + $0x20] sm:$0xf]
  %v172 = vld [vmem:[%s1 + $0x24] sm:$0xf]
  %v173 = vld [vmem:[%s1 + $0x28] sm:$0xf]
  %v174 = vld [vmem:[%s1 + $0x2c] sm:$0xf]
  %v175 = vld [vmem:[%s1 + $0x30] sm:$0xf]
  %v176 = vld [vmem:[%s1 + $0x34] sm:$0xf]
  %v177 = vld [vmem:[%s1 + $0x38] sm:$0xf]
  %v178 = vld [vmem:[%s1 + $0x3c] sm:$0xf]
  %v179 = vld [vmem:[%s1 + $0x40] sm:$0xf]
  %v180 = vld [vmem:[%s1 + $0x44] sm:$0xf]
  %v181 = vld [vmem:[%s1 + $0x48] sm:$0xf]
  %v182 = vld [vmem:[%s1 + $0x4c] sm:$0xf]
  %v183 = vld [vmem:[%s1 + $0x50] sm:$0xf]
  %v184 = vld [vmem:[%s1 + $0x54] sm:$0xf]
  %v185 = vld [vmem:[%s1 + $0x58] sm:$0xf]
  %v186 = vld [vmem:[%s1 + $0x5c] sm:$0xf]
  %v187 = vld [vmem:[%s1 + $0x60] sm:$0xf]
  %v188 = vld [vmem:[%s1 + $0x64] sm:$0xf]
  %v189 = vld [vmem:[%s1 + $0x68] sm:$0xf]
  %v190 = vld [vmem:[%s1 + $0x6c] sm:$0xf]
  %v191 = vld [vmem:[%s1 + $0x70] sm:$0xf]
  %v192 = vld [vmem:[%s1 + $0x74] sm:$0xf]
  %v193 = vld [vmem:[%s1 + $0x78] sm:$0xf]
  %v194 = vld [vmem:[%s1 + $0x7c] sm:$0xf]
  %v195 = vld [vmem:[%s1 + $0x80] sm:$0xf]
  %v196 = vld [vmem:[%s1 + $0x84] sm:$0xf]
  %v197 = vld [vmem:[%s1 + $0x88] sm:$0xf]
  %v198 = vld [vmem:[%s1 + $0x8c] sm:$0xf]
  %v199 = vld [vmem:[%s1 + $0x90] sm:$0xf]
  %v200 = vld [vmem:[%s1 + $0x94] sm:$0xf]
  %v201 = vld [vmem:[%s1 + $0x98] sm:$0xf]
  %v202 = vld [vmem:[%s1 + $0x9c] sm:$0xf]
  %v203 = vld [vmem:[%s1 + $0xa0] sm:$0xf]
  %v204 = vld [vmem:[%s1 + $0xa4] sm:$0xf]
  %v205 = vld [vmem:[%s1 + $0xa8] sm:$0xf]
  %v206 = vld [vmem:[%s1 + $0xac] sm:$0xf]
  %v207 = vld [vmem:[%s1 + $0xb0] sm:$0xf]
  %v208 = vld [vmem:[%s1 + $0xb4] sm:$0xf]
  %v209 = vld [vmem:[%s1 + $0xb8] sm:$0xf]
  %v210 = vld [vmem:[%s1 + $0xbc] sm:$0xf]
  %v211 = vld [vmem:[%s1 + $0xc0] sm:$0xf]
  %v212 = vld [vmem:[%s1 + $0xc4] sm:$0xf]
  %v213 = vld [vmem:[%s1 + $0xc8] sm:$0xf]
  %v214 = vld [vmem:[%s1 + $0xcc] sm:$0xf]
  %v215 = vld [vmem:[%s1 + $0xd0] sm:$0xf]
  %v216 = vld [vmem:[%s1 + $0xd4] sm:$0xf]
  %v217 = vld [vmem:[%s1 + $0xd8] sm:$0xf]
  %v218 = vld [vmem:[%s1 + $0xdc] sm:$0xf]
  %v219 = vld [vmem:[%s1 + $0xe0] sm:$0xf]
  %v220 = vld [vmem:[%s1 + $0xe4] sm:$0xf]
  %v221 = vld [vmem:[%s1 + $0xe8] sm:$0xf]
  %v222 = vld [vmem:[%s1 + $0xec] sm:$0xf]
  %v223 = vld [vmem:[%s1 + $0xf0] sm:$0xf]
  %v224 = vld [vmem:[%s1 + $0xf4] sm:$0xf]
  %v225 = vld [vmem:[%s1 + $0xf8] sm:$0xf]
  %v226 = vld [vmem:[%s1 + $0xfc] sm:$0xf]
  %v227 = vld [vmem:[%s1 + $0x100] sm:$0xf]
  %v228 = vld [vmem:[%s1 + $0x104] sm:$0xf]
  %v229 = vld [vmem:[%s1 + $0x108] sm:$0xf]
  %v230 = vld [vmem:[%s1 + $0x10c] sm:$0xf]
  %v231 = vld [vmem:[%s1 + $0x110] sm:$0xf]
  %v232 = vld [vmem:[%s1 + $0x114] sm:$0xf]
  %v233 = vld [vmem:[%s1 + $0x118] sm:$0xf]
  %v234 = vld [vmem:[%s1 + $0x11c] sm:$0xf]
  %v235 = vld [vmem:[%s1 + $0x120] sm:$0xf]
  %v236 = vld [vmem:[%s1 + $0x124] sm:$0xf]
  %v237 = vld [vmem:[%s1 + $0x128] sm:$0xf]
  %v238 = vld [vmem:[%s1 + $0x12c] sm:$0xf]
  %v239 = vld [vmem:[%s1 + $0x130] sm:$0xf]
  %v240 = vld [vmem:[%s1 + $0x134] sm:$0xf]
  %v241 = vld [vmem:[%s1 + $0x138] sm:$0xf]
  %v242 = vld [vmem:[%s1 + $0x13c] sm:$0xf]
  %v243 = vld [vmem:[%s1 + $0x140] sm:$0xf]
  %v244 = vld [vmem:[%s1 + $0x144] sm:$0xf]
  %v245 = vld [vmem:[%s1 + $0x148] sm:$0xf]
  %v246 = vld [vmem:[%s1 + $0x14c] sm:$0xf]
  %v247 = vld [vmem:[%s1 + $0x150] sm:$0xf]
  %v248 = vld [vmem:[%s1 + $0x154] sm:$0xf]
  %v249 = vld [vmem:[%s1 + $0x158] sm:$0xf]
  %v250 = vld [vmem:[%s1 + $0x15c] sm:$0xf]
  %v251 = vld [vmem:[%s1 + $0x160] sm:$0xf]
  %v252 = vld [vmem:[%s1 + $0x164] sm:$0xf]
  %v253 = vld [vmem:[%s1 + $0x168] sm:$0xf]
  %v254 = vld [vmem:[%s1 + $0x16c] sm:$0xf]
  %v255 = vld [vmem:[%s1 + $0x170] sm:$0xf]
  %v256 = vld [vmem:[%s1 + $0x174] sm:$0xf]
  %v257 = vld [vmem:[%s1 + $0x178] sm:$0xf]
  %v258 = vld [vmem:[%s1 + $0x17c] sm:$0xf]
  %v259 = vld [vmem:[%s1 + $0x180] sm:$0xf]
  %v260 = vld [vmem:[%s1 + $0x184] sm:$0xf]
  %v261 = vld [vmem:[%s1 + $0x188] sm:$0xf]
  %v262 = vld [vmem:[%s1 + $0x18c] sm:$0xf]
  %v263 = vld [vmem:[%s1 + $0x190] sm:$0xf]
  %v264 = vld [vmem:[%s1 + $0x194] sm:$0xf]
  %v265 = vld [vmem:[%s1 + $0x198] sm:$0xf]
  %v266 = vld [vmem:[%s1 + $0x19c] sm:$0xf]
  %v267 = vld [vmem:[%s1 + $0x1a0] sm:$0xf]
  %v268 = vld [vmem:[%s1 + $0x1a4] sm:$0xf]
  %v269 = vld [vmem:[%s1 + $0x1a8] sm:$0xf]
  %v270 = vld [vmem:[%s1 + $0x1ac] sm:$0xf]
  %v271 = vld [vmem:[%s1 + $0x1b0] sm:$0xf]
  %v272 = vld [vmem:[%s1 + $0x1b4] sm:$0xf]
  %v273 = vld [vmem:[%s1 + $0x1b8] sm:$0xf]
  %v274 = vld [vmem:[%s1 + $0x1bc] sm:$0xf]
  %v275 = vld [vmem:[%s1 + $0x1c0] sm:$0xf]
  %v276 = vld [vmem:[%s1 + $0x1c4] sm:$0xf]
  %v277 = vld [vmem:[%s1 + $0x1c8] sm:$0xf]
  %v278 = vld [vmem:[%s1 + $0x1cc] sm:$0xf]
  %v279 = vld [vmem:[%s1 + $0x1d0] sm:$0xf]
  %v280 = vld [vmem:[%s1 + $0x1d4] sm:$0xf]
  %v281 = vld [vmem:[%s1 + $0x1d8] sm:$0xf]
  %v282 = vld [vmem:[%s1 + $0x1dc] sm:$0xf]
  %v283 = vld [vmem:[%s1 + $0x1e0] sm:$0xf]
  %v284 = vld [vmem:[%s1 + $0x1e4] sm:$0xf]
  %v285 = vld [vmem:[%s1 + $0x1e8] sm:$0xf]
  %v286 = vld [vmem:[%s1 + $0x1ec] sm:$0xf]
  %v287 = vld [vmem:[%s1 + $0x1f0] sm:$0xf]
  %v288 = vld [vmem:[%s1 + $0x1f4] sm:$0xf]
  %v289 = vld [vmem:[%s1 + $0x1f8] sm:$0xf]
  %v290 = vld [vmem:[%s1 + $0x1fc] sm:$0xf]
  %v291 = vld [vmem:[%s1 + $0x200] sm:$0xf]
  %v292 = vld [vmem:[%s1 + $0x204] sm:$0xf]
  %v293 = vld [vmem:[%s1 + $0x208] sm:$0xf]
  %v294 = vld [vmem:[%s1 + $0x20c] sm:$0xf]
  %v295 = vld [vmem:[%s1 + $0x210] sm:$0xf]
  %v296 = vld [vmem:[%s1 + $0x214] sm:$0xf]
  %v297 = vld [vmem:[%s1 + $0x218] sm:$0xf]
  %v298 = vld [vmem:[%s1 + $0x21c] sm:$0xf]
  %v299 = vld [vmem:[%s1 + $0x220] sm:$0xf]
  %v300 = vld [vmem:[%s1 + $0x224] sm:$0xf]
  %v301 = vld [vmem:[%s1 + $0x228] sm:$0xf]
  %v302 = vld [vmem:[%s1 + $0x22c] sm:$0xf]
  %v303 = vld [vmem:[%s1 + $0x230] sm:$0xf]
  %v304 = vld [vmem:[%s1 + $0x234] sm:$0xf]
  %v305 = vld [vmem:[%s1 + $0x238] sm:$0xf]
  %v306 = vld [vmem:[%s1 + $0x23c] sm:$0xf]
  %v307 = vld [vmem:[%s1 + $0x240] sm:$0xf]
  %v308 = vld [vmem:[%s1 + $0x244] sm:$0xf]
  %v309 = vld [vmem:[%s1 + $0x248] sm:$0xf]
  %v310 = vld [vmem:[%s1 + $0x24c] sm:$0xf]
  %v311 = vld [vmem:[%s1 + $0x250] sm:$0xf]
  %v312 = vld [vmem:[%s1 + $0x254] sm:$0xf]
  %v313 = vld [vmem:[%s1 + $0x258] sm:$0xf]
  %v314 = vld [vmem:[%s1 + $0x25c] sm:$0xf]
  %v315 = vld [vmem:[%s1 + $0x260] sm:$0xf]
  %v316 = vld [vmem:[%s1 + $0x264] sm:$0xf]
  %v317 = vld [vmem:[%s1 + $0x268] sm:$0xf]
  %v318 = vld [vmem:[%s1 + $0x26c] sm:$0xf]
  %v319 = vld [vmem:[%s1 + $0x270] sm:$0xf]
  %v320 = vld [vmem:[%s1 + $0x274] sm:$0xf]
  %v321 = vld [vmem:[%s1 + $0x278] sm:$0xf]
  %v322 = vld [vmem:[%s1 + $0x27c] sm:$0xf]
  %v323 = vld [vmem:[%s1 + $0x280] sm:$0xf]
  %v324 = vld [vmem:[%s1 + $0x284] sm:$0xf]
  %v325 = vld [vmem:[%s1 + $0x288] sm:$0xf]
  %v326 = vld [vmem:[%s1 + $0x28c] sm:$0xf]
  %v327 = vld [vmem:[%s1 + $0x290] sm:$0xf]
  %v328 = vld [vmem:[%s1 + $0x294] sm:$0xf]
  %v329 = vld [vmem:[%s1 + $0x298] sm:$0xf]
  %v330 = vld [vmem:[%s1 + $0x29c] sm:$0xf]
  %v331 = vld [vmem:[%s1 + $0x2a0] sm:$0xf]
  %v332 = vld [vmem:[%s1 + $0x2a4] sm:$0xf]
  %v333 = vld [vmem:[%s1 + $0x2a8] sm:$0xf]
  %v334 = vld [vmem:[%s1 + $0x2ac] sm:$0xf]
  %v335 = vld [vmem:[%s1 + $0x2b0] sm:$0xf]
  %v336 = vld [vmem:[%s1 + $0x2b4] sm:$0xf]
  %v337 = vld [vmem:[%s1 + $0x2b8] sm:$0xf]
  %v338 = vld [vmem:[%s1 + $0x2bc] sm:$0xf]
  %v339 = vld [vmem:[%s1 + $0x2c0] sm:$0xf]
  %v340 = vld [vmem:[%s1 + $0x2c4] sm:$0xf]
  %v341 = vld [vmem:[%s1 + $0x2c8] sm:$0xf]
  %v342 = vld [vmem:[%s1 + $0x2cc] sm:$0xf]
  %v343 = vld [vmem:[%s1 + $0x2d0] sm:$0xf]
  %v344 = vld [vmem:[%s1 + $0x2d4] sm:$0xf]
  %v345 = vld [vmem:[%s1 + $0x2d8] sm:$0xf]
  %v346 = vld [vmem:[%s1 + $0x2dc] sm:$0xf]
  %v347 = vld [vmem:[%s1 + $0x2e0] sm:$0xf]
  %v348 = vld [vmem:[%s1 + $0x2e4] sm:$0xf]
  %v349 = vld [vmem:[%s1 + $0x2e8] sm:$0xf]
  %v350 = vld [vmem:[%s1 + $0x2ec] sm:$0xf]
  %v351 = vld [vmem:[%s1 + $0x2f0] sm:$0xf]
  %v352 = vld [vmem:[%s1 + $0x2f4] sm:$0xf]
  %v353 = vld [vmem:[%s1 + $0x2f8] sm:$0xf]
  %v354 = vld [vmem:[%s1 + $0x2fc] sm:$0xf]
  %v463 = vunpack.c.l.b16 %v55
  %v464 = vunpack.c.h.b16 %v55
  %v465 = vunpack.c.l.b16 %v56
  %v466 = vunpack.c.h.b16 %v56
  %v467 = vunpack.c.l.b16 %v57
  %v468 = vunpack.c.h.b16 %v57
  %v469 = vunpack.c.l.b16 %v58
  %v470 = vunpack.c.h.b16 %v58
  %v471 = vunpack.c.l.b16 %v59
  %v472 = vunpack.c.h.b16 %v59
  %v473 = vunpack.c.l.b16 %v60
  %v474 = vunpack.c.h.b16 %v60
  %v475 = vunpack.c.l.b16 %v61
  %v476 = vunpack.c.h.b16 %v61
  %v477 = vunpack.c.l.b16 %v62
  %v478 = vunpack.c.h.b16 %v62
  %v479 = vunpack.c.l.b16 %v63
  %v480 = vunpack.c.h.b16 %v63
  %v481 = vunpack.c.l.b16 %v64
  %v482 = vunpack.c.h.b16 %v64
  %v483 = vunpack.c.l.b16 %v65
  %v484 = vunpack.c.h.b16 %v65
  %v485 = vunpack.c.l.b16 %v66
  %v486 = vunpack.c.h.b16 %v66
  %v487 = vunpack.c.l.b16 %v67
  %v488 = vunpack.c.h.b16 %v67
  %v489 = vunpack.c.l.b16 %v68
  %v490 = vunpack.c.h.b16 %v68
  %v491 = vunpack.c.l.b16 %v69
  %v492 = vunpack.c.h.b16 %v69
  %v493 = vunpack.c.l.b16 %v70
  %v494 = vunpack.c.h.b16 %v70
  %v495 = vunpack.c.l.b16 %v71
  %v496 = vunpack.c.h.b16 %v71
  %v497 = vunpack.c.l.b16 %v72
  %v498 = vunpack.c.h.b16 %v72
  %v499 = vunpack.c.l.b16 %v73
  %v500 = vunpack.c.h.b16 %v73
  %v501 = vunpack.c.l.b16 %v74
  %v502 = vunpack.c.h.b16 %v74
  %v503 = vunpack.c.l.b16 %v75
  %v504 = vunpack.c.h.b16 %v75
  %v505 = vunpack.c.l.b16 %v76
  %v506 = vunpack.c.h.b16 %v76
  %v507 = vunpack.c.l.b16 %v77
  %v508 = vunpack.c.h.b16 %v77
  %v509 = vunpack.c.l.b16 %v78
  %v510 = vunpack.c.h.b16 %v78
  %v511 = vunpack.c.l.b16 %v79
  %v512 = vunpack.c.h.b16 %v79
  %v513 = vunpack.c.l.b16 %v80
  %v514 = vunpack.c.h.b16 %v80
  %v515 = vunpack.c.l.b16 %v81
  %v516 = vunpack.c.h.b16 %v81
  %v517 = vunpack.c.l.b16 %v82
  %v518 = vunpack.c.h.b16 %v82
  %v519 = vunpack.c.l.b16 %v83
  %v520 = vunpack.c.h.b16 %v83
  %v521 = vunpack.c.l.b16 %v84
  %v522 = vunpack.c.h.b16 %v84
  %v523 = vunpack.c.l.b16 %v85
  %v524 = vunpack.c.h.b16 %v85
  %v525 = vunpack.c.l.b16 %v86
  %v526 = vunpack.c.h.b16 %v86
  %v527 = vunpack.c.l.b16 %v87
  %v528 = vunpack.c.h.b16 %v87
  %v529 = vunpack.c.l.b16 %v88
  %v530 = vunpack.c.h.b16 %v88
  %v531 = vunpack.c.l.b16 %v89
  %v532 = vunpack.c.h.b16 %v89
  %v533 = vunpack.c.l.b16 %v90
  %v534 = vunpack.c.h.b16 %v90
  %v535 = vunpack.c.l.b16 %v91
  %v536 = vunpack.c.h.b16 %v91
  %v537 = vunpack.c.l.b16 %v92
  %v538 = vunpack.c.h.b16 %v92
  %v539 = vunpack.c.l.b16 %v93
  %v540 = vunpack.c.h.b16 %v93
  %v541 = vunpack.c.l.b16 %v94
  %v542 = vunpack.c.h.b16 %v94
  %v543 = vunpack.c.l.b16 %v95
  %v544 = vunpack.c.h.b16 %v95
  %v545 = vunpack.c.l.b16 %v96
  %v546 = vunpack.c.h.b16 %v96
  %v547 = vunpack.c.l.b16 %v97
  %v548 = vunpack.c.h.b16 %v97
  %v549 = vunpack.c.l.b16 %v98
  %v550 = vunpack.c.h.b16 %v98
  %v551 = vunpack.c.l.b16 %v99
  %v552 = vunpack.c.h.b16 %v99
  %v553 = vunpack.c.l.b16 %v100
  %v554 = vunpack.c.h.b16 %v100
  %v555 = vunpack.c.l.b16 %v101
  %v556 = vunpack.c.h.b16 %v101
  %v557 = vunpack.c.l.b16 %v102
  %v558 = vunpack.c.h.b16 %v102
  %v559 = vunpack.c.l.b16 %v103
  %v560 = vunpack.c.h.b16 %v103
  %v561 = vunpack.c.l.b16 %v104
  %v562 = vunpack.c.h.b16 %v104
  %v563 = vunpack.c.l.b16 %v105
  %v564 = vunpack.c.h.b16 %v105
  %v565 = vunpack.c.l.b16 %v106
  %v566 = vunpack.c.h.b16 %v106
  %v567 = vunpack.c.l.b16 %v107
  %v568 = vunpack.c.h.b16 %v107
  %v569 = vunpack.c.l.b16 %v108
  %v570 = vunpack.c.h.b16 %v108
  %v571 = vunpack.c.l.b16 %v109
  %v572 = vunpack.c.h.b16 %v109
  %v573 = vunpack.c.l.b16 %v110
  %v574 = vunpack.c.h.b16 %v110
  %v575 = vunpack.c.l.b16 %v111
  %v576 = vunpack.c.h.b16 %v111
  %v577 = vunpack.c.l.b16 %v112
  %v578 = vunpack.c.h.b16 %v112
  %v579 = vunpack.c.l.b16 %v113
  %v580 = vunpack.c.h.b16 %v113
  %v581 = vunpack.c.l.b16 %v114
  %v582 = vunpack.c.h.b16 %v114
  %v583 = vunpack.c.l.b16 %v115
  %v584 = vunpack.c.h.b16 %v115
  %v585 = vunpack.c.l.b16 %v116
  %v586 = vunpack.c.h.b16 %v116
  %v587 = vunpack.c.l.b16 %v117
  %v588 = vunpack.c.h.b16 %v117
  %v589 = vunpack.c.l.b16 %v118
  %v590 = vunpack.c.h.b16 %v118
  %v591 = vunpack.c.l.b16 %v119
  %v592 = vunpack.c.h.b16 %v119
  %v593 = vunpack.c.l.b16 %v120
  %v594 = vunpack.c.h.b16 %v120
  %v595 = vunpack.c.l.b16 %v121
  %v596 = vunpack.c.h.b16 %v121
  %v597 = vunpack.c.l.b16 %v122
  %v598 = vunpack.c.h.b16 %v122
  %v599 = vunpack.c.l.b16 %v123
  %v600 = vunpack.c.h.b16 %v123
  %v601 = vunpack.c.l.b16 %v124
  %v602 = vunpack.c.h.b16 %v124
  %v603 = vunpack.c.l.b16 %v125
  %v604 = vunpack.c.h.b16 %v125
  %v605 = vunpack.c.l.b16 %v126
  %v606 = vunpack.c.h.b16 %v126
  %v607 = vunpack.c.l.b16 %v127
  %v608 = vunpack.c.h.b16 %v127
  %v609 = vunpack.c.l.b16 %v128
  %v610 = vunpack.c.h.b16 %v128
  %v611 = vunpack.c.l.b16 %v129
  %v612 = vunpack.c.h.b16 %v129
  %v613 = vunpack.c.l.b16 %v130
  %v614 = vunpack.c.h.b16 %v130
  %v615 = vunpack.c.l.b16 %v131
  %v616 = vunpack.c.h.b16 %v131
  %v617 = vunpack.c.l.b16 %v132
  %v618 = vunpack.c.h.b16 %v132
  %v619 = vunpack.c.l.b16 %v133
  %v620 = vunpack.c.h.b16 %v133
  %v621 = vunpack.c.l.b16 %v134
  %v622 = vunpack.c.h.b16 %v134
  %v623 = vunpack.c.l.b16 %v135
  %v624 = vunpack.c.h.b16 %v135
  %v625 = vunpack.c.l.b16 %v136
  %v626 = vunpack.c.h.b16 %v136
  %v627 = vunpack.c.l.b16 %v137
  %v628 = vunpack.c.h.b16 %v137
  %v629 = vunpack.c.l.b16 %v138
  %v630 = vunpack.c.h.b16 %v138
  %v631 = vunpack.c.l.b16 %v139
  %v632 = vunpack.c.h.b16 %v139
  %v633 = vunpack.c.l.b16 %v140
  %v634 = vunpack.c.h.b16 %v140
  %v635 = vunpack.c.l.b16 %v141
  %v636 = vunpack.c.h.b16 %v141
  %v637 = vunpack.c.l.b16 %v142
  %v638 = vunpack.c.h.b16 %v142
  %v639 = vunpack.c.l.b16 %v143
  %v640 = vunpack.c.h.b16 %v143
  %v641 = vunpack.c.l.b16 %v144
  %v642 = vunpack.c.h.b16 %v144
  %v643 = vunpack.c.l.b16 %v145
  %v644 = vunpack.c.h.b16 %v145
  %v645 = vunpack.c.l.b16 %v146
  %v646 = vunpack.c.h.b16 %v146
  %v647 = vunpack.c.l.b16 %v147
  %v648 = vunpack.c.h.b16 %v147
  %v649 = vunpack.c.l.b16 %v148
  %v650 = vunpack.c.h.b16 %v148
  %v651 = vunpack.c.l.b16 %v149
  %v652 = vunpack.c.h.b16 %v149
  %v653 = vunpack.c.l.b16 %v150
  %v654 = vunpack.c.h.b16 %v150
  %v655 = vunpack.c.l.b16 %v151
  %v656 = vunpack.c.h.b16 %v151
  %v657 = vunpack.c.l.b16 %v152
  %v658 = vunpack.c.h.b16 %v152
  %v659 = vunpack.c.l.b16 %v153
  %v660 = vunpack.c.h.b16 %v153
  %v661 = vunpack.c.l.b16 %v154
  %v662 = vunpack.c.h.b16 %v154
  %v663 = vunpack.c.l.b16 %v155
  %v664 = vunpack.c.h.b16 %v155
  %v665 = vunpack.c.l.b16 %v156
  %v666 = vunpack.c.h.b16 %v156
  %v667 = vunpack.c.l.b16 %v157
  %v668 = vunpack.c.h.b16 %v157
  %v669 = vunpack.c.l.b16 %v158
  %v670 = vunpack.c.h.b16 %v158
  %v671 = vunpack.c.l.b16 %v159
  %v672 = vunpack.c.h.b16 %v159
  %v673 = vunpack.c.l.b16 %v160
  %v674 = vunpack.c.h.b16 %v160
  %v675 = vunpack.c.l.b16 %v161
  %v676 = vunpack.c.h.b16 %v161
  %v677 = vunpack.c.l.b16 %v162
  %v678 = vunpack.c.h.b16 %v162
  %v679 = vpack.c.b16 %v475, %v463
  %v680 = vpack.c.b16 %v476, %v464
  %v681 = vpack.c.b16 %v477, %v465
  %v682 = vpack.c.b16 %v478, %v466
  %v683 = vpack.c.b16 %v479, %v467
  %v684 = vpack.c.b16 %v480, %v468
  %v685 = vpack.c.b16 %v481, %v469
  %v686 = vpack.c.b16 %v482, %v470
  %v687 = vpack.c.b16 %v483, %v471
  %v688 = vpack.c.b16 %v484, %v472
  %v689 = vpack.c.b16 %v485, %v473
  %v690 = vpack.c.b16 %v486, %v474
  %v691 = vpack.c.b16 %v499, %v487
  %v692 = vpack.c.b16 %v500, %v488
  %v693 = vpack.c.b16 %v501, %v489
  %v694 = vpack.c.b16 %v502, %v490
  %v695 = vpack.c.b16 %v503, %v491
  %v696 = vpack.c.b16 %v504, %v492
  %v697 = vpack.c.b16 %v505, %v493
  %v698 = vpack.c.b16 %v506, %v494
  %v699 = vpack.c.b16 %v507, %v495
  %v700 = vpack.c.b16 %v508, %v496
  %v701 = vpack.c.b16 %v509, %v497
  %v702 = vpack.c.b16 %v510, %v498
  %v703 = vpack.c.b16 %v523, %v511
  %v704 = vpack.c.b16 %v524, %v512
  %v705 = vpack.c.b16 %v525, %v513
  %v706 = vpack.c.b16 %v526, %v514
  %v707 = vpack.c.b16 %v527, %v515
  %v708 = vpack.c.b16 %v528, %v516
  %v709 = vpack.c.b16 %v529, %v517
  %v710 = vpack.c.b16 %v530, %v518
  %v711 = vpack.c.b16 %v531, %v519
  %v712 = vpack.c.b16 %v532, %v520
  %v713 = vpack.c.b16 %v533, %v521
  %v714 = vpack.c.b16 %v534, %v522
  %v715 = vpack.c.b16 %v547, %v535
  %v716 = vpack.c.b16 %v548, %v536
  %v717 = vpack.c.b16 %v549, %v537
  %v718 = vpack.c.b16 %v550, %v538
  %v719 = vpack.c.b16 %v551, %v539
  %v720 = vpack.c.b16 %v552, %v540
  %v721 = vpack.c.b16 %v553, %v541
  %v722 = vpack.c.b16 %v554, %v542
  %v723 = vpack.c.b16 %v555, %v543
  %v724 = vpack.c.b16 %v556, %v544
  %v725 = vpack.c.b16 %v557, %v545
  %v726 = vpack.c.b16 %v558, %v546
  %v727 = vpack.c.b16 %v571, %v559
  %v728 = vpack.c.b16 %v572, %v560
  %v729 = vpack.c.b16 %v573, %v561
  %v730 = vpack.c.b16 %v574, %v562
  %v731 = vpack.c.b16 %v575, %v563
  %v732 = vpack.c.b16 %v576, %v564
  %v733 = vpack.c.b16 %v577, %v565
  %v734 = vpack.c.b16 %v578, %v566
  %v735 = vpack.c.b16 %v579, %v567
  %v736 = vpack.c.b16 %v580, %v568
  %v737 = vpack.c.b16 %v581, %v569
  %v738 = vpack.c.b16 %v582, %v570
  %v739 = vpack.c.b16 %v595, %v583
  %v740 = vpack.c.b16 %v596, %v584
  %v741 = vpack.c.b16 %v597, %v585
  %v742 = vpack.c.b16 %v598, %v586
  %v743 = vpack.c.b16 %v599, %v587
  %v744 = vpack.c.b16 %v600, %v588
  %v745 = vpack.c.b16 %v601, %v589
  %v746 = vpack.c.b16 %v602, %v590
  %v747 = vpack.c.b16 %v603, %v591
  %v748 = vpack.c.b16 %v604, %v592
  %v749 = vpack.c.b16 %v605, %v593
  %v750 = vpack.c.b16 %v606, %v594
  %v751 = vpack.c.b16 %v619, %v607
  %v752 = vpack.c.b16 %v620, %v608
  %v753 = vpack.c.b16 %v621, %v609
  %v754 = vpack.c.b16 %v622, %v610
  %v755 = vpack.c.b16 %v623, %v611
  %v756 = vpack.c.b16 %v624, %v612
  %v757 = vpack.c.b16 %v625, %v613
  %v758 = vpack.c.b16 %v626, %v614
  %v759 = vpack.c.b16 %v627, %v615
  %v760 = vpack.c.b16 %v628, %v616
  %v761 = vpack.c.b16 %v629, %v617
  %v762 = vpack.c.b16 %v630, %v618
  %v763 = vpack.c.b16 %v643, %v631
  %v764 = vpack.c.b16 %v644, %v632
  %v765 = vpack.c.b16 %v645, %v633
  %v766 = vpack.c.b16 %v646, %v634
  %v767 = vpack.c.b16 %v647, %v635
  %v768 = vpack.c.b16 %v648, %v636
  %v769 = vpack.c.b16 %v649, %v637
  %v770 = vpack.c.b16 %v650, %v638
  %v771 = vpack.c.b16 %v651, %v639
  %v772 = vpack.c.b16 %v652, %v640
  %v773 = vpack.c.b16 %v653, %v641
  %v774 = vpack.c.b16 %v654, %v642
  %v775 = vpack.c.b16 %v667, %v655
  %v776 = vpack.c.b16 %v668, %v656
  %v777 = vpack.c.b16 %v669, %v657
  %v778 = vpack.c.b16 %v670, %v658
  %v779 = vpack.c.b16 %v671, %v659
  %v780 = vpack.c.b16 %v672, %v660
  %v781 = vpack.c.b16 %v673, %v661
  %v782 = vpack.c.b16 %v674, %v662
  %v783 = vpack.c.b16 %v675, %v663
  %v784 = vpack.c.b16 %v676, %v664
  %v785 = vpack.c.b16 %v677, %v665
  %v786 = vpack.c.b16 %v678, %v666
  %v1087 = vunpack.c.l.b16 %v163
  %v1088 = vunpack.c.l.b16 %v164
  %v1089 = vunpack.c.l.b16 %v165
  %v1090 = vunpack.c.l.b16 %v166
  %v1091 = vunpack.c.l.b16 %v167
  %v1092 = vunpack.c.l.b16 %v168
  %v1093 = vunpack.c.l.b16 %v169
  %v1094 = vunpack.c.l.b16 %v170
  %v1095 = vunpack.c.l.b16 %v171
  %v1096 = vunpack.c.l.b16 %v172
  %v1097 = vunpack.c.l.b16 %v173
  %v1098 = vunpack.c.l.b16 %v174
  %v1099 = vunpack.c.l.b16 %v175
  %v1100 = vunpack.c.l.b16 %v176
  %v1101 = vunpack.c.l.b16 %v177
  %v1102 = vunpack.c.l.b16 %v178
  %v1103 = vunpack.c.l.b16 %v179
  %v1104 = vunpack.c.l.b16 %v180
  %v1105 = vunpack.c.l.b16 %v181
  %v1106 = vunpack.c.l.b16 %v182
  %v1107 = vunpack.c.l.b16 %v183
  %v1108 = vunpack.c.l.b16 %v184
  %v1109 = vunpack.c.l.b16 %v185
  %v1110 = vunpack.c.l.b16 %v186
  %v1111 = vunpack.c.l.b16 %v187
  %v1112 = vunpack.c.l.b16 %v188
  %v1113 = vunpack.c.l.b16 %v189
  %v1114 = vunpack.c.l.b16 %v190
  %v1115 = vunpack.c.l.b16 %v191
  %v1116 = vunpack.c.l.b16 %v192
  %v1117 = vunpack.c.l.b16 %v193
  %v1118 = vunpack.c.l.b16 %v194
  %v1119 = vunpack.c.l.b16 %v195
  %v1120 = vunpack.c.l.b16 %v196
  %v1121 = vunpack.c.l.b16 %v197
  %v1122 = vunpack.c.l.b16 %v198
  %v1123 = vunpack.c.l.b16 %v199
  %v1124 = vunpack.c.l.b16 %v200
  %v1125 = vunpack.c.l.b16 %v201
  %v1126 = vunpack.c.l.b16 %v202
  %v1127 = vunpack.c.l.b16 %v203
  %v1128 = vunpack.c.l.b16 %v204
  %v1129 = vunpack.c.l.b16 %v205
  %v1130 = vunpack.c.l.b16 %v206
  %v1131 = vunpack.c.l.b16 %v207
  %v1132 = vunpack.c.l.b16 %v208
  %v1133 = vunpack.c.l.b16 %v209
  %v1134 = vunpack.c.l.b16 %v210
  %v1135 = vunpack.c.l.b16 %v211
  %v1136 = vunpack.c.l.b16 %v212
  %v1137 = vunpack.c.l.b16 %v213
  %v1138 = vunpack.c.l.b16 %v214
  %v1139 = vunpack.c.l.b16 %v215
  %v1140 = vunpack.c.l.b16 %v216
  %v1141 = vunpack.c.l.b16 %v217
  %v1142 = vunpack.c.l.b16 %v218
  %v1143 = vunpack.c.l.b16 %v219
  %v1144 = vunpack.c.l.b16 %v220
  %v1145 = vunpack.c.l.b16 %v221
  %v1146 = vunpack.c.l.b16 %v222
  %v1147 = vunpack.c.l.b16 %v223
  %v1148 = vunpack.c.l.b16 %v224
  %v1149 = vunpack.c.l.b16 %v225
  %v1150 = vunpack.c.l.b16 %v226
  %v1151 = vunpack.c.l.b16 %v227
  %v1152 = vunpack.c.l.b16 %v228
  %v1153 = vunpack.c.l.b16 %v229
  %v1154 = vunpack.c.l.b16 %v230
  %v1155 = vunpack.c.l.b16 %v231
  %v1156 = vunpack.c.l.b16 %v232
  %v1157 = vunpack.c.l.b16 %v233
  %v1158 = vunpack.c.l.b16 %v234
  %v1159 = vunpack.c.l.b16 %v235
  %v1160 = vunpack.c.l.b16 %v236
  %v1161 = vunpack.c.l.b16 %v237
  %v1162 = vunpack.c.l.b16 %v238
  %v1163 = vunpack.c.l.b16 %v239
  %v1164 = vunpack.c.l.b16 %v240
  %v1165 = vunpack.c.l.b16 %v241
  %v1166 = vunpack.c.l.b16 %v242
  %v1167 = vunpack.c.l.b16 %v243
  %v1168 = vunpack.c.l.b16 %v244
  %v1169 = vunpack.c.l.b16 %v245
  %v1170 = vunpack.c.l.b16 %v246
  %v1171 = vunpack.c.l.b16 %v247
  %v1172 = vunpack.c.l.b16 %v248
  %v1173 = vunpack.c.l.b16 %v249
  %v1174 = vunpack.c.l.b16 %v250
  %v1175 = vunpack.c.l.b16 %v251
  %v1176 = vunpack.c.l.b16 %v252
  %v1177 = vunpack.c.l.b16 %v253
  %v1178 = vunpack.c.l.b16 %v254
  %v1179 = vunpack.c.l.b16 %v255
  %v1180 = vunpack.c.l.b16 %v256
  %v1181 = vunpack.c.l.b16 %v257
  %v1182 = vunpack.c.l.b16 %v258
  %v1183 = vunpack.c.l.b16 %v259
  %v1184 = vunpack.c.l.b16 %v260
  %v1185 = vunpack.c.l.b16 %v261
  %v1186 = vunpack.c.l.b16 %v262
  %v1187 = vunpack.c.l.b16 %v263
  %v1188 = vunpack.c.l.b16 %v264
  %v1189 = vunpack.c.l.b16 %v265
  %v1190 = vunpack.c.l.b16 %v266
  %v1191 = vunpack.c.l.b16 %v267
  %v1192 = vunpack.c.l.b16 %v268
  %v1193 = vunpack.c.l.b16 %v269
  %v1194 = vunpack.c.l.b16 %v270
  %v1195 = vunpack.c.l.b16 %v271
  %v1196 = vunpack.c.l.b16 %v272
  %v1197 = vunpack.c.l.b16 %v273
  %v1198 = vunpack.c.l.b16 %v274
  %v1199 = vunpack.c.l.b16 %v275
  %v1200 = vunpack.c.l.b16 %v276
  %v1201 = vunpack.c.l.b16 %v277
  %v1202 = vunpack.c.l.b16 %v278
  %v1203 = vunpack.c.l.b16 %v279
  %v1204 = vunpack.c.l.b16 %v280
  %v1205 = vunpack.c.l.b16 %v281
  %v1206 = vunpack.c.l.b16 %v282
  %v1207 = vunpack.c.l.b16 %v283
  %v1208 = vunpack.c.l.b16 %v284
  %v1209 = vunpack.c.l.b16 %v285
  %v1210 = vunpack.c.l.b16 %v286
  %v1211 = vunpack.c.l.b16 %v287
  %v1212 = vunpack.c.l.b16 %v288
  %v1213 = vunpack.c.l.b16 %v289
  %v1214 = vunpack.c.l.b16 %v290
  %v1215 = vunpack.c.l.b16 %v291
  %v1216 = vunpack.c.l.b16 %v292
  %v1217 = vunpack.c.l.b16 %v293
  %v1218 = vunpack.c.l.b16 %v294
  %v1219 = vunpack.c.l.b16 %v295
  %v1220 = vunpack.c.l.b16 %v296
  %v1221 = vunpack.c.l.b16 %v297
  %v1222 = vunpack.c.l.b16 %v298
  %v1223 = vunpack.c.l.b16 %v299
  %v1224 = vunpack.c.l.b16 %v300
  %v1225 = vunpack.c.l.b16 %v301
  %v1226 = vunpack.c.l.b16 %v302
  %v1227 = vunpack.c.l.b16 %v303
  %v1228 = vunpack.c.l.b16 %v304
  %v1229 = vunpack.c.l.b16 %v305
  %v1230 = vunpack.c.l.b16 %v306
  %v1231 = vunpack.c.l.b16 %v307
  %v1232 = vunpack.c.l.b16 %v308
  %v1233 = vunpack.c.l.b16 %v309
  %v1234 = vunpack.c.l.b16 %v310
  %v1235 = vunpack.c.l.b16 %v311
  %v1236 = vunpack.c.l.b16 %v312
  %v1237 = vunpack.c.l.b16 %v313
  %v1238 = vunpack.c.l.b16 %v314
  %v1239 = vunpack.c.l.b16 %v315
  %v1240 = vunpack.c.l.b16 %v316
  %v1241 = vunpack.c.l.b16 %v317
  %v1242 = vunpack.c.l.b16 %v318
  %v1243 = vunpack.c.l.b16 %v319
  %v1244 = vunpack.c.l.b16 %v320
  %v1245 = vunpack.c.l.b16 %v321
  %v1246 = vunpack.c.l.b16 %v322
  %v1247 = vunpack.c.l.b16 %v323
  %v1248 = vunpack.c.l.b16 %v324
  %v1249 = vunpack.c.l.b16 %v325
  %v1250 = vunpack.c.l.b16 %v326
  %v1251 = vunpack.c.l.b16 %v327
  %v1252 = vunpack.c.l.b16 %v328
  %v1253 = vunpack.c.l.b16 %v329
  %v1254 = vunpack.c.l.b16 %v330
  %v1255 = vunpack.c.l.b16 %v331
  %v1256 = vunpack.c.l.b16 %v332
  %v1257 = vunpack.c.l.b16 %v333
  %v1258 = vunpack.c.l.b16 %v334
  %v1259 = vunpack.c.l.b16 %v335
  %v1260 = vunpack.c.l.b16 %v336
  %v1261 = vunpack.c.l.b16 %v337
  %v1262 = vunpack.c.l.b16 %v338
  %v1263 = vunpack.c.l.b16 %v339
  %v1264 = vunpack.c.l.b16 %v340
  %v1265 = vunpack.c.l.b16 %v341
  %v1266 = vunpack.c.l.b16 %v342
  %v1267 = vunpack.c.l.b16 %v343
  %v1268 = vunpack.c.l.b16 %v344
  %v1269 = vunpack.c.l.b16 %v345
  %v1270 = vunpack.c.l.b16 %v346
  %v1271 = vunpack.c.l.b16 %v347
  %v1272 = vunpack.c.l.b16 %v348
  %v1273 = vunpack.c.l.b16 %v349
  %v1274 = vunpack.c.l.b16 %v350
  %v1275 = vunpack.c.l.b16 %v351
  %v1276 = vunpack.c.l.b16 %v352
  %v1277 = vunpack.c.l.b16 %v353
  %v1278 = vunpack.c.l.b16 %v354
  %v1279 = vpack.c.b16 %v1088, %v1087
  %v1280 = vpack.c.b16 %v1090, %v1089
  %v1281 = vpack.c.b16 %v1092, %v1091
  %v1282 = vpack.c.b16 %v1094, %v1093
  %v1283 = vpack.c.b16 %v1096, %v1095
  %v1284 = vpack.c.b16 %v1098, %v1097
  %v1285 = vpack.c.b16 %v1100, %v1099
  %v1286 = vpack.c.b16 %v1102, %v1101
  %v1287 = vpack.c.b16 %v1104, %v1103
  %v1288 = vpack.c.b16 %v1106, %v1105
  %v1289 = vpack.c.b16 %v1108, %v1107
  %v1290 = vpack.c.b16 %v1110, %v1109
  %v1291 = vpack.c.b16 %v1112, %v1111
  %v1292 = vpack.c.b16 %v1114, %v1113
  %v1293 = vpack.c.b16 %v1116, %v1115
  %v1294 = vpack.c.b16 %v1118, %v1117
  %v1295 = vpack.c.b16 %v1120, %v1119
  %v1296 = vpack.c.b16 %v1122, %v1121
  %v1297 = vpack.c.b16 %v1124, %v1123
  %v1298 = vpack.c.b16 %v1126, %v1125
  %v1299 = vpack.c.b16 %v1128, %v1127
  %v1300 = vpack.c.b16 %v1130, %v1129
  %v1301 = vpack.c.b16 %v1132, %v1131
  %v1302 = vpack.c.b16 %v1134, %v1133
  %v1303 = vpack.c.b16 %v1136, %v1135
  %v1304 = vpack.c.b16 %v1138, %v1137
  %v1305 = vpack.c.b16 %v1140, %v1139
  %v1306 = vpack.c.b16 %v1142, %v1141
  %v1307 = vpack.c.b16 %v1144, %v1143
  %v1308 = vpack.c.b16 %v1146, %v1145
  %v1309 = vpack.c.b16 %v1148, %v1147
  %v1310 = vpack.c.b16 %v1150, %v1149
  %v1311 = vpack.c.b16 %v1152, %v1151
  %v1312 = vpack.c.b16 %v1154, %v1153
  %v1313 = vpack.c.b16 %v1156, %v1155
  %v1314 = vpack.c.b16 %v1158, %v1157
  %v1315 = vpack.c.b16 %v1160, %v1159
  %v1316 = vpack.c.b16 %v1162, %v1161
  %v1317 = vpack.c.b16 %v1164, %v1163
  %v1318 = vpack.c.b16 %v1166, %v1165
  %v1319 = vpack.c.b16 %v1168, %v1167
  %v1320 = vpack.c.b16 %v1170, %v1169
  %v1321 = vpack.c.b16 %v1172, %v1171
  %v1322 = vpack.c.b16 %v1174, %v1173
  %v1323 = vpack.c.b16 %v1176, %v1175
  %v1324 = vpack.c.b16 %v1178, %v1177
  %v1325 = vpack.c.b16 %v1180, %v1179
  %v1326 = vpack.c.b16 %v1182, %v1181
  %v1327 = vpack.c.b16 %v1184, %v1183
  %v1328 = vpack.c.b16 %v1186, %v1185
  %v1329 = vpack.c.b16 %v1188, %v1187
  %v1330 = vpack.c.b16 %v1190, %v1189
  %v1331 = vpack.c.b16 %v1192, %v1191
  %v1332 = vpack.c.b16 %v1194, %v1193
  %v1333 = vpack.c.b16 %v1196, %v1195
  %v1334 = vpack.c.b16 %v1198, %v1197
  %v1335 = vpack.c.b16 %v1200, %v1199
  %v1336 = vpack.c.b16 %v1202, %v1201
  %v1337 = vpack.c.b16 %v1204, %v1203
  %v1338 = vpack.c.b16 %v1206, %v1205
  %v1339 = vpack.c.b16 %v1208, %v1207
  %v1340 = vpack.c.b16 %v1210, %v1209
  %v1341 = vpack.c.b16 %v1212, %v1211
  %v1342 = vpack.c.b16 %v1214, %v1213
  %v1343 = vpack.c.b16 %v1216, %v1215
  %v1344 = vpack.c.b16 %v1218, %v1217
  %v1345 = vpack.c.b16 %v1220, %v1219
  %v1346 = vpack.c.b16 %v1222, %v1221
  %v1347 = vpack.c.b16 %v1224, %v1223
  %v1348 = vpack.c.b16 %v1226, %v1225
  %v1349 = vpack.c.b16 %v1228, %v1227
  %v1350 = vpack.c.b16 %v1230, %v1229
  %v1351 = vpack.c.b16 %v1232, %v1231
  %v1352 = vpack.c.b16 %v1234, %v1233
  %v1353 = vpack.c.b16 %v1236, %v1235
  %v1354 = vpack.c.b16 %v1238, %v1237
  %v1355 = vpack.c.b16 %v1240, %v1239
  %v1356 = vpack.c.b16 %v1242, %v1241
  %v1357 = vpack.c.b16 %v1244, %v1243
  %v1358 = vpack.c.b16 %v1246, %v1245
  %v1359 = vpack.c.b16 %v1248, %v1247
  %v1360 = vpack.c.b16 %v1250, %v1249
  %v1361 = vpack.c.b16 %v1252, %v1251
  %v1362 = vpack.c.b16 %v1254, %v1253
  %v1363 = vpack.c.b16 %v1256, %v1255
  %v1364 = vpack.c.b16 %v1258, %v1257
  %v1365 = vpack.c.b16 %v1260, %v1259
  %v1366 = vpack.c.b16 %v1262, %v1261
  %v1367 = vpack.c.b16 %v1264, %v1263
  %v1368 = vpack.c.b16 %v1266, %v1265
  %v1369 = vpack.c.b16 %v1268, %v1267
  %v1370 = vpack.c.b16 %v1270, %v1269
  %v1371 = vpack.c.b16 %v1272, %v1271
  %v1372 = vpack.c.b16 %v1274, %v1273
  %v1373 = vpack.c.b16 %v1276, %v1275
  %v1374 = vpack.c.b16 %v1278, %v1277
  %1471 = vmatprep.subr.bf16.mxu0 0
  %1472 = vmatpush1.bf16.msra.mxu0 %v1279
  %1473 = vmatprep.subr.bf16.mxu0 0
  %1474 = vmatpush1.bf16.msra.mxu0 %v1280
  %1475 = vmatprep.subr.bf16.mxu0 0
  %1476 = vmatpush1.bf16.msra.mxu0 %v1281
  %1477 = vmatprep.subr.bf16.mxu0 0
  %1478 = vmatpush1.bf16.msra.mxu0 %v1282
  %1479 = vmatprep.subr.bf16.mxu0 0
  %1480 = vmatpush1.bf16.msra.mxu0 %v1283
  %1481 = vmatprep.subr.bf16.mxu0 0
  %1482 = vmatpush1.bf16.msra.mxu0 %v1284
  %1483 = vmatprep.subr.bf16.mxu0 0
  %1484 = vmatpush1.bf16.msra.mxu0 %v1285
  %1485 = vmatprep.subr.bf16.mxu0 0
  %1486 = vmatpush1.bf16.msra.mxu0 %v1286
  %1487 = vmatprep.subr.bf16.mxu0 0
  %1488 = vmatpush1.bf16.msra.mxu0 %v1287
  %1489 = vmatprep.subr.bf16.mxu0 0
  %1490 = vmatpush1.bf16.msra.mxu0 %v1288
  %1491 = vmatprep.subr.bf16.mxu0 0
  %1492 = vmatpush1.bf16.msra.mxu0 %v1289
  %1493 = vmatprep.subr.bf16.mxu0 0
  %1494 = vmatpush1.bf16.msra.mxu0 %v1290
  %1495 = vmatprep.subr.bf16.mxu0 0
  %1496 = vmatpush1.bf16.msra.mxu0 %v1291
  %1497 = vmatprep.subr.bf16.mxu0 0
  %1498 = vmatpush1.bf16.msra.mxu0 %v1292
  %1499 = vmatprep.subr.bf16.mxu0 0
  %1500 = vmatpush1.bf16.msra.mxu0 %v1293
  %1501 = vmatprep.subr.bf16.mxu0 0
  %1502 = vmatpush1.bf16.msra.mxu0 %v1294
  %1503 = vmatprep.mubr.bf16.mxu0 %v680
  %1504 = vmatmul.mubr.bf16.gmra.mrb[0].mxu0 %v679
  %v1505 = vpop.f32.mrb[0].mxu0
  %v1506 = vadd.f32 0.0, %v1505
  %v1507 = vpop.f32.mrb[0].mxu0
  %v1508 = vpop.f32.mrb[0].mxu0
  %v1509 = vadd.f32 0.0, %v1508
  %v1510 = vpop.f32.mrb[0].mxu0
  %1511 = vmatprep.mubr.bf16.mxu0 %v692
  %1512 = vmatmul.mubr.bf16.gmra.mrb[0].mxu0 %v691
  %v1513 = vpop.f32.mrb[0].mxu0
  %v1514 = vadd.f32 0.0, %v1513
  %v1515 = vpop.f32.mrb[0].mxu0
  %v1516 = vpop.f32.mrb[0].mxu0
  %v1517 = vadd.f32 0.0, %v1516
  %v1518 = vpop.f32.mrb[0].mxu0
  %1519 = vmatprep.mubr.bf16.mxu0 %v704
  %1520 = vmatmul.mubr.bf16.gmra.mrb[0].mxu0 %v703
  %v1521 = vpop.f32.mrb[0].mxu0
  %v1522 = vadd.f32 0.0, %v1521
  %v1523 = vpop.f32.mrb[0].mxu0
  %v1524 = vpop.f32.mrb[0].mxu0
  %v1525 = vadd.f32 0.0, %v1524
  %v1526 = vpop.f32.mrb[0].mxu0
  %1527 = vmatprep.mubr.bf16.mxu0 %v716
  %1528 = vmatmul.mubr.bf16.gmra.mrb[0].mxu0 %v715
  %v1529 = vpop.f32.mrb[0].mxu0
  %v1530 = vadd.f32 0.0, %v1529
  %v1531 = vpop.f32.mrb[0].mxu0
  %v1532 = vpop.f32.mrb[0].mxu0
  %v1533 = vadd.f32 0.0, %v1532
  %v1534 = vpop.f32.mrb[0].mxu0
  %1535 = vmatprep.mubr.bf16.mxu0 %v728
  %1536 = vmatmul.mubr.bf16.gmra.mrb[0].mxu0 %v727
  %v1537 = vpop.f32.mrb[0].mxu0
  %v1538 = vadd.f32 0.0, %v1537
  %v1539 = vpop.f32.mrb[0].mxu0
  %v1540 = vpop.f32.mrb[0].mxu0
  %v1541 = vadd.f32 0.0, %v1540
  %v1542 = vpop.f32.mrb[0].mxu0
  %1543 = vmatprep.mubr.bf16.mxu0 %v740
  %1544 = vmatmul.mubr.bf16.gmra.mrb[0].mxu0 %v739
  %v1545 = vpop.f32.mrb[0].mxu0
  %v1546 = vadd.f32 0.0, %v1545
  %v1547 = vpop.f32.mrb[0].mxu0
  %v1548 = vpop.f32.mrb[0].mxu0
  %v1549 = vadd.f32 0.0, %v1548
  %v1550 = vpop.f32.mrb[0].mxu0
  %1551 = vmatprep.mubr.bf16.mxu0 %v752
  %1552 = vmatmul.mubr.bf16.gmra.mrb[0].mxu0 %v751
  %v1553 = vpop.f32.mrb[0].mxu0
  %v1554 = vadd.f32 0.0, %v1553
  %v1555 = vpop.f32.mrb[0].mxu0
  %v1556 = vpop.f32.mrb[0].mxu0
  %v1557 = vadd.f32 0.0, %v1556
  %v1558 = vpop.f32.mrb[0].mxu0
  %1559 = vmatprep.mubr.bf16.mxu0 %v764
  %1560 = vmatmul.mubr.bf16.gmra.mrb[0].mxu0 %v763
  %v1561 = vpop.f32.mrb[0].mxu0
  %v1562 = vadd.f32 0.0, %v1561
  %v1563 = vpop.f32.mrb[0].mxu0
  %v1564 = vpop.f32.mrb[0].mxu0
  %v1565 = vadd.f32 0.0, %v1564
  %v1566 = vpop.f32.mrb[0].mxu0
  %1567 = vmatprep.mubr.bf16.mxu0 %v776
  %1568 = vmatmul.mubr.bf16.gmra.mrb[0].mxu0 %v775
  %v1569 = vpop.f32.mrb[0].mxu0
  %v1570 = vadd.f32 0.0, %v1569
  %v1571 = vpop.f32.mrb[0].mxu0
  %v1572 = vpop.f32.mrb[0].mxu0
  %v1573 = vadd.f32 0.0, %v1572
  %v1574 = vpop.f32.mrb[0].mxu0
  %1575 = vdwg.mxu0
  %1576 = vmatprep.subr.bf16.mxu0 0
  %1577 = vmatpush1.bf16.msra.mxu0 %v1295
  %1578 = vmatprep.subr.bf16.mxu0 0
  %1579 = vmatpush1.bf16.msra.mxu0 %v1296
  %1580 = vmatprep.subr.bf16.mxu0 0
  %1581 = vmatpush1.bf16.msra.mxu0 %v1297
  %1582 = vmatprep.subr.bf16.mxu0 0
  %1583 = vmatpush1.bf16.msra.mxu0 %v1298
  %1584 = vmatprep.subr.bf16.mxu0 0
  %1585 = vmatpush1.bf16.msra.mxu0 %v1299
  %1586 = vmatprep.subr.bf16.mxu0 0
  %1587 = vmatpush1.bf16.msra.mxu0 %v1300
  %1588 = vmatprep.subr.bf16.mxu0 0
  %1589 = vmatpush1.bf16.msra.mxu0 %v1301
  %1590 = vmatprep.subr.bf16.mxu0 0
  %1591 = vmatpush1.bf16.msra.mxu0 %v1302
  %1592 = vmatprep.subr.bf16.mxu0 0
  %1593 = vmatpush1.bf16.msra.mxu0 %v1303
  %1594 = vmatprep.subr.bf16.mxu0 0
  %1595 = vmatpush1.bf16.msra.mxu0 %v1304
  %1596 = vmatprep.subr.bf16.mxu0 0
  %1597 = vmatpush1.bf16.msra.mxu0 %v1305
  %1598 = vmatprep.subr.bf16.mxu0 0
  %1599 = vmatpush1.bf16.msra.mxu0 %v1306
  %1600 = vmatprep.subr.bf16.mxu0 0
  %1601 = vmatpush1.bf16.msra.mxu0 %v1307
  %1602 = vmatprep.subr.bf16.mxu0 0
  %1603 = vmatpush1.bf16.msra.mxu0 %v1308
  %1604 = vmatprep.subr.bf16.mxu0 0
  %1605 = vmatpush1.bf16.msra.mxu0 %v1309
  %1606 = vmatprep.subr.bf16.mxu0 0
  %1607 = vmatpush1.bf16.msra.mxu0 %v1310
  %1608 = vmatprep.mubr.bf16.mxu0 %v682
  %1609 = vmatmul.mubr.bf16.gmra.mrb[0].mxu0 %v681
  %v1610 = vpop.f32.mrb[0].mxu0
  %v1611 = vadd.f32 %v1506, %v1610
  %v1612 = vpop.f32.mrb[0].mxu0
  %v1613 = vpop.f32.mrb[0].mxu0
  %v1614 = vadd.f32 %v1509, %v1613
  %v1615 = vpop.f32.mrb[0].mxu0
  %1616 = vmatprep.mubr.bf16.mxu0 %v694
  %1617 = vmatmul.mubr.bf16.gmra.mrb[0].mxu0 %v693
  %v1618 = vpop.f32.mrb[0].mxu0
  %v1619 = vadd.f32 %v1514, %v1618
  %v1620 = vpop.f32.mrb[0].mxu0
  %v1621 = vpop.f32.mrb[0].mxu0
  %v1622 = vadd.f32 %v1517, %v1621
  %v1623 = vpop.f32.mrb[0].mxu0
  %1624 = vmatprep.mubr.bf16.mxu0 %v706
  %1625 = vmatmul.mubr.bf16.gmra.mrb[0].mxu0 %v705
  %v1626 = vpop.f32.mrb[0].mxu0
  %v1627 = vadd.f32 %v1522, %v1626
  %v1628 = vpop.f32.mrb[0].mxu0
  %v1629 = vpop.f32.mrb[0].mxu0
  %v1630 = vadd.f32 %v1525, %v1629
  %v1631 = vpop.f32.mrb[0].mxu0
  %1632 = vmatprep.mubr.bf16.mxu0 %v718
  %1633 = vmatmul.mubr.bf16.gmra.mrb[0].mxu0 %v717
  %v1634 = vpop.f32.mrb[0].mxu0
  %v1635 = vadd.f32 %v1530, %v1634
  %v1636 = vpop.f32.mrb[0].mxu0
  %v1637 = vpop.f32.mrb[0].mxu0
  %v1638 = vadd.f32 %v1533, %v1637
  %v1639 = vpop.f32.mrb[0].mxu0
  %1640 = vmatprep.mubr.bf16.mxu0 %v730
  %1641 = vmatmul.mubr.bf16.gmra.mrb[0].mxu0 %v729
  %v1642 = vpop.f32.mrb[0].mxu0
  %v1643 = vadd.f32 %v1538, %v1642
  %v1644 = vpop.f32.mrb[0].mxu0
  %v1645 = vpop.f32.mrb[0].mxu0
  %v1646 = vadd.f32 %v1541, %v1645
  %v1647 = vpop.f32.mrb[0].mxu0
  %1648 = vmatprep.mubr.bf16.mxu0 %v742
  %1649 = vmatmul.mubr.bf16.gmra.mrb[0].mxu0 %v741
  %v1650 = vpop.f32.mrb[0].mxu0
  %v1651 = vadd.f32 %v1546, %v1650
  %v1652 = vpop.f32.mrb[0].mxu0
  %v1653 = vpop.f32.mrb[0].mxu0
  %v1654 = vadd.f32 %v1549, %v1653
  %v1655 = vpop.f32.mrb[0].mxu0
  %1656 = vmatprep.mubr.bf16.mxu0 %v754
  %1657 = vmatmul.mubr.bf16.gmra.mrb[0].mxu0 %v753
  %v1658 = vpop.f32.mrb[0].mxu0
  %v1659 = vadd.f32 %v1554, %v1658
  %v1660 = vpop.f32.mrb[0].mxu0
  %v1661 = vpop.f32.mrb[0].mxu0
  %v1662 = vadd.f32 %v1557, %v1661
  %v1663 = vpop.f32.mrb[0].mxu0
  %1664 = vmatprep.mubr.bf16.mxu0 %v766
  %1665 = vmatmul.mubr.bf16.gmra.mrb[0].mxu0 %v765
  %v1666 = vpop.f32.mrb[0].mxu0
  %v1667 = vadd.f32 %v1562, %v1666
  %v1668 = vpop.f32.mrb[0].mxu0
  %v1669 = vpop.f32.mrb[0].mxu0
  %v1670 = vadd.f32 %v1565, %v1669
  %v1671 = vpop.f32.mrb[0].mxu0
  %1672 = vmatprep.mubr.bf16.mxu0 %v778
  %1673 = vmatmul.mubr.bf16.gmra.mrb[0].mxu0 %v777
  %v1674 = vpop.f32.mrb[0].mxu0
  %v1675 = vadd.f32 %v1570, %v1674
  %v1676 = vpop.f32.mrb[0].mxu0
  %v1677 = vpop.f32.mrb[0].mxu0
  %v1678 = vadd.f32 %v1573, %v1677
  %v1679 = vpop.f32.mrb[0].mxu0
  %1680 = vdwg.mxu0
  %1681 = vmatprep.subr.bf16.mxu0 0
  %1682 = vmatpush1.bf16.msra.mxu0 %v1311
  %1683 = vmatprep.subr.bf16.mxu0 0
  %1684 = vmatpush1.bf16.msra.mxu0 %v1312
  %1685 = vmatprep.subr.bf16.mxu0 0
  %1686 = vmatpush1.bf16.msra.mxu0 %v1313
  %1687 = vmatprep.subr.bf16.mxu0 0
  %1688 = vmatpush1.bf16.msra.mxu0 %v1314
  %1689 = vmatprep.subr.bf16.mxu0 0
  %1690 = vmatpush1.bf16.msra.mxu0 %v1315
  %1691 = vmatprep.subr.bf16.mxu0 0
  %1692 = vmatpush1.bf16.msra.mxu0 %v1316
  %1693 = vmatprep.subr.bf16.mxu0 0
  %1694 = vmatpush1.bf16.msra.mxu0 %v1317
  %1695 = vmatprep.subr.bf16.mxu0 0
  %1696 = vmatpush1.bf16.msra.mxu0 %v1318
  %1697 = vmatprep.subr.bf16.mxu0 0
  %1698 = vmatpush1.bf16.msra.mxu0 %v1319
  %1699 = vmatprep.subr.bf16.mxu0 0
  %1700 = vmatpush1.bf16.msra.mxu0 %v1320
  %1701 = vmatprep.subr.bf16.mxu0 0
  %1702 = vmatpush1.bf16.msra.mxu0 %v1321
  %1703 = vmatprep.subr.bf16.mxu0 0
  %1704 = vmatpush1.bf16.msra.mxu0 %v1322
  %1705 = vmatprep.subr.bf16.mxu0 0
  %1706 = vmatpush1.bf16.msra.mxu0 %v1323
  %1707 = vmatprep.subr.bf16.mxu0 0
  %1708 = vmatpush1.bf16.msra.mxu0 %v1324
  %1709 = vmatprep.subr.bf16.mxu0 0
  %1710 = vmatpush1.bf16.msra.mxu0 %v1325
  %1711 = vmatprep.subr.bf16.mxu0 0
  %1712 = vmatpush1.bf16.msra.mxu0 %v1326
  %1713 = vmatprep.mubr.bf16.mxu0 %v684
  %1714 = vmatmul.mubr.bf16.gmra.mrb[0].mxu0 %v683
  %v1715 = vpop.f32.mrb[0].mxu0
  %v1716 = vadd.f32 %v1611, %v1715
  %v1717 = vpop.f32.mrb[0].mxu0
  %v1718 = vpop.f32.mrb[0].mxu0
  %v1719 = vadd.f32 %v1614, %v1718
  %v1720 = vpop.f32.mrb[0].mxu0
  %1721 = vmatprep.mubr.bf16.mxu0 %v696
  %1722 = vmatmul.mubr.bf16.gmra.mrb[0].mxu0 %v695
  %v1723 = vpop.f32.mrb[0].mxu0
  %v1724 = vadd.f32 %v1619, %v1723
  %v1725 = vpop.f32.mrb[0].mxu0
  %v1726 = vpop.f32.mrb[0].mxu0
  %v1727 = vadd.f32 %v1622, %v1726
  %v1728 = vpop.f32.mrb[0].mxu0
  %1729 = vmatprep.mubr.bf16.mxu0 %v708
  %1730 = vmatmul.mubr.bf16.gmra.mrb[0].mxu0 %v707
  %v1731 = vpop.f32.mrb[0].mxu0
  %v1732 = vadd.f32 %v1627, %v1731
  %v1733 = vpop.f32.mrb[0].mxu0
  %v1734 = vpop.f32.mrb[0].mxu0
  %v1735 = vadd.f32 %v1630, %v1734
  %v1736 = vpop.f32.mrb[0].mxu0
  %1737 = vmatprep.mubr.bf16.mxu0 %v720
  %1738 = vmatmul.mubr.bf16.gmra.mrb[0].mxu0 %v719
  %v1739 = vpop.f32.mrb[0].mxu0
  %v1740 = vadd.f32 %v1635, %v1739
  %v1741 = vpop.f32.mrb[0].mxu0
  %v1742 = vpop.f32.mrb[0].mxu0
  %v1743 = vadd.f32 %v1638, %v1742
  %v1744 = vpop.f32.mrb[0].mxu0
  %1745 = vmatprep.mubr.bf16.mxu0 %v732
  %1746 = vmatmul.mubr.bf16.gmra.mrb[0].mxu0 %v731
  %v1747 = vpop.f32.mrb[0].mxu0
  %v1748 = vadd.f32 %v1643, %v1747
  %v1749 = vpop.f32.mrb[0].mxu0
  %v1750 = vpop.f32.mrb[0].mxu0
  %v1751 = vadd.f32 %v1646, %v1750
  %v1752 = vpop.f32.mrb[0].mxu0
  %1753 = vmatprep.mubr.bf16.mxu0 %v744
  %1754 = vmatmul.mubr.bf16.gmra.mrb[0].mxu0 %v743
  %v1755 = vpop.f32.mrb[0].mxu0
  %v1756 = vadd.f32 %v1651, %v1755
  %v1757 = vpop.f32.mrb[0].mxu0
  %v1758 = vpop.f32.mrb[0].mxu0
  %v1759 = vadd.f32 %v1654, %v1758
  %v1760 = vpop.f32.mrb[0].mxu0
  %1761 = vmatprep.mubr.bf16.mxu0 %v756
  %1762 = vmatmul.mubr.bf16.gmra.mrb[0].mxu0 %v755
  %v1763 = vpop.f32.mrb[0].mxu0
  %v1764 = vadd.f32 %v1659, %v1763
  %v1765 = vpop.f32.mrb[0].mxu0
  %v1766 = vpop.f32.mrb[0].mxu0
  %v1767 = vadd.f32 %v1662, %v1766
  %v1768 = vpop.f32.mrb[0].mxu0
  %1769 = vmatprep.mubr.bf16.mxu0 %v768
  %1770 = vmatmul.mubr.bf16.gmra.mrb[0].mxu0 %v767
  %v1771 = vpop.f32.mrb[0].mxu0
  %v1772 = vadd.f32 %v1667, %v1771
  %v1773 = vpop.f32.mrb[0].mxu0
  %v1774 = vpop.f32.mrb[0].mxu0
  %v1775 = vadd.f32 %v1670, %v1774
  %v1776 = vpop.f32.mrb[0].mxu0
  %1777 = vmatprep.mubr.bf16.mxu0 %v780
  %1778 = vmatmul.mubr.bf16.gmra.mrb[0].mxu0 %v779
  %v1779 = vpop.f32.mrb[0].mxu0
  %v1780 = vadd.f32 %v1675, %v1779
  %v1781 = vpop.f32.mrb[0].mxu0
  %v1782 = vpop.f32.mrb[0].mxu0
  %v1783 = vadd.f32 %v1678, %v1782
  %v1784 = vpop.f32.mrb[0].mxu0
  %1785 = vdwg.mxu0
  %1786 = vmatprep.subr.bf16.mxu0 0
  %1787 = vmatpush1.bf16.msra.mxu0 %v1327
  %1788 = vmatprep.subr.bf16.mxu0 0
  %1789 = vmatpush1.bf16.msra.mxu0 %v1328
  %1790 = vmatprep.subr.bf16.mxu0 0
  %1791 = vmatpush1.bf16.msra.mxu0 %v1329
  %1792 = vmatprep.subr.bf16.mxu0 0
  %1793 = vmatpush1.bf16.msra.mxu0 %v1330
  %1794 = vmatprep.subr.bf16.mxu0 0
  %1795 = vmatpush1.bf16.msra.mxu0 %v1331
  %1796 = vmatprep.subr.bf16.mxu0 0
  %1797 = vmatpush1.bf16.msra.mxu0 %v1332
  %1798 = vmatprep.subr.bf16.mxu0 0
  %1799 = vmatpush1.bf16.msra.mxu0 %v1333
  %1800 = vmatprep.subr.bf16.mxu0 0
  %1801 = vmatpush1.bf16.msra.mxu0 %v1334
  %1802 = vmatprep.subr.bf16.mxu0 0
  %1803 = vmatpush1.bf16.msra.mxu0 %v1335
  %1804 = vmatprep.subr.bf16.mxu0 0
  %1805 = vmatpush1.bf16.msra.mxu0 %v1336
  %1806 = vmatprep.subr.bf16.mxu0 0
  %1807 = vmatpush1.bf16.msra.mxu0 %v1337
  %1808 = vmatprep.subr.bf16.mxu0 0
  %1809 = vmatpush1.bf16.msra.mxu0 %v1338
  %1810 = vmatprep.subr.bf16.mxu0 0
  %1811 = vmatpush1.bf16.msra.mxu0 %v1339
  %1812 = vmatprep.subr.bf16.mxu0 0
  %1813 = vmatpush1.bf16.msra.mxu0 %v1340
  %1814 = vmatprep.subr.bf16.mxu0 0
  %1815 = vmatpush1.bf16.msra.mxu0 %v1341
  %1816 = vmatprep.subr.bf16.mxu0 0
  %1817 = vmatpush1.bf16.msra.mxu0 %v1342
  %1818 = vmatprep.mubr.bf16.mxu0 %v686
  %1819 = vmatmul.mubr.bf16.gmra.mrb[0].mxu0 %v685
  %v1820 = vpop.f32.mrb[0].mxu0
  %v1821 = vadd.f32 %v1716, %v1820
  %v1822 = vpop.f32.mrb[0].mxu0
  %v1823 = vpop.f32.mrb[0].mxu0
  %v1824 = vadd.f32 %v1719, %v1823
  %v1825 = vpop.f32.mrb[0].mxu0
  %1826 = vmatprep.mubr.bf16.mxu0 %v698
  %1827 = vmatmul.mubr.bf16.gmra.mrb[0].mxu0 %v697
  %v1828 = vpop.f32.mrb[0].mxu0
  %v1829 = vadd.f32 %v1724, %v1828
  %v1830 = vpop.f32.mrb[0].mxu0
  %v1831 = vpop.f32.mrb[0].mxu0
  %v1832 = vadd.f32 %v1727, %v1831
  %v1833 = vpop.f32.mrb[0].mxu0
  %1834 = vmatprep.mubr.bf16.mxu0 %v710
  %1835 = vmatmul.mubr.bf16.gmra.mrb[0].mxu0 %v709
  %v1836 = vpop.f32.mrb[0].mxu0
  %v1837 = vadd.f32 %v1732, %v1836
  %v1838 = vpop.f32.mrb[0].mxu0
  %v1839 = vpop.f32.mrb[0].mxu0
  %v1840 = vadd.f32 %v1735, %v1839
  %v1841 = vpop.f32.mrb[0].mxu0
  %1842 = vmatprep.mubr.bf16.mxu0 %v722
  %1843 = vmatmul.mubr.bf16.gmra.mrb[0].mxu0 %v721
  %v1844 = vpop.f32.mrb[0].mxu0
  %v1845 = vadd.f32 %v1740, %v1844
  %v1846 = vpop.f32.mrb[0].mxu0
  %v1847 = vpop.f32.mrb[0].mxu0
  %v1848 = vadd.f32 %v1743, %v1847
  %v1849 = vpop.f32.mrb[0].mxu0
  %1850 = vmatprep.mubr.bf16.mxu0 %v734
  %1851 = vmatmul.mubr.bf16.gmra.mrb[0].mxu0 %v733
  %v1852 = vpop.f32.mrb[0].mxu0
  %v1853 = vadd.f32 %v1748, %v1852
  %v1854 = vpop.f32.mrb[0].mxu0
  %v1855 = vpop.f32.mrb[0].mxu0
  %v1856 = vadd.f32 %v1751, %v1855
  %v1857 = vpop.f32.mrb[0].mxu0
  %1858 = vmatprep.mubr.bf16.mxu0 %v746
  %1859 = vmatmul.mubr.bf16.gmra.mrb[0].mxu0 %v745
  %v1860 = vpop.f32.mrb[0].mxu0
  %v1861 = vadd.f32 %v1756, %v1860
  %v1862 = vpop.f32.mrb[0].mxu0
  %v1863 = vpop.f32.mrb[0].mxu0
  %v1864 = vadd.f32 %v1759, %v1863
  %v1865 = vpop.f32.mrb[0].mxu0
  %1866 = vmatprep.mubr.bf16.mxu0 %v758
  %1867 = vmatmul.mubr.bf16.gmra.mrb[0].mxu0 %v757
  %v1868 = vpop.f32.mrb[0].mxu0
  %v1869 = vadd.f32 %v1764, %v1868
  %v1870 = vpop.f32.mrb[0].mxu0
  %v1871 = vpop.f32.mrb[0].mxu0
  %v1872 = vadd.f32 %v1767, %v1871
  %v1873 = vpop.f32.mrb[0].mxu0
  %1874 = vmatprep.mubr.bf16.mxu0 %v770
  %1875 = vmatmul.mubr.bf16.gmra.mrb[0].mxu0 %v769
  %v1876 = vpop.f32.mrb[0].mxu0
  %v1877 = vadd.f32 %v1772, %v1876
  %v1878 = vpop.f32.mrb[0].mxu0
  %v1879 = vpop.f32.mrb[0].mxu0
  %v1880 = vadd.f32 %v1775, %v1879
  %v1881 = vpop.f32.mrb[0].mxu0
  %1882 = vmatprep.mubr.bf16.mxu0 %v782
  %1883 = vmatmul.mubr.bf16.gmra.mrb[0].mxu0 %v781
  %v1884 = vpop.f32.mrb[0].mxu0
  %v1885 = vadd.f32 %v1780, %v1884
  %v1886 = vpop.f32.mrb[0].mxu0
  %v1887 = vpop.f32.mrb[0].mxu0
  %v1888 = vadd.f32 %v1783, %v1887
  %v1889 = vpop.f32.mrb[0].mxu0
  %1890 = vdwg.mxu0
  %1891 = vmatprep.subr.bf16.mxu0 0
  %1892 = vmatpush1.bf16.msra.mxu0 %v1343
  %1893 = vmatprep.subr.bf16.mxu0 0
  %1894 = vmatpush1.bf16.msra.mxu0 %v1344
  %1895 = vmatprep.subr.bf16.mxu0 0
  %1896 = vmatpush1.bf16.msra.mxu0 %v1345
  %1897 = vmatprep.subr.bf16.mxu0 0
  %1898 = vmatpush1.bf16.msra.mxu0 %v1346
  %1899 = vmatprep.subr.bf16.mxu0 0
  %1900 = vmatpush1.bf16.msra.mxu0 %v1347
  %1901 = vmatprep.subr.bf16.mxu0 0
  %1902 = vmatpush1.bf16.msra.mxu0 %v1348
  %1903 = vmatprep.subr.bf16.mxu0 0
  %1904 = vmatpush1.bf16.msra.mxu0 %v1349
  %1905 = vmatprep.subr.bf16.mxu0 0
  %1906 = vmatpush1.bf16.msra.mxu0 %v1350
  %1907 = vmatprep.subr.bf16.mxu0 0
  %1908 = vmatpush1.bf16.msra.mxu0 %v1351
  %1909 = vmatprep.subr.bf16.mxu0 0
  %1910 = vmatpush1.bf16.msra.mxu0 %v1352
  %1911 = vmatprep.subr.bf16.mxu0 0
  %1912 = vmatpush1.bf16.msra.mxu0 %v1353
  %1913 = vmatprep.subr.bf16.mxu0 0
  %1914 = vmatpush1.bf16.msra.mxu0 %v1354
  %1915 = vmatprep.subr.bf16.mxu0 0
  %1916 = vmatpush1.bf16.msra.mxu0 %v1355
  %1917 = vmatprep.subr.bf16.mxu0 0
  %1918 = vmatpush1.bf16.msra.mxu0 %v1356
  %1919 = vmatprep.subr.bf16.mxu0 0
  %1920 = vmatpush1.bf16.msra.mxu0 %v1357
  %1921 = vmatprep.subr.bf16.mxu0 0
  %1922 = vmatpush1.bf16.msra.mxu0 %v1358
  %1923 = vmatprep.mubr.bf16.mxu0 %v688
  %1924 = vmatmul.mubr.bf16.gmra.mrb[0].mxu0 %v687
  %v1925 = vpop.f32.mrb[0].mxu0
  %v1926 = vadd.f32 %v1821, %v1925
  %v1927 = vpop.f32.mrb[0].mxu0
  %v1928 = vpop.f32.mrb[0].mxu0
  %v1929 = vadd.f32 %v1824, %v1928
  %v1930 = vpop.f32.mrb[0].mxu0
  %1931 = vmatprep.mubr.bf16.mxu0 %v700
  %1932 = vmatmul.mubr.bf16.gmra.mrb[0].mxu0 %v699
  %v1933 = vpop.f32.mrb[0].mxu0
  %v1934 = vadd.f32 %v1829, %v1933
  %v1935 = vpop.f32.mrb[0].mxu0
  %v1936 = vpop.f32.mrb[0].mxu0
  %v1937 = vadd.f32 %v1832, %v1936
  %v1938 = vpop.f32.mrb[0].mxu0
  %1939 = vmatprep.mubr.bf16.mxu0 %v712
  %1940 = vmatmul.mubr.bf16.gmra.mrb[0].mxu0 %v711
  %v1941 = vpop.f32.mrb[0].mxu0
  %v1942 = vadd.f32 %v1837, %v1941
  %v1943 = vpop.f32.mrb[0].mxu0
  %v1944 = vpop.f32.mrb[0].mxu0
  %v1945 = vadd.f32 %v1840, %v1944
  %v1946 = vpop.f32.mrb[0].mxu0
  %1947 = vmatprep.mubr.bf16.mxu0 %v724
  %1948 = vmatmul.mubr.bf16.gmra.mrb[0].mxu0 %v723
  %v1949 = vpop.f32.mrb[0].mxu0
  %v1950 = vadd.f32 %v1845, %v1949
  %v1951 = vpop.f32.mrb[0].mxu0
  %v1952 = vpop.f32.mrb[0].mxu0
  %v1953 = vadd.f32 %v1848, %v1952
  %v1954 = vpop.f32.mrb[0].mxu0
  %1955 = vmatprep.mubr.bf16.mxu0 %v736
  %1956 = vmatmul.mubr.bf16.gmra.mrb[0].mxu0 %v735
  %v1957 = vpop.f32.mrb[0].mxu0
  %v1958 = vadd.f32 %v1853, %v1957
  %v1959 = vpop.f32.mrb[0].mxu0
  %v1960 = vpop.f32.mrb[0].mxu0
  %v1961 = vadd.f32 %v1856, %v1960
  %v1962 = vpop.f32.mrb[0].mxu0
  %1963 = vmatprep.mubr.bf16.mxu0 %v748
  %1964 = vmatmul.mubr.bf16.gmra.mrb[0].mxu0 %v747
  %v1965 = vpop.f32.mrb[0].mxu0
  %v1966 = vadd.f32 %v1861, %v1965
  %v1967 = vpop.f32.mrb[0].mxu0
  %v1968 = vpop.f32.mrb[0].mxu0
  %v1969 = vadd.f32 %v1864, %v1968
  %v1970 = vpop.f32.mrb[0].mxu0
  %1971 = vmatprep.mubr.bf16.mxu0 %v760
  %1972 = vmatmul.mubr.bf16.gmra.mrb[0].mxu0 %v759
  %v1973 = vpop.f32.mrb[0].mxu0
  %v1974 = vadd.f32 %v1869, %v1973
  %v1975 = vpop.f32.mrb[0].mxu0
  %v1976 = vpop.f32.mrb[0].mxu0
  %v1977 = vadd.f32 %v1872, %v1976
  %v1978 = vpop.f32.mrb[0].mxu0
  %1979 = vmatprep.mubr.bf16.mxu0 %v772
  %1980 = vmatmul.mubr.bf16.gmra.mrb[0].mxu0 %v771
  %v1981 = vpop.f32.mrb[0].mxu0
  %v1982 = vadd.f32 %v1877, %v1981
  %v1983 = vpop.f32.mrb[0].mxu0
  %v1984 = vpop.f32.mrb[0].mxu0
  %v1985 = vadd.f32 %v1880, %v1984
  %v1986 = vpop.f32.mrb[0].mxu0
  %1987 = vmatprep.mubr.bf16.mxu0 %v784
  %1988 = vmatmul.mubr.bf16.gmra.mrb[0].mxu0 %v783
  %v1989 = vpop.f32.mrb[0].mxu0
  %v1990 = vadd.f32 %v1885, %v1989
  %v1991 = vpop.f32.mrb[0].mxu0
  %v1992 = vpop.f32.mrb[0].mxu0
  %v1993 = vadd.f32 %v1888, %v1992
  %v1994 = vpop.f32.mrb[0].mxu0
  %1995 = vdwg.mxu0
  %1996 = vmatprep.subr.bf16.mxu0 0
  %1997 = vmatpush1.bf16.msra.mxu0 %v1359
  %1998 = vmatprep.subr.bf16.mxu0 0
  %1999 = vmatpush1.bf16.msra.mxu0 %v1360
  %2000 = vmatprep.subr.bf16.mxu0 0
  %2001 = vmatpush1.bf16.msra.mxu0 %v1361
  %2002 = vmatprep.subr.bf16.mxu0 0
  %2003 = vmatpush1.bf16.msra.mxu0 %v1362
  %2004 = vmatprep.subr.bf16.mxu0 0
  %2005 = vmatpush1.bf16.msra.mxu0 %v1363
  %2006 = vmatprep.subr.bf16.mxu0 0
  %2007 = vmatpush1.bf16.msra.mxu0 %v1364
  %2008 = vmatprep.subr.bf16.mxu0 0
  %2009 = vmatpush1.bf16.msra.mxu0 %v1365
  %2010 = vmatprep.subr.bf16.mxu0 0
  %2011 = vmatpush1.bf16.msra.mxu0 %v1366
  %2012 = vmatprep.subr.bf16.mxu0 0
  %2013 = vmatpush1.bf16.msra.mxu0 %v1367
  %2014 = vmatprep.subr.bf16.mxu0 0
  %2015 = vmatpush1.bf16.msra.mxu0 %v1368
  %2016 = vmatprep.subr.bf16.mxu0 0
  %2017 = vmatpush1.bf16.msra.mxu0 %v1369
  %2018 = vmatprep.subr.bf16.mxu0 0
  %2019 = vmatpush1.bf16.msra.mxu0 %v1370
  %2020 = vmatprep.subr.bf16.mxu0 0
  %2021 = vmatpush1.bf16.msra.mxu0 %v1371
  %2022 = vmatprep.subr.bf16.mxu0 0
  %2023 = vmatpush1.bf16.msra.mxu0 %v1372
  %2024 = vmatprep.subr.bf16.mxu0 0
  %2025 = vmatpush1.bf16.msra.mxu0 %v1373
  %2026 = vmatprep.subr.bf16.mxu0 0
  %2027 = vmatpush1.bf16.msra.mxu0 %v1374
  %2028 = vmatprep.mubr.bf16.mxu0 %v690
  %2029 = vmatmul.mubr.bf16.gmra.mrb[0].mxu0 %v689
  %v2030 = vpop.f32.mrb[0].mxu0
  %v2031 = vadd.f32 %v1926, %v2030
  %v2032 = vpop.f32.mrb[0].mxu0
  %v2033 = vpop.f32.mrb[0].mxu0
  %v2034 = vadd.f32 %v1929, %v2033
  %v2035 = vpop.f32.mrb[0].mxu0
  %2036 = vmatprep.mubr.bf16.mxu0 %v702
  %2037 = vmatmul.mubr.bf16.gmra.mrb[0].mxu0 %v701
  %v2038 = vpop.f32.mrb[0].mxu0
  %v2039 = vadd.f32 %v1934, %v2038
  %v2040 = vpop.f32.mrb[0].mxu0
  %v2041 = vpop.f32.mrb[0].mxu0
  %v2042 = vadd.f32 %v1937, %v2041
  %v2043 = vpop.f32.mrb[0].mxu0
  %2044 = vmatprep.mubr.bf16.mxu0 %v714
  %2045 = vmatmul.mubr.bf16.gmra.mrb[0].mxu0 %v713
  %v2046 = vpop.f32.mrb[0].mxu0
  %v2047 = vadd.f32 %v1942, %v2046
  %v2048 = vpop.f32.mrb[0].mxu0
  %v2049 = vpop.f32.mrb[0].mxu0
  %v2050 = vadd.f32 %v1945, %v2049
  %v2051 = vpop.f32.mrb[0].mxu0
  %2052 = vmatprep.mubr.bf16.mxu0 %v726
  %2053 = vmatmul.mubr.bf16.gmra.mrb[0].mxu0 %v725
  %v2054 = vpop.f32.mrb[0].mxu0
  %v2055 = vadd.f32 %v1950, %v2054
  %v2056 = vpop.f32.mrb[0].mxu0
  %v2057 = vpop.f32.mrb[0].mxu0
  %v2058 = vadd.f32 %v1953, %v2057
  %v2059 = vpop.f32.mrb[0].mxu0
  %2060 = vmatprep.mubr.bf16.mxu0 %v738
  %2061 = vmatmul.mubr.bf16.gmra.mrb[0].mxu0 %v737
  %v2062 = vpop.f32.mrb[0].mxu0
  %v2063 = vadd.f32 %v1958, %v2062
  %v2064 = vpop.f32.mrb[0].mxu0
  %v2065 = vpop.f32.mrb[0].mxu0
  %v2066 = vadd.f32 %v1961, %v2065
  %v2067 = vpop.f32.mrb[0].mxu0
  %2068 = vmatprep.mubr.bf16.mxu0 %v750
  %2069 = vmatmul.mubr.bf16.gmra.mrb[0].mxu0 %v749
  %v2070 = vpop.f32.mrb[0].mxu0
  %v2071 = vadd.f32 %v1966, %v2070
  %v2072 = vpop.f32.mrb[0].mxu0
  %v2073 = vpop.f32.mrb[0].mxu0
  %v2074 = vadd.f32 %v1969, %v2073
  %v2075 = vpop.f32.mrb[0].mxu0
  %2076 = vmatprep.mubr.bf16.mxu0 %v762
  %2077 = vmatmul.mubr.bf16.gmra.mrb[0].mxu0 %v761
  %v2078 = vpop.f32.mrb[0].mxu0
  %v2079 = vadd.f32 %v1974, %v2078
  %v2080 = vpop.f32.mrb[0].mxu0
  %v2081 = vpop.f32.mrb[0].mxu0
  %v2082 = vadd.f32 %v1977, %v2081
  %v2083 = vpop.f32.mrb[0].mxu0
  %2084 = vmatprep.mubr.bf16.mxu0 %v774
  %2085 = vmatmul.mubr.bf16.gmra.mrb[0].mxu0 %v773
  %v2086 = vpop.f32.mrb[0].mxu0
  %v2087 = vadd.f32 %v1982, %v2086
  %v2088 = vpop.f32.mrb[0].mxu0
  %v2089 = vpop.f32.mrb[0].mxu0
  %v2090 = vadd.f32 %v1985, %v2089
  %v2091 = vpop.f32.mrb[0].mxu0
  %2092 = vmatprep.mubr.bf16.mxu0 %v786
  %2093 = vmatmul.mubr.bf16.gmra.mrb[0].mxu0 %v785
  %v2094 = vpop.f32.mrb[0].mxu0
  %v2095 = vadd.f32 %v1990, %v2094
  %v2096 = vpop.f32.mrb[0].mxu0
  %v2097 = vpop.f32.mrb[0].mxu0
  %v2098 = vadd.f32 %v1993, %v2097
  %v2099 = vpop.f32.mrb[0].mxu0
  %2100 = vdwg.mxu0
  %v2101 = vadd.f32 %v37, %v2031
  %v2102 = vadd.f32 %v38, %v2034
  %v2103 = vadd.f32 %v39, %v2039
  %v2104 = vadd.f32 %v40, %v2042
  %v2105 = vadd.f32 %v41, %v2047
  %v2106 = vadd.f32 %v42, %v2050
  %v2107 = vadd.f32 %v43, %v2055
  %v2108 = vadd.f32 %v44, %v2058
  %v2109 = vadd.f32 %v45, %v2063
  %v2110 = vadd.f32 %v46, %v2066
  %v2111 = vadd.f32 %v47, %v2071
  %v2112 = vadd.f32 %v48, %v2074
  %v2113 = vadd.f32 %v49, %v2079
  %v2114 = vadd.f32 %v50, %v2082
  %v2115 = vadd.f32 %v51, %v2087
  %v2116 = vadd.f32 %v52, %v2090
  %v2117 = vadd.f32 %v53, %v2095
  %v2118 = vadd.f32 %v54, %v2098
  %2119 = vst [vmem:[#allocation2] sm:$0xff] %v2101
  %2120 = vst [vmem:[#allocation2 + $0x8] sm:$0xff] %v2102
  %2121 = vst [vmem:[#allocation2 + $0x10] sm:$0xff] %v2103
  %2122 = vst [vmem:[#allocation2 + $0x18] sm:$0xff] %v2104
  %2123 = vst [vmem:[#allocation2 + $0x20] sm:$0xff] %v2105
  %2124 = vst [vmem:[#allocation2 + $0x28] sm:$0xff] %v2106
  %2125 = vst [vmem:[#allocation2 + $0x30] sm:$0xff] %v2107
  %2126 = vst [vmem:[#allocation2 + $0x38] sm:$0xff] %v2108
  %2127 = vst [vmem:[#allocation2 + $0x40] sm:$0xff] %v2109
  %2128 = vst [vmem:[#allocation2 + $0x48] sm:$0xff] %v2110
  %2129 = vst [vmem:[#allocation2 + $0x50] sm:$0xff] %v2111
  %2130 = vst [vmem:[#allocation2 + $0x58] sm:$0xff] %v2112
  %2131 = vst [vmem:[#allocation2 + $0x60] sm:$0xff] %v2113
  %2132 = vst [vmem:[#allocation2 + $0x68] sm:$0xff] %v2114
  %2133 = vst [vmem:[#allocation2 + $0x70] sm:$0xff] %v2115
  %2134 = vst [vmem:[#allocation2 + $0x78] sm:$0xff] %v2116
  %2135 = vst [vmem:[#allocation2 + $0x80] sm:$0xff] %v2117
  %2136 = vst [vmem:[#allocation2 + $0x88] sm:$0xff] %v2118
  // Predicated region
  $region18: #{discriminator_image.6} parent=0 // pred_check
    %p2137 = pneg %p15
  $region19: #{discriminator_image.6} parent=0 // pred_check_branch
    %2139 = sbr.rel (%p2137) target = $region21
  $region20: #{discriminator_image.6} parent=0 // pred_region
    %v2140 = vld [vmem:[#allocation2] sm:$0xff]
    %v2141 = vld [vmem:[#allocation2 + $0x8] sm:$0xff]
    %v2142 = vld [vmem:[#allocation2 + $0x10] sm:$0xff]
    %v2143 = vld [vmem:[#allocation2 + $0x18] sm:$0xff]
    %v2144 = vld [vmem:[#allocation2 + $0x20] sm:$0xff]
    %v2145 = vld [vmem:[#allocation2 + $0x28] sm:$0xff]
    %v2146 = vld [vmem:[#allocation2 + $0x30] sm:$0xff]
    %v2147 = vld [vmem:[#allocation2 + $0x38] sm:$0xff]
    %v2148 = vld [vmem:[#allocation2 + $0x40] sm:$0xff]
    %v2149 = vld [vmem:[#allocation2 + $0x48] sm:$0xff]
    %v2150 = vld [vmem:[#allocation2 + $0x50] sm:$0xff]
    %v2151 = vld [vmem:[#allocation2 + $0x58] sm:$0xff]
    %v2152 = vld [vmem:[#allocation2 + $0x60] sm:$0xff]
    %v2153 = vld [vmem:[#allocation2 + $0x68] sm:$0xff]
    %v2154 = vld [vmem:[#allocation2 + $0x70] sm:$0xff]
    %v2155 = vld [vmem:[#allocation2 + $0x78] sm:$0xff]
    %v2156 = vld [vmem:[#allocation2 + $0x80] sm:$0xff]
    %v2157 = vld [vmem:[#allocation2 + $0x88] sm:$0xff]
    %v2158 = vld [vmem:[%s2] sm:$0x1]
    %v2160 = vlaneseq
    %v2161 = vshrl.u32 %v2160, 7
    %v2162 = vsub.s32 0, %v2161
    %v2163 = vrot.slane %v2158, %v2162
    %v2165 = vadd.f32 %v2140, %v2163
    %v2166 = vadd.f32 %v2141, %v2163
    %v2167 = vadd.f32 %v2142, %v2163
    %v2168 = vadd.f32 %v2143, %v2163
    %v2169 = vadd.f32 %v2144, %v2163
    %v2170 = vadd.f32 %v2145, %v2163
    %v2171 = vadd.f32 %v2146, %v2163
    %v2172 = vadd.f32 %v2147, %v2163
    %v2173 = vadd.f32 %v2148, %v2163
    %v2174 = vadd.f32 %v2149, %v2163
    %v2175 = vadd.f32 %v2150, %v2163
    %v2176 = vadd.f32 %v2151, %v2163
    %v2177 = vadd.f32 %v2152, %v2163
    %v2178 = vadd.f32 %v2153, %v2163
    %v2179 = vadd.f32 %v2154, %v2163
    %v2180 = vadd.f32 %v2155, %v2163
    %v2181 = vadd.f32 %v2156, %v2163
    %v2182 = vadd.f32 %v2157, %v2163
    %vm2183 = vcmp.ge.f32.partialorder %v2165, 0.0
    %vm2184 = vcmp.ge.f32.partialorder %v2166, 0.0
    %vm2185 = vcmp.ge.f32.partialorder %v2167, 0.0
    %vm2186 = vcmp.ge.f32.partialorder %v2168, 0.0
    %vm2187 = vcmp.ge.f32.partialorder %v2169, 0.0
    %vm2188 = vcmp.ge.f32.partialorder %v2170, 0.0
    %vm2189 = vcmp.ge.f32.partialorder %v2171, 0.0
    %vm2190 = vcmp.ge.f32.partialorder %v2172, 0.0
    %vm2191 = vcmp.ge.f32.partialorder %v2173, 0.0
    %vm2192 = vcmp.ge.f32.partialorder %v2174, 0.0
    %vm2193 = vcmp.ge.f32.partialorder %v2175, 0.0
    %vm2194 = vcmp.ge.f32.partialorder %v2176, 0.0
    %vm2195 = vcmp.ge.f32.partialorder %v2177, 0.0
    %vm2196 = vcmp.ge.f32.partialorder %v2178, 0.0
    %vm2197 = vcmp.ge.f32.partialorder %v2179, 0.0
    %vm2198 = vcmp.ge.f32.partialorder %v2180, 0.0
    %vm2199 = vcmp.ge.f32.partialorder %v2181, 0.0
    %vm2200 = vcmp.ge.f32.partialorder %v2182, 0.0
    %v2201 = vmul.f32 %v2165, 0.01
    %v2202 = vmul.f32 %v2166, 0.01
    %v2203 = vmul.f32 %v2167, 0.01
    %v2204 = vmul.f32 %v2168, 0.01
    %v2205 = vmul.f32 %v2169, 0.01
    %v2206 = vmul.f32 %v2170, 0.01
    %v2207 = vmul.f32 %v2171, 0.01
    %v2208 = vmul.f32 %v2172, 0.01
    %v2209 = vmul.f32 %v2173, 0.01
    %v2210 = vmul.f32 %v2174, 0.01
    %v2211 = vmul.f32 %v2175, 0.01
    %v2212 = vmul.f32 %v2176, 0.01
    %v2213 = vmul.f32 %v2177, 0.01
    %v2214 = vmul.f32 %v2178, 0.01
    %v2215 = vmul.f32 %v2179, 0.01
    %v2216 = vmul.f32 %v2180, 0.01
    %v2217 = vmul.f32 %v2181, 0.01
    %v2218 = vmul.f32 %v2182, 0.01
    %v2219 = vsel %vm2183, %v2165, %v2201
    %v2220 = vsel %vm2184, %v2166, %v2202
    %v2221 = vsel %vm2185, %v2167, %v2203
    %v2222 = vsel %vm2186, %v2168, %v2204
    %v2223 = vsel %vm2187, %v2169, %v2205
    %v2224 = vsel %vm2188, %v2170, %v2206
    %v2225 = vsel %vm2189, %v2171, %v2207
    %v2226 = vsel %vm2190, %v2172, %v2208
    %v2227 = vsel %vm2191, %v2173, %v2209
    %v2228 = vsel %vm2192, %v2174, %v2210
    %v2229 = vsel %vm2193, %v2175, %v2211
    %v2230 = vsel %vm2194, %v2176, %v2212
    %v2231 = vsel %vm2195, %v2177, %v2213
    %v2232 = vsel %vm2196, %v2178, %v2214
    %v2233 = vsel %vm2197, %v2179, %v2215
    %v2234 = vsel %vm2198, %v2180, %v2216
    %v2235 = vsel %vm2199, %v2181, %v2217
    %v2236 = vsel %vm2200, %v2182, %v2218
    %v2237 = vpack.c.bf16 %v2220, %v2219
    %v2238 = vpack.c.bf16 %v2222, %v2221
    %v2239 = vpack.c.bf16 %v2224, %v2223
    %v2240 = vpack.c.bf16 %v2226, %v2225
    %v2241 = vpack.c.bf16 %v2228, %v2227
    %v2242 = vpack.c.bf16 %v2230, %v2229
    %v2243 = vpack.c.bf16 %v2232, %v2231
    %v2244 = vpack.c.bf16 %v2234, %v2233
    %v2245 = vpack.c.bf16 %v2236, %v2235
    %v2255 = vunpack.c.l.b16 %v2237
    %v2256 = vunpack.c.h.b16 %v2237
    %v2257 = vunpack.c.l.b16 %v2238
    %v2258 = vunpack.c.h.b16 %v2238
    %v2259 = vunpack.c.l.b16 %v2239
    %v2260 = vunpack.c.h.b16 %v2239
    %v2261 = vunpack.c.l.b16 %v2240
    %v2262 = vunpack.c.h.b16 %v2240
    %v2263 = vunpack.c.l.b16 %v2241
    %v2264 = vunpack.c.h.b16 %v2241
    %v2265 = vunpack.c.l.b16 %v2242
    %v2266 = vunpack.c.h.b16 %v2242
    %v2267 = vunpack.c.l.b16 %v2243
    %v2268 = vunpack.c.h.b16 %v2243
    %v2269 = vunpack.c.l.b16 %v2244
    %v2270 = vunpack.c.h.b16 %v2244
    %v2271 = vunpack.c.l.b16 %v2245
    %v2272 = vunpack.c.h.b16 %v2245
    %v2273 = vpack.c.b16 %v2255, %v2255
    %v2274 = vpack.c.b16 %v2256, %v2256
    %v2275 = vpack.c.b16 %v2257, %v2257
    %v2276 = vpack.c.b16 %v2258, %v2258
    %v2277 = vpack.c.b16 %v2259, %v2259
    %v2278 = vpack.c.b16 %v2260, %v2260
    %v2279 = vpack.c.b16 %v2261, %v2261
    %v2280 = vpack.c.b16 %v2262, %v2262
    %v2281 = vpack.c.b16 %v2263, %v2263
    %v2282 = vpack.c.b16 %v2264, %v2264
    %v2283 = vpack.c.b16 %v2265, %v2265
    %v2284 = vpack.c.b16 %v2266, %v2266
    %v2285 = vpack.c.b16 %v2267, %v2267
    %v2286 = vpack.c.b16 %v2268, %v2268
    %v2287 = vpack.c.b16 %v2269, %v2269
    %v2288 = vpack.c.b16 %v2270, %v2270
    %v2289 = vpack.c.b16 %v2271, %v2271
    %v2290 = vpack.c.b16 %v2272, %v2272
    %2309 = vst [vmem:[%s3] sm:$0xf] %v2273
    %2310 = vst [vmem:[%s3 + $0x4] sm:$0xf] %v2274
    %2311 = vst [vmem:[%s3 + $0x8] sm:$0xf] %v2275
    %2312 = vst [vmem:[%s3 + $0xc] sm:$0xf] %v2276
    %2313 = vst [vmem:[%s3 + $0x10] sm:$0xf] %v2277
    %2314 = vst [vmem:[%s3 + $0x14] sm:$0xf] %v2278
    %2315 = vst [vmem:[%s3 + $0x18] sm:$0xf] %v2279
    %2316 = vst [vmem:[%s3 + $0x1c] sm:$0xf] %v2280
    %2317 = vst [vmem:[%s3 + $0x20] sm:$0xf] %v2281
    %2318 = vst [vmem:[%s3 + $0x24] sm:$0xf] %v2282
    %2319 = vst [vmem:[%s3 + $0x28] sm:$0xf] %v2283
    %2320 = vst [vmem:[%s3 + $0x2c] sm:$0xf] %v2284
    %2321 = vst [vmem:[%s3 + $0x30] sm:$0xf] %v2285
    %2322 = vst [vmem:[%s3 + $0x34] sm:$0xf] %v2286
    %2323 = vst [vmem:[%s3 + $0x38] sm:$0xf] %v2287
    %2324 = vst [vmem:[%s3 + $0x3c] sm:$0xf] %v2288
    %2325 = vst [vmem:[%s3 + $0x40] sm:$0xf] %v2289
    %2326 = vst [vmem:[%s3 + $0x44] sm:$0xf] %v2290
  $region21: #{discriminator_image.6} parent=0 // pred_fallthru
    _
  // Predicated region
  $region22: #{discriminator_image.6} parent=0 // pred_check
    _
  $region23: #{discriminator_image.6} parent=0 // pred_check_branch
    %2328 = sbr.rel (0) target = $region25
  $region24: #{discriminator_image.6} parent=0 // pred_region
    _
  $region25: #{discriminator_image.6} parent=0 // pred_fallthru
    _
  // Predicated region
  $region26: #{discriminator_image.6} parent=0 // pred_check
    _
  $region27: #{discriminator_image.6} parent=0 // pred_check_branch
    %2330 = sbr.rel (0) target = $region29
  $region28: #{discriminator_image.6} parent=0 // pred_region
    _
  $region29: #{discriminator_image.6} parent=0 // pred_fallthru
    _

// kernel: discriminator_image.7
$region0: #{discriminator_image.7}
  #allocation0 [shape = 'u32[]', space=smem, size = 0x4, offset = 0x4, fixed_abs, tag = 'smem constant byte address 0x4 - core index']
  #allocation1 [shape = 'u32[144,128]{1,0:T(1,128)}', space=vmem, size = 0x12000, scoped, tag = 'internal scratch']
  #allocation2 [shape = 'f32[72,128]{1,0:T(8,128)}', space=vmem, size = 0x9000, scoped, tag = 'scratch operand']
  %s0 = inlined_call_operand.vmem [shape: bf16[72,1024], index: 0, kind: input, shape index: {}]
  %s1 = inlined_call_operand.vmem [shape: bf16[1024,128], index: 1, kind: input, shape index: {}]
  %s2 = inlined_call_operand.vmem [shape: f32[1,128], index: 2, kind: input, shape index: {}]
  %s3 = inlined_call_operand.vmem [shape: bf16[72,128], index: 3, kind: output, shape index: {}]
  %s4 = sld [smem:[#allocation0]]
  $region30: #{discriminator_image.7} parent=0
    _
  %s6 = ssub.s32 1, %s4
  %s7 = scalar_select 0, %s6, %s4
  // Predicated region
  $region2: #{discriminator_image.7} parent=0 // pred_check
    _
  $region3: #{discriminator_image.7} parent=0 // pred_check_branch
    %9 = sbr.rel (0) target = $region5
  $region4: #{discriminator_image.7} parent=0 // pred_region
    _
  $region5: #{discriminator_image.7} parent=0 // pred_fallthru
    _
  // Predicated region
  $region6: #{discriminator_image.7} parent=0 // pred_check
    _
  $region7: #{discriminator_image.7} parent=0 // pred_check_branch
    %11 = sbr.rel (0) target = $region9
  $region8: #{discriminator_image.7} parent=0 // pred_region
    _
  $region9: #{discriminator_image.7} parent=0 // pred_fallthru
    _
  // Predicated region
  $region10: #{discriminator_image.7} parent=0 // pred_check
    _
  $region11: #{discriminator_image.7} parent=0 // pred_check_branch
    %13 = sbr.rel (0) target = $region13
  $region12: #{discriminator_image.7} parent=0 // pred_region
    _
  $region13: #{discriminator_image.7} parent=0 // pred_fallthru
    _
  %p15 = scmp.eq.s32.totalorder 0, 0
  // Predicated region
  $region14: #{discriminator_image.7} parent=0 // pred_check
    %p16 = pneg %p15
  $region15: #{discriminator_image.7} parent=0 // pred_check_branch
    %18 = sbr.rel (%p16) target = $region17
  $region16: #{discriminator_image.7} parent=0 // pred_region
    %19 = vst [vmem:[#allocation2] sm:$0xff] 0.0
    %20 = vst [vmem:[#allocation2 + $0x8] sm:$0xff] 0.0
    %21 = vst [vmem:[#allocation2 + $0x10] sm:$0xff] 0.0
    %22 = vst [vmem:[#allocation2 + $0x18] sm:$0xff] 0.0
    %23 = vst [vmem:[#allocation2 + $0x20] sm:$0xff] 0.0
    %24 = vst [vmem:[#allocation2 + $0x28] sm:$0xff] 0.0
    %25 = vst [vmem:[#allocation2 + $0x30] sm:$0xff] 0.0
    %26 = vst [vmem:[#allocation2 + $0x38] sm:$0xff] 0.0
    %27 = vst [vmem:[#allocation2 + $0x40] sm:$0xff] 0.0
  $region17: #{discriminator_image.7} parent=0 // pred_fallthru
    _
  %v28 = vld [vmem:[#allocation2] sm:$0xff]
  %v29 = vld [vmem:[#allocation2 + $0x8] sm:$0xff]
  %v30 = vld [vmem:[#allocation2 + $0x10] sm:$0xff]
  %v31 = vld [vmem:[#allocation2 + $0x18] sm:$0xff]
  %v32 = vld [vmem:[#allocation2 + $0x20] sm:$0xff]
  %v33 = vld [vmem:[#allocation2 + $0x28] sm:$0xff]
  %v34 = vld [vmem:[#allocation2 + $0x30] sm:$0xff]
  %v35 = vld [vmem:[#allocation2 + $0x38] sm:$0xff]
  %v36 = vld [vmem:[#allocation2 + $0x40] sm:$0xff]
  %v37 = vld [vmem:[%s0] sm:$0xff]
  %v38 = vld [vmem:[%s0 + $0x8] sm:$0xff]
  %v39 = vld [vmem:[%s0 + $0x10] sm:$0xff]
  %v40 = vld [vmem:[%s0 + $0x18] sm:$0xff]
  %v41 = vld [vmem:[%s0 + $0x20] sm:$0xff]
  %v42 = vld [vmem:[%s0 + $0x28] sm:$0xff]
  %v43 = vld [vmem:[%s0 + $0x30] sm:$0xff]
  %v44 = vld [vmem:[%s0 + $0x38] sm:$0xff]
  %v45 = vld [vmem:[%s0 + $0x40] sm:$0xff]
  %v46 = vld [vmem:[%s0 + $0x48] sm:$0xff]
  %v47 = vld [vmem:[%s0 + $0x50] sm:$0xff]
  %v48 = vld [vmem:[%s0 + $0x58] sm:$0xff]
  %v49 = vld [vmem:[%s0 + $0x60] sm:$0xff]
  %v50 = vld [vmem:[%s0 + $0x68] sm:$0xff]
  %v51 = vld [vmem:[%s0 + $0x70] sm:$0xff]
  %v52 = vld [vmem:[%s0 + $0x78] sm:$0xff]
  %v53 = vld [vmem:[%s0 + $0x80] sm:$0xff]
  %v54 = vld [vmem:[%s0 + $0x88] sm:$0xff]
  %v55 = vld [vmem:[%s0 + $0x90] sm:$0xff]
  %v56 = vld [vmem:[%s0 + $0x98] sm:$0xff]
  %v57 = vld [vmem:[%s0 + $0xa0] sm:$0xff]
  %v58 = vld [vmem:[%s0 + $0xa8] sm:$0xff]
  %v59 = vld [vmem:[%s0 + $0xb0] sm:$0xff]
  %v60 = vld [vmem:[%s0 + $0xb8] sm:$0xff]
  %v61 = vld [vmem:[%s0 + $0xc0] sm:$0xff]
  %v62 = vld [vmem:[%s0 + $0xc8] sm:$0xff]
  %v63 = vld [vmem:[%s0 + $0xd0] sm:$0xff]
  %v64 = vld [vmem:[%s0 + $0xd8] sm:$0xff]
  %v65 = vld [vmem:[%s0 + $0xe0] sm:$0xff]
  %v66 = vld [vmem:[%s0 + $0xe8] sm:$0xff]
  %v67 = vld [vmem:[%s0 + $0xf0] sm:$0xff]
  %v68 = vld [vmem:[%s0 + $0xf8] sm:$0xff]
  %v69 = vld [vmem:[%s0 + $0x100] sm:$0xff]
  %v70 = vld [vmem:[%s0 + $0x108] sm:$0xff]
  %v71 = vld [vmem:[%s0 + $0x110] sm:$0xff]
  %v72 = vld [vmem:[%s0 + $0x118] sm:$0xff]
  %v73 = vld [vmem:[%s1] sm:$0xf]
  %v74 = vld [vmem:[%s1 + $0x4] sm:$0xf]
  %v75 = vld [vmem:[%s1 + $0x8] sm:$0xf]
  %v76 = vld [vmem:[%s1 + $0xc] sm:$0xf]
  %v77 = vld [vmem:[%s1 + $0x10] sm:$0xf]
  %v78 = vld [vmem:[%s1 + $0x14] sm:$0xf]
  %v79 = vld [vmem:[%s1 + $0x18] sm:$0xf]
  %v80 = vld [vmem:[%s1 + $0x1c] sm:$0xf]
  %v81 = vld [vmem:[%s1 + $0x20] sm:$0xf]
  %v82 = vld [vmem:[%s1 + $0x24] sm:$0xf]
  %v83 = vld [vmem:[%s1 + $0x28] sm:$0xf]
  %v84 = vld [vmem:[%s1 + $0x2c] sm:$0xf]
  %v85 = vld [vmem:[%s1 + $0x30] sm:$0xf]
  %v86 = vld [vmem:[%s1 + $0x34] sm:$0xf]
  %v87 = vld [vmem:[%s1 + $0x38] sm:$0xf]
  %v88 = vld [vmem:[%s1 + $0x3c] sm:$0xf]
  %v89 = vld [vmem:[%s1 + $0x40] sm:$0xf]
  %v90 = vld [vmem:[%s1 + $0x44] sm:$0xf]
  %v91 = vld [vmem:[%s1 + $0x48] sm:$0xf]
  %v92 = vld [vmem:[%s1 + $0x4c] sm:$0xf]
  %v93 = vld [vmem:[%s1 + $0x50] sm:$0xf]
  %v94 = vld [vmem:[%s1 + $0x54] sm:$0xf]
  %v95 = vld [vmem:[%s1 + $0x58] sm:$0xf]
  %v96 = vld [vmem:[%s1 + $0x5c] sm:$0xf]
  %v97 = vld [vmem:[%s1 + $0x60] sm:$0xf]
  %v98 = vld [vmem:[%s1 + $0x64] sm:$0xf]
  %v99 = vld [vmem:[%s1 + $0x68] sm:$0xf]
  %v100 = vld [vmem:[%s1 + $0x6c] sm:$0xf]
  %v101 = vld [vmem:[%s1 + $0x70] sm:$0xf]
  %v102 = vld [vmem:[%s1 + $0x74] sm:$0xf]
  %v103 = vld [vmem:[%s1 + $0x78] sm:$0xf]
  %v104 = vld [vmem:[%s1 + $0x7c] sm:$0xf]
  %v105 = vld [vmem:[%s1 + $0x80] sm:$0xf]
  %v106 = vld [vmem:[%s1 + $0x84] sm:$0xf]
  %v107 = vld [vmem:[%s1 + $0x88] sm:$0xf]
  %v108 = vld [vmem:[%s1 + $0x8c] sm:$0xf]
  %v109 = vld [vmem:[%s1 + $0x90] sm:$0xf]
  %v110 = vld [vmem:[%s1 + $0x94] sm:$0xf]
  %v111 = vld [vmem:[%s1 + $0x98] sm:$0xf]
  %v112 = vld [vmem:[%s1 + $0x9c] sm:$0xf]
  %v113 = vld [vmem:[%s1 + $0xa0] sm:$0xf]
  %v114 = vld [vmem:[%s1 + $0xa4] sm:$0xf]
  %v115 = vld [vmem:[%s1 + $0xa8] sm:$0xf]
  %v116 = vld [vmem:[%s1 + $0xac] sm:$0xf]
  %v117 = vld [vmem:[%s1 + $0xb0] sm:$0xf]
  %v118 = vld [vmem:[%s1 + $0xb4] sm:$0xf]
  %v119 = vld [vmem:[%s1 + $0xb8] sm:$0xf]
  %v120 = vld [vmem:[%s1 + $0xbc] sm:$0xf]
  %v121 = vld [vmem:[%s1 + $0xc0] sm:$0xf]
  %v122 = vld [vmem:[%s1 + $0xc4] sm:$0xf]
  %v123 = vld [vmem:[%s1 + $0xc8] sm:$0xf]
  %v124 = vld [vmem:[%s1 + $0xcc] sm:$0xf]
  %v125 = vld [vmem:[%s1 + $0xd0] sm:$0xf]
  %v126 = vld [vmem:[%s1 + $0xd4] sm:$0xf]
  %v127 = vld [vmem:[%s1 + $0xd8] sm:$0xf]
  %v128 = vld [vmem:[%s1 + $0xdc] sm:$0xf]
  %v129 = vld [vmem:[%s1 + $0xe0] sm:$0xf]
  %v130 = vld [vmem:[%s1 + $0xe4] sm:$0xf]
  %v131 = vld [vmem:[%s1 + $0xe8] sm:$0xf]
  %v132 = vld [vmem:[%s1 + $0xec] sm:$0xf]
  %v133 = vld [vmem:[%s1 + $0xf0] sm:$0xf]
  %v134 = vld [vmem:[%s1 + $0xf4] sm:$0xf]
  %v135 = vld [vmem:[%s1 + $0xf8] sm:$0xf]
  %v136 = vld [vmem:[%s1 + $0xfc] sm:$0xf]
  %v137 = vld [vmem:[%s1 + $0x100] sm:$0xf]
  %v138 = vld [vmem:[%s1 + $0x104] sm:$0xf]
  %v139 = vld [vmem:[%s1 + $0x108] sm:$0xf]
  %v140 = vld [vmem:[%s1 + $0x10c] sm:$0xf]
  %v141 = vld [vmem:[%s1 + $0x110] sm:$0xf]
  %v142 = vld [vmem:[%s1 + $0x114] sm:$0xf]
  %v143 = vld [vmem:[%s1 + $0x118] sm:$0xf]
  %v144 = vld [vmem:[%s1 + $0x11c] sm:$0xf]
  %v145 = vld [vmem:[%s1 + $0x120] sm:$0xf]
  %v146 = vld [vmem:[%s1 + $0x124] sm:$0xf]
  %v147 = vld [vmem:[%s1 + $0x128] sm:$0xf]
  %v148 = vld [vmem:[%s1 + $0x12c] sm:$0xf]
  %v149 = vld [vmem:[%s1 + $0x130] sm:$0xf]
  %v150 = vld [vmem:[%s1 + $0x134] sm:$0xf]
  %v151 = vld [vmem:[%s1 + $0x138] sm:$0xf]
  %v152 = vld [vmem:[%s1 + $0x13c] sm:$0xf]
  %v153 = vld [vmem:[%s1 + $0x140] sm:$0xf]
  %v154 = vld [vmem:[%s1 + $0x144] sm:$0xf]
  %v155 = vld [vmem:[%s1 + $0x148] sm:$0xf]
  %v156 = vld [vmem:[%s1 + $0x14c] sm:$0xf]
  %v157 = vld [vmem:[%s1 + $0x150] sm:$0xf]
  %v158 = vld [vmem:[%s1 + $0x154] sm:$0xf]
  %v159 = vld [vmem:[%s1 + $0x158] sm:$0xf]
  %v160 = vld [vmem:[%s1 + $0x15c] sm:$0xf]
  %v161 = vld [vmem:[%s1 + $0x160] sm:$0xf]
  %v162 = vld [vmem:[%s1 + $0x164] sm:$0xf]
  %v163 = vld [vmem:[%s1 + $0x168] sm:$0xf]
  %v164 = vld [vmem:[%s1 + $0x16c] sm:$0xf]
  %v165 = vld [vmem:[%s1 + $0x170] sm:$0xf]
  %v166 = vld [vmem:[%s1 + $0x174] sm:$0xf]
  %v167 = vld [vmem:[%s1 + $0x178] sm:$0xf]
  %v168 = vld [vmem:[%s1 + $0x17c] sm:$0xf]
  %v169 = vld [vmem:[%s1 + $0x180] sm:$0xf]
  %v170 = vld [vmem:[%s1 + $0x184] sm:$0xf]
  %v171 = vld [vmem:[%s1 + $0x188] sm:$0xf]
  %v172 = vld [vmem:[%s1 + $0x18c] sm:$0xf]
  %v173 = vld [vmem:[%s1 + $0x190] sm:$0xf]
  %v174 = vld [vmem:[%s1 + $0x194] sm:$0xf]
  %v175 = vld [vmem:[%s1 + $0x198] sm:$0xf]
  %v176 = vld [vmem:[%s1 + $0x19c] sm:$0xf]
  %v177 = vld [vmem:[%s1 + $0x1a0] sm:$0xf]
  %v178 = vld [vmem:[%s1 + $0x1a4] sm:$0xf]
  %v179 = vld [vmem:[%s1 + $0x1a8] sm:$0xf]
  %v180 = vld [vmem:[%s1 + $0x1ac] sm:$0xf]
  %v181 = vld [vmem:[%s1 + $0x1b0] sm:$0xf]
  %v182 = vld [vmem:[%s1 + $0x1b4] sm:$0xf]
  %v183 = vld [vmem:[%s1 + $0x1b8] sm:$0xf]
  %v184 = vld [vmem:[%s1 + $0x1bc] sm:$0xf]
  %v185 = vld [vmem:[%s1 + $0x1c0] sm:$0xf]
  %v186 = vld [vmem:[%s1 + $0x1c4] sm:$0xf]
  %v187 = vld [vmem:[%s1 + $0x1c8] sm:$0xf]
  %v188 = vld [vmem:[%s1 + $0x1cc] sm:$0xf]
  %v189 = vld [vmem:[%s1 + $0x1d0] sm:$0xf]
  %v190 = vld [vmem:[%s1 + $0x1d4] sm:$0xf]
  %v191 = vld [vmem:[%s1 + $0x1d8] sm:$0xf]
  %v192 = vld [vmem:[%s1 + $0x1dc] sm:$0xf]
  %v193 = vld [vmem:[%s1 + $0x1e0] sm:$0xf]
  %v194 = vld [vmem:[%s1 + $0x1e4] sm:$0xf]
  %v195 = vld [vmem:[%s1 + $0x1e8] sm:$0xf]
  %v196 = vld [vmem:[%s1 + $0x1ec] sm:$0xf]
  %v197 = vld [vmem:[%s1 + $0x1f0] sm:$0xf]
  %v198 = vld [vmem:[%s1 + $0x1f4] sm:$0xf]
  %v199 = vld [vmem:[%s1 + $0x1f8] sm:$0xf]
  %v200 = vld [vmem:[%s1 + $0x1fc] sm:$0xf]
  %v237 = vunpack.c.l.b16 %v37
  %v238 = vunpack.c.h.b16 %v37
  %v239 = vunpack.c.l.b16 %v38
  %v240 = vunpack.c.h.b16 %v38
  %v241 = vunpack.c.l.b16 %v39
  %v242 = vunpack.c.h.b16 %v39
  %v243 = vunpack.c.l.b16 %v40
  %v244 = vunpack.c.h.b16 %v40
  %v245 = vunpack.c.l.b16 %v41
  %v246 = vunpack.c.h.b16 %v41
  %v247 = vunpack.c.l.b16 %v42
  %v248 = vunpack.c.h.b16 %v42
  %v249 = vunpack.c.l.b16 %v43
  %v250 = vunpack.c.h.b16 %v43
  %v251 = vunpack.c.l.b16 %v44
  %v252 = vunpack.c.h.b16 %v44
  %v253 = vunpack.c.l.b16 %v45
  %v254 = vunpack.c.h.b16 %v45
  %v255 = vunpack.c.l.b16 %v46
  %v256 = vunpack.c.h.b16 %v46
  %v257 = vunpack.c.l.b16 %v47
  %v258 = vunpack.c.h.b16 %v47
  %v259 = vunpack.c.l.b16 %v48
  %v260 = vunpack.c.h.b16 %v48
  %v261 = vunpack.c.l.b16 %v49
  %v262 = vunpack.c.h.b16 %v49
  %v263 = vunpack.c.l.b16 %v50
  %v264 = vunpack.c.h.b16 %v50
  %v265 = vunpack.c.l.b16 %v51
  %v266 = vunpack.c.h.b16 %v51
  %v267 = vunpack.c.l.b16 %v52
  %v268 = vunpack.c.h.b16 %v52
  %v269 = vunpack.c.l.b16 %v53
  %v270 = vunpack.c.h.b16 %v53
  %v271 = vunpack.c.l.b16 %v54
  %v272 = vunpack.c.h.b16 %v54
  %v273 = vunpack.c.l.b16 %v55
  %v274 = vunpack.c.h.b16 %v55
  %v275 = vunpack.c.l.b16 %v56
  %v276 = vunpack.c.h.b16 %v56
  %v277 = vunpack.c.l.b16 %v57
  %v278 = vunpack.c.h.b16 %v57
  %v279 = vunpack.c.l.b16 %v58
  %v280 = vunpack.c.h.b16 %v58
  %v281 = vunpack.c.l.b16 %v59
  %v282 = vunpack.c.h.b16 %v59
  %v283 = vunpack.c.l.b16 %v60
  %v284 = vunpack.c.h.b16 %v60
  %v285 = vunpack.c.l.b16 %v61
  %v286 = vunpack.c.h.b16 %v61
  %v287 = vunpack.c.l.b16 %v62
  %v288 = vunpack.c.h.b16 %v62
  %v289 = vunpack.c.l.b16 %v63
  %v290 = vunpack.c.h.b16 %v63
  %v291 = vunpack.c.l.b16 %v64
  %v292 = vunpack.c.h.b16 %v64
  %v293 = vunpack.c.l.b16 %v65
  %v294 = vunpack.c.h.b16 %v65
  %v295 = vunpack.c.l.b16 %v66
  %v296 = vunpack.c.h.b16 %v66
  %v297 = vunpack.c.l.b16 %v67
  %v298 = vunpack.c.h.b16 %v67
  %v299 = vunpack.c.l.b16 %v68
  %v300 = vunpack.c.h.b16 %v68
  %v301 = vunpack.c.l.b16 %v69
  %v302 = vunpack.c.h.b16 %v69
  %v303 = vunpack.c.l.b16 %v70
  %v304 = vunpack.c.h.b16 %v70
  %v305 = vunpack.c.l.b16 %v71
  %v306 = vunpack.c.h.b16 %v71
  %v307 = vunpack.c.l.b16 %v72
  %v308 = vunpack.c.h.b16 %v72
  %v309 = vpack.c.b16 %v245, %v237
  %v310 = vpack.c.b16 %v246, %v238
  %v311 = vpack.c.b16 %v247, %v239
  %v312 = vpack.c.b16 %v248, %v240
  %v313 = vpack.c.b16 %v249, %v241
  %v314 = vpack.c.b16 %v250, %v242
  %v315 = vpack.c.b16 %v251, %v243
  %v316 = vpack.c.b16 %v252, %v244
  %v317 = vpack.c.b16 %v261, %v253
  %v318 = vpack.c.b16 %v262, %v254
  %v319 = vpack.c.b16 %v263, %v255
  %v320 = vpack.c.b16 %v264, %v256
  %v321 = vpack.c.b16 %v265, %v257
  %v322 = vpack.c.b16 %v266, %v258
  %v323 = vpack.c.b16 %v267, %v259
  %v324 = vpack.c.b16 %v268, %v260
  %v325 = vpack.c.b16 %v277, %v269
  %v326 = vpack.c.b16 %v278, %v270
  %v327 = vpack.c.b16 %v279, %v271
  %v328 = vpack.c.b16 %v280, %v272
  %v329 = vpack.c.b16 %v281, %v273
  %v330 = vpack.c.b16 %v282, %v274
  %v331 = vpack.c.b16 %v283, %v275
  %v332 = vpack.c.b16 %v284, %v276
  %v333 = vpack.c.b16 %v293, %v285
  %v334 = vpack.c.b16 %v294, %v286
  %v335 = vpack.c.b16 %v295, %v287
  %v336 = vpack.c.b16 %v296, %v288
  %v337 = vpack.c.b16 %v297, %v289
  %v338 = vpack.c.b16 %v298, %v290
  %v339 = vpack.c.b16 %v299, %v291
  %v340 = vpack.c.b16 %v300, %v292
  %v341 = vpack.c.b16 %v301, %v301
  %v342 = vpack.c.b16 %v302, %v302
  %v343 = vpack.c.b16 %v303, %v303
  %v344 = vpack.c.b16 %v304, %v304
  %v345 = vpack.c.b16 %v305, %v305
  %v346 = vpack.c.b16 %v306, %v306
  %v347 = vpack.c.b16 %v307, %v307
  %v348 = vpack.c.b16 %v308, %v308
  %v517 = vunpack.c.l.b16 %v73
  %v518 = vunpack.c.l.b16 %v74
  %v519 = vunpack.c.l.b16 %v75
  %v520 = vunpack.c.l.b16 %v76
  %v521 = vunpack.c.l.b16 %v77
  %v522 = vunpack.c.l.b16 %v78
  %v523 = vunpack.c.l.b16 %v79
  %v524 = vunpack.c.l.b16 %v80
  %v525 = vunpack.c.l.b16 %v81
  %v526 = vunpack.c.l.b16 %v82
  %v527 = vunpack.c.l.b16 %v83
  %v528 = vunpack.c.l.b16 %v84
  %v529 = vunpack.c.l.b16 %v85
  %v530 = vunpack.c.l.b16 %v86
  %v531 = vunpack.c.l.b16 %v87
  %v532 = vunpack.c.l.b16 %v88
  %v533 = vunpack.c.l.b16 %v89
  %v534 = vunpack.c.l.b16 %v90
  %v535 = vunpack.c.l.b16 %v91
  %v536 = vunpack.c.l.b16 %v92
  %v537 = vunpack.c.l.b16 %v93
  %v538 = vunpack.c.l.b16 %v94
  %v539 = vunpack.c.l.b16 %v95
  %v540 = vunpack.c.l.b16 %v96
  %v541 = vunpack.c.l.b16 %v97
  %v542 = vunpack.c.l.b16 %v98
  %v543 = vunpack.c.l.b16 %v99
  %v544 = vunpack.c.l.b16 %v100
  %v545 = vunpack.c.l.b16 %v101
  %v546 = vunpack.c.l.b16 %v102
  %v547 = vunpack.c.l.b16 %v103
  %v548 = vunpack.c.l.b16 %v104
  %v549 = vunpack.c.l.b16 %v105
  %v550 = vunpack.c.l.b16 %v106
  %v551 = vunpack.c.l.b16 %v107
  %v552 = vunpack.c.l.b16 %v108
  %v553 = vunpack.c.l.b16 %v109
  %v554 = vunpack.c.l.b16 %v110
  %v555 = vunpack.c.l.b16 %v111
  %v556 = vunpack.c.l.b16 %v112
  %v557 = vunpack.c.l.b16 %v113
  %v558 = vunpack.c.l.b16 %v114
  %v559 = vunpack.c.l.b16 %v115
  %v560 = vunpack.c.l.b16 %v116
  %v561 = vunpack.c.l.b16 %v117
  %v562 = vunpack.c.l.b16 %v118
  %v563 = vunpack.c.l.b16 %v119
  %v564 = vunpack.c.l.b16 %v120
  %v565 = vunpack.c.l.b16 %v121
  %v566 = vunpack.c.l.b16 %v122
  %v567 = vunpack.c.l.b16 %v123
  %v568 = vunpack.c.l.b16 %v124
  %v569 = vunpack.c.l.b16 %v125
  %v570 = vunpack.c.l.b16 %v126
  %v571 = vunpack.c.l.b16 %v127
  %v572 = vunpack.c.l.b16 %v128
  %v573 = vunpack.c.l.b16 %v129
  %v574 = vunpack.c.l.b16 %v130
  %v575 = vunpack.c.l.b16 %v131
  %v576 = vunpack.c.l.b16 %v132
  %v577 = vunpack.c.l.b16 %v133
  %v578 = vunpack.c.l.b16 %v134
  %v579 = vunpack.c.l.b16 %v135
  %v580 = vunpack.c.l.b16 %v136
  %v581 = vunpack.c.l.b16 %v137
  %v582 = vunpack.c.l.b16 %v138
  %v583 = vunpack.c.l.b16 %v139
  %v584 = vunpack.c.l.b16 %v140
  %v585 = vunpack.c.l.b16 %v141
  %v586 = vunpack.c.l.b16 %v142
  %v587 = vunpack.c.l.b16 %v143
  %v588 = vunpack.c.l.b16 %v144
  %v589 = vunpack.c.l.b16 %v145
  %v590 = vunpack.c.l.b16 %v146
  %v591 = vunpack.c.l.b16 %v147
  %v592 = vunpack.c.l.b16 %v148
  %v593 = vunpack.c.l.b16 %v149
  %v594 = vunpack.c.l.b16 %v150
  %v595 = vunpack.c.l.b16 %v151
  %v596 = vunpack.c.l.b16 %v152
  %v597 = vunpack.c.l.b16 %v153
  %v598 = vunpack.c.l.b16 %v154
  %v599 = vunpack.c.l.b16 %v155
  %v600 = vunpack.c.l.b16 %v156
  %v601 = vunpack.c.l.b16 %v157
  %v602 = vunpack.c.l.b16 %v158
  %v603 = vunpack.c.l.b16 %v159
  %v604 = vunpack.c.l.b16 %v160
  %v605 = vunpack.c.l.b16 %v161
  %v606 = vunpack.c.l.b16 %v162
  %v607 = vunpack.c.l.b16 %v163
  %v608 = vunpack.c.l.b16 %v164
  %v609 = vunpack.c.l.b16 %v165
  %v610 = vunpack.c.l.b16 %v166
  %v611 = vunpack.c.l.b16 %v167
  %v612 = vunpack.c.l.b16 %v168
  %v613 = vunpack.c.l.b16 %v169
  %v614 = vunpack.c.l.b16 %v170
  %v615 = vunpack.c.l.b16 %v171
  %v616 = vunpack.c.l.b16 %v172
  %v617 = vunpack.c.l.b16 %v173
  %v618 = vunpack.c.l.b16 %v174
  %v619 = vunpack.c.l.b16 %v175
  %v620 = vunpack.c.l.b16 %v176
  %v621 = vunpack.c.l.b16 %v177
  %v622 = vunpack.c.l.b16 %v178
  %v623 = vunpack.c.l.b16 %v179
  %v624 = vunpack.c.l.b16 %v180
  %v625 = vunpack.c.l.b16 %v181
  %v626 = vunpack.c.l.b16 %v182
  %v627 = vunpack.c.l.b16 %v183
  %v628 = vunpack.c.l.b16 %v184
  %v629 = vunpack.c.l.b16 %v185
  %v630 = vunpack.c.l.b16 %v186
  %v631 = vunpack.c.l.b16 %v187
  %v632 = vunpack.c.l.b16 %v188
  %v633 = vunpack.c.l.b16 %v189
  %v634 = vunpack.c.l.b16 %v190
  %v635 = vunpack.c.l.b16 %v191
  %v636 = vunpack.c.l.b16 %v192
  %v637 = vunpack.c.l.b16 %v193
  %v638 = vunpack.c.l.b16 %v194
  %v639 = vunpack.c.l.b16 %v195
  %v640 = vunpack.c.l.b16 %v196
  %v641 = vunpack.c.l.b16 %v197
  %v642 = vunpack.c.l.b16 %v198
  %v643 = vunpack.c.l.b16 %v199
  %v644 = vunpack.c.l.b16 %v200
  %v645 = vpack.c.b16 %v518, %v517
  %v646 = vpack.c.b16 %v520, %v519
  %v647 = vpack.c.b16 %v522, %v521
  %v648 = vpack.c.b16 %v524, %v523
  %v649 = vpack.c.b16 %v526, %v525
  %v650 = vpack.c.b16 %v528, %v527
  %v651 = vpack.c.b16 %v530, %v529
  %v652 = vpack.c.b16 %v532, %v531
  %v653 = vpack.c.b16 %v534, %v533
  %v654 = vpack.c.b16 %v536, %v535
  %v655 = vpack.c.b16 %v538, %v537
  %v656 = vpack.c.b16 %v540, %v539
  %v657 = vpack.c.b16 %v542, %v541
  %v658 = vpack.c.b16 %v544, %v543
  %v659 = vpack.c.b16 %v546, %v545
  %v660 = vpack.c.b16 %v548, %v547
  %v661 = vpack.c.b16 %v550, %v549
  %v662 = vpack.c.b16 %v552, %v551
  %v663 = vpack.c.b16 %v554, %v553
  %v664 = vpack.c.b16 %v556, %v555
  %v665 = vpack.c.b16 %v558, %v557
  %v666 = vpack.c.b16 %v560, %v559
  %v667 = vpack.c.b16 %v562, %v561
  %v668 = vpack.c.b16 %v564, %v563
  %v669 = vpack.c.b16 %v566, %v565
  %v670 = vpack.c.b16 %v568, %v567
  %v671 = vpack.c.b16 %v570, %v569
  %v672 = vpack.c.b16 %v572, %v571
  %v673 = vpack.c.b16 %v574, %v573
  %v674 = vpack.c.b16 %v576, %v575
  %v675 = vpack.c.b16 %v578, %v577
  %v676 = vpack.c.b16 %v580, %v579
  %v677 = vpack.c.b16 %v582, %v581
  %v678 = vpack.c.b16 %v584, %v583
  %v679 = vpack.c.b16 %v586, %v585
  %v680 = vpack.c.b16 %v588, %v587
  %v681 = vpack.c.b16 %v590, %v589
  %v682 = vpack.c.b16 %v592, %v591
  %v683 = vpack.c.b16 %v594, %v593
  %v684 = vpack.c.b16 %v596, %v595
  %v685 = vpack.c.b16 %v598, %v597
  %v686 = vpack.c.b16 %v600, %v599
  %v687 = vpack.c.b16 %v602, %v601
  %v688 = vpack.c.b16 %v604, %v603
  %v689 = vpack.c.b16 %v606, %v605
  %v690 = vpack.c.b16 %v608, %v607
  %v691 = vpack.c.b16 %v610, %v609
  %v692 = vpack.c.b16 %v612, %v611
  %v693 = vpack.c.b16 %v614, %v613
  %v694 = vpack.c.b16 %v616, %v615
  %v695 = vpack.c.b16 %v618, %v617
  %v696 = vpack.c.b16 %v620, %v619
  %v697 = vpack.c.b16 %v622, %v621
  %v698 = vpack.c.b16 %v624, %v623
  %v699 = vpack.c.b16 %v626, %v625
  %v700 = vpack.c.b16 %v628, %v627
  %v701 = vpack.c.b16 %v630, %v629
  %v702 = vpack.c.b16 %v632, %v631
  %v703 = vpack.c.b16 %v634, %v633
  %v704 = vpack.c.b16 %v636, %v635
  %v705 = vpack.c.b16 %v638, %v637
  %v706 = vpack.c.b16 %v640, %v639
  %v707 = vpack.c.b16 %v642, %v641
  %v708 = vpack.c.b16 %v644, %v643
  %773 = vmatprep.subr.bf16.mxu0 0
  %774 = vmatpush1.bf16.msra.mxu0 %v645
  %775 = vmatprep.subr.bf16.mxu0 0
  %776 = vmatpush1.bf16.msra.mxu0 %v646
  %777 = vmatprep.subr.bf16.mxu0 0
  %778 = vmatpush1.bf16.msra.mxu0 %v647
  %779 = vmatprep.subr.bf16.mxu0 0
  %780 = vmatpush1.bf16.msra.mxu0 %v648
  %781 = vmatprep.subr.bf16.mxu0 0
  %782 = vmatpush1.bf16.msra.mxu0 %v649
  %783 = vmatprep.subr.bf16.mxu0 0
  %784 = vmatpush1.bf16.msra.mxu0 %v650
  %785 = vmatprep.subr.bf16.mxu0 0
  %786 = vmatpush1.bf16.msra.mxu0 %v651
  %787 = vmatprep.subr.bf16.mxu0 0
  %788 = vmatpush1.bf16.msra.mxu0 %v652
  %789 = vmatprep.subr.bf16.mxu0 0
  %790 = vmatpush1.bf16.msra.mxu0 %v653
  %791 = vmatprep.subr.bf16.mxu0 0
  %792 = vmatpush1.bf16.msra.mxu0 %v654
  %793 = vmatprep.subr.bf16.mxu0 0
  %794 = vmatpush1.bf16.msra.mxu0 %v655
  %795 = vmatprep.subr.bf16.mxu0 0
  %796 = vmatpush1.bf16.msra.mxu0 %v656
  %797 = vmatprep.subr.bf16.mxu0 0
  %798 = vmatpush1.bf16.msra.mxu0 %v657
  %799 = vmatprep.subr.bf16.mxu0 0
  %800 = vmatpush1.bf16.msra.mxu0 %v658
  %801 = vmatprep.subr.bf16.mxu0 0
  %802 = vmatpush1.bf16.msra.mxu0 %v659
  %803 = vmatprep.subr.bf16.mxu0 0
  %804 = vmatpush1.bf16.msra.mxu0 %v660
  %805 = vmatprep.mubr.bf16.mxu0 %v310
  %806 = vmatmul.mubr.bf16.gmra.mrb[0].mxu0 %v309
  %v807 = vpop.f32.mrb[0].mxu0
  %v808 = vadd.f32 0.0, %v807
  %v809 = vpop.f32.mrb[0].mxu0
  %v810 = vpop.f32.mrb[0].mxu0
  %v811 = vadd.f32 0.0, %v810
  %v812 = vpop.f32.mrb[0].mxu0
  %813 = vmatprep.mubr.bf16.mxu0 %v318
  %814 = vmatmul.mubr.bf16.gmra.mrb[0].mxu0 %v317
  %v815 = vpop.f32.mrb[0].mxu0
  %v816 = vadd.f32 0.0, %v815
  %v817 = vpop.f32.mrb[0].mxu0
  %v818 = vpop.f32.mrb[0].mxu0
  %v819 = vadd.f32 0.0, %v818
  %v820 = vpop.f32.mrb[0].mxu0
  %821 = vmatprep.mubr.bf16.mxu0 %v326
  %822 = vmatmul.mubr.bf16.gmra.mrb[0].mxu0 %v325
  %v823 = vpop.f32.mrb[0].mxu0
  %v824 = vadd.f32 0.0, %v823
  %v825 = vpop.f32.mrb[0].mxu0
  %v826 = vpop.f32.mrb[0].mxu0
  %v827 = vadd.f32 0.0, %v826
  %v828 = vpop.f32.mrb[0].mxu0
  %829 = vmatprep.mubr.bf16.mxu0 %v334
  %830 = vmatmul.mubr.bf16.gmra.mrb[0].mxu0 %v333
  %v831 = vpop.f32.mrb[0].mxu0
  %v832 = vadd.f32 0.0, %v831
  %v833 = vpop.f32.mrb[0].mxu0
  %v834 = vpop.f32.mrb[0].mxu0
  %v835 = vadd.f32 0.0, %v834
  %v836 = vpop.f32.mrb[0].mxu0
  %837 = vmatprep.mubr.bf16.mxu0 %v342
  %838 = vmatmul.mubr.bf16.gmra.mrb[0].mxu0 %v341
  %v839 = vpop.f32.mrb[0].mxu0
  %v840 = vadd.f32 0.0, %v839
  %v841 = vpop.f32.mrb[0].mxu0
  %v842 = vpop.f32.mrb[0].mxu0
  %v843 = vpop.f32.mrb[0].mxu0
  %844 = vdwg.mxu0
  %845 = vmatprep.subr.bf16.mxu0 0
  %846 = vmatpush1.bf16.msra.mxu0 %v661
  %847 = vmatprep.subr.bf16.mxu0 0
  %848 = vmatpush1.bf16.msra.mxu0 %v662
  %849 = vmatprep.subr.bf16.mxu0 0
  %850 = vmatpush1.bf16.msra.mxu0 %v663
  %851 = vmatprep.subr.bf16.mxu0 0
  %852 = vmatpush1.bf16.msra.mxu0 %v664
  %853 = vmatprep.subr.bf16.mxu0 0
  %854 = vmatpush1.bf16.msra.mxu0 %v665
  %855 = vmatprep.subr.bf16.mxu0 0
  %856 = vmatpush1.bf16.msra.mxu0 %v666
  %857 = vmatprep.subr.bf16.mxu0 0
  %858 = vmatpush1.bf16.msra.mxu0 %v667
  %859 = vmatprep.subr.bf16.mxu0 0
  %860 = vmatpush1.bf16.msra.mxu0 %v668
  %861 = vmatprep.subr.bf16.mxu0 0
  %862 = vmatpush1.bf16.msra.mxu0 %v669
  %863 = vmatprep.subr.bf16.mxu0 0
  %864 = vmatpush1.bf16.msra.mxu0 %v670
  %865 = vmatprep.subr.bf16.mxu0 0
  %866 = vmatpush1.bf16.msra.mxu0 %v671
  %867 = vmatprep.subr.bf16.mxu0 0
  %868 = vmatpush1.bf16.msra.mxu0 %v672
  %869 = vmatprep.subr.bf16.mxu0 0
  %870 = vmatpush1.bf16.msra.mxu0 %v673
  %871 = vmatprep.subr.bf16.mxu0 0
  %872 = vmatpush1.bf16.msra.mxu0 %v674
  %873 = vmatprep.subr.bf16.mxu0 0
  %874 = vmatpush1.bf16.msra.mxu0 %v675
  %875 = vmatprep.subr.bf16.mxu0 0
  %876 = vmatpush1.bf16.msra.mxu0 %v676
  %877 = vmatprep.mubr.bf16.mxu0 %v312
  %878 = vmatmul.mubr.bf16.gmra.mrb[0].mxu0 %v311
  %v879 = vpop.f32.mrb[0].mxu0
  %v880 = vadd.f32 %v808, %v879
  %v881 = vpop.f32.mrb[0].mxu0
  %v882 = vpop.f32.mrb[0].mxu0
  %v883 = vadd.f32 %v811, %v882
  %v884 = vpop.f32.mrb[0].mxu0
  %885 = vmatprep.mubr.bf16.mxu0 %v320
  %886 = vmatmul.mubr.bf16.gmra.mrb[0].mxu0 %v319
  %v887 = vpop.f32.mrb[0].mxu0
  %v888 = vadd.f32 %v816, %v887
  %v889 = vpop.f32.mrb[0].mxu0
  %v890 = vpop.f32.mrb[0].mxu0
  %v891 = vadd.f32 %v819, %v890
  %v892 = vpop.f32.mrb[0].mxu0
  %893 = vmatprep.mubr.bf16.mxu0 %v328
  %894 = vmatmul.mubr.bf16.gmra.mrb[0].mxu0 %v327
  %v895 = vpop.f32.mrb[0].mxu0
  %v896 = vadd.f32 %v824, %v895
  %v897 = vpop.f32.mrb[0].mxu0
  %v898 = vpop.f32.mrb[0].mxu0
  %v899 = vadd.f32 %v827, %v898
  %v900 = vpop.f32.mrb[0].mxu0
  %901 = vmatprep.mubr.bf16.mxu0 %v336
  %902 = vmatmul.mubr.bf16.gmra.mrb[0].mxu0 %v335
  %v903 = vpop.f32.mrb[0].mxu0
  %v904 = vadd.f32 %v832, %v903
  %v905 = vpop.f32.mrb[0].mxu0
  %v906 = vpop.f32.mrb[0].mxu0
  %v907 = vadd.f32 %v835, %v906
  %v908 = vpop.f32.mrb[0].mxu0
  %909 = vmatprep.mubr.bf16.mxu0 %v344
  %910 = vmatmul.mubr.bf16.gmra.mrb[0].mxu0 %v343
  %v911 = vpop.f32.mrb[0].mxu0
  %v912 = vadd.f32 %v840, %v911
  %v913 = vpop.f32.mrb[0].mxu0
  %v914 = vpop.f32.mrb[0].mxu0
  %v915 = vpop.f32.mrb[0].mxu0
  %916 = vdwg.mxu0
  %917 = vmatprep.subr.bf16.mxu0 0
  %918 = vmatpush1.bf16.msra.mxu0 %v677
  %919 = vmatprep.subr.bf16.mxu0 0
  %920 = vmatpush1.bf16.msra.mxu0 %v678
  %921 = vmatprep.subr.bf16.mxu0 0
  %922 = vmatpush1.bf16.msra.mxu0 %v679
  %923 = vmatprep.subr.bf16.mxu0 0
  %924 = vmatpush1.bf16.msra.mxu0 %v680
  %925 = vmatprep.subr.bf16.mxu0 0
  %926 = vmatpush1.bf16.msra.mxu0 %v681
  %927 = vmatprep.subr.bf16.mxu0 0
  %928 = vmatpush1.bf16.msra.mxu0 %v682
  %929 = vmatprep.subr.bf16.mxu0 0
  %930 = vmatpush1.bf16.msra.mxu0 %v683
  %931 = vmatprep.subr.bf16.mxu0 0
  %932 = vmatpush1.bf16.msra.mxu0 %v684
  %933 = vmatprep.subr.bf16.mxu0 0
  %934 = vmatpush1.bf16.msra.mxu0 %v685
  %935 = vmatprep.subr.bf16.mxu0 0
  %936 = vmatpush1.bf16.msra.mxu0 %v686
  %937 = vmatprep.subr.bf16.mxu0 0
  %938 = vmatpush1.bf16.msra.mxu0 %v687
  %939 = vmatprep.subr.bf16.mxu0 0
  %940 = vmatpush1.bf16.msra.mxu0 %v688
  %941 = vmatprep.subr.bf16.mxu0 0
  %942 = vmatpush1.bf16.msra.mxu0 %v689
  %943 = vmatprep.subr.bf16.mxu0 0
  %944 = vmatpush1.bf16.msra.mxu0 %v690
  %945 = vmatprep.subr.bf16.mxu0 0
  %946 = vmatpush1.bf16.msra.mxu0 %v691
  %947 = vmatprep.subr.bf16.mxu0 0
  %948 = vmatpush1.bf16.msra.mxu0 %v692
  %949 = vmatprep.mubr.bf16.mxu0 %v314
  %950 = vmatmul.mubr.bf16.gmra.mrb[0].mxu0 %v313
  %v951 = vpop.f32.mrb[0].mxu0
  %v952 = vadd.f32 %v880, %v951
  %v953 = vpop.f32.mrb[0].mxu0
  %v954 = vpop.f32.mrb[0].mxu0
  %v955 = vadd.f32 %v883, %v954
  %v956 = vpop.f32.mrb[0].mxu0
  %957 = vmatprep.mubr.bf16.mxu0 %v322
  %958 = vmatmul.mubr.bf16.gmra.mrb[0].mxu0 %v321
  %v959 = vpop.f32.mrb[0].mxu0
  %v960 = vadd.f32 %v888, %v959
  %v961 = vpop.f32.mrb[0].mxu0
  %v962 = vpop.f32.mrb[0].mxu0
  %v963 = vadd.f32 %v891, %v962
  %v964 = vpop.f32.mrb[0].mxu0
  %965 = vmatprep.mubr.bf16.mxu0 %v330
  %966 = vmatmul.mubr.bf16.gmra.mrb[0].mxu0 %v329
  %v967 = vpop.f32.mrb[0].mxu0
  %v968 = vadd.f32 %v896, %v967
  %v969 = vpop.f32.mrb[0].mxu0
  %v970 = vpop.f32.mrb[0].mxu0
  %v971 = vadd.f32 %v899, %v970
  %v972 = vpop.f32.mrb[0].mxu0
  %973 = vmatprep.mubr.bf16.mxu0 %v338
  %974 = vmatmul.mubr.bf16.gmra.mrb[0].mxu0 %v337
  %v975 = vpop.f32.mrb[0].mxu0
  %v976 = vadd.f32 %v904, %v975
  %v977 = vpop.f32.mrb[0].mxu0
  %v978 = vpop.f32.mrb[0].mxu0
  %v979 = vadd.f32 %v907, %v978
  %v980 = vpop.f32.mrb[0].mxu0
  %981 = vmatprep.mubr.bf16.mxu0 %v346
  %982 = vmatmul.mubr.bf16.gmra.mrb[0].mxu0 %v345
  %v983 = vpop.f32.mrb[0].mxu0
  %v984 = vadd.f32 %v912, %v983
  %v985 = vpop.f32.mrb[0].mxu0
  %v986 = vpop.f32.mrb[0].mxu0
  %v987 = vpop.f32.mrb[0].mxu0
  %988 = vdwg.mxu0
  %989 = vmatprep.subr.bf16.mxu0 0
  %990 = vmatpush1.bf16.msra.mxu0 %v693
  %991 = vmatprep.subr.bf16.mxu0 0
  %992 = vmatpush1.bf16.msra.mxu0 %v694
  %993 = vmatprep.subr.bf16.mxu0 0
  %994 = vmatpush1.bf16.msra.mxu0 %v695
  %995 = vmatprep.subr.bf16.mxu0 0
  %996 = vmatpush1.bf16.msra.mxu0 %v696
  %997 = vmatprep.subr.bf16.mxu0 0
  %998 = vmatpush1.bf16.msra.mxu0 %v697
  %999 = vmatprep.subr.bf16.mxu0 0
  %1000 = vmatpush1.bf16.msra.mxu0 %v698
  %1001 = vmatprep.subr.bf16.mxu0 0
  %1002 = vmatpush1.bf16.msra.mxu0 %v699
  %1003 = vmatprep.subr.bf16.mxu0 0
  %1004 = vmatpush1.bf16.msra.mxu0 %v700
  %1005 = vmatprep.subr.bf16.mxu0 0
  %1006 = vmatpush1.bf16.msra.mxu0 %v701
  %1007 = vmatprep.subr.bf16.mxu0 0
  %1008 = vmatpush1.bf16.msra.mxu0 %v702
  %1009 = vmatprep.subr.bf16.mxu0 0
  %1010 = vmatpush1.bf16.msra.mxu0 %v703
  %1011 = vmatprep.subr.bf16.mxu0 0
  %1012 = vmatpush1.bf16.msra.mxu0 %v704
  %1013 = vmatprep.subr.bf16.mxu0 0
  %1014 = vmatpush1.bf16.msra.mxu0 %v705
  %1015 = vmatprep.subr.bf16.mxu0 0
  %1016 = vmatpush1.bf16.msra.mxu0 %v706
  %1017 = vmatprep.subr.bf16.mxu0 0
  %1018 = vmatpush1.bf16.msra.mxu0 %v707
  %1019 = vmatprep.subr.bf16.mxu0 0
  %1020 = vmatpush1.bf16.msra.mxu0 %v708
  %1021 = vmatprep.mubr.bf16.mxu0 %v316
  %1022 = vmatmul.mubr.bf16.gmra.mrb[0].mxu0 %v315
  %v1023 = vpop.f32.mrb[0].mxu0
  %v1024 = vadd.f32 %v952, %v1023
  %v1025 = vpop.f32.mrb[0].mxu0
  %v1026 = vpop.f32.mrb[0].mxu0
  %v1027 = vadd.f32 %v955, %v1026
  %v1028 = vpop.f32.mrb[0].mxu0
  %1029 = vmatprep.mubr.bf16.mxu0 %v324
  %1030 = vmatmul.mubr.bf16.gmra.mrb[0].mxu0 %v323
  %v1031 = vpop.f32.mrb[0].mxu0
  %v1032 = vadd.f32 %v960, %v1031
  %v1033 = vpop.f32.mrb[0].mxu0
  %v1034 = vpop.f32.mrb[0].mxu0
  %v1035 = vadd.f32 %v963, %v1034
  %v1036 = vpop.f32.mrb[0].mxu0
  %1037 = vmatprep.mubr.bf16.mxu0 %v332
  %1038 = vmatmul.mubr.bf16.gmra.mrb[0].mxu0 %v331
  %v1039 = vpop.f32.mrb[0].mxu0
  %v1040 = vadd.f32 %v968, %v1039
  %v1041 = vpop.f32.mrb[0].mxu0
  %v1042 = vpop.f32.mrb[0].mxu0
  %v1043 = vadd.f32 %v971, %v1042
  %v1044 = vpop.f32.mrb[0].mxu0
  %1045 = vmatprep.mubr.bf16.mxu0 %v340
  %1046 = vmatmul.mubr.bf16.gmra.mrb[0].mxu0 %v339
  %v1047 = vpop.f32.mrb[0].mxu0
  %v1048 = vadd.f32 %v976, %v1047
  %v1049 = vpop.f32.mrb[0].mxu0
  %v1050 = vpop.f32.mrb[0].mxu0
  %v1051 = vadd.f32 %v979, %v1050
  %v1052 = vpop.f32.mrb[0].mxu0
  %1053 = vmatprep.mubr.bf16.mxu0 %v348
  %1054 = vmatmul.mubr.bf16.gmra.mrb[0].mxu0 %v347
  %v1055 = vpop.f32.mrb[0].mxu0
  %v1056 = vadd.f32 %v984, %v1055
  %v1057 = vpop.f32.mrb[0].mxu0
  %v1058 = vpop.f32.mrb[0].mxu0
  %v1059 = vpop.f32.mrb[0].mxu0
  %1060 = vdwg.mxu0
  %v1061 = vadd.f32 %v28, %v1024
  %v1062 = vadd.f32 %v29, %v1027
  %v1063 = vadd.f32 %v30, %v1032
  %v1064 = vadd.f32 %v31, %v1035
  %v1065 = vadd.f32 %v32, %v1040
  %v1066 = vadd.f32 %v33, %v1043
  %v1067 = vadd.f32 %v34, %v1048
  %v1068 = vadd.f32 %v35, %v1051
  %v1069 = vadd.f32 %v36, %v1056
  %1070 = vst [vmem:[#allocation2] sm:$0xff] %v1061
  %1071 = vst [vmem:[#allocation2 + $0x8] sm:$0xff] %v1062
  %1072 = vst [vmem:[#allocation2 + $0x10] sm:$0xff] %v1063
  %1073 = vst [vmem:[#allocation2 + $0x18] sm:$0xff] %v1064
  %1074 = vst [vmem:[#allocation2 + $0x20] sm:$0xff] %v1065
  %1075 = vst [vmem:[#allocation2 + $0x28] sm:$0xff] %v1066
  %1076 = vst [vmem:[#allocation2 + $0x30] sm:$0xff] %v1067
  %1077 = vst [vmem:[#allocation2 + $0x38] sm:$0xff] %v1068
  %1078 = vst [vmem:[#allocation2 + $0x40] sm:$0xff] %v1069
  // Predicated region
  $region18: #{discriminator_image.7} parent=0 // pred_check
    %p1079 = pneg %p15
  $region19: #{discriminator_image.7} parent=0 // pred_check_branch
    %1081 = sbr.rel (%p1079) target = $region21
  $region20: #{discriminator_image.7} parent=0 // pred_region
    %v1082 = vld [vmem:[#allocation2] sm:$0xff]
    %v1083 = vld [vmem:[#allocation2 + $0x8] sm:$0xff]
    %v1084 = vld [vmem:[#allocation2 + $0x10] sm:$0xff]
    %v1085 = vld [vmem:[#allocation2 + $0x18] sm:$0xff]
    %v1086 = vld [vmem:[#allocation2 + $0x20] sm:$0xff]
    %v1087 = vld [vmem:[#allocation2 + $0x28] sm:$0xff]
    %v1088 = vld [vmem:[#allocation2 + $0x30] sm:$0xff]
    %v1089 = vld [vmem:[#allocation2 + $0x38] sm:$0xff]
    %v1090 = vld [vmem:[#allocation2 + $0x40] sm:$0xff]
    %v1091 = vld [vmem:[%s2] sm:$0x1]
    %v1093 = vlaneseq
    %v1094 = vshrl.u32 %v1093, 7
    %v1095 = vsub.s32 0, %v1094
    %v1096 = vrot.slane %v1091, %v1095
    %v1098 = vadd.f32 %v1082, %v1096
    %v1099 = vadd.f32 %v1083, %v1096
    %v1100 = vadd.f32 %v1084, %v1096
    %v1101 = vadd.f32 %v1085, %v1096
    %v1102 = vadd.f32 %v1086, %v1096
    %v1103 = vadd.f32 %v1087, %v1096
    %v1104 = vadd.f32 %v1088, %v1096
    %v1105 = vadd.f32 %v1089, %v1096
    %v1106 = vadd.f32 %v1090, %v1096
    %vm1107 = vcmp.ge.f32.partialorder %v1098, 0.0
    %vm1108 = vcmp.ge.f32.partialorder %v1099, 0.0
    %vm1109 = vcmp.ge.f32.partialorder %v1100, 0.0
    %vm1110 = vcmp.ge.f32.partialorder %v1101, 0.0
    %vm1111 = vcmp.ge.f32.partialorder %v1102, 0.0
    %vm1112 = vcmp.ge.f32.partialorder %v1103, 0.0
    %vm1113 = vcmp.ge.f32.partialorder %v1104, 0.0
    %vm1114 = vcmp.ge.f32.partialorder %v1105, 0.0
    %vm1115 = vcmp.ge.f32.partialorder %v1106, 0.0
    %v1116 = vmul.f32 %v1098, 0.01
    %v1117 = vmul.f32 %v1099, 0.01
    %v1118 = vmul.f32 %v1100, 0.01
    %v1119 = vmul.f32 %v1101, 0.01
    %v1120 = vmul.f32 %v1102, 0.01
    %v1121 = vmul.f32 %v1103, 0.01
    %v1122 = vmul.f32 %v1104, 0.01
    %v1123 = vmul.f32 %v1105, 0.01
    %v1124 = vmul.f32 %v1106, 0.01
    %v1125 = vsel %vm1107, %v1098, %v1116
    %v1126 = vsel %vm1108, %v1099, %v1117
    %v1127 = vsel %vm1109, %v1100, %v1118
    %v1128 = vsel %vm1110, %v1101, %v1119
    %v1129 = vsel %vm1111, %v1102, %v1120
    %v1130 = vsel %vm1112, %v1103, %v1121
    %v1131 = vsel %vm1113, %v1104, %v1122
    %v1132 = vsel %vm1114, %v1105, %v1123
    %v1133 = vsel %vm1115, %v1106, %v1124
    %v1134 = vpack.c.bf16 %v1126, %v1125
    %v1135 = vpack.c.bf16 %v1128, %v1127
    %v1136 = vpack.c.bf16 %v1130, %v1129
    %v1137 = vpack.c.bf16 %v1132, %v1131
    %v1138 = vpack.c.bf16 %v1133, %v1133
    %v1144 = vunpack.c.l.b16 %v1134
    %v1145 = vunpack.c.h.b16 %v1134
    %v1146 = vunpack.c.l.b16 %v1135
    %v1147 = vunpack.c.h.b16 %v1135
    %v1148 = vunpack.c.l.b16 %v1136
    %v1149 = vunpack.c.h.b16 %v1136
    %v1150 = vunpack.c.l.b16 %v1137
    %v1151 = vunpack.c.h.b16 %v1137
    %v1152 = vunpack.c.l.b16 %v1138
    %v1153 = vpack.c.b16 %v1144, %v1144
    %v1154 = vpack.c.b16 %v1145, %v1145
    %v1155 = vpack.c.b16 %v1146, %v1146
    %v1156 = vpack.c.b16 %v1147, %v1147
    %v1157 = vpack.c.b16 %v1148, %v1148
    %v1158 = vpack.c.b16 %v1149, %v1149
    %v1159 = vpack.c.b16 %v1150, %v1150
    %v1160 = vpack.c.b16 %v1151, %v1151
    %v1161 = vpack.c.b16 %v1152, %v1152
    %1171 = vst [vmem:[%s3] sm:$0xf] %v1153
    %1172 = vst [vmem:[%s3 + $0x4] sm:$0xf] %v1154
    %1173 = vst [vmem:[%s3 + $0x8] sm:$0xf] %v1155
    %1174 = vst [vmem:[%s3 + $0xc] sm:$0xf] %v1156
    %1175 = vst [vmem:[%s3 + $0x10] sm:$0xf] %v1157
    %1176 = vst [vmem:[%s3 + $0x14] sm:$0xf] %v1158
    %1177 = vst [vmem:[%s3 + $0x18] sm:$0xf] %v1159
    %1178 = vst [vmem:[%s3 + $0x1c] sm:$0xf] %v1160
    %1179 = vst [vmem:[%s3 + $0x20] sm:$0xf] %v1161
  $region21: #{discriminator_image.7} parent=0 // pred_fallthru
    _
  // Predicated region
  $region22: #{discriminator_image.7} parent=0 // pred_check
    _
  $region23: #{discriminator_image.7} parent=0 // pred_check_branch
    %1181 = sbr.rel (0) target = $region25
  $region24: #{discriminator_image.7} parent=0 // pred_region
    _
  $region25: #{discriminator_image.7} parent=0 // pred_fallthru
    _
  // Predicated region
  $region26: #{discriminator_image.7} parent=0 // pred_check
    _
  $region27: #{discriminator_image.7} parent=0 // pred_check_branch
    %1183 = sbr.rel (0) target = $region29
  $region28: #{discriminator_image.7} parent=0 // pred_region
    _
  $region29: #{discriminator_image.7} parent=0 // pred_fallthru
    _

// kernel: discriminator_image.8
$region0: #{discriminator_image.8}
  #allocation0 [shape = 'u32[]', space=smem, size = 0x4, offset = 0x4, fixed_abs, tag = 'smem constant byte address 0x4 - core index']
  #allocation1 [shape = 'u32[144,128]{1,0:T(1,128)}', space=vmem, size = 0x12000, scoped, tag = 'internal scratch']
  #allocation2 [shape = 'f32[36,128]{1,0:T(8,128)}', space=vmem, size = 0x5000, scoped, tag = 'scratch operand']
  %s0 = inlined_call_operand.vmem [shape: bf16[36,1024], index: 0, kind: input, shape index: {}]
  %s1 = inlined_call_operand.vmem [shape: bf16[1024,128], index: 1, kind: input, shape index: {}]
  %s2 = inlined_call_operand.vmem [shape: f32[1,128], index: 2, kind: input, shape index: {}]
  %s3 = inlined_call_operand.vmem [shape: bf16[36,128], index: 3, kind: output, shape index: {}]
  %s4 = sld [smem:[#allocation0]]
  $region30: #{discriminator_image.8} parent=0
    _
  %s6 = ssub.s32 1, %s4
  %s7 = scalar_select 0, %s6, %s4
  // Predicated region
  $region2: #{discriminator_image.8} parent=0 // pred_check
    _
  $region3: #{discriminator_image.8} parent=0 // pred_check_branch
    %9 = sbr.rel (0) target = $region5
  $region4: #{discriminator_image.8} parent=0 // pred_region
    _
  $region5: #{discriminator_image.8} parent=0 // pred_fallthru
    _
  // Predicated region
  $region6: #{discriminator_image.8} parent=0 // pred_check
    _
  $region7: #{discriminator_image.8} parent=0 // pred_check_branch
    %11 = sbr.rel (0) target = $region9
  $region8: #{discriminator_image.8} parent=0 // pred_region
    _
  $region9: #{discriminator_image.8} parent=0 // pred_fallthru
    _
  // Predicated region
  $region10: #{discriminator_image.8} parent=0 // pred_check
    _
  $region11: #{discriminator_image.8} parent=0 // pred_check_branch
    %13 = sbr.rel (0) target = $region13
  $region12: #{discriminator_image.8} parent=0 // pred_region
    _
  $region13: #{discriminator_image.8} parent=0 // pred_fallthru
    _
  %p15 = scmp.eq.s32.totalorder 0, 0
  // Predicated region
  $region14: #{discriminator_image.8} parent=0 // pred_check
    %p16 = pneg %p15
  $region15: #{discriminator_image.8} parent=0 // pred_check_branch
    %18 = sbr.rel (%p16) target = $region17
  $region16: #{discriminator_image.8} parent=0 // pred_region
    %19 = vst [vmem:[#allocation2] sm:$0xff] 0.0
    %20 = vst [vmem:[#allocation2 + $0x8] sm:$0xff] 0.0
    %21 = vst [vmem:[#allocation2 + $0x10] sm:$0xff] 0.0
    %22 = vst [vmem:[#allocation2 + $0x18] sm:$0xff] 0.0
    %23 = vst [vmem:[#allocation2 + $0x20] sm:$0xf] 0.0
  $region17: #{discriminator_image.8} parent=0 // pred_fallthru
    _
  %v24 = vld [vmem:[#allocation2] sm:$0xff]
  %v25 = vld [vmem:[#allocation2 + $0x8] sm:$0xff]
  %v26 = vld [vmem:[#allocation2 + $0x10] sm:$0xff]
  %v27 = vld [vmem:[#allocation2 + $0x18] sm:$0xff]
  %v28 = vld [vmem:[#allocation2 + $0x20] sm:$0xf]
  %v29 = vld [vmem:[%s0] sm:$0xff]
  %v30 = vld [vmem:[%s0 + $0x8] sm:$0xff]
  %v31 = vld [vmem:[%s0 + $0x10] sm:$0xff]
  %v32 = vld [vmem:[%s0 + $0x18] sm:$0xff]
  %v33 = vld [vmem:[%s0 + $0x20] sm:$0xff]
  %v34 = vld [vmem:[%s0 + $0x28] sm:$0xff]
  %v35 = vld [vmem:[%s0 + $0x30] sm:$0xff]
  %v36 = vld [vmem:[%s0 + $0x38] sm:$0xff]
  %v37 = vld [vmem:[%s0 + $0x40] sm:$0xff]
  %v38 = vld [vmem:[%s0 + $0x48] sm:$0xff]
  %v39 = vld [vmem:[%s0 + $0x50] sm:$0xff]
  %v40 = vld [vmem:[%s0 + $0x58] sm:$0xff]
  %v41 = vld [vmem:[%s0 + $0x60] sm:$0xff]
  %v42 = vld [vmem:[%s0 + $0x68] sm:$0xff]
  %v43 = vld [vmem:[%s0 + $0x70] sm:$0xff]
  %v44 = vld [vmem:[%s0 + $0x78] sm:$0xff]
  %v45 = vld [vmem:[%s0 + $0x80] sm:$0x33]
  %v46 = vld [vmem:[%s0 + $0x88] sm:$0x33]
  %v47 = vld [vmem:[%s0 + $0x90] sm:$0x33]
  %v48 = vld [vmem:[%s0 + $0x98] sm:$0x33]
  %v49 = vld [vmem:[%s1] sm:$0xf]
  %v50 = vld [vmem:[%s1 + $0x4] sm:$0xf]
  %v51 = vld [vmem:[%s1 + $0x8] sm:$0xf]
  %v52 = vld [vmem:[%s1 + $0xc] sm:$0xf]
  %v53 = vld [vmem:[%s1 + $0x10] sm:$0xf]
  %v54 = vld [vmem:[%s1 + $0x14] sm:$0xf]
  %v55 = vld [vmem:[%s1 + $0x18] sm:$0xf]
  %v56 = vld [vmem:[%s1 + $0x1c] sm:$0xf]
  %v57 = vld [vmem:[%s1 + $0x20] sm:$0xf]
  %v58 = vld [vmem:[%s1 + $0x24] sm:$0xf]
  %v59 = vld [vmem:[%s1 + $0x28] sm:$0xf]
  %v60 = vld [vmem:[%s1 + $0x2c] sm:$0xf]
  %v61 = vld [vmem:[%s1 + $0x30] sm:$0xf]
  %v62 = vld [vmem:[%s1 + $0x34] sm:$0xf]
  %v63 = vld [vmem:[%s1 + $0x38] sm:$0xf]
  %v64 = vld [vmem:[%s1 + $0x3c] sm:$0xf]
  %v65 = vld [vmem:[%s1 + $0x40] sm:$0xf]
  %v66 = vld [vmem:[%s1 + $0x44] sm:$0xf]
  %v67 = vld [vmem:[%s1 + $0x48] sm:$0xf]
  %v68 = vld [vmem:[%s1 + $0x4c] sm:$0xf]
  %v69 = vld [vmem:[%s1 + $0x50] sm:$0xf]
  %v70 = vld [vmem:[%s1 + $0x54] sm:$0xf]
  %v71 = vld [vmem:[%s1 + $0x58] sm:$0xf]
  %v72 = vld [vmem:[%s1 + $0x5c] sm:$0xf]
  %v73 = vld [vmem:[%s1 + $0x60] sm:$0xf]
  %v74 = vld [vmem:[%s1 + $0x64] sm:$0xf]
  %v75 = vld [vmem:[%s1 + $0x68] sm:$0xf]
  %v76 = vld [vmem:[%s1 + $0x6c] sm:$0xf]
  %v77 = vld [vmem:[%s1 + $0x70] sm:$0xf]
  %v78 = vld [vmem:[%s1 + $0x74] sm:$0xf]
  %v79 = vld [vmem:[%s1 + $0x78] sm:$0xf]
  %v80 = vld [vmem:[%s1 + $0x7c] sm:$0xf]
  %v81 = vld [vmem:[%s1 + $0x80] sm:$0xf]
  %v82 = vld [vmem:[%s1 + $0x84] sm:$0xf]
  %v83 = vld [vmem:[%s1 + $0x88] sm:$0xf]
  %v84 = vld [vmem:[%s1 + $0x8c] sm:$0xf]
  %v85 = vld [vmem:[%s1 + $0x90] sm:$0xf]
  %v86 = vld [vmem:[%s1 + $0x94] sm:$0xf]
  %v87 = vld [vmem:[%s1 + $0x98] sm:$0xf]
  %v88 = vld [vmem:[%s1 + $0x9c] sm:$0xf]
  %v89 = vld [vmem:[%s1 + $0xa0] sm:$0xf]
  %v90 = vld [vmem:[%s1 + $0xa4] sm:$0xf]
  %v91 = vld [vmem:[%s1 + $0xa8] sm:$0xf]
  %v92 = vld [vmem:[%s1 + $0xac] sm:$0xf]
  %v93 = vld [vmem:[%s1 + $0xb0] sm:$0xf]
  %v94 = vld [vmem:[%s1 + $0xb4] sm:$0xf]
  %v95 = vld [vmem:[%s1 + $0xb8] sm:$0xf]
  %v96 = vld [vmem:[%s1 + $0xbc] sm:$0xf]
  %v97 = vld [vmem:[%s1 + $0xc0] sm:$0xf]
  %v98 = vld [vmem:[%s1 + $0xc4] sm:$0xf]
  %v99 = vld [vmem:[%s1 + $0xc8] sm:$0xf]
  %v100 = vld [vmem:[%s1 + $0xcc] sm:$0xf]
  %v101 = vld [vmem:[%s1 + $0xd0] sm:$0xf]
  %v102 = vld [vmem:[%s1 + $0xd4] sm:$0xf]
  %v103 = vld [vmem:[%s1 + $0xd8] sm:$0xf]
  %v104 = vld [vmem:[%s1 + $0xdc] sm:$0xf]
  %v105 = vld [vmem:[%s1 + $0xe0] sm:$0xf]
  %v106 = vld [vmem:[%s1 + $0xe4] sm:$0xf]
  %v107 = vld [vmem:[%s1 + $0xe8] sm:$0xf]
  %v108 = vld [vmem:[%s1 + $0xec] sm:$0xf]
  %v109 = vld [vmem:[%s1 + $0xf0] sm:$0xf]
  %v110 = vld [vmem:[%s1 + $0xf4] sm:$0xf]
  %v111 = vld [vmem:[%s1 + $0xf8] sm:$0xf]
  %v112 = vld [vmem:[%s1 + $0xfc] sm:$0xf]
  %v113 = vld [vmem:[%s1 + $0x100] sm:$0xf]
  %v114 = vld [vmem:[%s1 + $0x104] sm:$0xf]
  %v115 = vld [vmem:[%s1 + $0x108] sm:$0xf]
  %v116 = vld [vmem:[%s1 + $0x10c] sm:$0xf]
  %v117 = vld [vmem:[%s1 + $0x110] sm:$0xf]
  %v118 = vld [vmem:[%s1 + $0x114] sm:$0xf]
  %v119 = vld [vmem:[%s1 + $0x118] sm:$0xf]
  %v120 = vld [vmem:[%s1 + $0x11c] sm:$0xf]
  %v121 = vld [vmem:[%s1 + $0x120] sm:$0xf]
  %v122 = vld [vmem:[%s1 + $0x124] sm:$0xf]
  %v123 = vld [vmem:[%s1 + $0x128] sm:$0xf]
  %v124 = vld [vmem:[%s1 + $0x12c] sm:$0xf]
  %v125 = vld [vmem:[%s1 + $0x130] sm:$0xf]
  %v126 = vld [vmem:[%s1 + $0x134] sm:$0xf]
  %v127 = vld [vmem:[%s1 + $0x138] sm:$0xf]
  %v128 = vld [vmem:[%s1 + $0x13c] sm:$0xf]
  %v129 = vld [vmem:[%s1 + $0x140] sm:$0xf]
  %v130 = vld [vmem:[%s1 + $0x144] sm:$0xf]
  %v131 = vld [vmem:[%s1 + $0x148] sm:$0xf]
  %v132 = vld [vmem:[%s1 + $0x14c] sm:$0xf]
  %v133 = vld [vmem:[%s1 + $0x150] sm:$0xf]
  %v134 = vld [vmem:[%s1 + $0x154] sm:$0xf]
  %v135 = vld [vmem:[%s1 + $0x158] sm:$0xf]
  %v136 = vld [vmem:[%s1 + $0x15c] sm:$0xf]
  %v137 = vld [vmem:[%s1 + $0x160] sm:$0xf]
  %v138 = vld [vmem:[%s1 + $0x164] sm:$0xf]
  %v139 = vld [vmem:[%s1 + $0x168] sm:$0xf]
  %v140 = vld [vmem:[%s1 + $0x16c] sm:$0xf]
  %v141 = vld [vmem:[%s1 + $0x170] sm:$0xf]
  %v142 = vld [vmem:[%s1 + $0x174] sm:$0xf]
  %v143 = vld [vmem:[%s1 + $0x178] sm:$0xf]
  %v144 = vld [vmem:[%s1 + $0x17c] sm:$0xf]
  %v145 = vld [vmem:[%s1 + $0x180] sm:$0xf]
  %v146 = vld [vmem:[%s1 + $0x184] sm:$0xf]
  %v147 = vld [vmem:[%s1 + $0x188] sm:$0xf]
  %v148 = vld [vmem:[%s1 + $0x18c] sm:$0xf]
  %v149 = vld [vmem:[%s1 + $0x190] sm:$0xf]
  %v150 = vld [vmem:[%s1 + $0x194] sm:$0xf]
  %v151 = vld [vmem:[%s1 + $0x198] sm:$0xf]
  %v152 = vld [vmem:[%s1 + $0x19c] sm:$0xf]
  %v153 = vld [vmem:[%s1 + $0x1a0] sm:$0xf]
  %v154 = vld [vmem:[%s1 + $0x1a4] sm:$0xf]
  %v155 = vld [vmem:[%s1 + $0x1a8] sm:$0xf]
  %v156 = vld [vmem:[%s1 + $0x1ac] sm:$0xf]
  %v157 = vld [vmem:[%s1 + $0x1b0] sm:$0xf]
  %v158 = vld [vmem:[%s1 + $0x1b4] sm:$0xf]
  %v159 = vld [vmem:[%s1 + $0x1b8] sm:$0xf]
  %v160 = vld [vmem:[%s1 + $0x1bc] sm:$0xf]
  %v161 = vld [vmem:[%s1 + $0x1c0] sm:$0xf]
  %v162 = vld [vmem:[%s1 + $0x1c4] sm:$0xf]
  %v163 = vld [vmem:[%s1 + $0x1c8] sm:$0xf]
  %v164 = vld [vmem:[%s1 + $0x1cc] sm:$0xf]
  %v165 = vld [vmem:[%s1 + $0x1d0] sm:$0xf]
  %v166 = vld [vmem:[%s1 + $0x1d4] sm:$0xf]
  %v167 = vld [vmem:[%s1 + $0x1d8] sm:$0xf]
  %v168 = vld [vmem:[%s1 + $0x1dc] sm:$0xf]
  %v169 = vld [vmem:[%s1 + $0x1e0] sm:$0xf]
  %v170 = vld [vmem:[%s1 + $0x1e4] sm:$0xf]
  %v171 = vld [vmem:[%s1 + $0x1e8] sm:$0xf]
  %v172 = vld [vmem:[%s1 + $0x1ec] sm:$0xf]
  %v173 = vld [vmem:[%s1 + $0x1f0] sm:$0xf]
  %v174 = vld [vmem:[%s1 + $0x1f4] sm:$0xf]
  %v175 = vld [vmem:[%s1 + $0x1f8] sm:$0xf]
  %v176 = vld [vmem:[%s1 + $0x1fc] sm:$0xf]
  %v197 = vunpack.c.l.b16 %v29
  %v198 = vunpack.c.h.b16 %v29
  %v199 = vunpack.c.l.b16 %v30
  %v200 = vunpack.c.h.b16 %v30
  %v201 = vunpack.c.l.b16 %v31
  %v202 = vunpack.c.h.b16 %v31
  %v203 = vunpack.c.l.b16 %v32
  %v204 = vunpack.c.h.b16 %v32
  %v205 = vunpack.c.l.b16 %v33
  %v206 = vunpack.c.h.b16 %v33
  %v207 = vunpack.c.l.b16 %v34
  %v208 = vunpack.c.h.b16 %v34
  %v209 = vunpack.c.l.b16 %v35
  %v210 = vunpack.c.h.b16 %v35
  %v211 = vunpack.c.l.b16 %v36
  %v212 = vunpack.c.h.b16 %v36
  %v213 = vunpack.c.l.b16 %v37
  %v214 = vunpack.c.h.b16 %v37
  %v215 = vunpack.c.l.b16 %v38
  %v216 = vunpack.c.h.b16 %v38
  %v217 = vunpack.c.l.b16 %v39
  %v218 = vunpack.c.h.b16 %v39
  %v219 = vunpack.c.l.b16 %v40
  %v220 = vunpack.c.h.b16 %v40
  %v221 = vunpack.c.l.b16 %v41
  %v222 = vunpack.c.h.b16 %v41
  %v223 = vunpack.c.l.b16 %v42
  %v224 = vunpack.c.h.b16 %v42
  %v225 = vunpack.c.l.b16 %v43
  %v226 = vunpack.c.h.b16 %v43
  %v227 = vunpack.c.l.b16 %v44
  %v228 = vunpack.c.h.b16 %v44
  %v229 = vunpack.c.l.b16 %v45
  %v230 = vunpack.c.h.b16 %v45
  %v231 = vunpack.c.l.b16 %v46
  %v232 = vunpack.c.h.b16 %v46
  %v233 = vunpack.c.l.b16 %v47
  %v234 = vunpack.c.h.b16 %v47
  %v235 = vunpack.c.l.b16 %v48
  %v236 = vunpack.c.h.b16 %v48
  %v237 = vpack.c.b16 %v205, %v197
  %v238 = vpack.c.b16 %v206, %v198
  %v239 = vpack.c.b16 %v207, %v199
  %v240 = vpack.c.b16 %v208, %v200
  %v241 = vpack.c.b16 %v209, %v201
  %v242 = vpack.c.b16 %v210, %v202
  %v243 = vpack.c.b16 %v211, %v203
  %v244 = vpack.c.b16 %v212, %v204
  %v245 = vpack.c.b16 %v221, %v213
  %v246 = vpack.c.b16 %v222, %v214
  %v247 = vpack.c.b16 %v223, %v215
  %v248 = vpack.c.b16 %v224, %v216
  %v249 = vpack.c.b16 %v225, %v217
  %v250 = vpack.c.b16 %v226, %v218
  %v251 = vpack.c.b16 %v227, %v219
  %v252 = vpack.c.b16 %v228, %v220
  %v253 = vpack.c.b16 %v229, %v229
  %v254 = vpack.c.b16 %v230, %v230
  %v255 = vpack.c.b16 %v231, %v231
  %v256 = vpack.c.b16 %v232, %v232
  %v257 = vpack.c.b16 %v233, %v233
  %v258 = vpack.c.b16 %v234, %v234
  %v259 = vpack.c.b16 %v235, %v235
  %v260 = vpack.c.b16 %v236, %v236
  %v413 = vunpack.c.l.b16 %v49
  %v414 = vunpack.c.l.b16 %v50
  %v415 = vunpack.c.l.b16 %v51
  %v416 = vunpack.c.l.b16 %v52
  %v417 = vunpack.c.l.b16 %v53
  %v418 = vunpack.c.l.b16 %v54
  %v419 = vunpack.c.l.b16 %v55
  %v420 = vunpack.c.l.b16 %v56
  %v421 = vunpack.c.l.b16 %v57
  %v422 = vunpack.c.l.b16 %v58
  %v423 = vunpack.c.l.b16 %v59
  %v424 = vunpack.c.l.b16 %v60
  %v425 = vunpack.c.l.b16 %v61
  %v426 = vunpack.c.l.b16 %v62
  %v427 = vunpack.c.l.b16 %v63
  %v428 = vunpack.c.l.b16 %v64
  %v429 = vunpack.c.l.b16 %v65
  %v430 = vunpack.c.l.b16 %v66
  %v431 = vunpack.c.l.b16 %v67
  %v432 = vunpack.c.l.b16 %v68
  %v433 = vunpack.c.l.b16 %v69
  %v434 = vunpack.c.l.b16 %v70
  %v435 = vunpack.c.l.b16 %v71
  %v436 = vunpack.c.l.b16 %v72
  %v437 = vunpack.c.l.b16 %v73
  %v438 = vunpack.c.l.b16 %v74
  %v439 = vunpack.c.l.b16 %v75
  %v440 = vunpack.c.l.b16 %v76
  %v441 = vunpack.c.l.b16 %v77
  %v442 = vunpack.c.l.b16 %v78
  %v443 = vunpack.c.l.b16 %v79
  %v444 = vunpack.c.l.b16 %v80
  %v445 = vunpack.c.l.b16 %v81
  %v446 = vunpack.c.l.b16 %v82
  %v447 = vunpack.c.l.b16 %v83
  %v448 = vunpack.c.l.b16 %v84
  %v449 = vunpack.c.l.b16 %v85
  %v450 = vunpack.c.l.b16 %v86
  %v451 = vunpack.c.l.b16 %v87
  %v452 = vunpack.c.l.b16 %v88
  %v453 = vunpack.c.l.b16 %v89
  %v454 = vunpack.c.l.b16 %v90
  %v455 = vunpack.c.l.b16 %v91
  %v456 = vunpack.c.l.b16 %v92
  %v457 = vunpack.c.l.b16 %v93
  %v458 = vunpack.c.l.b16 %v94
  %v459 = vunpack.c.l.b16 %v95
  %v460 = vunpack.c.l.b16 %v96
  %v461 = vunpack.c.l.b16 %v97
  %v462 = vunpack.c.l.b16 %v98
  %v463 = vunpack.c.l.b16 %v99
  %v464 = vunpack.c.l.b16 %v100
  %v465 = vunpack.c.l.b16 %v101
  %v466 = vunpack.c.l.b16 %v102
  %v467 = vunpack.c.l.b16 %v103
  %v468 = vunpack.c.l.b16 %v104
  %v469 = vunpack.c.l.b16 %v105
  %v470 = vunpack.c.l.b16 %v106
  %v471 = vunpack.c.l.b16 %v107
  %v472 = vunpack.c.l.b16 %v108
  %v473 = vunpack.c.l.b16 %v109
  %v474 = vunpack.c.l.b16 %v110
  %v475 = vunpack.c.l.b16 %v111
  %v476 = vunpack.c.l.b16 %v112
  %v477 = vunpack.c.l.b16 %v113
  %v478 = vunpack.c.l.b16 %v114
  %v479 = vunpack.c.l.b16 %v115
  %v480 = vunpack.c.l.b16 %v116
  %v481 = vunpack.c.l.b16 %v117
  %v482 = vunpack.c.l.b16 %v118
  %v483 = vunpack.c.l.b16 %v119
  %v484 = vunpack.c.l.b16 %v120
  %v485 = vunpack.c.l.b16 %v121
  %v486 = vunpack.c.l.b16 %v122
  %v487 = vunpack.c.l.b16 %v123
  %v488 = vunpack.c.l.b16 %v124
  %v489 = vunpack.c.l.b16 %v125
  %v490 = vunpack.c.l.b16 %v126
  %v491 = vunpack.c.l.b16 %v127
  %v492 = vunpack.c.l.b16 %v128
  %v493 = vunpack.c.l.b16 %v129
  %v494 = vunpack.c.l.b16 %v130
  %v495 = vunpack.c.l.b16 %v131
  %v496 = vunpack.c.l.b16 %v132
  %v497 = vunpack.c.l.b16 %v133
  %v498 = vunpack.c.l.b16 %v134
  %v499 = vunpack.c.l.b16 %v135
  %v500 = vunpack.c.l.b16 %v136
  %v501 = vunpack.c.l.b16 %v137
  %v502 = vunpack.c.l.b16 %v138
  %v503 = vunpack.c.l.b16 %v139
  %v504 = vunpack.c.l.b16 %v140
  %v505 = vunpack.c.l.b16 %v141
  %v506 = vunpack.c.l.b16 %v142
  %v507 = vunpack.c.l.b16 %v143
  %v508 = vunpack.c.l.b16 %v144
  %v509 = vunpack.c.l.b16 %v145
  %v510 = vunpack.c.l.b16 %v146
  %v511 = vunpack.c.l.b16 %v147
  %v512 = vunpack.c.l.b16 %v148
  %v513 = vunpack.c.l.b16 %v149
  %v514 = vunpack.c.l.b16 %v150
  %v515 = vunpack.c.l.b16 %v151
  %v516 = vunpack.c.l.b16 %v152
  %v517 = vunpack.c.l.b16 %v153
  %v518 = vunpack.c.l.b16 %v154
  %v519 = vunpack.c.l.b16 %v155
  %v520 = vunpack.c.l.b16 %v156
  %v521 = vunpack.c.l.b16 %v157
  %v522 = vunpack.c.l.b16 %v158
  %v523 = vunpack.c.l.b16 %v159
  %v524 = vunpack.c.l.b16 %v160
  %v525 = vunpack.c.l.b16 %v161
  %v526 = vunpack.c.l.b16 %v162
  %v527 = vunpack.c.l.b16 %v163
  %v528 = vunpack.c.l.b16 %v164
  %v529 = vunpack.c.l.b16 %v165
  %v530 = vunpack.c.l.b16 %v166
  %v531 = vunpack.c.l.b16 %v167
  %v532 = vunpack.c.l.b16 %v168
  %v533 = vunpack.c.l.b16 %v169
  %v534 = vunpack.c.l.b16 %v170
  %v535 = vunpack.c.l.b16 %v171
  %v536 = vunpack.c.l.b16 %v172
  %v537 = vunpack.c.l.b16 %v173
  %v538 = vunpack.c.l.b16 %v174
  %v539 = vunpack.c.l.b16 %v175
  %v540 = vunpack.c.l.b16 %v176
  %v541 = vpack.c.b16 %v414, %v413
  %v542 = vpack.c.b16 %v416, %v415
  %v543 = vpack.c.b16 %v418, %v417
  %v544 = vpack.c.b16 %v420, %v419
  %v545 = vpack.c.b16 %v422, %v421
  %v546 = vpack.c.b16 %v424, %v423
  %v547 = vpack.c.b16 %v426, %v425
  %v548 = vpack.c.b16 %v428, %v427
  %v549 = vpack.c.b16 %v430, %v429
  %v550 = vpack.c.b16 %v432, %v431
  %v551 = vpack.c.b16 %v434, %v433
  %v552 = vpack.c.b16 %v436, %v435
  %v553 = vpack.c.b16 %v438, %v437
  %v554 = vpack.c.b16 %v440, %v439
  %v555 = vpack.c.b16 %v442, %v441
  %v556 = vpack.c.b16 %v444, %v443
  %v557 = vpack.c.b16 %v446, %v445
  %v558 = vpack.c.b16 %v448, %v447
  %v559 = vpack.c.b16 %v450, %v449
  %v560 = vpack.c.b16 %v452, %v451
  %v561 = vpack.c.b16 %v454, %v453
  %v562 = vpack.c.b16 %v456, %v455
  %v563 = vpack.c.b16 %v458, %v457
  %v564 = vpack.c.b16 %v460, %v459
  %v565 = vpack.c.b16 %v462, %v461
  %v566 = vpack.c.b16 %v464, %v463
  %v567 = vpack.c.b16 %v466, %v465
  %v568 = vpack.c.b16 %v468, %v467
  %v569 = vpack.c.b16 %v470, %v469
  %v570 = vpack.c.b16 %v472, %v471
  %v571 = vpack.c.b16 %v474, %v473
  %v572 = vpack.c.b16 %v476, %v475
  %v573 = vpack.c.b16 %v478, %v477
  %v574 = vpack.c.b16 %v480, %v479
  %v575 = vpack.c.b16 %v482, %v481
  %v576 = vpack.c.b16 %v484, %v483
  %v577 = vpack.c.b16 %v486, %v485
  %v578 = vpack.c.b16 %v488, %v487
  %v579 = vpack.c.b16 %v490, %v489
  %v580 = vpack.c.b16 %v492, %v491
  %v581 = vpack.c.b16 %v494, %v493
  %v582 = vpack.c.b16 %v496, %v495
  %v583 = vpack.c.b16 %v498, %v497
  %v584 = vpack.c.b16 %v500, %v499
  %v585 = vpack.c.b16 %v502, %v501
  %v586 = vpack.c.b16 %v504, %v503
  %v587 = vpack.c.b16 %v506, %v505
  %v588 = vpack.c.b16 %v508, %v507
  %v589 = vpack.c.b16 %v510, %v509
  %v590 = vpack.c.b16 %v512, %v511
  %v591 = vpack.c.b16 %v514, %v513
  %v592 = vpack.c.b16 %v516, %v515
  %v593 = vpack.c.b16 %v518, %v517
  %v594 = vpack.c.b16 %v520, %v519
  %v595 = vpack.c.b16 %v522, %v521
  %v596 = vpack.c.b16 %v524, %v523
  %v597 = vpack.c.b16 %v526, %v525
  %v598 = vpack.c.b16 %v528, %v527
  %v599 = vpack.c.b16 %v530, %v529
  %v600 = vpack.c.b16 %v532, %v531
  %v601 = vpack.c.b16 %v534, %v533
  %v602 = vpack.c.b16 %v536, %v535
  %v603 = vpack.c.b16 %v538, %v537
  %v604 = vpack.c.b16 %v540, %v539
  %669 = vmatprep.subr.bf16.mxu0 0
  %670 = vmatpush1.bf16.msra.mxu0 %v541
  %671 = vmatprep.subr.bf16.mxu0 0
  %672 = vmatpush1.bf16.msra.mxu0 %v542
  %673 = vmatprep.subr.bf16.mxu0 0
  %674 = vmatpush1.bf16.msra.mxu0 %v543
  %675 = vmatprep.subr.bf16.mxu0 0
  %676 = vmatpush1.bf16.msra.mxu0 %v544
  %677 = vmatprep.subr.bf16.mxu0 0
  %678 = vmatpush1.bf16.msra.mxu0 %v545
  %679 = vmatprep.subr.bf16.mxu0 0
  %680 = vmatpush1.bf16.msra.mxu0 %v546
  %681 = vmatprep.subr.bf16.mxu0 0
  %682 = vmatpush1.bf16.msra.mxu0 %v547
  %683 = vmatprep.subr.bf16.mxu0 0
  %684 = vmatpush1.bf16.msra.mxu0 %v548
  %685 = vmatprep.subr.bf16.mxu0 0
  %686 = vmatpush1.bf16.msra.mxu0 %v549
  %687 = vmatprep.subr.bf16.mxu0 0
  %688 = vmatpush1.bf16.msra.mxu0 %v550
  %689 = vmatprep.subr.bf16.mxu0 0
  %690 = vmatpush1.bf16.msra.mxu0 %v551
  %691 = vmatprep.subr.bf16.mxu0 0
  %692 = vmatpush1.bf16.msra.mxu0 %v552
  %693 = vmatprep.subr.bf16.mxu0 0
  %694 = vmatpush1.bf16.msra.mxu0 %v553
  %695 = vmatprep.subr.bf16.mxu0 0
  %696 = vmatpush1.bf16.msra.mxu0 %v554
  %697 = vmatprep.subr.bf16.mxu0 0
  %698 = vmatpush1.bf16.msra.mxu0 %v555
  %699 = vmatprep.subr.bf16.mxu0 0
  %700 = vmatpush1.bf16.msra.mxu0 %v556
  %701 = vmatprep.mubr.bf16.mxu0 %v238
  %702 = vmatmul.mubr.bf16.gmra.mrb[0].mxu0 %v237
  %v703 = vpop.f32.mrb[0].mxu0
  %v704 = vadd.f32 0.0, %v703
  %v705 = vpop.f32.mrb[0].mxu0
  %v706 = vpop.f32.mrb[0].mxu0
  %v707 = vadd.f32 0.0, %v706
  %v708 = vpop.f32.mrb[0].mxu0
  %709 = vmatprep.mubr.bf16.mxu0 %v246
  %710 = vmatmul.mubr.bf16.gmra.mrb[0].mxu0 %v245
  %v711 = vpop.f32.mrb[0].mxu0
  %v712 = vadd.f32 0.0, %v711
  %v713 = vpop.f32.mrb[0].mxu0
  %v714 = vpop.f32.mrb[0].mxu0
  %v715 = vadd.f32 0.0, %v714
  %v716 = vpop.f32.mrb[0].mxu0
  %717 = vmatprep.mubr.bf16.mxu0 %v254
  %718 = vmatmul.mubr.bf16.gmra.mrb[0].mxu0 %v253
  %v719 = vpop.f32.mrb[0].mxu0
  %v720 = vadd.f32 0.0, %v719
  %v721 = vpop.f32.mrb[0].mxu0
  %v722 = vpop.f32.mrb[0].mxu0
  %v723 = vpop.f32.mrb[0].mxu0
  %724 = vdwg.mxu0
  %725 = vmatprep.subr.bf16.mxu0 0
  %726 = vmatpush1.bf16.msra.mxu0 %v557
  %727 = vmatprep.subr.bf16.mxu0 0
  %728 = vmatpush1.bf16.msra.mxu0 %v558
  %729 = vmatprep.subr.bf16.mxu0 0
  %730 = vmatpush1.bf16.msra.mxu0 %v559
  %731 = vmatprep.subr.bf16.mxu0 0
  %732 = vmatpush1.bf16.msra.mxu0 %v560
  %733 = vmatprep.subr.bf16.mxu0 0
  %734 = vmatpush1.bf16.msra.mxu0 %v561
  %735 = vmatprep.subr.bf16.mxu0 0
  %736 = vmatpush1.bf16.msra.mxu0 %v562
  %737 = vmatprep.subr.bf16.mxu0 0
  %738 = vmatpush1.bf16.msra.mxu0 %v563
  %739 = vmatprep.subr.bf16.mxu0 0
  %740 = vmatpush1.bf16.msra.mxu0 %v564
  %741 = vmatprep.subr.bf16.mxu0 0
  %742 = vmatpush1.bf16.msra.mxu0 %v565
  %743 = vmatprep.subr.bf16.mxu0 0
  %744 = vmatpush1.bf16.msra.mxu0 %v566
  %745 = vmatprep.subr.bf16.mxu0 0
  %746 = vmatpush1.bf16.msra.mxu0 %v567
  %747 = vmatprep.subr.bf16.mxu0 0
  %748 = vmatpush1.bf16.msra.mxu0 %v568
  %749 = vmatprep.subr.bf16.mxu0 0
  %750 = vmatpush1.bf16.msra.mxu0 %v569
  %751 = vmatprep.subr.bf16.mxu0 0
  %752 = vmatpush1.bf16.msra.mxu0 %v570
  %753 = vmatprep.subr.bf16.mxu0 0
  %754 = vmatpush1.bf16.msra.mxu0 %v571
  %755 = vmatprep.subr.bf16.mxu0 0
  %756 = vmatpush1.bf16.msra.mxu0 %v572
  %757 = vmatprep.mubr.bf16.mxu0 %v240
  %758 = vmatmul.mubr.bf16.gmra.mrb[0].mxu0 %v239
  %v759 = vpop.f32.mrb[0].mxu0
  %v760 = vadd.f32 %v704, %v759
  %v761 = vpop.f32.mrb[0].mxu0
  %v762 = vpop.f32.mrb[0].mxu0
  %v763 = vadd.f32 %v707, %v762
  %v764 = vpop.f32.mrb[0].mxu0
  %765 = vmatprep.mubr.bf16.mxu0 %v248
  %766 = vmatmul.mubr.bf16.gmra.mrb[0].mxu0 %v247
  %v767 = vpop.f32.mrb[0].mxu0
  %v768 = vadd.f32 %v712, %v767
  %v769 = vpop.f32.mrb[0].mxu0
  %v770 = vpop.f32.mrb[0].mxu0
  %v771 = vadd.f32 %v715, %v770
  %v772 = vpop.f32.mrb[0].mxu0
  %773 = vmatprep.mubr.bf16.mxu0 %v256
  %774 = vmatmul.mubr.bf16.gmra.mrb[0].mxu0 %v255
  %v775 = vpop.f32.mrb[0].mxu0
  %v776 = vadd.f32 %v720, %v775
  %v777 = vpop.f32.mrb[0].mxu0
  %v778 = vpop.f32.mrb[0].mxu0
  %v779 = vpop.f32.mrb[0].mxu0
  %780 = vdwg.mxu0
  %781 = vmatprep.subr.bf16.mxu0 0
  %782 = vmatpush1.bf16.msra.mxu0 %v573
  %783 = vmatprep.subr.bf16.mxu0 0
  %784 = vmatpush1.bf16.msra.mxu0 %v574
  %785 = vmatprep.subr.bf16.mxu0 0
  %786 = vmatpush1.bf16.msra.mxu0 %v575
  %787 = vmatprep.subr.bf16.mxu0 0
  %788 = vmatpush1.bf16.msra.mxu0 %v576
  %789 = vmatprep.subr.bf16.mxu0 0
  %790 = vmatpush1.bf16.msra.mxu0 %v577
  %791 = vmatprep.subr.bf16.mxu0 0
  %792 = vmatpush1.bf16.msra.mxu0 %v578
  %793 = vmatprep.subr.bf16.mxu0 0
  %794 = vmatpush1.bf16.msra.mxu0 %v579
  %795 = vmatprep.subr.bf16.mxu0 0
  %796 = vmatpush1.bf16.msra.mxu0 %v580
  %797 = vmatprep.subr.bf16.mxu0 0
  %798 = vmatpush1.bf16.msra.mxu0 %v581
  %799 = vmatprep.subr.bf16.mxu0 0
  %800 = vmatpush1.bf16.msra.mxu0 %v582
  %801 = vmatprep.subr.bf16.mxu0 0
  %802 = vmatpush1.bf16.msra.mxu0 %v583
  %803 = vmatprep.subr.bf16.mxu0 0
  %804 = vmatpush1.bf16.msra.mxu0 %v584
  %805 = vmatprep.subr.bf16.mxu0 0
  %806 = vmatpush1.bf16.msra.mxu0 %v585
  %807 = vmatprep.subr.bf16.mxu0 0
  %808 = vmatpush1.bf16.msra.mxu0 %v586
  %809 = vmatprep.subr.bf16.mxu0 0
  %810 = vmatpush1.bf16.msra.mxu0 %v587
  %811 = vmatprep.subr.bf16.mxu0 0
  %812 = vmatpush1.bf16.msra.mxu0 %v588
  %813 = vmatprep.mubr.bf16.mxu0 %v242
  %814 = vmatmul.mubr.bf16.gmra.mrb[0].mxu0 %v241
  %v815 = vpop.f32.mrb[0].mxu0
  %v816 = vadd.f32 %v760, %v815
  %v817 = vpop.f32.mrb[0].mxu0
  %v818 = vpop.f32.mrb[0].mxu0
  %v819 = vadd.f32 %v763, %v818
  %v820 = vpop.f32.mrb[0].mxu0
  %821 = vmatprep.mubr.bf16.mxu0 %v250
  %822 = vmatmul.mubr.bf16.gmra.mrb[0].mxu0 %v249
  %v823 = vpop.f32.mrb[0].mxu0
  %v824 = vadd.f32 %v768, %v823
  %v825 = vpop.f32.mrb[0].mxu0
  %v826 = vpop.f32.mrb[0].mxu0
  %v827 = vadd.f32 %v771, %v826
  %v828 = vpop.f32.mrb[0].mxu0
  %829 = vmatprep.mubr.bf16.mxu0 %v258
  %830 = vmatmul.mubr.bf16.gmra.mrb[0].mxu0 %v257
  %v831 = vpop.f32.mrb[0].mxu0
  %v832 = vadd.f32 %v776, %v831
  %v833 = vpop.f32.mrb[0].mxu0
  %v834 = vpop.f32.mrb[0].mxu0
  %v835 = vpop.f32.mrb[0].mxu0
  %836 = vdwg.mxu0
  %837 = vmatprep.subr.bf16.mxu0 0
  %838 = vmatpush1.bf16.msra.mxu0 %v589
  %839 = vmatprep.subr.bf16.mxu0 0
  %840 = vmatpush1.bf16.msra.mxu0 %v590
  %841 = vmatprep.subr.bf16.mxu0 0
  %842 = vmatpush1.bf16.msra.mxu0 %v591
  %843 = vmatprep.subr.bf16.mxu0 0
  %844 = vmatpush1.bf16.msra.mxu0 %v592
  %845 = vmatprep.subr.bf16.mxu0 0
  %846 = vmatpush1.bf16.msra.mxu0 %v593
  %847 = vmatprep.subr.bf16.mxu0 0
  %848 = vmatpush1.bf16.msra.mxu0 %v594
  %849 = vmatprep.subr.bf16.mxu0 0
  %850 = vmatpush1.bf16.msra.mxu0 %v595
  %851 = vmatprep.subr.bf16.mxu0 0
  %852 = vmatpush1.bf16.msra.mxu0 %v596
  %853 = vmatprep.subr.bf16.mxu0 0
  %854 = vmatpush1.bf16.msra.mxu0 %v597
  %855 = vmatprep.subr.bf16.mxu0 0
  %856 = vmatpush1.bf16.msra.mxu0 %v598
  %857 = vmatprep.subr.bf16.mxu0 0
  %858 = vmatpush1.bf16.msra.mxu0 %v599
  %859 = vmatprep.subr.bf16.mxu0 0
  %860 = vmatpush1.bf16.msra.mxu0 %v600
  %861 = vmatprep.subr.bf16.mxu0 0
  %862 = vmatpush1.bf16.msra.mxu0 %v601
  %863 = vmatprep.subr.bf16.mxu0 0
  %864 = vmatpush1.bf16.msra.mxu0 %v602
  %865 = vmatprep.subr.bf16.mxu0 0
  %866 = vmatpush1.bf16.msra.mxu0 %v603
  %867 = vmatprep.subr.bf16.mxu0 0
  %868 = vmatpush1.bf16.msra.mxu0 %v604
  %869 = vmatprep.mubr.bf16.mxu0 %v244
  %870 = vmatmul.mubr.bf16.gmra.mrb[0].mxu0 %v243
  %v871 = vpop.f32.mrb[0].mxu0
  %v872 = vadd.f32 %v816, %v871
  %v873 = vpop.f32.mrb[0].mxu0
  %v874 = vpop.f32.mrb[0].mxu0
  %v875 = vadd.f32 %v819, %v874
  %v876 = vpop.f32.mrb[0].mxu0
  %877 = vmatprep.mubr.bf16.mxu0 %v252
  %878 = vmatmul.mubr.bf16.gmra.mrb[0].mxu0 %v251
  %v879 = vpop.f32.mrb[0].mxu0
  %v880 = vadd.f32 %v824, %v879
  %v881 = vpop.f32.mrb[0].mxu0
  %v882 = vpop.f32.mrb[0].mxu0
  %v883 = vadd.f32 %v827, %v882
  %v884 = vpop.f32.mrb[0].mxu0
  %885 = vmatprep.mubr.bf16.mxu0 %v260
  %886 = vmatmul.mubr.bf16.gmra.mrb[0].mxu0 %v259
  %v887 = vpop.f32.mrb[0].mxu0
  %v888 = vadd.f32 %v832, %v887
  %v889 = vpop.f32.mrb[0].mxu0
  %v890 = vpop.f32.mrb[0].mxu0
  %v891 = vpop.f32.mrb[0].mxu0
  %892 = vdwg.mxu0
  %v893 = vadd.f32 %v24, %v872
  %v894 = vadd.f32 %v25, %v875
  %v895 = vadd.f32 %v26, %v880
  %v896 = vadd.f32 %v27, %v883
  %v897 = vadd.f32 %v28, %v888
  %898 = vst [vmem:[#allocation2] sm:$0xff] %v893
  %899 = vst [vmem:[#allocation2 + $0x8] sm:$0xff] %v894
  %900 = vst [vmem:[#allocation2 + $0x10] sm:$0xff] %v895
  %901 = vst [vmem:[#allocation2 + $0x18] sm:$0xff] %v896
  %902 = vst [vmem:[#allocation2 + $0x20] sm:$0xf] %v897
  // Predicated region
  $region18: #{discriminator_image.8} parent=0 // pred_check
    %p903 = pneg %p15
  $region19: #{discriminator_image.8} parent=0 // pred_check_branch
    %905 = sbr.rel (%p903) target = $region21
  $region20: #{discriminator_image.8} parent=0 // pred_region
    %v906 = vld [vmem:[#allocation2] sm:$0xff]
    %v907 = vld [vmem:[#allocation2 + $0x8] sm:$0xff]
    %v908 = vld [vmem:[#allocation2 + $0x10] sm:$0xff]
    %v909 = vld [vmem:[#allocation2 + $0x18] sm:$0xff]
    %v910 = vld [vmem:[#allocation2 + $0x20] sm:$0xf]
    %v911 = vld [vmem:[%s2] sm:$0x1]
    %v913 = vlaneseq
    %v914 = vshrl.u32 %v913, 7
    %v915 = vsub.s32 0, %v914
    %v916 = vrot.slane %v911, %v915
    %v918 = vadd.f32 %v906, %v916
    %v919 = vadd.f32 %v907, %v916
    %v920 = vadd.f32 %v908, %v916
    %v921 = vadd.f32 %v909, %v916
    %v922 = vadd.f32 %v910, %v916
    %vm923 = vcmp.ge.f32.partialorder %v918, 0.0
    %vm924 = vcmp.ge.f32.partialorder %v919, 0.0
    %vm925 = vcmp.ge.f32.partialorder %v920, 0.0
    %vm926 = vcmp.ge.f32.partialorder %v921, 0.0
    %vm927 = vcmp.ge.f32.partialorder %v922, 0.0
    %v928 = vmul.f32 %v918, 0.01
    %v929 = vmul.f32 %v919, 0.01
    %v930 = vmul.f32 %v920, 0.01
    %v931 = vmul.f32 %v921, 0.01
    %v932 = vmul.f32 %v922, 0.01
    %v933 = vsel %vm923, %v918, %v928
    %v934 = vsel %vm924, %v919, %v929
    %v935 = vsel %vm925, %v920, %v930
    %v936 = vsel %vm926, %v921, %v931
    %v937 = vsel %vm927, %v922, %v932
    %v938 = vpack.c.bf16 %v934, %v933
    %v939 = vpack.c.bf16 %v936, %v935
    %v940 = vpack.c.bf16 %v937, %v937
    %v944 = vunpack.c.l.b16 %v938
    %v945 = vunpack.c.h.b16 %v938
    %v946 = vunpack.c.l.b16 %v939
    %v947 = vunpack.c.h.b16 %v939
    %v948 = vunpack.c.l.b16 %v940
    %v949 = vpack.c.b16 %v944, %v944
    %v950 = vpack.c.b16 %v945, %v945
    %v951 = vpack.c.b16 %v946, %v946
    %v952 = vpack.c.b16 %v947, %v947
    %v953 = vpack.c.b16 %v948, %v948
    %959 = vst [vmem:[%s3] sm:$0xf] %v949
    %960 = vst [vmem:[%s3 + $0x4] sm:$0xf] %v950
    %961 = vst [vmem:[%s3 + $0x8] sm:$0xf] %v951
    %962 = vst [vmem:[%s3 + $0xc] sm:$0xf] %v952
    %963 = vst [vmem:[%s3 + $0x10] sm:$0x3] %v953
  $region21: #{discriminator_image.8} parent=0 // pred_fallthru
    _
  // Predicated region
  $region22: #{discriminator_image.8} parent=0 // pred_check
    _
  $region23: #{discriminator_image.8} parent=0 // pred_check_branch
    %965 = sbr.rel (0) target = $region25
  $region24: #{discriminator_image.8} parent=0 // pred_region
    _
  $region25: #{discriminator_image.8} parent=0 // pred_fallthru
    _
  // Predicated region
  $region26: #{discriminator_image.8} parent=0 // pred_check
    _
  $region27: #{discriminator_image.8} parent=0 // pred_check_branch
    %967 = sbr.rel (0) target = $region29
  $region28: #{discriminator_image.8} parent=0 // pred_region
    _
  $region29: #{discriminator_image.8} parent=0 // pred_fallthru
    _

// kernel: discriminator_image.9
$region0: #{discriminator_image.9}
  #allocation0 [shape = 'u32[]', space=smem, size = 0x4, offset = 0x4, fixed_abs, tag = 'smem constant byte address 0x4 - core index']
  #allocation1 [shape = 'u32[144,128]{1,0:T(1,128)}', space=vmem, size = 0x12000, scoped, tag = 'internal scratch']
  #allocation2 [shape = 'f32[2,1]{1,0:T(2,128)}', space=vmem, size = 0x400, scoped, tag = 'scratch operand']
  #allocation3 [shape = 'f32[1,1]{1,0:T(1,128)S(1)}', space=vmem, size = 0x200, scoped, tag = 'scoped memory for discriminator_image.9']
  %s0 = inlined_call_operand.vmem [shape: bf16[2,2304], index: 0, kind: input, shape index: {}]
  %s1 = inlined_call_operand.vmem [shape: bf16[2304,1024], index: 1, kind: input, shape index: {}]
  %s2 = inlined_call_operand.vmem [shape: f32[1,1024], index: 2, kind: input, shape index: {}]
  %s3 = inlined_call_operand.vmem [shape: f32[1,1024], index: 3, kind: input, shape index: {}]
  %s4 = inlined_call_operand.<no memory space> [shape: f32[1,1], index: 4, kind: input, shape index: {}]
  %s5 = inlined_call_operand.vmem [shape: f32[2,1], index: 5, kind: output, shape index: {}]
  %s6 = sld [smem:[#allocation0]]
  $region84: #{discriminator_image.9} parent=0
    _
  %s8 = ssub.s32 1, %s6
  %s9 = scalar_select 0, %s8, %s6
  %v10 = vstv %s4
  %11 = vst [vmem:[#allocation3] sm:$0x1] %v10
  $region1: #{discriminator_image.9} parent=0
    #allocation4 [shape = 'u8[4718592]{0}', space=vmem, size = 0x480000, scoped, tag = 'input window, operand 1']
    loop: start=0, step=1, limit=4
    $region2: #{discriminator_image.9} parent=1 // loop_pre_header
      _
    $region3: #{discriminator_image.9} parent=1 // loop_header
      %s13 = sphi 0, %s17
      %p14 = scmp.ge.s32.totalorder %s13, 4
      %s20 = sphi 0, %s32
      %s21 = sphi 0, %s28
      %s22 = sphi 0, %s20
      %s23 = sphi 0, %s21
      %s24 = sphi 0, %s22
      %s25 = sphi 0, %s23
      %s35 = sphi 0, %s37
      %s38 = sphi 0, %s35
      %s39 = sphi 0, %s38
      %s55 = sphi 0, %s39
      %s61 = sphi 0, %s63
      %s64 = sphi 0, %s61
      %s65 = sphi 0, %s64
      %s81 = sphi 0, %s65
      %s87 = sphi 0, %s89
      %s90 = sphi 0, %s87
      %s91 = sphi 0, %s90
      %s107 = sphi 0, %s91
      %s113 = sphi 0, %s115
      %s116 = sphi 0, %s113
      %s117 = sphi 0, %s116
      %s133 = sphi 0, %s117
      %s137 = sphi 0, %s137
      %s139 = sphi 0, %s137
      %s140 = sphi 0, %s139
      %s154 = sphi 0, %s140
      %s160 = sphi 0, %s162
      %s163 = sphi 0, %s160
      %s164 = sphi 0, %s163
      %s180 = sphi 0, %s164
    $region4: #{discriminator_image.9} parent=1 // loop_header_branch
      %16 = sbr.rel (%p14) target = $region8
    $region5: #{discriminator_image.9} parent=1 // loop_body
      %s18 = ssub.s32 %s13, 1
      %s19 = ssub.s32 %s13, 2
      %s26 = sadd.s32 1, %s21
      %p27 = scmp.ge.s32.totalorder %s26, 2
      %s28 = scalar_select %p27, 0, %s26
      %s29 = sadd.s32 1, %s20
      %s30 = scalar_select %p27, %s29, %s20
      %p31 = scmp.ge.s32.totalorder %s30, 1
      %s32 = scalar_select %p31, 0, %s30
      %s33 = ssub.s32 %s20, %s32
      %p34 = scmp.eq.s32.totalorder %s33, 0
      %s36 = sadd.s32 %s35, 1
      %s37 = scalar_select %p34, %s35, %s36
      %p40 = pneg %p34
      %p41 = scmp.eq.s32.totalorder %s13, 1
      %p42 = por %p40, %p41
      %p43 = scmp.ne.s32.totalorder %s35, %s38
      %p44 = scmp.eq.s32.totalorder %s13, 0
      %p45 = por %p43, %p44
      %p46 = scmp.ne.s32.totalorder %s35, %s38
      %p47 = scmp.eq.s32.totalorder %s18, 1
      %p48 = por %p46, %p47
      %p49 = scmp.ne.s32.totalorder %s38, %s39
      %p50 = scmp.eq.s32.totalorder %s18, 0
      %p51 = por %p49, %p50
      %p52 = scmp.ne.s32.totalorder %s38, %s39
      %p53 = scmp.eq.s32.totalorder %s19, 1
      %p54 = por %p52, %p53
      %p56 = scmp.ne.s32.totalorder %s39, %s55
      %p57 = scmp.eq.s32.totalorder %s19, 0
      %p58 = por %p56, %p57
      %s59 = ssub.s32 %s21, %s28
      %p60 = scmp.eq.s32.totalorder %s59, 0
      %s62 = sadd.s32 %s61, 1
      %s63 = scalar_select %p60, %s61, %s62
      %p66 = pneg %p60
      %p67 = scmp.eq.s32.totalorder %s13, 1
      %p68 = por %p66, %p67
      %p69 = scmp.ne.s32.totalorder %s61, %s64
      %p70 = scmp.eq.s32.totalorder %s13, 0
      %p71 = por %p69, %p70
      %p72 = scmp.ne.s32.totalorder %s61, %s64
      %p73 = scmp.eq.s32.totalorder %s18, 1
      %p74 = por %p72, %p73
      %p75 = scmp.ne.s32.totalorder %s64, %s65
      %p76 = scmp.eq.s32.totalorder %s18, 0
      %p77 = por %p75, %p76
      %p78 = scmp.ne.s32.totalorder %s64, %s65
      %p79 = scmp.eq.s32.totalorder %s19, 1
      %p80 = por %p78, %p79
      %p82 = scmp.ne.s32.totalorder %s65, %s81
      %p83 = scmp.eq.s32.totalorder %s19, 0
      %p84 = por %p82, %p83
      %s85 = ssub.s32 %s21, %s28
      %p86 = scmp.eq.s32.totalorder %s85, 0
      %s88 = sadd.s32 %s87, 1
      %s89 = scalar_select %p86, %s87, %s88
      %p92 = pneg %p86
      %p93 = scmp.eq.s32.totalorder %s13, 1
      %p94 = por %p92, %p93
      %p95 = scmp.ne.s32.totalorder %s87, %s90
      %p96 = scmp.eq.s32.totalorder %s13, 0
      %p97 = por %p95, %p96
      %p98 = scmp.ne.s32.totalorder %s87, %s90
      %p99 = scmp.eq.s32.totalorder %s18, 1
      %p100 = por %p98, %p99
      %p101 = scmp.ne.s32.totalorder %s90, %s91
      %p102 = scmp.eq.s32.totalorder %s18, 0
      %p103 = por %p101, %p102
      %p104 = scmp.ne.s32.totalorder %s90, %s91
      %p105 = scmp.eq.s32.totalorder %s19, 1
      %p106 = por %p104, %p105
      %p108 = scmp.ne.s32.totalorder %s91, %s107
      %p109 = scmp.eq.s32.totalorder %s19, 0
      %p110 = por %p108, %p109
      %s111 = ssub.s32 %s21, %s28
      %p112 = scmp.eq.s32.totalorder %s111, 0
      %s114 = sadd.s32 %s113, 1
      %s115 = scalar_select %p112, %s113, %s114
      %p118 = pneg %p112
      %p119 = scmp.eq.s32.totalorder %s13, 1
      %p120 = por %p118, %p119
      %p121 = scmp.ne.s32.totalorder %s113, %s116
      %p122 = scmp.eq.s32.totalorder %s13, 0
      %p123 = por %p121, %p122
      %p124 = scmp.ne.s32.totalorder %s113, %s116
      %p125 = scmp.eq.s32.totalorder %s18, 1
      %p126 = por %p124, %p125
      %p127 = scmp.ne.s32.totalorder %s116, %s117
      %p128 = scmp.eq.s32.totalorder %s18, 0
      %p129 = por %p127, %p128
      %p130 = scmp.ne.s32.totalorder %s116, %s117
      %p131 = scmp.eq.s32.totalorder %s19, 1
      %p132 = por %p130, %p131
      %p134 = scmp.ne.s32.totalorder %s117, %s133
      %p135 = scmp.eq.s32.totalorder %s19, 0
      %p136 = por %p134, %p135
      %s138 = sadd.s32 %s137, 1
      %p141 = scmp.eq.s32.totalorder %s13, 1
      %p142 = scmp.ne.s32.totalorder %s137, %s139
      %p143 = scmp.eq.s32.totalorder %s13, 0
      %p144 = por %p142, %p143
      %p145 = scmp.ne.s32.totalorder %s137, %s139
      %p146 = scmp.eq.s32.totalorder %s18, 1
      %p147 = por %p145, %p146
      %p148 = scmp.ne.s32.totalorder %s139, %s140
      %p149 = scmp.eq.s32.totalorder %s18, 0
      %p150 = por %p148, %p149
      %p151 = scmp.ne.s32.totalorder %s139, %s140
      %p152 = scmp.eq.s32.totalorder %s19, 1
      %p153 = por %p151, %p152
      %p155 = scmp.ne.s32.totalorder %s140, %s154
      %p156 = scmp.eq.s32.totalorder %s19, 0
      %p157 = por %p155, %p156
      %s158 = ssub.s32 %s20, %s32
      %p159 = scmp.eq.s32.totalorder %s158, 0
      %s161 = sadd.s32 %s160, 1
      %s162 = scalar_select %p159, %s160, %s161
      %p165 = pneg %p159
      %p166 = scmp.eq.s32.totalorder %s13, 1
      %p167 = por %p165, %p166
      %p168 = scmp.ne.s32.totalorder %s160, %s163
      %p169 = scmp.eq.s32.totalorder %s13, 0
      %p170 = por %p168, %p169
      %p171 = scmp.ne.s32.totalorder %s160, %s163
      %p172 = scmp.eq.s32.totalorder %s18, 1
      %p173 = por %p171, %p172
      %p174 = scmp.ne.s32.totalorder %s163, %s164
      %p175 = scmp.eq.s32.totalorder %s18, 0
      %p176 = por %p174, %p175
      %p177 = scmp.ne.s32.totalorder %s163, %s164
      %p178 = scmp.eq.s32.totalorder %s19, 1
      %p179 = por %p177, %p178
      %p181 = scmp.ne.s32.totalorder %s164, %s180
      %p182 = scmp.eq.s32.totalorder %s19, 0
      %p183 = por %p181, %p182
      %p184 = scmp.le.s32.totalorder 1, %s13
      %p185 = scmp.lt.s32.totalorder %s13, 3
      %p186 = pnand %p184, %p185
      %p187 = pneg %p186
      // Predicated region
      $region9: #{discriminator_image.9} parent=5 // pred_check
        _
      $region10: #{discriminator_image.9} parent=5 // pred_check_branch
        %189 = sbr.rel (%p186) target = $region12
      $region11: #{discriminator_image.9} parent=5 // pred_region
        %s190 = ssub.s32 %s13, 1
        // Predicated region
        $region13: #{discriminator_image.9} parent=11 // pred_check
          %p191 = pneg %p51
        $region14: #{discriminator_image.9} parent=11 // pred_check_branch
          %193 = sbr.rel (%p191) target = $region16
        $region15: #{discriminator_image.9} parent=11 // pred_region
          %p194 = scmp.lt.s32.totalorder %s22, 0
          %s195 = scalar_select %p194, %s22, 0
          %s196 = smul.addr %s195, 18
          %s197 = scalar_lea.vmem %s0, %s196
        $region16: #{discriminator_image.9} parent=11 // pred_fallthru
          _
        // Predicated region
        $region17: #{discriminator_image.9} parent=11 // pred_check
          %p198 = pneg %p150
        $region18: #{discriminator_image.9} parent=11 // pred_check_branch
          %200 = sbr.rel (%p198) target = $region20
        $region19: #{discriminator_image.9} parent=11 // pred_region
          _
        $region20: #{discriminator_image.9} parent=11 // pred_fallthru
          _
      $region12: #{discriminator_image.9} parent=5 // pred_fallthru
        _
      %p201 = scmp.lt.s32.totalorder %s13, 2
      // Predicated region
      $region21: #{discriminator_image.9} parent=5 // pred_check
        %p202 = pneg %p201
      $region22: #{discriminator_image.9} parent=5 // pred_check_branch
        %204 = sbr.rel (%p202) target = $region24
      $region23: #{discriminator_image.9} parent=5 // pred_region
        // Predicated region
        $region25: #{discriminator_image.9} parent=23 // pred_check
          %p205 = pneg %p71
        $region26: #{discriminator_image.9} parent=23 // pred_check_branch
          %207 = sbr.rel (%p205) target = $region28
        $region27: #{discriminator_image.9} parent=23 // pred_region
          %s208 = sand.u32 %s61, 1
          %s209 = sand.u32 %s61, 1
          %s210 = smul.addr %s209, 4608
          %s211 = scalar_lea.vmem [#allocation4], %s210
          %s212 = smul.u32 4, %s21
          %s213 = smul.addr %s212, 4
          %s214 = scalar_lea.vmem %s1, %s213
          // Predicated region
          $region29: #{discriminator_image.9} parent=27 // pred_check
            _
          $region30: #{discriminator_image.9} parent=27 // pred_check_branch
            %216 = sbr.rel (0) target = $region32
          $region31: #{discriminator_image.9} parent=27 // pred_region
            // Predicated region
            $region33: #{discriminator_image.9} parent=31 // pred_check
              _
            $region34: #{discriminator_image.9} parent=31 // pred_check_branch
              %218 = sbr.rel (0) target = $region36
            $region35: #{discriminator_image.9} parent=31 // pred_region
              loop: start=0, step=1, limit=1
              $region37: #{discriminator_image.9} parent=35 // loop_pre_header
                _
              $region38: #{discriminator_image.9} parent=35 // loop_header
                %s220 = sphi 0, %s224
                %p221 = scmp.ge.s32.totalorder %s220, 1
                %s225 = sphi %s214, %s214
                %s226 = sphi %s211, %s211
              $region39: #{discriminator_image.9} parent=35 // loop_header_branch
                %223 = sbr.rel (%p221) target = $region43
              $region40: #{discriminator_image.9} parent=35 // loop_body
                %v227 = vld [vmem:[%s225] sm:$0xff]
                %228 = vst [vmem:[%s226] sm:$0xff] %v227
                %v229 = vld [vmem:[%s225 + $0x8] sm:$0xff]
                %230 = vst [vmem:[%s226 + $0x8] sm:$0xff] %v229
                %v231 = vld [vmem:[%s225 + $0x20] sm:$0xff]
                %232 = vst [vmem:[%s226 + $0x10] sm:$0xff] %v231
                %v233 = vld [vmem:[%s225 + $0x28] sm:$0xff]
                %234 = vst [vmem:[%s226 + $0x18] sm:$0xff] %v233
                %v235 = vld [vmem:[%s225 + $0x40] sm:$0xff]
                %236 = vst [vmem:[%s226 + $0x20] sm:$0xff] %v235
                %v237 = vld [vmem:[%s225 + $0x48] sm:$0xff]
                %238 = vst [vmem:[%s226 + $0x28] sm:$0xff] %v237
                %v239 = vld [vmem:[%s225 + $0x60] sm:$0xff]
                %240 = vst [vmem:[%s226 + $0x30] sm:$0xff] %v239
                %v241 = vld [vmem:[%s225 + $0x68] sm:$0xff]
                %242 = vst [vmem:[%s226 + $0x38] sm:$0xff] %v241
                %v243 = vld [vmem:[%s225 + $0x80] sm:$0xff]
                %244 = vst [vmem:[%s226 + $0x40] sm:$0xff] %v243
                %v245 = vld [vmem:[%s225 + $0x88] sm:$0xff]
                %246 = vst [vmem:[%s226 + $0x48] sm:$0xff] %v245
                %v247 = vld [vmem:[%s225 + $0xa0] sm:$0xff]
                %248 = vst [vmem:[%s226 + $0x50] sm:$0xff] %v247
                %v249 = vld [vmem:[%s225 + $0xa8] sm:$0xff]
                %250 = vst [vmem:[%s226 + $0x58] sm:$0xff] %v249
                %v251 = vld [vmem:[%s225 + $0xc0] sm:$0xff]
                %252 = vst [vmem:[%s226 + $0x60] sm:$0xff] %v251
                %v253 = vld [vmem:[%s225 + $0xc8] sm:$0xff]
                %254 = vst [vmem:[%s226 + $0x68] sm:$0xff] %v253
                %v255 = vld [vmem:[%s225 + $0xe0] sm:$0xff]
                %256 = vst [vmem:[%s226 + $0x70] sm:$0xff] %v255
                %v257 = vld [vmem:[%s225 + $0xe8] sm:$0xff]
                %258 = vst [vmem:[%s226 + $0x78] sm:$0xff] %v257
                %v259 = vld [vmem:[%s225 + $0x100] sm:$0xff]
                %260 = vst [vmem:[%s226 + $0x80] sm:$0xff] %v259
                %v261 = vld [vmem:[%s225 + $0x108] sm:$0xff]
                %262 = vst [vmem:[%s226 + $0x88] sm:$0xff] %v261
                %v263 = vld [vmem:[%s225 + $0x120] sm:$0xff]
                %264 = vst [vmem:[%s226 + $0x90] sm:$0xff] %v263
                %v265 = vld [vmem:[%s225 + $0x128] sm:$0xff]
                %266 = vst [vmem:[%s226 + $0x98] sm:$0xff] %v265
                %v267 = vld [vmem:[%s225 + $0x140] sm:$0xff]
                %268 = vst [vmem:[%s226 + $0xa0] sm:$0xff] %v267
                %v269 = vld [vmem:[%s225 + $0x148] sm:$0xff]
                %270 = vst [vmem:[%s226 + $0xa8] sm:$0xff] %v269
                %v271 = vld [vmem:[%s225 + $0x160] sm:$0xff]
                %272 = vst [vmem:[%s226 + $0xb0] sm:$0xff] %v271
                %v273 = vld [vmem:[%s225 + $0x168] sm:$0xff]
                %274 = vst [vmem:[%s226 + $0xb8] sm:$0xff] %v273
                %v275 = vld [vmem:[%s225 + $0x180] sm:$0xff]
                %276 = vst [vmem:[%s226 + $0xc0] sm:$0xff] %v275
                %v277 = vld [vmem:[%s225 + $0x188] sm:$0xff]
                %278 = vst [vmem:[%s226 + $0xc8] sm:$0xff] %v277
                %v279 = vld [vmem:[%s225 + $0x1a0] sm:$0xff]
                %280 = vst [vmem:[%s226 + $0xd0] sm:$0xff] %v279
                %v281 = vld [vmem:[%s225 + $0x1a8] sm:$0xff]
                %282 = vst [vmem:[%s226 + $0xd8] sm:$0xff] %v281
                %v283 = vld [vmem:[%s225 + $0x1c0] sm:$0xff]
                %284 = vst [vmem:[%s226 + $0xe0] sm:$0xff] %v283
                %v285 = vld [vmem:[%s225 + $0x1c8] sm:$0xff]
                %286 = vst [vmem:[%s226 + $0xe8] sm:$0xff] %v285
                %v287 = vld [vmem:[%s225 + $0x1e0] sm:$0xff]
                %288 = vst [vmem:[%s226 + $0xf0] sm:$0xff] %v287
                %v289 = vld [vmem:[%s225 + $0x1e8] sm:$0xff]
                %290 = vst [vmem:[%s226 + $0xf8] sm:$0xff] %v289
                %v291 = vld [vmem:[%s225 + $0x200] sm:$0xff]
                %292 = vst [vmem:[%s226 + $0x100] sm:$0xff] %v291
                %v293 = vld [vmem:[%s225 + $0x208] sm:$0xff]
                %294 = vst [vmem:[%s226 + $0x108] sm:$0xff] %v293
                %v295 = vld [vmem:[%s225 + $0x220] sm:$0xff]
                %296 = vst [vmem:[%s226 + $0x110] sm:$0xff] %v295
                %v297 = vld [vmem:[%s225 + $0x228] sm:$0xff]
                %298 = vst [vmem:[%s226 + $0x118] sm:$0xff] %v297
                %v299 = vld [vmem:[%s225 + $0x240] sm:$0xff]
                %300 = vst [vmem:[%s226 + $0x120] sm:$0xff] %v299
                %v301 = vld [vmem:[%s225 + $0x248] sm:$0xff]
                %302 = vst [vmem:[%s226 + $0x128] sm:$0xff] %v301
                %v303 = vld [vmem:[%s225 + $0x260] sm:$0xff]
                %304 = vst [vmem:[%s226 + $0x130] sm:$0xff] %v303
                %v305 = vld [vmem:[%s225 + $0x268] sm:$0xff]
                %306 = vst [vmem:[%s226 + $0x138] sm:$0xff] %v305
                %v307 = vld [vmem:[%s225 + $0x280] sm:$0xff]
                %308 = vst [vmem:[%s226 + $0x140] sm:$0xff] %v307
                %v309 = vld [vmem:[%s225 + $0x288] sm:$0xff]
                %310 = vst [vmem:[%s226 + $0x148] sm:$0xff] %v309
                %v311 = vld [vmem:[%s225 + $0x2a0] sm:$0xff]
                %312 = vst [vmem:[%s226 + $0x150] sm:$0xff] %v311
                %v313 = vld [vmem:[%s225 + $0x2a8] sm:$0xff]
                %314 = vst [vmem:[%s226 + $0x158] sm:$0xff] %v313
                %v315 = vld [vmem:[%s225 + $0x2c0] sm:$0xff]
                %316 = vst [vmem:[%s226 + $0x160] sm:$0xff] %v315
                %v317 = vld [vmem:[%s225 + $0x2c8] sm:$0xff]
                %318 = vst [vmem:[%s226 + $0x168] sm:$0xff] %v317
                %v319 = vld [vmem:[%s225 + $0x2e0] sm:$0xff]
                %320 = vst [vmem:[%s226 + $0x170] sm:$0xff] %v319
                %v321 = vld [vmem:[%s225 + $0x2e8] sm:$0xff]
                %322 = vst [vmem:[%s226 + $0x178] sm:$0xff] %v321
                %v323 = vld [vmem:[%s225 + $0x300] sm:$0xff]
                %324 = vst [vmem:[%s226 + $0x180] sm:$0xff] %v323
                %v325 = vld [vmem:[%s225 + $0x308] sm:$0xff]
                %326 = vst [vmem:[%s226 + $0x188] sm:$0xff] %v325
                %v327 = vld [vmem:[%s225 + $0x320] sm:$0xff]
                %328 = vst [vmem:[%s226 + $0x190] sm:$0xff] %v327
                %v329 = vld [vmem:[%s225 + $0x328] sm:$0xff]
                %330 = vst [vmem:[%s226 + $0x198] sm:$0xff] %v329
                %v331 = vld [vmem:[%s225 + $0x340] sm:$0xff]
                %332 = vst [vmem:[%s226 + $0x1a0] sm:$0xff] %v331
                %v333 = vld [vmem:[%s225 + $0x348] sm:$0xff]
                %334 = vst [vmem:[%s226 + $0x1a8] sm:$0xff] %v333
                %v335 = vld [vmem:[%s225 + $0x360] sm:$0xff]
                %336 = vst [vmem:[%s226 + $0x1b0] sm:$0xff] %v335
                %v337 = vld [vmem:[%s225 + $0x368] sm:$0xff]
                %338 = vst [vmem:[%s226 + $0x1b8] sm:$0xff] %v337
                %v339 = vld [vmem:[%s225 + $0x380] sm:$0xff]
                %340 = vst [vmem:[%s226 + $0x1c0] sm:$0xff] %v339
                %v341 = vld [vmem:[%s225 + $0x388] sm:$0xff]
                %342 = vst [vmem:[%s226 + $0x1c8] sm:$0xff] %v341
                %v343 = vld [vmem:[%s225 + $0x3a0] sm:$0xff]
                %344 = vst [vmem:[%s226 + $0x1d0] sm:$0xff] %v343
                %v345 = vld [vmem:[%s225 + $0x3a8] sm:$0xff]
                %346 = vst [vmem:[%s226 + $0x1d8] sm:$0xff] %v345
                %v347 = vld [vmem:[%s225 + $0x3c0] sm:$0xff]
                %348 = vst [vmem:[%s226 + $0x1e0] sm:$0xff] %v347
                %v349 = vld [vmem:[%s225 + $0x3c8] sm:$0xff]
                %350 = vst [vmem:[%s226 + $0x1e8] sm:$0xff] %v349
                %v351 = vld [vmem:[%s225 + $0x3e0] sm:$0xff]
                %352 = vst [vmem:[%s226 + $0x1f0] sm:$0xff] %v351
                %v353 = vld [vmem:[%s225 + $0x3e8] sm:$0xff]
                %354 = vst [vmem:[%s226 + $0x1f8] sm:$0xff] %v353
                %v355 = vld [vmem:[%s225 + $0x400] sm:$0xff]
                %356 = vst [vmem:[%s226 + $0x200] sm:$0xff] %v355
                %v357 = vld [vmem:[%s225 + $0x408] sm:$0xff]
                %358 = vst [vmem:[%s226 + $0x208] sm:$0xff] %v357
                %v359 = vld [vmem:[%s225 + $0x420] sm:$0xff]
                %360 = vst [vmem:[%s226 + $0x210] sm:$0xff] %v359
                %v361 = vld [vmem:[%s225 + $0x428] sm:$0xff]
                %362 = vst [vmem:[%s226 + $0x218] sm:$0xff] %v361
                %v363 = vld [vmem:[%s225 + $0x440] sm:$0xff]
                %364 = vst [vmem:[%s226 + $0x220] sm:$0xff] %v363
                %v365 = vld [vmem:[%s225 + $0x448] sm:$0xff]
                %366 = vst [vmem:[%s226 + $0x228] sm:$0xff] %v365
                %v367 = vld [vmem:[%s225 + $0x460] sm:$0xff]
                %368 = vst [vmem:[%s226 + $0x230] sm:$0xff] %v367
                %v369 = vld [vmem:[%s225 + $0x468] sm:$0xff]
                %370 = vst [vmem:[%s226 + $0x238] sm:$0xff] %v369
                %v371 = vld [vmem:[%s225 + $0x480] sm:$0xff]
                %372 = vst [vmem:[%s226 + $0x240] sm:$0xff] %v371
                %v373 = vld [vmem:[%s225 + $0x488] sm:$0xff]
                %374 = vst [vmem:[%s226 + $0x248] sm:$0xff] %v373
                %v375 = vld [vmem:[%s225 + $0x4a0] sm:$0xff]
                %376 = vst [vmem:[%s226 + $0x250] sm:$0xff] %v375
                %v377 = vld [vmem:[%s225 + $0x4a8] sm:$0xff]
                %378 = vst [vmem:[%s226 + $0x258] sm:$0xff] %v377
                %v379 = vld [vmem:[%s225 + $0x4c0] sm:$0xff]
                %380 = vst [vmem:[%s226 + $0x260] sm:$0xff] %v379
                %v381 = vld [vmem:[%s225 + $0x4c8] sm:$0xff]
                %382 = vst [vmem:[%s226 + $0x268] sm:$0xff] %v381
                %v383 = vld [vmem:[%s225 + $0x4e0] sm:$0xff]
                %384 = vst [vmem:[%s226 + $0x270] sm:$0xff] %v383
                %v385 = vld [vmem:[%s225 + $0x4e8] sm:$0xff]
                %386 = vst [vmem:[%s226 + $0x278] sm:$0xff] %v385
                %v387 = vld [vmem:[%s225 + $0x500] sm:$0xff]
                %388 = vst [vmem:[%s226 + $0x280] sm:$0xff] %v387
                %v389 = vld [vmem:[%s225 + $0x508] sm:$0xff]
                %390 = vst [vmem:[%s226 + $0x288] sm:$0xff] %v389
                %v391 = vld [vmem:[%s225 + $0x520] sm:$0xff]
                %392 = vst [vmem:[%s226 + $0x290] sm:$0xff] %v391
                %v393 = vld [vmem:[%s225 + $0x528] sm:$0xff]
                %394 = vst [vmem:[%s226 + $0x298] sm:$0xff] %v393
                %v395 = vld [vmem:[%s225 + $0x540] sm:$0xff]
                %396 = vst [vmem:[%s226 + $0x2a0] sm:$0xff] %v395
                %v397 = vld [vmem:[%s225 + $0x548] sm:$0xff]
                %398 = vst [vmem:[%s226 + $0x2a8] sm:$0xff] %v397
                %v399 = vld [vmem:[%s225 + $0x560] sm:$0xff]
                %400 = vst [vmem:[%s226 + $0x2b0] sm:$0xff] %v399
                %v401 = vld [vmem:[%s225 + $0x568] sm:$0xff]
                %402 = vst [vmem:[%s226 + $0x2b8] sm:$0xff] %v401
                %v403 = vld [vmem:[%s225 + $0x580] sm:$0xff]
                %404 = vst [vmem:[%s226 + $0x2c0] sm:$0xff] %v403
                %v405 = vld [vmem:[%s225 + $0x588] sm:$0xff]
                %406 = vst [vmem:[%s226 + $0x2c8] sm:$0xff] %v405
                %v407 = vld [vmem:[%s225 + $0x5a0] sm:$0xff]
                %408 = vst [vmem:[%s226 + $0x2d0] sm:$0xff] %v407
                %v409 = vld [vmem:[%s225 + $0x5a8] sm:$0xff]
                %410 = vst [vmem:[%s226 + $0x2d8] sm:$0xff] %v409
                %v411 = vld [vmem:[%s225 + $0x5c0] sm:$0xff]
                %412 = vst [vmem:[%s226 + $0x2e0] sm:$0xff] %v411
                %v413 = vld [vmem:[%s225 + $0x5c8] sm:$0xff]
                %414 = vst [vmem:[%s226 + $0x2e8] sm:$0xff] %v413
                %v415 = vld [vmem:[%s225 + $0x5e0] sm:$0xff]
                %416 = vst [vmem:[%s226 + $0x2f0] sm:$0xff] %v415
                %v417 = vld [vmem:[%s225 + $0x5e8] sm:$0xff]
                %418 = vst [vmem:[%s226 + $0x2f8] sm:$0xff] %v417
                %v419 = vld [vmem:[%s225 + $0x600] sm:$0xff]
                %420 = vst [vmem:[%s226 + $0x300] sm:$0xff] %v419
                %v421 = vld [vmem:[%s225 + $0x608] sm:$0xff]
                %422 = vst [vmem:[%s226 + $0x308] sm:$0xff] %v421
                %v423 = vld [vmem:[%s225 + $0x620] sm:$0xff]
                %424 = vst [vmem:[%s226 + $0x310] sm:$0xff] %v423
                %v425 = vld [vmem:[%s225 + $0x628] sm:$0xff]
                %426 = vst [vmem:[%s226 + $0x318] sm:$0xff] %v425
                %v427 = vld [vmem:[%s225 + $0x640] sm:$0xff]
                %428 = vst [vmem:[%s226 + $0x320] sm:$0xff] %v427
                %v429 = vld [vmem:[%s225 + $0x648] sm:$0xff]
                %430 = vst [vmem:[%s226 + $0x328] sm:$0xff] %v429
                %v431 = vld [vmem:[%s225 + $0x660] sm:$0xff]
                %432 = vst [vmem:[%s226 + $0x330] sm:$0xff] %v431
                %v433 = vld [vmem:[%s225 + $0x668] sm:$0xff]
                %434 = vst [vmem:[%s226 + $0x338] sm:$0xff] %v433
                %v435 = vld [vmem:[%s225 + $0x680] sm:$0xff]
                %436 = vst [vmem:[%s226 + $0x340] sm:$0xff] %v435
                %v437 = vld [vmem:[%s225 + $0x688] sm:$0xff]
                %438 = vst [vmem:[%s226 + $0x348] sm:$0xff] %v437
                %v439 = vld [vmem:[%s225 + $0x6a0] sm:$0xff]
                %440 = vst [vmem:[%s226 + $0x350] sm:$0xff] %v439
                %v441 = vld [vmem:[%s225 + $0x6a8] sm:$0xff]
                %442 = vst [vmem:[%s226 + $0x358] sm:$0xff] %v441
                %v443 = vld [vmem:[%s225 + $0x6c0] sm:$0xff]
                %444 = vst [vmem:[%s226 + $0x360] sm:$0xff] %v443
                %v445 = vld [vmem:[%s225 + $0x6c8] sm:$0xff]
                %446 = vst [vmem:[%s226 + $0x368] sm:$0xff] %v445
                %v447 = vld [vmem:[%s225 + $0x6e0] sm:$0xff]
                %448 = vst [vmem:[%s226 + $0x370] sm:$0xff] %v447
                %v449 = vld [vmem:[%s225 + $0x6e8] sm:$0xff]
                %450 = vst [vmem:[%s226 + $0x378] sm:$0xff] %v449
                %v451 = vld [vmem:[%s225 + $0x700] sm:$0xff]
                %452 = vst [vmem:[%s226 + $0x380] sm:$0xff] %v451
                %v453 = vld [vmem:[%s225 + $0x708] sm:$0xff]
                %454 = vst [vmem:[%s226 + $0x388] sm:$0xff] %v453
                %v455 = vld [vmem:[%s225 + $0x720] sm:$0xff]
                %456 = vst [vmem:[%s226 + $0x390] sm:$0xff] %v455
                %v457 = vld [vmem:[%s225 + $0x728] sm:$0xff]
                %458 = vst [vmem:[%s226 + $0x398] sm:$0xff] %v457
                %v459 = vld [vmem:[%s225 + $0x740] sm:$0xff]
                %460 = vst [vmem:[%s226 + $0x3a0] sm:$0xff] %v459
                %v461 = vld [vmem:[%s225 + $0x748] sm:$0xff]
                %462 = vst [vmem:[%s226 + $0x3a8] sm:$0xff] %v461
                %v463 = vld [vmem:[%s225 + $0x760] sm:$0xff]
                %464 = vst [vmem:[%s226 + $0x3b0] sm:$0xff] %v463
                %v465 = vld [vmem:[%s225 + $0x768] sm:$0xff]
                %466 = vst [vmem:[%s226 + $0x3b8] sm:$0xff] %v465
                %v467 = vld [vmem:[%s225 + $0x780] sm:$0xff]
                %468 = vst [vmem:[%s226 + $0x3c0] sm:$0xff] %v467
                %v469 = vld [vmem:[%s225 + $0x788] sm:$0xff]
                %470 = vst [vmem:[%s226 + $0x3c8] sm:$0xff] %v469
                %v471 = vld [vmem:[%s225 + $0x7a0] sm:$0xff]
                %472 = vst [vmem:[%s226 + $0x3d0] sm:$0xff] %v471
                %v473 = vld [vmem:[%s225 + $0x7a8] sm:$0xff]
                %474 = vst [vmem:[%s226 + $0x3d8] sm:$0xff] %v473
                %v475 = vld [vmem:[%s225 + $0x7c0] sm:$0xff]
                %476 = vst [vmem:[%s226 + $0x3e0] sm:$0xff] %v475
                %v477 = vld [vmem:[%s225 + $0x7c8] sm:$0xff]
                %478 = vst [vmem:[%s226 + $0x3e8] sm:$0xff] %v477
                %v479 = vld [vmem:[%s225 + $0x7e0] sm:$0xff]
                %480 = vst [vmem:[%s226 + $0x3f0] sm:$0xff] %v479
                %v481 = vld [vmem:[%s225 + $0x7e8] sm:$0xff]
                %482 = vst [vmem:[%s226 + $0x3f8] sm:$0xff] %v481
                %v483 = vld [vmem:[%s225 + $0x800] sm:$0xff]
                %484 = vst [vmem:[%s226 + $0x400] sm:$0xff] %v483
                %v485 = vld [vmem:[%s225 + $0x808] sm:$0xff]
                %486 = vst [vmem:[%s226 + $0x408] sm:$0xff] %v485
                %v487 = vld [vmem:[%s225 + $0x820] sm:$0xff]
                %488 = vst [vmem:[%s226 + $0x410] sm:$0xff] %v487
                %v489 = vld [vmem:[%s225 + $0x828] sm:$0xff]
                %490 = vst [vmem:[%s226 + $0x418] sm:$0xff] %v489
                %v491 = vld [vmem:[%s225 + $0x840] sm:$0xff]
                %492 = vst [vmem:[%s226 + $0x420] sm:$0xff] %v491
                %v493 = vld [vmem:[%s225 + $0x848] sm:$0xff]
                %494 = vst [vmem:[%s226 + $0x428] sm:$0xff] %v493
                %v495 = vld [vmem:[%s225 + $0x860] sm:$0xff]
                %496 = vst [vmem:[%s226 + $0x430] sm:$0xff] %v495
                %v497 = vld [vmem:[%s225 + $0x868] sm:$0xff]
                %498 = vst [vmem:[%s226 + $0x438] sm:$0xff] %v497
                %v499 = vld [vmem:[%s225 + $0x880] sm:$0xff]
                %500 = vst [vmem:[%s226 + $0x440] sm:$0xff] %v499
                %v501 = vld [vmem:[%s225 + $0x888] sm:$0xff]
                %502 = vst [vmem:[%s226 + $0x448] sm:$0xff] %v501
                %v503 = vld [vmem:[%s225 + $0x8a0] sm:$0xff]
                %504 = vst [vmem:[%s226 + $0x450] sm:$0xff] %v503
                %v505 = vld [vmem:[%s225 + $0x8a8] sm:$0xff]
                %506 = vst [vmem:[%s226 + $0x458] sm:$0xff] %v505
                %v507 = vld [vmem:[%s225 + $0x8c0] sm:$0xff]
                %508 = vst [vmem:[%s226 + $0x460] sm:$0xff] %v507
                %v509 = vld [vmem:[%s225 + $0x8c8] sm:$0xff]
                %510 = vst [vmem:[%s226 + $0x468] sm:$0xff] %v509
                %v511 = vld [vmem:[%s225 + $0x8e0] sm:$0xff]
                %512 = vst [vmem:[%s226 + $0x470] sm:$0xff] %v511
                %v513 = vld [vmem:[%s225 + $0x8e8] sm:$0xff]
                %514 = vst [vmem:[%s226 + $0x478] sm:$0xff] %v513
                %v515 = vld [vmem:[%s225 + $0x900] sm:$0xff]
                %516 = vst [vmem:[%s226 + $0x480] sm:$0xff] %v515
                %v517 = vld [vmem:[%s225 + $0x908] sm:$0xff]
                %518 = vst [vmem:[%s226 + $0x488] sm:$0xff] %v517
                %v519 = vld [vmem:[%s225 + $0x920] sm:$0xff]
                %520 = vst [vmem:[%s226 + $0x490] sm:$0xff] %v519
                %v521 = vld [vmem:[%s225 + $0x928] sm:$0xff]
                %522 = vst [vmem:[%s226 + $0x498] sm:$0xff] %v521
                %v523 = vld [vmem:[%s225 + $0x940] sm:$0xff]
                %524 = vst [vmem:[%s226 + $0x4a0] sm:$0xff] %v523
                %v525 = vld [vmem:[%s225 + $0x948] sm:$0xff]
                %526 = vst [vmem:[%s226 + $0x4a8] sm:$0xff] %v525
                %v527 = vld [vmem:[%s225 + $0x960] sm:$0xff]
                %528 = vst [vmem:[%s226 + $0x4b0] sm:$0xff] %v527
                %v529 = vld [vmem:[%s225 + $0x968] sm:$0xff]
                %530 = vst [vmem:[%s226 + $0x4b8] sm:$0xff] %v529
                %v531 = vld [vmem:[%s225 + $0x980] sm:$0xff]
                %532 = vst [vmem:[%s226 + $0x4c0] sm:$0xff] %v531
                %v533 = vld [vmem:[%s225 + $0x988] sm:$0xff]
                %534 = vst [vmem:[%s226 + $0x4c8] sm:$0xff] %v533
                %v535 = vld [vmem:[%s225 + $0x9a0] sm:$0xff]
                %536 = vst [vmem:[%s226 + $0x4d0] sm:$0xff] %v535
                %v537 = vld [vmem:[%s225 + $0x9a8] sm:$0xff]
                %538 = vst [vmem:[%s226 + $0x4d8] sm:$0xff] %v537
                %v539 = vld [vmem:[%s225 + $0x9c0] sm:$0xff]
                %540 = vst [vmem:[%s226 + $0x4e0] sm:$0xff] %v539
                %v541 = vld [vmem:[%s225 + $0x9c8] sm:$0xff]
                %542 = vst [vmem:[%s226 + $0x4e8] sm:$0xff] %v541
                %v543 = vld [vmem:[%s225 + $0x9e0] sm:$0xff]
                %544 = vst [vmem:[%s226 + $0x4f0] sm:$0xff] %v543
                %v545 = vld [vmem:[%s225 + $0x9e8] sm:$0xff]
                %546 = vst [vmem:[%s226 + $0x4f8] sm:$0xff] %v545
                %v547 = vld [vmem:[%s225 + $0xa00] sm:$0xff]
                %548 = vst [vmem:[%s226 + $0x500] sm:$0xff] %v547
                %v549 = vld [vmem:[%s225 + $0xa08] sm:$0xff]
                %550 = vst [vmem:[%s226 + $0x508] sm:$0xff] %v549
                %v551 = vld [vmem:[%s225 + $0xa20] sm:$0xff]
                %552 = vst [vmem:[%s226 + $0x510] sm:$0xff] %v551
                %v553 = vld [vmem:[%s225 + $0xa28] sm:$0xff]
                %554 = vst [vmem:[%s226 + $0x518] sm:$0xff] %v553
                %v555 = vld [vmem:[%s225 + $0xa40] sm:$0xff]
                %556 = vst [vmem:[%s226 + $0x520] sm:$0xff] %v555
                %v557 = vld [vmem:[%s225 + $0xa48] sm:$0xff]
                %558 = vst [vmem:[%s226 + $0x528] sm:$0xff] %v557
                %v559 = vld [vmem:[%s225 + $0xa60] sm:$0xff]
                %560 = vst [vmem:[%s226 + $0x530] sm:$0xff] %v559
                %v561 = vld [vmem:[%s225 + $0xa68] sm:$0xff]
                %562 = vst [vmem:[%s226 + $0x538] sm:$0xff] %v561
                %v563 = vld [vmem:[%s225 + $0xa80] sm:$0xff]
                %564 = vst [vmem:[%s226 + $0x540] sm:$0xff] %v563
                %v565 = vld [vmem:[%s225 + $0xa88] sm:$0xff]
                %566 = vst [vmem:[%s226 + $0x548] sm:$0xff] %v565
                %v567 = vld [vmem:[%s225 + $0xaa0] sm:$0xff]
                %568 = vst [vmem:[%s226 + $0x550] sm:$0xff] %v567
                %v569 = vld [vmem:[%s225 + $0xaa8] sm:$0xff]
                %570 = vst [vmem:[%s226 + $0x558] sm:$0xff] %v569
                %v571 = vld [vmem:[%s225 + $0xac0] sm:$0xff]
                %572 = vst [vmem:[%s226 + $0x560] sm:$0xff] %v571
                %v573 = vld [vmem:[%s225 + $0xac8] sm:$0xff]
                %574 = vst [vmem:[%s226 + $0x568] sm:$0xff] %v573
                %v575 = vld [vmem:[%s225 + $0xae0] sm:$0xff]
                %576 = vst [vmem:[%s226 + $0x570] sm:$0xff] %v575
                %v577 = vld [vmem:[%s225 + $0xae8] sm:$0xff]
                %578 = vst [vmem:[%s226 + $0x578] sm:$0xff] %v577
                %v579 = vld [vmem:[%s225 + $0xb00] sm:$0xff]
                %580 = vst [vmem:[%s226 + $0x580] sm:$0xff] %v579
                %v581 = vld [vmem:[%s225 + $0xb08] sm:$0xff]
                %582 = vst [vmem:[%s226 + $0x588] sm:$0xff] %v581
                %v583 = vld [vmem:[%s225 + $0xb20] sm:$0xff]
                %584 = vst [vmem:[%s226 + $0x590] sm:$0xff] %v583
                %v585 = vld [vmem:[%s225 + $0xb28] sm:$0xff]
                %586 = vst [vmem:[%s226 + $0x598] sm:$0xff] %v585
                %v587 = vld [vmem:[%s225 + $0xb40] sm:$0xff]
                %588 = vst [vmem:[%s226 + $0x5a0] sm:$0xff] %v587
                %v589 = vld [vmem:[%s225 + $0xb48] sm:$0xff]
                %590 = vst [vmem:[%s226 + $0x5a8] sm:$0xff] %v589
                %v591 = vld [vmem:[%s225 + $0xb60] sm:$0xff]
                %592 = vst [vmem:[%s226 + $0x5b0] sm:$0xff] %v591
                %v593 = vld [vmem:[%s225 + $0xb68] sm:$0xff]
                %594 = vst [vmem:[%s226 + $0x5b8] sm:$0xff] %v593
                %v595 = vld [vmem:[%s225 + $0xb80] sm:$0xff]
                %596 = vst [vmem:[%s226 + $0x5c0] sm:$0xff] %v595
                %v597 = vld [vmem:[%s225 + $0xb88] sm:$0xff]
                %598 = vst [vmem:[%s226 + $0x5c8] sm:$0xff] %v597
                %v599 = vld [vmem:[%s225 + $0xba0] sm:$0xff]
                %600 = vst [vmem:[%s226 + $0x5d0] sm:$0xff] %v599
                %v601 = vld [vmem:[%s225 + $0xba8] sm:$0xff]
                %602 = vst [vmem:[%s226 + $0x5d8] sm:$0xff] %v601
                %v603 = vld [vmem:[%s225 + $0xbc0] sm:$0xff]
                %604 = vst [vmem:[%s226 + $0x5e0] sm:$0xff] %v603
                %v605 = vld [vmem:[%s225 + $0xbc8] sm:$0xff]
                %606 = vst [vmem:[%s226 + $0x5e8] sm:$0xff] %v605
                %v607 = vld [vmem:[%s225 + $0xbe0] sm:$0xff]
                %608 = vst [vmem:[%s226 + $0x5f0] sm:$0xff] %v607
                %v609 = vld [vmem:[%s225 + $0xbe8] sm:$0xff]
                %610 = vst [vmem:[%s226 + $0x5f8] sm:$0xff] %v609
                %v611 = vld [vmem:[%s225 + $0xc00] sm:$0xff]
                %612 = vst [vmem:[%s226 + $0x600] sm:$0xff] %v611
                %v613 = vld [vmem:[%s225 + $0xc08] sm:$0xff]
                %614 = vst [vmem:[%s226 + $0x608] sm:$0xff] %v613
                %v615 = vld [vmem:[%s225 + $0xc20] sm:$0xff]
                %616 = vst [vmem:[%s226 + $0x610] sm:$0xff] %v615
                %v617 = vld [vmem:[%s225 + $0xc28] sm:$0xff]
                %618 = vst [vmem:[%s226 + $0x618] sm:$0xff] %v617
                %v619 = vld [vmem:[%s225 + $0xc40] sm:$0xff]
                %620 = vst [vmem:[%s226 + $0x620] sm:$0xff] %v619
                %v621 = vld [vmem:[%s225 + $0xc48] sm:$0xff]
                %622 = vst [vmem:[%s226 + $0x628] sm:$0xff] %v621
                %v623 = vld [vmem:[%s225 + $0xc60] sm:$0xff]
                %624 = vst [vmem:[%s226 + $0x630] sm:$0xff] %v623
                %v625 = vld [vmem:[%s225 + $0xc68] sm:$0xff]
                %626 = vst [vmem:[%s226 + $0x638] sm:$0xff] %v625
                %v627 = vld [vmem:[%s225 + $0xc80] sm:$0xff]
                %628 = vst [vmem:[%s226 + $0x640] sm:$0xff] %v627
                %v629 = vld [vmem:[%s225 + $0xc88] sm:$0xff]
                %630 = vst [vmem:[%s226 + $0x648] sm:$0xff] %v629
                %v631 = vld [vmem:[%s225 + $0xca0] sm:$0xff]
                %632 = vst [vmem:[%s226 + $0x650] sm:$0xff] %v631
                %v633 = vld [vmem:[%s225 + $0xca8] sm:$0xff]
                %634 = vst [vmem:[%s226 + $0x658] sm:$0xff] %v633
                %v635 = vld [vmem:[%s225 + $0xcc0] sm:$0xff]
                %636 = vst [vmem:[%s226 + $0x660] sm:$0xff] %v635
                %v637 = vld [vmem:[%s225 + $0xcc8] sm:$0xff]
                %638 = vst [vmem:[%s226 + $0x668] sm:$0xff] %v637
                %v639 = vld [vmem:[%s225 + $0xce0] sm:$0xff]
                %640 = vst [vmem:[%s226 + $0x670] sm:$0xff] %v639
                %v641 = vld [vmem:[%s225 + $0xce8] sm:$0xff]
                %642 = vst [vmem:[%s226 + $0x678] sm:$0xff] %v641
                %v643 = vld [vmem:[%s225 + $0xd00] sm:$0xff]
                %644 = vst [vmem:[%s226 + $0x680] sm:$0xff] %v643
                %v645 = vld [vmem:[%s225 + $0xd08] sm:$0xff]
                %646 = vst [vmem:[%s226 + $0x688] sm:$0xff] %v645
                %v647 = vld [vmem:[%s225 + $0xd20] sm:$0xff]
                %648 = vst [vmem:[%s226 + $0x690] sm:$0xff] %v647
                %v649 = vld [vmem:[%s225 + $0xd28] sm:$0xff]
                %650 = vst [vmem:[%s226 + $0x698] sm:$0xff] %v649
                %v651 = vld [vmem:[%s225 + $0xd40] sm:$0xff]
                %652 = vst [vmem:[%s226 + $0x6a0] sm:$0xff] %v651
                %v653 = vld [vmem:[%s225 + $0xd48] sm:$0xff]
                %654 = vst [vmem:[%s226 + $0x6a8] sm:$0xff] %v653
                %v655 = vld [vmem:[%s225 + $0xd60] sm:$0xff]
                %656 = vst [vmem:[%s226 + $0x6b0] sm:$0xff] %v655
                %v657 = vld [vmem:[%s225 + $0xd68] sm:$0xff]
                %658 = vst [vmem:[%s226 + $0x6b8] sm:$0xff] %v657
                %v659 = vld [vmem:[%s225 + $0xd80] sm:$0xff]
                %660 = vst [vmem:[%s226 + $0x6c0] sm:$0xff] %v659
                %v661 = vld [vmem:[%s225 + $0xd88] sm:$0xff]
                %662 = vst [vmem:[%s226 + $0x6c8] sm:$0xff] %v661
                %v663 = vld [vmem:[%s225 + $0xda0] sm:$0xff]
                %664 = vst [vmem:[%s226 + $0x6d0] sm:$0xff] %v663
                %v665 = vld [vmem:[%s225 + $0xda8] sm:$0xff]
                %666 = vst [vmem:[%s226 + $0x6d8] sm:$0xff] %v665
                %v667 = vld [vmem:[%s225 + $0xdc0] sm:$0xff]
                %668 = vst [vmem:[%s226 + $0x6e0] sm:$0xff] %v667
                %v669 = vld [vmem:[%s225 + $0xdc8] sm:$0xff]
                %670 = vst [vmem:[%s226 + $0x6e8] sm:$0xff] %v669
                %v671 = vld [vmem:[%s225 + $0xde0] sm:$0xff]
                %672 = vst [vmem:[%s226 + $0x6f0] sm:$0xff] %v671
                %v673 = vld [vmem:[%s225 + $0xde8] sm:$0xff]
                %674 = vst [vmem:[%s226 + $0x6f8] sm:$0xff] %v673
                %v675 = vld [vmem:[%s225 + $0xe00] sm:$0xff]
                %676 = vst [vmem:[%s226 + $0x700] sm:$0xff] %v675
                %v677 = vld [vmem:[%s225 + $0xe08] sm:$0xff]
                %678 = vst [vmem:[%s226 + $0x708] sm:$0xff] %v677
                %v679 = vld [vmem:[%s225 + $0xe20] sm:$0xff]
                %680 = vst [vmem:[%s226 + $0x710] sm:$0xff] %v679
                %v681 = vld [vmem:[%s225 + $0xe28] sm:$0xff]
                %682 = vst [vmem:[%s226 + $0x718] sm:$0xff] %v681
                %v683 = vld [vmem:[%s225 + $0xe40] sm:$0xff]
                %684 = vst [vmem:[%s226 + $0x720] sm:$0xff] %v683
                %v685 = vld [vmem:[%s225 + $0xe48] sm:$0xff]
                %686 = vst [vmem:[%s226 + $0x728] sm:$0xff] %v685
                %v687 = vld [vmem:[%s225 + $0xe60] sm:$0xff]
                %688 = vst [vmem:[%s226 + $0x730] sm:$0xff] %v687
                %v689 = vld [vmem:[%s225 + $0xe68] sm:$0xff]
                %690 = vst [vmem:[%s226 + $0x738] sm:$0xff] %v689
                %v691 = vld [vmem:[%s225 + $0xe80] sm:$0xff]
                %692 = vst [vmem:[%s226 + $0x740] sm:$0xff] %v691
                %v693 = vld [vmem:[%s225 + $0xe88] sm:$0xff]
                %694 = vst [vmem:[%s226 + $0x748] sm:$0xff] %v693
                %v695 = vld [vmem:[%s225 + $0xea0] sm:$0xff]
                %696 = vst [vmem:[%s226 + $0x750] sm:$0xff] %v695
                %v697 = vld [vmem:[%s225 + $0xea8] sm:$0xff]
                %698 = vst [vmem:[%s226 + $0x758] sm:$0xff] %v697
                %v699 = vld [vmem:[%s225 + $0xec0] sm:$0xff]
                %700 = vst [vmem:[%s226 + $0x760] sm:$0xff] %v699
                %v701 = vld [vmem:[%s225 + $0xec8] sm:$0xff]
                %702 = vst [vmem:[%s226 + $0x768] sm:$0xff] %v701
                %v703 = vld [vmem:[%s225 + $0xee0] sm:$0xff]
                %704 = vst [vmem:[%s226 + $0x770] sm:$0xff] %v703
                %v705 = vld [vmem:[%s225 + $0xee8] sm:$0xff]
                %706 = vst [vmem:[%s226 + $0x778] sm:$0xff] %v705
                %v707 = vld [vmem:[%s225 + $0xf00] sm:$0xff]
                %708 = vst [vmem:[%s226 + $0x780] sm:$0xff] %v707
                %v709 = vld [vmem:[%s225 + $0xf08] sm:$0xff]
                %710 = vst [vmem:[%s226 + $0x788] sm:$0xff] %v709
                %v711 = vld [vmem:[%s225 + $0xf20] sm:$0xff]
                %712 = vst [vmem:[%s226 + $0x790] sm:$0xff] %v711
                %v713 = vld [vmem:[%s225 + $0xf28] sm:$0xff]
                %714 = vst [vmem:[%s226 + $0x798] sm:$0xff] %v713
                %v715 = vld [vmem:[%s225 + $0xf40] sm:$0xff]
                %716 = vst [vmem:[%s226 + $0x7a0] sm:$0xff] %v715
                %v717 = vld [vmem:[%s225 + $0xf48] sm:$0xff]
                %718 = vst [vmem:[%s226 + $0x7a8] sm:$0xff] %v717
                %v719 = vld [vmem:[%s225 + $0xf60] sm:$0xff]
                %720 = vst [vmem:[%s226 + $0x7b0] sm:$0xff] %v719
                %v721 = vld [vmem:[%s225 + $0xf68] sm:$0xff]
                %722 = vst [vmem:[%s226 + $0x7b8] sm:$0xff] %v721
                %v723 = vld [vmem:[%s225 + $0xf80] sm:$0xff]
                %724 = vst [vmem:[%s226 + $0x7c0] sm:$0xff] %v723
                %v725 = vld [vmem:[%s225 + $0xf88] sm:$0xff]
                %726 = vst [vmem:[%s226 + $0x7c8] sm:$0xff] %v725
                %v727 = vld [vmem:[%s225 + $0xfa0] sm:$0xff]
                %728 = vst [vmem:[%s226 + $0x7d0] sm:$0xff] %v727
                %v729 = vld [vmem:[%s225 + $0xfa8] sm:$0xff]
                %730 = vst [vmem:[%s226 + $0x7d8] sm:$0xff] %v729
                %v731 = vld [vmem:[%s225 + $0xfc0] sm:$0xff]
                %732 = vst [vmem:[%s226 + $0x7e0] sm:$0xff] %v731
                %v733 = vld [vmem:[%s225 + $0xfc8] sm:$0xff]
                %734 = vst [vmem:[%s226 + $0x7e8] sm:$0xff] %v733
                %v735 = vld [vmem:[%s225 + $0xfe0] sm:$0xff]
                %736 = vst [vmem:[%s226 + $0x7f0] sm:$0xff] %v735
                %v737 = vld [vmem:[%s225 + $0xfe8] sm:$0xff]
                %738 = vst [vmem:[%s226 + $0x7f8] sm:$0xff] %v737
                %v739 = vld [vmem:[%s225 + $0x1000] sm:$0xff]
                %740 = vst [vmem:[%s226 + $0x800] sm:$0xff] %v739
                %v741 = vld [vmem:[%s225 + $0x1008] sm:$0xff]
                %742 = vst [vmem:[%s226 + $0x808] sm:$0xff] %v741
                %v743 = vld [vmem:[%s225 + $0x1020] sm:$0xff]
                %744 = vst [vmem:[%s226 + $0x810] sm:$0xff] %v743
                %v745 = vld [vmem:[%s225 + $0x1028] sm:$0xff]
                %746 = vst [vmem:[%s226 + $0x818] sm:$0xff] %v745
                %v747 = vld [vmem:[%s225 + $0x1040] sm:$0xff]
                %748 = vst [vmem:[%s226 + $0x820] sm:$0xff] %v747
                %v749 = vld [vmem:[%s225 + $0x1048] sm:$0xff]
                %750 = vst [vmem:[%s226 + $0x828] sm:$0xff] %v749
                %v751 = vld [vmem:[%s225 + $0x1060] sm:$0xff]
                %752 = vst [vmem:[%s226 + $0x830] sm:$0xff] %v751
                %v753 = vld [vmem:[%s225 + $0x1068] sm:$0xff]
                %754 = vst [vmem:[%s226 + $0x838] sm:$0xff] %v753
                %v755 = vld [vmem:[%s225 + $0x1080] sm:$0xff]
                %756 = vst [vmem:[%s226 + $0x840] sm:$0xff] %v755
                %v757 = vld [vmem:[%s225 + $0x1088] sm:$0xff]
                %758 = vst [vmem:[%s226 + $0x848] sm:$0xff] %v757
                %v759 = vld [vmem:[%s225 + $0x10a0] sm:$0xff]
                %760 = vst [vmem:[%s226 + $0x850] sm:$0xff] %v759
                %v761 = vld [vmem:[%s225 + $0x10a8] sm:$0xff]
                %762 = vst [vmem:[%s226 + $0x858] sm:$0xff] %v761
                %v763 = vld [vmem:[%s225 + $0x10c0] sm:$0xff]
                %764 = vst [vmem:[%s226 + $0x860] sm:$0xff] %v763
                %v765 = vld [vmem:[%s225 + $0x10c8] sm:$0xff]
                %766 = vst [vmem:[%s226 + $0x868] sm:$0xff] %v765
                %v767 = vld [vmem:[%s225 + $0x10e0] sm:$0xff]
                %768 = vst [vmem:[%s226 + $0x870] sm:$0xff] %v767
                %v769 = vld [vmem:[%s225 + $0x10e8] sm:$0xff]
                %770 = vst [vmem:[%s226 + $0x878] sm:$0xff] %v769
                %v771 = vld [vmem:[%s225 + $0x1100] sm:$0xff]
                %772 = vst [vmem:[%s226 + $0x880] sm:$0xff] %v771
                %v773 = vld [vmem:[%s225 + $0x1108] sm:$0xff]
                %774 = vst [vmem:[%s226 + $0x888] sm:$0xff] %v773
                %v775 = vld [vmem:[%s225 + $0x1120] sm:$0xff]
                %776 = vst [vmem:[%s226 + $0x890] sm:$0xff] %v775
                %v777 = vld [vmem:[%s225 + $0x1128] sm:$0xff]
                %778 = vst [vmem:[%s226 + $0x898] sm:$0xff] %v777
                %v779 = vld [vmem:[%s225 + $0x1140] sm:$0xff]
                %780 = vst [vmem:[%s226 + $0x8a0] sm:$0xff] %v779
                %v781 = vld [vmem:[%s225 + $0x1148] sm:$0xff]
                %782 = vst [vmem:[%s226 + $0x8a8] sm:$0xff] %v781
                %v783 = vld [vmem:[%s225 + $0x1160] sm:$0xff]
                %784 = vst [vmem:[%s226 + $0x8b0] sm:$0xff] %v783
                %v785 = vld [vmem:[%s225 + $0x1168] sm:$0xff]
                %786 = vst [vmem:[%s226 + $0x8b8] sm:$0xff] %v785
                %v787 = vld [vmem:[%s225 + $0x1180] sm:$0xff]
                %788 = vst [vmem:[%s226 + $0x8c0] sm:$0xff] %v787
                %v789 = vld [vmem:[%s225 + $0x1188] sm:$0xff]
                %790 = vst [vmem:[%s226 + $0x8c8] sm:$0xff] %v789
                %v791 = vld [vmem:[%s225 + $0x11a0] sm:$0xff]
                %792 = vst [vmem:[%s226 + $0x8d0] sm:$0xff] %v791
                %v793 = vld [vmem:[%s225 + $0x11a8] sm:$0xff]
                %794 = vst [vmem:[%s226 + $0x8d8] sm:$0xff] %v793
                %v795 = vld [vmem:[%s225 + $0x11c0] sm:$0xff]
                %796 = vst [vmem:[%s226 + $0x8e0] sm:$0xff] %v795
                %v797 = vld [vmem:[%s225 + $0x11c8] sm:$0xff]
                %798 = vst [vmem:[%s226 + $0x8e8] sm:$0xff] %v797
                %v799 = vld [vmem:[%s225 + $0x11e0] sm:$0xff]
                %800 = vst [vmem:[%s226 + $0x8f0] sm:$0xff] %v799
                %v801 = vld [vmem:[%s225 + $0x11e8] sm:$0xff]
                %802 = vst [vmem:[%s226 + $0x8f8] sm:$0xff] %v801
                %v803 = vld [vmem:[%s225 + $0x1200] sm:$0xff]
                %804 = vst [vmem:[%s226 + $0x900] sm:$0xff] %v803
                %v805 = vld [vmem:[%s225 + $0x1208] sm:$0xff]
                %806 = vst [vmem:[%s226 + $0x908] sm:$0xff] %v805
                %v807 = vld [vmem:[%s225 + $0x1220] sm:$0xff]
                %808 = vst [vmem:[%s226 + $0x910] sm:$0xff] %v807
                %v809 = vld [vmem:[%s225 + $0x1228] sm:$0xff]
                %810 = vst [vmem:[%s226 + $0x918] sm:$0xff] %v809
                %v811 = vld [vmem:[%s225 + $0x1240] sm:$0xff]
                %812 = vst [vmem:[%s226 + $0x920] sm:$0xff] %v811
                %v813 = vld [vmem:[%s225 + $0x1248] sm:$0xff]
                %814 = vst [vmem:[%s226 + $0x928] sm:$0xff] %v813
                %v815 = vld [vmem:[%s225 + $0x1260] sm:$0xff]
                %816 = vst [vmem:[%s226 + $0x930] sm:$0xff] %v815
                %v817 = vld [vmem:[%s225 + $0x1268] sm:$0xff]
                %818 = vst [vmem:[%s226 + $0x938] sm:$0xff] %v817
                %v819 = vld [vmem:[%s225 + $0x1280] sm:$0xff]
                %820 = vst [vmem:[%s226 + $0x940] sm:$0xff] %v819
                %v821 = vld [vmem:[%s225 + $0x1288] sm:$0xff]
                %822 = vst [vmem:[%s226 + $0x948] sm:$0xff] %v821
                %v823 = vld [vmem:[%s225 + $0x12a0] sm:$0xff]
                %824 = vst [vmem:[%s226 + $0x950] sm:$0xff] %v823
                %v825 = vld [vmem:[%s225 + $0x12a8] sm:$0xff]
                %826 = vst [vmem:[%s226 + $0x958] sm:$0xff] %v825
                %v827 = vld [vmem:[%s225 + $0x12c0] sm:$0xff]
                %828 = vst [vmem:[%s226 + $0x960] sm:$0xff] %v827
                %v829 = vld [vmem:[%s225 + $0x12c8] sm:$0xff]
                %830 = vst [vmem:[%s226 + $0x968] sm:$0xff] %v829
                %v831 = vld [vmem:[%s225 + $0x12e0] sm:$0xff]
                %832 = vst [vmem:[%s226 + $0x970] sm:$0xff] %v831
                %v833 = vld [vmem:[%s225 + $0x12e8] sm:$0xff]
                %834 = vst [vmem:[%s226 + $0x978] sm:$0xff] %v833
                %v835 = vld [vmem:[%s225 + $0x1300] sm:$0xff]
                %836 = vst [vmem:[%s226 + $0x980] sm:$0xff] %v835
                %v837 = vld [vmem:[%s225 + $0x1308] sm:$0xff]
                %838 = vst [vmem:[%s226 + $0x988] sm:$0xff] %v837
                %v839 = vld [vmem:[%s225 + $0x1320] sm:$0xff]
                %840 = vst [vmem:[%s226 + $0x990] sm:$0xff] %v839
                %v841 = vld [vmem:[%s225 + $0x1328] sm:$0xff]
                %842 = vst [vmem:[%s226 + $0x998] sm:$0xff] %v841
                %v843 = vld [vmem:[%s225 + $0x1340] sm:$0xff]
                %844 = vst [vmem:[%s226 + $0x9a0] sm:$0xff] %v843
                %v845 = vld [vmem:[%s225 + $0x1348] sm:$0xff]
                %846 = vst [vmem:[%s226 + $0x9a8] sm:$0xff] %v845
                %v847 = vld [vmem:[%s225 + $0x1360] sm:$0xff]
                %848 = vst [vmem:[%s226 + $0x9b0] sm:$0xff] %v847
                %v849 = vld [vmem:[%s225 + $0x1368] sm:$0xff]
                %850 = vst [vmem:[%s226 + $0x9b8] sm:$0xff] %v849
                %v851 = vld [vmem:[%s225 + $0x1380] sm:$0xff]
                %852 = vst [vmem:[%s226 + $0x9c0] sm:$0xff] %v851
                %v853 = vld [vmem:[%s225 + $0x1388] sm:$0xff]
                %854 = vst [vmem:[%s226 + $0x9c8] sm:$0xff] %v853
                %v855 = vld [vmem:[%s225 + $0x13a0] sm:$0xff]
                %856 = vst [vmem:[%s226 + $0x9d0] sm:$0xff] %v855
                %v857 = vld [vmem:[%s225 + $0x13a8] sm:$0xff]
                %858 = vst [vmem:[%s226 + $0x9d8] sm:$0xff] %v857
                %v859 = vld [vmem:[%s225 + $0x13c0] sm:$0xff]
                %860 = vst [vmem:[%s226 + $0x9e0] sm:$0xff] %v859
                %v861 = vld [vmem:[%s225 + $0x13c8] sm:$0xff]
                %862 = vst [vmem:[%s226 + $0x9e8] sm:$0xff] %v861
                %v863 = vld [vmem:[%s225 + $0x13e0] sm:$0xff]
                %864 = vst [vmem:[%s226 + $0x9f0] sm:$0xff] %v863
                %v865 = vld [vmem:[%s225 + $0x13e8] sm:$0xff]
                %866 = vst [vmem:[%s226 + $0x9f8] sm:$0xff] %v865
                %v867 = vld [vmem:[%s225 + $0x1400] sm:$0xff]
                %868 = vst [vmem:[%s226 + $0xa00] sm:$0xff] %v867
                %v869 = vld [vmem:[%s225 + $0x1408] sm:$0xff]
                %870 = vst [vmem:[%s226 + $0xa08] sm:$0xff] %v869
                %v871 = vld [vmem:[%s225 + $0x1420] sm:$0xff]
                %872 = vst [vmem:[%s226 + $0xa10] sm:$0xff] %v871
                %v873 = vld [vmem:[%s225 + $0x1428] sm:$0xff]
                %874 = vst [vmem:[%s226 + $0xa18] sm:$0xff] %v873
                %v875 = vld [vmem:[%s225 + $0x1440] sm:$0xff]
                %876 = vst [vmem:[%s226 + $0xa20] sm:$0xff] %v875
                %v877 = vld [vmem:[%s225 + $0x1448] sm:$0xff]
                %878 = vst [vmem:[%s226 + $0xa28] sm:$0xff] %v877
                %v879 = vld [vmem:[%s225 + $0x1460] sm:$0xff]
                %880 = vst [vmem:[%s226 + $0xa30] sm:$0xff] %v879
                %v881 = vld [vmem:[%s225 + $0x1468] sm:$0xff]
                %882 = vst [vmem:[%s226 + $0xa38] sm:$0xff] %v881
                %v883 = vld [vmem:[%s225 + $0x1480] sm:$0xff]
                %884 = vst [vmem:[%s226 + $0xa40] sm:$0xff] %v883
                %v885 = vld [vmem:[%s225 + $0x1488] sm:$0xff]
                %886 = vst [vmem:[%s226 + $0xa48] sm:$0xff] %v885
                %v887 = vld [vmem:[%s225 + $0x14a0] sm:$0xff]
                %888 = vst [vmem:[%s226 + $0xa50] sm:$0xff] %v887
                %v889 = vld [vmem:[%s225 + $0x14a8] sm:$0xff]
                %890 = vst [vmem:[%s226 + $0xa58] sm:$0xff] %v889
                %v891 = vld [vmem:[%s225 + $0x14c0] sm:$0xff]
                %892 = vst [vmem:[%s226 + $0xa60] sm:$0xff] %v891
                %v893 = vld [vmem:[%s225 + $0x14c8] sm:$0xff]
                %894 = vst [vmem:[%s226 + $0xa68] sm:$0xff] %v893
                %v895 = vld [vmem:[%s225 + $0x14e0] sm:$0xff]
                %896 = vst [vmem:[%s226 + $0xa70] sm:$0xff] %v895
                %v897 = vld [vmem:[%s225 + $0x14e8] sm:$0xff]
                %898 = vst [vmem:[%s226 + $0xa78] sm:$0xff] %v897
                %v899 = vld [vmem:[%s225 + $0x1500] sm:$0xff]
                %900 = vst [vmem:[%s226 + $0xa80] sm:$0xff] %v899
                %v901 = vld [vmem:[%s225 + $0x1508] sm:$0xff]
                %902 = vst [vmem:[%s226 + $0xa88] sm:$0xff] %v901
                %v903 = vld [vmem:[%s225 + $0x1520] sm:$0xff]
                %904 = vst [vmem:[%s226 + $0xa90] sm:$0xff] %v903
                %v905 = vld [vmem:[%s225 + $0x1528] sm:$0xff]
                %906 = vst [vmem:[%s226 + $0xa98] sm:$0xff] %v905
                %v907 = vld [vmem:[%s225 + $0x1540] sm:$0xff]
                %908 = vst [vmem:[%s226 + $0xaa0] sm:$0xff] %v907
                %v909 = vld [vmem:[%s225 + $0x1548] sm:$0xff]
                %910 = vst [vmem:[%s226 + $0xaa8] sm:$0xff] %v909
                %v911 = vld [vmem:[%s225 + $0x1560] sm:$0xff]
                %912 = vst [vmem:[%s226 + $0xab0] sm:$0xff] %v911
                %v913 = vld [vmem:[%s225 + $0x1568] sm:$0xff]
                %914 = vst [vmem:[%s226 + $0xab8] sm:$0xff] %v913
                %v915 = vld [vmem:[%s225 + $0x1580] sm:$0xff]
                %916 = vst [vmem:[%s226 + $0xac0] sm:$0xff] %v915
                %v917 = vld [vmem:[%s225 + $0x1588] sm:$0xff]
                %918 = vst [vmem:[%s226 + $0xac8] sm:$0xff] %v917
                %v919 = vld [vmem:[%s225 + $0x15a0] sm:$0xff]
                %920 = vst [vmem:[%s226 + $0xad0] sm:$0xff] %v919
                %v921 = vld [vmem:[%s225 + $0x15a8] sm:$0xff]
                %922 = vst [vmem:[%s226 + $0xad8] sm:$0xff] %v921
                %v923 = vld [vmem:[%s225 + $0x15c0] sm:$0xff]
                %924 = vst [vmem:[%s226 + $0xae0] sm:$0xff] %v923
                %v925 = vld [vmem:[%s225 + $0x15c8] sm:$0xff]
                %926 = vst [vmem:[%s226 + $0xae8] sm:$0xff] %v925
                %v927 = vld [vmem:[%s225 + $0x15e0] sm:$0xff]
                %928 = vst [vmem:[%s226 + $0xaf0] sm:$0xff] %v927
                %v929 = vld [vmem:[%s225 + $0x15e8] sm:$0xff]
                %930 = vst [vmem:[%s226 + $0xaf8] sm:$0xff] %v929
                %v931 = vld [vmem:[%s225 + $0x1600] sm:$0xff]
                %932 = vst [vmem:[%s226 + $0xb00] sm:$0xff] %v931
                %v933 = vld [vmem:[%s225 + $0x1608] sm:$0xff]
                %934 = vst [vmem:[%s226 + $0xb08] sm:$0xff] %v933
                %v935 = vld [vmem:[%s225 + $0x1620] sm:$0xff]
                %936 = vst [vmem:[%s226 + $0xb10] sm:$0xff] %v935
                %v937 = vld [vmem:[%s225 + $0x1628] sm:$0xff]
                %938 = vst [vmem:[%s226 + $0xb18] sm:$0xff] %v937
                %v939 = vld [vmem:[%s225 + $0x1640] sm:$0xff]
                %940 = vst [vmem:[%s226 + $0xb20] sm:$0xff] %v939
                %v941 = vld [vmem:[%s225 + $0x1648] sm:$0xff]
                %942 = vst [vmem:[%s226 + $0xb28] sm:$0xff] %v941
                %v943 = vld [vmem:[%s225 + $0x1660] sm:$0xff]
                %944 = vst [vmem:[%s226 + $0xb30] sm:$0xff] %v943
                %v945 = vld [vmem:[%s225 + $0x1668] sm:$0xff]
                %946 = vst [vmem:[%s226 + $0xb38] sm:$0xff] %v945
                %v947 = vld [vmem:[%s225 + $0x1680] sm:$0xff]
                %948 = vst [vmem:[%s226 + $0xb40] sm:$0xff] %v947
                %v949 = vld [vmem:[%s225 + $0x1688] sm:$0xff]
                %950 = vst [vmem:[%s226 + $0xb48] sm:$0xff] %v949
                %v951 = vld [vmem:[%s225 + $0x16a0] sm:$0xff]
                %952 = vst [vmem:[%s226 + $0xb50] sm:$0xff] %v951
                %v953 = vld [vmem:[%s225 + $0x16a8] sm:$0xff]
                %954 = vst [vmem:[%s226 + $0xb58] sm:$0xff] %v953
                %v955 = vld [vmem:[%s225 + $0x16c0] sm:$0xff]
                %956 = vst [vmem:[%s226 + $0xb60] sm:$0xff] %v955
                %v957 = vld [vmem:[%s225 + $0x16c8] sm:$0xff]
                %958 = vst [vmem:[%s226 + $0xb68] sm:$0xff] %v957
                %v959 = vld [vmem:[%s225 + $0x16e0] sm:$0xff]
                %960 = vst [vmem:[%s226 + $0xb70] sm:$0xff] %v959
                %v961 = vld [vmem:[%s225 + $0x16e8] sm:$0xff]
                %962 = vst [vmem:[%s226 + $0xb78] sm:$0xff] %v961
                %v963 = vld [vmem:[%s225 + $0x1700] sm:$0xff]
                %964 = vst [vmem:[%s226 + $0xb80] sm:$0xff] %v963
                %v965 = vld [vmem:[%s225 + $0x1708] sm:$0xff]
                %966 = vst [vmem:[%s226 + $0xb88] sm:$0xff] %v965
                %v967 = vld [vmem:[%s225 + $0x1720] sm:$0xff]
                %968 = vst [vmem:[%s226 + $0xb90] sm:$0xff] %v967
                %v969 = vld [vmem:[%s225 + $0x1728] sm:$0xff]
                %970 = vst [vmem:[%s226 + $0xb98] sm:$0xff] %v969
                %v971 = vld [vmem:[%s225 + $0x1740] sm:$0xff]
                %972 = vst [vmem:[%s226 + $0xba0] sm:$0xff] %v971
                %v973 = vld [vmem:[%s225 + $0x1748] sm:$0xff]
                %974 = vst [vmem:[%s226 + $0xba8] sm:$0xff] %v973
                %v975 = vld [vmem:[%s225 + $0x1760] sm:$0xff]
                %976 = vst [vmem:[%s226 + $0xbb0] sm:$0xff] %v975
                %v977 = vld [vmem:[%s225 + $0x1768] sm:$0xff]
                %978 = vst [vmem:[%s226 + $0xbb8] sm:$0xff] %v977
                %v979 = vld [vmem:[%s225 + $0x1780] sm:$0xff]
                %980 = vst [vmem:[%s226 + $0xbc0] sm:$0xff] %v979
                %v981 = vld [vmem:[%s225 + $0x1788] sm:$0xff]
                %982 = vst [vmem:[%s226 + $0xbc8] sm:$0xff] %v981
                %v983 = vld [vmem:[%s225 + $0x17a0] sm:$0xff]
                %984 = vst [vmem:[%s226 + $0xbd0] sm:$0xff] %v983
                %v985 = vld [vmem:[%s225 + $0x17a8] sm:$0xff]
                %986 = vst [vmem:[%s226 + $0xbd8] sm:$0xff] %v985
                %v987 = vld [vmem:[%s225 + $0x17c0] sm:$0xff]
                %988 = vst [vmem:[%s226 + $0xbe0] sm:$0xff] %v987
                %v989 = vld [vmem:[%s225 + $0x17c8] sm:$0xff]
                %990 = vst [vmem:[%s226 + $0xbe8] sm:$0xff] %v989
                %v991 = vld [vmem:[%s225 + $0x17e0] sm:$0xff]
                %992 = vst [vmem:[%s226 + $0xbf0] sm:$0xff] %v991
                %v993 = vld [vmem:[%s225 + $0x17e8] sm:$0xff]
                %994 = vst [vmem:[%s226 + $0xbf8] sm:$0xff] %v993
                %v995 = vld [vmem:[%s225 + $0x1800] sm:$0xff]
                %996 = vst [vmem:[%s226 + $0xc00] sm:$0xff] %v995
                %v997 = vld [vmem:[%s225 + $0x1808] sm:$0xff]
                %998 = vst [vmem:[%s226 + $0xc08] sm:$0xff] %v997
                %v999 = vld [vmem:[%s225 + $0x1820] sm:$0xff]
                %1000 = vst [vmem:[%s226 + $0xc10] sm:$0xff] %v999
                %v1001 = vld [vmem:[%s225 + $0x1828] sm:$0xff]
                %1002 = vst [vmem:[%s226 + $0xc18] sm:$0xff] %v1001
                %v1003 = vld [vmem:[%s225 + $0x1840] sm:$0xff]
                %1004 = vst [vmem:[%s226 + $0xc20] sm:$0xff] %v1003
                %v1005 = vld [vmem:[%s225 + $0x1848] sm:$0xff]
                %1006 = vst [vmem:[%s226 + $0xc28] sm:$0xff] %v1005
                %v1007 = vld [vmem:[%s225 + $0x1860] sm:$0xff]
                %1008 = vst [vmem:[%s226 + $0xc30] sm:$0xff] %v1007
                %v1009 = vld [vmem:[%s225 + $0x1868] sm:$0xff]
                %1010 = vst [vmem:[%s226 + $0xc38] sm:$0xff] %v1009
                %v1011 = vld [vmem:[%s225 + $0x1880] sm:$0xff]
                %1012 = vst [vmem:[%s226 + $0xc40] sm:$0xff] %v1011
                %v1013 = vld [vmem:[%s225 + $0x1888] sm:$0xff]
                %1014 = vst [vmem:[%s226 + $0xc48] sm:$0xff] %v1013
                %v1015 = vld [vmem:[%s225 + $0x18a0] sm:$0xff]
                %1016 = vst [vmem:[%s226 + $0xc50] sm:$0xff] %v1015
                %v1017 = vld [vmem:[%s225 + $0x18a8] sm:$0xff]
                %1018 = vst [vmem:[%s226 + $0xc58] sm:$0xff] %v1017
                %v1019 = vld [vmem:[%s225 + $0x18c0] sm:$0xff]
                %1020 = vst [vmem:[%s226 + $0xc60] sm:$0xff] %v1019
                %v1021 = vld [vmem:[%s225 + $0x18c8] sm:$0xff]
                %1022 = vst [vmem:[%s226 + $0xc68] sm:$0xff] %v1021
                %v1023 = vld [vmem:[%s225 + $0x18e0] sm:$0xff]
                %1024 = vst [vmem:[%s226 + $0xc70] sm:$0xff] %v1023
                %v1025 = vld [vmem:[%s225 + $0x18e8] sm:$0xff]
                %1026 = vst [vmem:[%s226 + $0xc78] sm:$0xff] %v1025
                %v1027 = vld [vmem:[%s225 + $0x1900] sm:$0xff]
                %1028 = vst [vmem:[%s226 + $0xc80] sm:$0xff] %v1027
                %v1029 = vld [vmem:[%s225 + $0x1908] sm:$0xff]
                %1030 = vst [vmem:[%s226 + $0xc88] sm:$0xff] %v1029
                %v1031 = vld [vmem:[%s225 + $0x1920] sm:$0xff]
                %1032 = vst [vmem:[%s226 + $0xc90] sm:$0xff] %v1031
                %v1033 = vld [vmem:[%s225 + $0x1928] sm:$0xff]
                %1034 = vst [vmem:[%s226 + $0xc98] sm:$0xff] %v1033
                %v1035 = vld [vmem:[%s225 + $0x1940] sm:$0xff]
                %1036 = vst [vmem:[%s226 + $0xca0] sm:$0xff] %v1035
                %v1037 = vld [vmem:[%s225 + $0x1948] sm:$0xff]
                %1038 = vst [vmem:[%s226 + $0xca8] sm:$0xff] %v1037
                %v1039 = vld [vmem:[%s225 + $0x1960] sm:$0xff]
                %1040 = vst [vmem:[%s226 + $0xcb0] sm:$0xff] %v1039
                %v1041 = vld [vmem:[%s225 + $0x1968] sm:$0xff]
                %1042 = vst [vmem:[%s226 + $0xcb8] sm:$0xff] %v1041
                %v1043 = vld [vmem:[%s225 + $0x1980] sm:$0xff]
                %1044 = vst [vmem:[%s226 + $0xcc0] sm:$0xff] %v1043
                %v1045 = vld [vmem:[%s225 + $0x1988] sm:$0xff]
                %1046 = vst [vmem:[%s226 + $0xcc8] sm:$0xff] %v1045
                %v1047 = vld [vmem:[%s225 + $0x19a0] sm:$0xff]
                %1048 = vst [vmem:[%s226 + $0xcd0] sm:$0xff] %v1047
                %v1049 = vld [vmem:[%s225 + $0x19a8] sm:$0xff]
                %1050 = vst [vmem:[%s226 + $0xcd8] sm:$0xff] %v1049
                %v1051 = vld [vmem:[%s225 + $0x19c0] sm:$0xff]
                %1052 = vst [vmem:[%s226 + $0xce0] sm:$0xff] %v1051
                %v1053 = vld [vmem:[%s225 + $0x19c8] sm:$0xff]
                %1054 = vst [vmem:[%s226 + $0xce8] sm:$0xff] %v1053
                %v1055 = vld [vmem:[%s225 + $0x19e0] sm:$0xff]
                %1056 = vst [vmem:[%s226 + $0xcf0] sm:$0xff] %v1055
                %v1057 = vld [vmem:[%s225 + $0x19e8] sm:$0xff]
                %1058 = vst [vmem:[%s226 + $0xcf8] sm:$0xff] %v1057
                %v1059 = vld [vmem:[%s225 + $0x1a00] sm:$0xff]
                %1060 = vst [vmem:[%s226 + $0xd00] sm:$0xff] %v1059
                %v1061 = vld [vmem:[%s225 + $0x1a08] sm:$0xff]
                %1062 = vst [vmem:[%s226 + $0xd08] sm:$0xff] %v1061
                %v1063 = vld [vmem:[%s225 + $0x1a20] sm:$0xff]
                %1064 = vst [vmem:[%s226 + $0xd10] sm:$0xff] %v1063
                %v1065 = vld [vmem:[%s225 + $0x1a28] sm:$0xff]
                %1066 = vst [vmem:[%s226 + $0xd18] sm:$0xff] %v1065
                %v1067 = vld [vmem:[%s225 + $0x1a40] sm:$0xff]
                %1068 = vst [vmem:[%s226 + $0xd20] sm:$0xff] %v1067
                %v1069 = vld [vmem:[%s225 + $0x1a48] sm:$0xff]
                %1070 = vst [vmem:[%s226 + $0xd28] sm:$0xff] %v1069
                %v1071 = vld [vmem:[%s225 + $0x1a60] sm:$0xff]
                %1072 = vst [vmem:[%s226 + $0xd30] sm:$0xff] %v1071
                %v1073 = vld [vmem:[%s225 + $0x1a68] sm:$0xff]
                %1074 = vst [vmem:[%s226 + $0xd38] sm:$0xff] %v1073
                %v1075 = vld [vmem:[%s225 + $0x1a80] sm:$0xff]
                %1076 = vst [vmem:[%s226 + $0xd40] sm:$0xff] %v1075
                %v1077 = vld [vmem:[%s225 + $0x1a88] sm:$0xff]
                %1078 = vst [vmem:[%s226 + $0xd48] sm:$0xff] %v1077
                %v1079 = vld [vmem:[%s225 + $0x1aa0] sm:$0xff]
                %1080 = vst [vmem:[%s226 + $0xd50] sm:$0xff] %v1079
                %v1081 = vld [vmem:[%s225 + $0x1aa8] sm:$0xff]
                %1082 = vst [vmem:[%s226 + $0xd58] sm:$0xff] %v1081
                %v1083 = vld [vmem:[%s225 + $0x1ac0] sm:$0xff]
                %1084 = vst [vmem:[%s226 + $0xd60] sm:$0xff] %v1083
                %v1085 = vld [vmem:[%s225 + $0x1ac8] sm:$0xff]
                %1086 = vst [vmem:[%s226 + $0xd68] sm:$0xff] %v1085
                %v1087 = vld [vmem:[%s225 + $0x1ae0] sm:$0xff]
                %1088 = vst [vmem:[%s226 + $0xd70] sm:$0xff] %v1087
                %v1089 = vld [vmem:[%s225 + $0x1ae8] sm:$0xff]
                %1090 = vst [vmem:[%s226 + $0xd78] sm:$0xff] %v1089
                %v1091 = vld [vmem:[%s225 + $0x1b00] sm:$0xff]
                %1092 = vst [vmem:[%s226 + $0xd80] sm:$0xff] %v1091
                %v1093 = vld [vmem:[%s225 + $0x1b08] sm:$0xff]
                %1094 = vst [vmem:[%s226 + $0xd88] sm:$0xff] %v1093
                %v1095 = vld [vmem:[%s225 + $0x1b20] sm:$0xff]
                %1096 = vst [vmem:[%s226 + $0xd90] sm:$0xff] %v1095
                %v1097 = vld [vmem:[%s225 + $0x1b28] sm:$0xff]
                %1098 = vst [vmem:[%s226 + $0xd98] sm:$0xff] %v1097
                %v1099 = vld [vmem:[%s225 + $0x1b40] sm:$0xff]
                %1100 = vst [vmem:[%s226 + $0xda0] sm:$0xff] %v1099
                %v1101 = vld [vmem:[%s225 + $0x1b48] sm:$0xff]
                %1102 = vst [vmem:[%s226 + $0xda8] sm:$0xff] %v1101
                %v1103 = vld [vmem:[%s225 + $0x1b60] sm:$0xff]
                %1104 = vst [vmem:[%s226 + $0xdb0] sm:$0xff] %v1103
                %v1105 = vld [vmem:[%s225 + $0x1b68] sm:$0xff]
                %1106 = vst [vmem:[%s226 + $0xdb8] sm:$0xff] %v1105
                %v1107 = vld [vmem:[%s225 + $0x1b80] sm:$0xff]
                %1108 = vst [vmem:[%s226 + $0xdc0] sm:$0xff] %v1107
                %v1109 = vld [vmem:[%s225 + $0x1b88] sm:$0xff]
                %1110 = vst [vmem:[%s226 + $0xdc8] sm:$0xff] %v1109
                %v1111 = vld [vmem:[%s225 + $0x1ba0] sm:$0xff]
                %1112 = vst [vmem:[%s226 + $0xdd0] sm:$0xff] %v1111
                %v1113 = vld [vmem:[%s225 + $0x1ba8] sm:$0xff]
                %1114 = vst [vmem:[%s226 + $0xdd8] sm:$0xff] %v1113
                %v1115 = vld [vmem:[%s225 + $0x1bc0] sm:$0xff]
                %1116 = vst [vmem:[%s226 + $0xde0] sm:$0xff] %v1115
                %v1117 = vld [vmem:[%s225 + $0x1bc8] sm:$0xff]
                %1118 = vst [vmem:[%s226 + $0xde8] sm:$0xff] %v1117
                %v1119 = vld [vmem:[%s225 + $0x1be0] sm:$0xff]
                %1120 = vst [vmem:[%s226 + $0xdf0] sm:$0xff] %v1119
                %v1121 = vld [vmem:[%s225 + $0x1be8] sm:$0xff]
                %1122 = vst [vmem:[%s226 + $0xdf8] sm:$0xff] %v1121
                %v1123 = vld [vmem:[%s225 + $0x1c00] sm:$0xff]
                %1124 = vst [vmem:[%s226 + $0xe00] sm:$0xff] %v1123
                %v1125 = vld [vmem:[%s225 + $0x1c08] sm:$0xff]
                %1126 = vst [vmem:[%s226 + $0xe08] sm:$0xff] %v1125
                %v1127 = vld [vmem:[%s225 + $0x1c20] sm:$0xff]
                %1128 = vst [vmem:[%s226 + $0xe10] sm:$0xff] %v1127
                %v1129 = vld [vmem:[%s225 + $0x1c28] sm:$0xff]
                %1130 = vst [vmem:[%s226 + $0xe18] sm:$0xff] %v1129
                %v1131 = vld [vmem:[%s225 + $0x1c40] sm:$0xff]
                %1132 = vst [vmem:[%s226 + $0xe20] sm:$0xff] %v1131
                %v1133 = vld [vmem:[%s225 + $0x1c48] sm:$0xff]
                %1134 = vst [vmem:[%s226 + $0xe28] sm:$0xff] %v1133
                %v1135 = vld [vmem:[%s225 + $0x1c60] sm:$0xff]
                %1136 = vst [vmem:[%s226 + $0xe30] sm:$0xff] %v1135
                %v1137 = vld [vmem:[%s225 + $0x1c68] sm:$0xff]
                %1138 = vst [vmem:[%s226 + $0xe38] sm:$0xff] %v1137
                %v1139 = vld [vmem:[%s225 + $0x1c80] sm:$0xff]
                %1140 = vst [vmem:[%s226 + $0xe40] sm:$0xff] %v1139
                %v1141 = vld [vmem:[%s225 + $0x1c88] sm:$0xff]
                %1142 = vst [vmem:[%s226 + $0xe48] sm:$0xff] %v1141
                %v1143 = vld [vmem:[%s225 + $0x1ca0] sm:$0xff]
                %1144 = vst [vmem:[%s226 + $0xe50] sm:$0xff] %v1143
                %v1145 = vld [vmem:[%s225 + $0x1ca8] sm:$0xff]
                %1146 = vst [vmem:[%s226 + $0xe58] sm:$0xff] %v1145
                %v1147 = vld [vmem:[%s225 + $0x1cc0] sm:$0xff]
                %1148 = vst [vmem:[%s226 + $0xe60] sm:$0xff] %v1147
                %v1149 = vld [vmem:[%s225 + $0x1cc8] sm:$0xff]
                %1150 = vst [vmem:[%s226 + $0xe68] sm:$0xff] %v1149
                %v1151 = vld [vmem:[%s225 + $0x1ce0] sm:$0xff]
                %1152 = vst [vmem:[%s226 + $0xe70] sm:$0xff] %v1151
                %v1153 = vld [vmem:[%s225 + $0x1ce8] sm:$0xff]
                %1154 = vst [vmem:[%s226 + $0xe78] sm:$0xff] %v1153
                %v1155 = vld [vmem:[%s225 + $0x1d00] sm:$0xff]
                %1156 = vst [vmem:[%s226 + $0xe80] sm:$0xff] %v1155
                %v1157 = vld [vmem:[%s225 + $0x1d08] sm:$0xff]
                %1158 = vst [vmem:[%s226 + $0xe88] sm:$0xff] %v1157
                %v1159 = vld [vmem:[%s225 + $0x1d20] sm:$0xff]
                %1160 = vst [vmem:[%s226 + $0xe90] sm:$0xff] %v1159
                %v1161 = vld [vmem:[%s225 + $0x1d28] sm:$0xff]
                %1162 = vst [vmem:[%s226 + $0xe98] sm:$0xff] %v1161
                %v1163 = vld [vmem:[%s225 + $0x1d40] sm:$0xff]
                %1164 = vst [vmem:[%s226 + $0xea0] sm:$0xff] %v1163
                %v1165 = vld [vmem:[%s225 + $0x1d48] sm:$0xff]
                %1166 = vst [vmem:[%s226 + $0xea8] sm:$0xff] %v1165
                %v1167 = vld [vmem:[%s225 + $0x1d60] sm:$0xff]
                %1168 = vst [vmem:[%s226 + $0xeb0] sm:$0xff] %v1167
                %v1169 = vld [vmem:[%s225 + $0x1d68] sm:$0xff]
                %1170 = vst [vmem:[%s226 + $0xeb8] sm:$0xff] %v1169
                %v1171 = vld [vmem:[%s225 + $0x1d80] sm:$0xff]
                %1172 = vst [vmem:[%s226 + $0xec0] sm:$0xff] %v1171
                %v1173 = vld [vmem:[%s225 + $0x1d88] sm:$0xff]
                %1174 = vst [vmem:[%s226 + $0xec8] sm:$0xff] %v1173
                %v1175 = vld [vmem:[%s225 + $0x1da0] sm:$0xff]
                %1176 = vst [vmem:[%s226 + $0xed0] sm:$0xff] %v1175
                %v1177 = vld [vmem:[%s225 + $0x1da8] sm:$0xff]
                %1178 = vst [vmem:[%s226 + $0xed8] sm:$0xff] %v1177
                %v1179 = vld [vmem:[%s225 + $0x1dc0] sm:$0xff]
                %1180 = vst [vmem:[%s226 + $0xee0] sm:$0xff] %v1179
                %v1181 = vld [vmem:[%s225 + $0x1dc8] sm:$0xff]
                %1182 = vst [vmem:[%s226 + $0xee8] sm:$0xff] %v1181
                %v1183 = vld [vmem:[%s225 + $0x1de0] sm:$0xff]
                %1184 = vst [vmem:[%s226 + $0xef0] sm:$0xff] %v1183
                %v1185 = vld [vmem:[%s225 + $0x1de8] sm:$0xff]
                %1186 = vst [vmem:[%s226 + $0xef8] sm:$0xff] %v1185
                %v1187 = vld [vmem:[%s225 + $0x1e00] sm:$0xff]
                %1188 = vst [vmem:[%s226 + $0xf00] sm:$0xff] %v1187
                %v1189 = vld [vmem:[%s225 + $0x1e08] sm:$0xff]
                %1190 = vst [vmem:[%s226 + $0xf08] sm:$0xff] %v1189
                %v1191 = vld [vmem:[%s225 + $0x1e20] sm:$0xff]
                %1192 = vst [vmem:[%s226 + $0xf10] sm:$0xff] %v1191
                %v1193 = vld [vmem:[%s225 + $0x1e28] sm:$0xff]
                %1194 = vst [vmem:[%s226 + $0xf18] sm:$0xff] %v1193
                %v1195 = vld [vmem:[%s225 + $0x1e40] sm:$0xff]
                %1196 = vst [vmem:[%s226 + $0xf20] sm:$0xff] %v1195
                %v1197 = vld [vmem:[%s225 + $0x1e48] sm:$0xff]
                %1198 = vst [vmem:[%s226 + $0xf28] sm:$0xff] %v1197
                %v1199 = vld [vmem:[%s225 + $0x1e60] sm:$0xff]
                %1200 = vst [vmem:[%s226 + $0xf30] sm:$0xff] %v1199
                %v1201 = vld [vmem:[%s225 + $0x1e68] sm:$0xff]
                %1202 = vst [vmem:[%s226 + $0xf38] sm:$0xff] %v1201
                %v1203 = vld [vmem:[%s225 + $0x1e80] sm:$0xff]
                %1204 = vst [vmem:[%s226 + $0xf40] sm:$0xff] %v1203
                %v1205 = vld [vmem:[%s225 + $0x1e88] sm:$0xff]
                %1206 = vst [vmem:[%s226 + $0xf48] sm:$0xff] %v1205
                %v1207 = vld [vmem:[%s225 + $0x1ea0] sm:$0xff]
                %1208 = vst [vmem:[%s226 + $0xf50] sm:$0xff] %v1207
                %v1209 = vld [vmem:[%s225 + $0x1ea8] sm:$0xff]
                %1210 = vst [vmem:[%s226 + $0xf58] sm:$0xff] %v1209
                %v1211 = vld [vmem:[%s225 + $0x1ec0] sm:$0xff]
                %1212 = vst [vmem:[%s226 + $0xf60] sm:$0xff] %v1211
                %v1213 = vld [vmem:[%s225 + $0x1ec8] sm:$0xff]
                %1214 = vst [vmem:[%s226 + $0xf68] sm:$0xff] %v1213
                %v1215 = vld [vmem:[%s225 + $0x1ee0] sm:$0xff]
                %1216 = vst [vmem:[%s226 + $0xf70] sm:$0xff] %v1215
                %v1217 = vld [vmem:[%s225 + $0x1ee8] sm:$0xff]
                %1218 = vst [vmem:[%s226 + $0xf78] sm:$0xff] %v1217
                %v1219 = vld [vmem:[%s225 + $0x1f00] sm:$0xff]
                %1220 = vst [vmem:[%s226 + $0xf80] sm:$0xff] %v1219
                %v1221 = vld [vmem:[%s225 + $0x1f08] sm:$0xff]
                %1222 = vst [vmem:[%s226 + $0xf88] sm:$0xff] %v1221
                %v1223 = vld [vmem:[%s225 + $0x1f20] sm:$0xff]
                %1224 = vst [vmem:[%s226 + $0xf90] sm:$0xff] %v1223
                %v1225 = vld [vmem:[%s225 + $0x1f28] sm:$0xff]
                %1226 = vst [vmem:[%s226 + $0xf98] sm:$0xff] %v1225
                %v1227 = vld [vmem:[%s225 + $0x1f40] sm:$0xff]
                %1228 = vst [vmem:[%s226 + $0xfa0] sm:$0xff] %v1227
                %v1229 = vld [vmem:[%s225 + $0x1f48] sm:$0xff]
                %1230 = vst [vmem:[%s226 + $0xfa8] sm:$0xff] %v1229
                %v1231 = vld [vmem:[%s225 + $0x1f60] sm:$0xff]
                %1232 = vst [vmem:[%s226 + $0xfb0] sm:$0xff] %v1231
                %v1233 = vld [vmem:[%s225 + $0x1f68] sm:$0xff]
                %1234 = vst [vmem:[%s226 + $0xfb8] sm:$0xff] %v1233
                %v1235 = vld [vmem:[%s225 + $0x1f80] sm:$0xff]
                %1236 = vst [vmem:[%s226 + $0xfc0] sm:$0xff] %v1235
                %v1237 = vld [vmem:[%s225 + $0x1f88] sm:$0xff]
                %1238 = vst [vmem:[%s226 + $0xfc8] sm:$0xff] %v1237
                %v1239 = vld [vmem:[%s225 + $0x1fa0] sm:$0xff]
                %1240 = vst [vmem:[%s226 + $0xfd0] sm:$0xff] %v1239
                %v1241 = vld [vmem:[%s225 + $0x1fa8] sm:$0xff]
                %1242 = vst [vmem:[%s226 + $0xfd8] sm:$0xff] %v1241
                %v1243 = vld [vmem:[%s225 + $0x1fc0] sm:$0xff]
                %1244 = vst [vmem:[%s226 + $0xfe0] sm:$0xff] %v1243
                %v1245 = vld [vmem:[%s225 + $0x1fc8] sm:$0xff]
                %1246 = vst [vmem:[%s226 + $0xfe8] sm:$0xff] %v1245
                %v1247 = vld [vmem:[%s225 + $0x1fe0] sm:$0xff]
                %1248 = vst [vmem:[%s226 + $0xff0] sm:$0xff] %v1247
                %v1249 = vld [vmem:[%s225 + $0x1fe8] sm:$0xff]
                %1250 = vst [vmem:[%s226 + $0xff8] sm:$0xff] %v1249
                %v1251 = vld [vmem:[%s225 + $0x2000] sm:$0xff]
                %1252 = vst [vmem:[%s226 + $0x1000] sm:$0xff] %v1251
                %v1253 = vld [vmem:[%s225 + $0x2008] sm:$0xff]
                %1254 = vst [vmem:[%s226 + $0x1008] sm:$0xff] %v1253
                %v1255 = vld [vmem:[%s225 + $0x2020] sm:$0xff]
                %1256 = vst [vmem:[%s226 + $0x1010] sm:$0xff] %v1255
                %v1257 = vld [vmem:[%s225 + $0x2028] sm:$0xff]
                %1258 = vst [vmem:[%s226 + $0x1018] sm:$0xff] %v1257
                %v1259 = vld [vmem:[%s225 + $0x2040] sm:$0xff]
                %1260 = vst [vmem:[%s226 + $0x1020] sm:$0xff] %v1259
                %v1261 = vld [vmem:[%s225 + $0x2048] sm:$0xff]
                %1262 = vst [vmem:[%s226 + $0x1028] sm:$0xff] %v1261
                %v1263 = vld [vmem:[%s225 + $0x2060] sm:$0xff]
                %1264 = vst [vmem:[%s226 + $0x1030] sm:$0xff] %v1263
                %v1265 = vld [vmem:[%s225 + $0x2068] sm:$0xff]
                %1266 = vst [vmem:[%s226 + $0x1038] sm:$0xff] %v1265
                %v1267 = vld [vmem:[%s225 + $0x2080] sm:$0xff]
                %1268 = vst [vmem:[%s226 + $0x1040] sm:$0xff] %v1267
                %v1269 = vld [vmem:[%s225 + $0x2088] sm:$0xff]
                %1270 = vst [vmem:[%s226 + $0x1048] sm:$0xff] %v1269
                %v1271 = vld [vmem:[%s225 + $0x20a0] sm:$0xff]
                %1272 = vst [vmem:[%s226 + $0x1050] sm:$0xff] %v1271
                %v1273 = vld [vmem:[%s225 + $0x20a8] sm:$0xff]
                %1274 = vst [vmem:[%s226 + $0x1058] sm:$0xff] %v1273
                %v1275 = vld [vmem:[%s225 + $0x20c0] sm:$0xff]
                %1276 = vst [vmem:[%s226 + $0x1060] sm:$0xff] %v1275
                %v1277 = vld [vmem:[%s225 + $0x20c8] sm:$0xff]
                %1278 = vst [vmem:[%s226 + $0x1068] sm:$0xff] %v1277
                %v1279 = vld [vmem:[%s225 + $0x20e0] sm:$0xff]
                %1280 = vst [vmem:[%s226 + $0x1070] sm:$0xff] %v1279
                %v1281 = vld [vmem:[%s225 + $0x20e8] sm:$0xff]
                %1282 = vst [vmem:[%s226 + $0x1078] sm:$0xff] %v1281
                %v1283 = vld [vmem:[%s225 + $0x2100] sm:$0xff]
                %1284 = vst [vmem:[%s226 + $0x1080] sm:$0xff] %v1283
                %v1285 = vld [vmem:[%s225 + $0x2108] sm:$0xff]
                %1286 = vst [vmem:[%s226 + $0x1088] sm:$0xff] %v1285
                %v1287 = vld [vmem:[%s225 + $0x2120] sm:$0xff]
                %1288 = vst [vmem:[%s226 + $0x1090] sm:$0xff] %v1287
                %v1289 = vld [vmem:[%s225 + $0x2128] sm:$0xff]
                %1290 = vst [vmem:[%s226 + $0x1098] sm:$0xff] %v1289
                %v1291 = vld [vmem:[%s225 + $0x2140] sm:$0xff]
                %1292 = vst [vmem:[%s226 + $0x10a0] sm:$0xff] %v1291
                %v1293 = vld [vmem:[%s225 + $0x2148] sm:$0xff]
                %1294 = vst [vmem:[%s226 + $0x10a8] sm:$0xff] %v1293
                %v1295 = vld [vmem:[%s225 + $0x2160] sm:$0xff]
                %1296 = vst [vmem:[%s226 + $0x10b0] sm:$0xff] %v1295
                %v1297 = vld [vmem:[%s225 + $0x2168] sm:$0xff]
                %1298 = vst [vmem:[%s226 + $0x10b8] sm:$0xff] %v1297
                %v1299 = vld [vmem:[%s225 + $0x2180] sm:$0xff]
                %1300 = vst [vmem:[%s226 + $0x10c0] sm:$0xff] %v1299
                %v1301 = vld [vmem:[%s225 + $0x2188] sm:$0xff]
                %1302 = vst [vmem:[%s226 + $0x10c8] sm:$0xff] %v1301
                %v1303 = vld [vmem:[%s225 + $0x21a0] sm:$0xff]
                %1304 = vst [vmem:[%s226 + $0x10d0] sm:$0xff] %v1303
                %v1305 = vld [vmem:[%s225 + $0x21a8] sm:$0xff]
                %1306 = vst [vmem:[%s226 + $0x10d8] sm:$0xff] %v1305
                %v1307 = vld [vmem:[%s225 + $0x21c0] sm:$0xff]
                %1308 = vst [vmem:[%s226 + $0x10e0] sm:$0xff] %v1307
                %v1309 = vld [vmem:[%s225 + $0x21c8] sm:$0xff]
                %1310 = vst [vmem:[%s226 + $0x10e8] sm:$0xff] %v1309
                %v1311 = vld [vmem:[%s225 + $0x21e0] sm:$0xff]
                %1312 = vst [vmem:[%s226 + $0x10f0] sm:$0xff] %v1311
                %v1313 = vld [vmem:[%s225 + $0x21e8] sm:$0xff]
                %1314 = vst [vmem:[%s226 + $0x10f8] sm:$0xff] %v1313
                %v1315 = vld [vmem:[%s225 + $0x2200] sm:$0xff]
                %1316 = vst [vmem:[%s226 + $0x1100] sm:$0xff] %v1315
                %v1317 = vld [vmem:[%s225 + $0x2208] sm:$0xff]
                %1318 = vst [vmem:[%s226 + $0x1108] sm:$0xff] %v1317
                %v1319 = vld [vmem:[%s225 + $0x2220] sm:$0xff]
                %1320 = vst [vmem:[%s226 + $0x1110] sm:$0xff] %v1319
                %v1321 = vld [vmem:[%s225 + $0x2228] sm:$0xff]
                %1322 = vst [vmem:[%s226 + $0x1118] sm:$0xff] %v1321
                %v1323 = vld [vmem:[%s225 + $0x2240] sm:$0xff]
                %1324 = vst [vmem:[%s226 + $0x1120] sm:$0xff] %v1323
                %v1325 = vld [vmem:[%s225 + $0x2248] sm:$0xff]
                %1326 = vst [vmem:[%s226 + $0x1128] sm:$0xff] %v1325
                %v1327 = vld [vmem:[%s225 + $0x2260] sm:$0xff]
                %1328 = vst [vmem:[%s226 + $0x1130] sm:$0xff] %v1327
                %v1329 = vld [vmem:[%s225 + $0x2268] sm:$0xff]
                %1330 = vst [vmem:[%s226 + $0x1138] sm:$0xff] %v1329
                %v1331 = vld [vmem:[%s225 + $0x2280] sm:$0xff]
                %1332 = vst [vmem:[%s226 + $0x1140] sm:$0xff] %v1331
                %v1333 = vld [vmem:[%s225 + $0x2288] sm:$0xff]
                %1334 = vst [vmem:[%s226 + $0x1148] sm:$0xff] %v1333
                %v1335 = vld [vmem:[%s225 + $0x22a0] sm:$0xff]
                %1336 = vst [vmem:[%s226 + $0x1150] sm:$0xff] %v1335
                %v1337 = vld [vmem:[%s225 + $0x22a8] sm:$0xff]
                %1338 = vst [vmem:[%s226 + $0x1158] sm:$0xff] %v1337
                %v1339 = vld [vmem:[%s225 + $0x22c0] sm:$0xff]
                %1340 = vst [vmem:[%s226 + $0x1160] sm:$0xff] %v1339
                %v1341 = vld [vmem:[%s225 + $0x22c8] sm:$0xff]
                %1342 = vst [vmem:[%s226 + $0x1168] sm:$0xff] %v1341
                %v1343 = vld [vmem:[%s225 + $0x22e0] sm:$0xff]
                %1344 = vst [vmem:[%s226 + $0x1170] sm:$0xff] %v1343
                %v1345 = vld [vmem:[%s225 + $0x22e8] sm:$0xff]
                %1346 = vst [vmem:[%s226 + $0x1178] sm:$0xff] %v1345
                %v1347 = vld [vmem:[%s225 + $0x2300] sm:$0xff]
                %1348 = vst [vmem:[%s226 + $0x1180] sm:$0xff] %v1347
                %v1349 = vld [vmem:[%s225 + $0x2308] sm:$0xff]
                %1350 = vst [vmem:[%s226 + $0x1188] sm:$0xff] %v1349
                %v1351 = vld [vmem:[%s225 + $0x2320] sm:$0xff]
                %1352 = vst [vmem:[%s226 + $0x1190] sm:$0xff] %v1351
                %v1353 = vld [vmem:[%s225 + $0x2328] sm:$0xff]
                %1354 = vst [vmem:[%s226 + $0x1198] sm:$0xff] %v1353
                %v1355 = vld [vmem:[%s225 + $0x2340] sm:$0xff]
                %1356 = vst [vmem:[%s226 + $0x11a0] sm:$0xff] %v1355
                %v1357 = vld [vmem:[%s225 + $0x2348] sm:$0xff]
                %1358 = vst [vmem:[%s226 + $0x11a8] sm:$0xff] %v1357
                %v1359 = vld [vmem:[%s225 + $0x2360] sm:$0xff]
                %1360 = vst [vmem:[%s226 + $0x11b0] sm:$0xff] %v1359
                %v1361 = vld [vmem:[%s225 + $0x2368] sm:$0xff]
                %1362 = vst [vmem:[%s226 + $0x11b8] sm:$0xff] %v1361
                %v1363 = vld [vmem:[%s225 + $0x2380] sm:$0xff]
                %1364 = vst [vmem:[%s226 + $0x11c0] sm:$0xff] %v1363
                %v1365 = vld [vmem:[%s225 + $0x2388] sm:$0xff]
                %1366 = vst [vmem:[%s226 + $0x11c8] sm:$0xff] %v1365
                %v1367 = vld [vmem:[%s225 + $0x23a0] sm:$0xff]
                %1368 = vst [vmem:[%s226 + $0x11d0] sm:$0xff] %v1367
                %v1369 = vld [vmem:[%s225 + $0x23a8] sm:$0xff]
                %1370 = vst [vmem:[%s226 + $0x11d8] sm:$0xff] %v1369
                %v1371 = vld [vmem:[%s225 + $0x23c0] sm:$0xff]
                %1372 = vst [vmem:[%s226 + $0x11e0] sm:$0xff] %v1371
                %v1373 = vld [vmem:[%s225 + $0x23c8] sm:$0xff]
                %1374 = vst [vmem:[%s226 + $0x11e8] sm:$0xff] %v1373
                %v1375 = vld [vmem:[%s225 + $0x23e0] sm:$0xff]
                %1376 = vst [vmem:[%s226 + $0x11f0] sm:$0xff] %v1375
                %v1377 = vld [vmem:[%s225 + $0x23e8] sm:$0xff]
                %1378 = vst [vmem:[%s226 + $0x11f8] sm:$0xff] %v1377
              $region41: #{discriminator_image.9} parent=35 // loop_footer
                %s224 = sadd.s32 1, %s220
              $region42: #{discriminator_image.9} parent=35 // loop_footer_branch
                %219 = sbr.rel target = $region38
              $region43: #{discriminator_image.9} parent=35 // loop_exit
                _
            $region36: #{discriminator_image.9} parent=31 // pred_fallthru
              _
            // Predicated region
            $region44: #{discriminator_image.9} parent=31 // pred_check
              _
            $region45: #{discriminator_image.9} parent=31 // pred_check_branch
              %1380 = sbr.rel target = $region47
            $region46: #{discriminator_image.9} parent=31 // pred_region
              _
            $region47: #{discriminator_image.9} parent=31 // pred_fallthru
              _
          $region32: #{discriminator_image.9} parent=27 // pred_fallthru
            _
          %1381 = vnop
        $region28: #{discriminator_image.9} parent=23 // pred_fallthru
          _
        // Predicated region
        $region48: #{discriminator_image.9} parent=23 // pred_check
          %p1382 = pneg %p97
        $region49: #{discriminator_image.9} parent=23 // pred_check_branch
          %1384 = sbr.rel (%p1382) target = $region51
        $region50: #{discriminator_image.9} parent=23 // pred_region
          %s1385 = smul.u32 4, %s21
          %p1386 = scmp.lt.s32.totalorder %s1385, 7
          %s1387 = scalar_select %p1386, %s1385, 7
          %s1388 = scalar_lea.vmem %s2, %s1387
          %s1389 = smul.u32 4, %s21
        $region51: #{discriminator_image.9} parent=23 // pred_fallthru
          _
        // Predicated region
        $region52: #{discriminator_image.9} parent=23 // pred_check
          %p1390 = pneg %p123
        $region53: #{discriminator_image.9} parent=23 // pred_check_branch
          %1392 = sbr.rel (%p1390) target = $region55
        $region54: #{discriminator_image.9} parent=23 // pred_region
          %s1393 = smul.u32 4, %s21
          %p1394 = scmp.lt.s32.totalorder %s1393, 7
          %s1395 = scalar_select %p1394, %s1393, 7
          %s1396 = scalar_lea.vmem %s3, %s1395
          %s1397 = smul.u32 4, %s21
        $region55: #{discriminator_image.9} parent=23 // pred_fallthru
          _
      $region24: #{discriminator_image.9} parent=5 // pred_fallthru
        _
      %p1398 = scmp.le.s32.totalorder 1, %s13
      %p1399 = scmp.lt.s32.totalorder %s13, 3
      %p1400 = pnand %p1398, %p1399
      %p1401 = pneg %p1400
      // Predicated region
      $region56: #{discriminator_image.9} parent=5 // pred_check
        _
      $region57: #{discriminator_image.9} parent=5 // pred_check_branch
        %1403 = sbr.rel (%p1400) target = $region59
      $region58: #{discriminator_image.9} parent=5 // pred_region
        %s1404 = ssub.s32 %s13, 1
        %s1405 = sand.u32 %s64, 1
        %s1406 = sand.u32 %s64, 1
        %s1407 = smul.addr %s1406, 4608
        %s1408 = scalar_lea.vmem [#allocation4], %s1407
        // Predicated region
        $region60: #{discriminator_image.9} parent=58 // pred_check
          %p1409 = pneg %p77
        $region61: #{discriminator_image.9} parent=58 // pred_check_branch
          %1411 = sbr.rel (%p1409) target = $region63
        $region62: #{discriminator_image.9} parent=58 // pred_region
          _
        $region63: #{discriminator_image.9} parent=58 // pred_fallthru
          _
        %p1412 = scmp.lt.s32.totalorder %s22, 0
        %s1413 = scalar_select %p1412, %s22, 0
        %s1414 = smul.addr %s1413, 18
        %s1415 = scalar_lea.vmem %s0, %s1414
        %p1416 = pneg %p51
        %p1417 = pneg %p48
        %s1418 = sand.u32 %s64, 1
        %s1419 = sand.u32 %s64, 1
        %s1420 = smul.addr %s1419, 4608
        %s1421 = scalar_lea.vmem [#allocation4], %s1420
        %p1422 = pneg %p77
        %p1423 = pneg %p74
        %s1424 = smul.u32 4, %s23
        %p1425 = scmp.lt.s32.totalorder %s1424, 7
        %s1426 = scalar_select %p1425, %s1424, 7
        %s1427 = scalar_lea.vmem %s2, %s1426
        %p1428 = pneg %p103
        %p1429 = pneg %p100
        %s1430 = smul.u32 4, %s23
        %p1431 = scmp.lt.s32.totalorder %s1430, 7
        %s1432 = scalar_select %p1431, %s1430, 7
        %s1433 = scalar_lea.vmem %s3, %s1432
        %p1434 = pneg %p129
        %p1435 = pneg %p126
        %p1436 = pneg %p150
        %p1437 = pneg %p147
        %p1438 = pneg %p176
        %p1439 = pneg %p173
        %p1440 = scmp.lt.s32.totalorder %s22, 0
        %s1441 = scalar_select %p1440, %s22, 0
        %s1442 = smul.addr %s1441, 2
        %s1443 = scalar_lea.vmem %s5, %s1442
        %p1444 = scmp.lt.s32.totalorder %s22, 0
        %s1445 = scalar_select %p1444, %s22, 0
        %s1446 = smul.addr %s1445, 18
        %s1447 = scalar_lea.vmem %s0, %s1446
        %s1448 = smul.u32 4, %s23
        %s1449 = smul.u32 4, %s23
        %p1450 = scmp.lt.s32.totalorder %s1449, 7
        %s1451 = scalar_select %p1450, %s1449, 7
        %s1452 = scalar_lea.vmem %s2, %s1451
        %s1453 = smul.u32 4, %s23
        %s1454 = smul.u32 4, %s23
        %p1455 = scmp.lt.s32.totalorder %s1454, 7
        %s1456 = scalar_select %p1455, %s1454, 7
        %s1457 = scalar_lea.vmem %s3, %s1456
        %s1458 = smul.u32 4, %s23
        %p1459 = scmp.lt.s32.totalorder %s22, 0
        %s1460 = scalar_select %p1459, %s22, 0
        %s1461 = smul.addr %s1460, 2
        %s1462 = scalar_lea.vmem %s5, %s1461
        %p1463 = scmp.eq.s32.totalorder %s23, 0
        // Predicated region
        $region64: #{discriminator_image.9} parent=58 // pred_check
          %p1464 = pneg %p1463
        $region65: #{discriminator_image.9} parent=58 // pred_check_branch
          %1466 = sbr.rel (%p1464) target = $region67
        $region66: #{discriminator_image.9} parent=58 // pred_region
          %vm1467 = vcmask 1024
          %1468 = vst.msk [vmem:[#allocation2] sm:$0x3] %vm1467, 0.0
        $region67: #{discriminator_image.9} parent=58 // pred_fallthru
          _
        %v1469 = vld [vmem:[%s1447] sm:$0xff]
        %v1470 = vld [vmem:[%s1447 + $0x8] sm:$0xff]
        %v1471 = vld [vmem:[%s1447 + $0x10] sm:$0x3]
        %v1472 = vld [vmem:[%s1408] sm:$0xff]
        %v1473 = vld [vmem:[%s1408 + $0x8] sm:$0xff]
        %v1474 = vld [vmem:[%s1408 + $0x10] sm:$0xff]
        %v1475 = vld [vmem:[%s1408 + $0x18] sm:$0xff]
        %v1476 = vld [vmem:[%s1408 + $0x20] sm:$0xff]
        %v1477 = vld [vmem:[%s1408 + $0x28] sm:$0xff]
        %v1478 = vld [vmem:[%s1408 + $0x30] sm:$0xff]
        %v1479 = vld [vmem:[%s1408 + $0x38] sm:$0xff]
        %v1480 = vld [vmem:[%s1408 + $0x40] sm:$0xff]
        %v1481 = vld [vmem:[%s1408 + $0x48] sm:$0xff]
        %v1482 = vld [vmem:[%s1408 + $0x50] sm:$0xff]
        %v1483 = vld [vmem:[%s1408 + $0x58] sm:$0xff]
        %v1484 = vld [vmem:[%s1408 + $0x60] sm:$0xff]
        %v1485 = vld [vmem:[%s1408 + $0x68] sm:$0xff]
        %v1486 = vld [vmem:[%s1408 + $0x70] sm:$0xff]
        %v1487 = vld [vmem:[%s1408 + $0x78] sm:$0xff]
        %v1488 = vld [vmem:[%s1408 + $0x80] sm:$0xff]
        %v1489 = vld [vmem:[%s1408 + $0x88] sm:$0xff]
        %v1490 = vld [vmem:[%s1408 + $0x90] sm:$0xff]
        %v1491 = vld [vmem:[%s1408 + $0x98] sm:$0xff]
        %v1492 = vld [vmem:[%s1408 + $0xa0] sm:$0xff]
        %v1493 = vld [vmem:[%s1408 + $0xa8] sm:$0xff]
        %v1494 = vld [vmem:[%s1408 + $0xb0] sm:$0xff]
        %v1495 = vld [vmem:[%s1408 + $0xb8] sm:$0xff]
        %v1496 = vld [vmem:[%s1408 + $0xc0] sm:$0xff]
        %v1497 = vld [vmem:[%s1408 + $0xc8] sm:$0xff]
        %v1498 = vld [vmem:[%s1408 + $0xd0] sm:$0xff]
        %v1499 = vld [vmem:[%s1408 + $0xd8] sm:$0xff]
        %v1500 = vld [vmem:[%s1408 + $0xe0] sm:$0xff]
        %v1501 = vld [vmem:[%s1408 + $0xe8] sm:$0xff]
        %v1502 = vld [vmem:[%s1408 + $0xf0] sm:$0xff]
        %v1503 = vld [vmem:[%s1408 + $0xf8] sm:$0xff]
        %v1504 = vld [vmem:[%s1408 + $0x100] sm:$0xff]
        %v1505 = vld [vmem:[%s1408 + $0x108] sm:$0xff]
        %v1506 = vld [vmem:[%s1408 + $0x110] sm:$0xff]
        %v1507 = vld [vmem:[%s1408 + $0x118] sm:$0xff]
        %v1508 = vld [vmem:[%s1408 + $0x120] sm:$0xff]
        %v1509 = vld [vmem:[%s1408 + $0x128] sm:$0xff]
        %v1510 = vld [vmem:[%s1408 + $0x130] sm:$0xff]
        %v1511 = vld [vmem:[%s1408 + $0x138] sm:$0xff]
        %v1512 = vld [vmem:[%s1408 + $0x140] sm:$0xff]
        %v1513 = vld [vmem:[%s1408 + $0x148] sm:$0xff]
        %v1514 = vld [vmem:[%s1408 + $0x150] sm:$0xff]
        %v1515 = vld [vmem:[%s1408 + $0x158] sm:$0xff]
        %v1516 = vld [vmem:[%s1408 + $0x160] sm:$0xff]
        %v1517 = vld [vmem:[%s1408 + $0x168] sm:$0xff]
        %v1518 = vld [vmem:[%s1408 + $0x170] sm:$0xff]
        %v1519 = vld [vmem:[%s1408 + $0x178] sm:$0xff]
        %v1520 = vld [vmem:[%s1408 + $0x180] sm:$0xff]
        %v1521 = vld [vmem:[%s1408 + $0x188] sm:$0xff]
        %v1522 = vld [vmem:[%s1408 + $0x190] sm:$0xff]
        %v1523 = vld [vmem:[%s1408 + $0x198] sm:$0xff]
        %v1524 = vld [vmem:[%s1408 + $0x1a0] sm:$0xff]
        %v1525 = vld [vmem:[%s1408 + $0x1a8] sm:$0xff]
        %v1526 = vld [vmem:[%s1408 + $0x1b0] sm:$0xff]
        %v1527 = vld [vmem:[%s1408 + $0x1b8] sm:$0xff]
        %v1528 = vld [vmem:[%s1408 + $0x1c0] sm:$0xff]
        %v1529 = vld [vmem:[%s1408 + $0x1c8] sm:$0xff]
        %v1530 = vld [vmem:[%s1408 + $0x1d0] sm:$0xff]
        %v1531 = vld [vmem:[%s1408 + $0x1d8] sm:$0xff]
        %v1532 = vld [vmem:[%s1408 + $0x1e0] sm:$0xff]
        %v1533 = vld [vmem:[%s1408 + $0x1e8] sm:$0xff]
        %v1534 = vld [vmem:[%s1408 + $0x1f0] sm:$0xff]
        %v1535 = vld [vmem:[%s1408 + $0x1f8] sm:$0xff]
        %v1536 = vld [vmem:[%s1408 + $0x200] sm:$0xff]
        %v1537 = vld [vmem:[%s1408 + $0x208] sm:$0xff]
        %v1538 = vld [vmem:[%s1408 + $0x210] sm:$0xff]
        %v1539 = vld [vmem:[%s1408 + $0x218] sm:$0xff]
        %v1540 = vld [vmem:[%s1408 + $0x220] sm:$0xff]
        %v1541 = vld [vmem:[%s1408 + $0x228] sm:$0xff]
        %v1542 = vld [vmem:[%s1408 + $0x230] sm:$0xff]
        %v1543 = vld [vmem:[%s1408 + $0x238] sm:$0xff]
        %v1544 = vld [vmem:[%s1408 + $0x240] sm:$0xff]
        %v1545 = vld [vmem:[%s1408 + $0x248] sm:$0xff]
        %v1546 = vld [vmem:[%s1408 + $0x250] sm:$0xff]
        %v1547 = vld [vmem:[%s1408 + $0x258] sm:$0xff]
        %v1548 = vld [vmem:[%s1408 + $0x260] sm:$0xff]
        %v1549 = vld [vmem:[%s1408 + $0x268] sm:$0xff]
        %v1550 = vld [vmem:[%s1408 + $0x270] sm:$0xff]
        %v1551 = vld [vmem:[%s1408 + $0x278] sm:$0xff]
        %v1552 = vld [vmem:[%s1408 + $0x280] sm:$0xff]
        %v1553 = vld [vmem:[%s1408 + $0x288] sm:$0xff]
        %v1554 = vld [vmem:[%s1408 + $0x290] sm:$0xff]
        %v1555 = vld [vmem:[%s1408 + $0x298] sm:$0xff]
        %v1556 = vld [vmem:[%s1408 + $0x2a0] sm:$0xff]
        %v1557 = vld [vmem:[%s1408 + $0x2a8] sm:$0xff]
        %v1558 = vld [vmem:[%s1408 + $0x2b0] sm:$0xff]
        %v1559 = vld [vmem:[%s1408 + $0x2b8] sm:$0xff]
        %v1560 = vld [vmem:[%s1408 + $0x2c0] sm:$0xff]
        %v1561 = vld [vmem:[%s1408 + $0x2c8] sm:$0xff]
        %v1562 = vld [vmem:[%s1408 + $0x2d0] sm:$0xff]
        %v1563 = vld [vmem:[%s1408 + $0x2d8] sm:$0xff]
        %v1564 = vld [vmem:[%s1408 + $0x2e0] sm:$0xff]
        %v1565 = vld [vmem:[%s1408 + $0x2e8] sm:$0xff]
        %v1566 = vld [vmem:[%s1408 + $0x2f0] sm:$0xff]
        %v1567 = vld [vmem:[%s1408 + $0x2f8] sm:$0xff]
        %v1568 = vld [vmem:[%s1408 + $0x300] sm:$0xff]
        %v1569 = vld [vmem:[%s1408 + $0x308] sm:$0xff]
        %v1570 = vld [vmem:[%s1408 + $0x310] sm:$0xff]
        %v1571 = vld [vmem:[%s1408 + $0x318] sm:$0xff]
        %v1572 = vld [vmem:[%s1408 + $0x320] sm:$0xff]
        %v1573 = vld [vmem:[%s1408 + $0x328] sm:$0xff]
        %v1574 = vld [vmem:[%s1408 + $0x330] sm:$0xff]
        %v1575 = vld [vmem:[%s1408 + $0x338] sm:$0xff]
        %v1576 = vld [vmem:[%s1408 + $0x340] sm:$0xff]
        %v1577 = vld [vmem:[%s1408 + $0x348] sm:$0xff]
        %v1578 = vld [vmem:[%s1408 + $0x350] sm:$0xff]
        %v1579 = vld [vmem:[%s1408 + $0x358] sm:$0xff]
        %v1580 = vld [vmem:[%s1408 + $0x360] sm:$0xff]
        %v1581 = vld [vmem:[%s1408 + $0x368] sm:$0xff]
        %v1582 = vld [vmem:[%s1408 + $0x370] sm:$0xff]
        %v1583 = vld [vmem:[%s1408 + $0x378] sm:$0xff]
        %v1584 = vld [vmem:[%s1408 + $0x380] sm:$0xff]
        %v1585 = vld [vmem:[%s1408 + $0x388] sm:$0xff]
        %v1586 = vld [vmem:[%s1408 + $0x390] sm:$0xff]
        %v1587 = vld [vmem:[%s1408 + $0x398] sm:$0xff]
        %v1588 = vld [vmem:[%s1408 + $0x3a0] sm:$0xff]
        %v1589 = vld [vmem:[%s1408 + $0x3a8] sm:$0xff]
        %v1590 = vld [vmem:[%s1408 + $0x3b0] sm:$0xff]
        %v1591 = vld [vmem:[%s1408 + $0x3b8] sm:$0xff]
        %v1592 = vld [vmem:[%s1408 + $0x3c0] sm:$0xff]
        %v1593 = vld [vmem:[%s1408 + $0x3c8] sm:$0xff]
        %v1594 = vld [vmem:[%s1408 + $0x3d0] sm:$0xff]
        %v1595 = vld [vmem:[%s1408 + $0x3d8] sm:$0xff]
        %v1596 = vld [vmem:[%s1408 + $0x3e0] sm:$0xff]
        %v1597 = vld [vmem:[%s1408 + $0x3e8] sm:$0xff]
        %v1598 = vld [vmem:[%s1408 + $0x3f0] sm:$0xff]
        %v1599 = vld [vmem:[%s1408 + $0x3f8] sm:$0xff]
        %v1600 = vld [vmem:[%s1408 + $0x400] sm:$0xff]
        %v1601 = vld [vmem:[%s1408 + $0x408] sm:$0xff]
        %v1602 = vld [vmem:[%s1408 + $0x410] sm:$0xff]
        %v1603 = vld [vmem:[%s1408 + $0x418] sm:$0xff]
        %v1604 = vld [vmem:[%s1408 + $0x420] sm:$0xff]
        %v1605 = vld [vmem:[%s1408 + $0x428] sm:$0xff]
        %v1606 = vld [vmem:[%s1408 + $0x430] sm:$0xff]
        %v1607 = vld [vmem:[%s1408 + $0x438] sm:$0xff]
        %v1608 = vld [vmem:[%s1408 + $0x440] sm:$0xff]
        %v1609 = vld [vmem:[%s1408 + $0x448] sm:$0xff]
        %v1610 = vld [vmem:[%s1408 + $0x450] sm:$0xff]
        %v1611 = vld [vmem:[%s1408 + $0x458] sm:$0xff]
        %v1612 = vld [vmem:[%s1408 + $0x460] sm:$0xff]
        %v1613 = vld [vmem:[%s1408 + $0x468] sm:$0xff]
        %v1614 = vld [vmem:[%s1408 + $0x470] sm:$0xff]
        %v1615 = vld [vmem:[%s1408 + $0x478] sm:$0xff]
        %v1616 = vld [vmem:[%s1408 + $0x480] sm:$0xff]
        %v1617 = vld [vmem:[%s1408 + $0x488] sm:$0xff]
        %v1618 = vld [vmem:[%s1408 + $0x490] sm:$0xff]
        %v1619 = vld [vmem:[%s1408 + $0x498] sm:$0xff]
        %v1620 = vld [vmem:[%s1408 + $0x4a0] sm:$0xff]
        %v1621 = vld [vmem:[%s1408 + $0x4a8] sm:$0xff]
        %v1622 = vld [vmem:[%s1408 + $0x4b0] sm:$0xff]
        %v1623 = vld [vmem:[%s1408 + $0x4b8] sm:$0xff]
        %v1624 = vld [vmem:[%s1408 + $0x4c0] sm:$0xff]
        %v1625 = vld [vmem:[%s1408 + $0x4c8] sm:$0xff]
        %v1626 = vld [vmem:[%s1408 + $0x4d0] sm:$0xff]
        %v1627 = vld [vmem:[%s1408 + $0x4d8] sm:$0xff]
        %v1628 = vld [vmem:[%s1408 + $0x4e0] sm:$0xff]
        %v1629 = vld [vmem:[%s1408 + $0x4e8] sm:$0xff]
        %v1630 = vld [vmem:[%s1408 + $0x4f0] sm:$0xff]
        %v1631 = vld [vmem:[%s1408 + $0x4f8] sm:$0xff]
        %v1632 = vld [vmem:[%s1408 + $0x500] sm:$0xff]
        %v1633 = vld [vmem:[%s1408 + $0x508] sm:$0xff]
        %v1634 = vld [vmem:[%s1408 + $0x510] sm:$0xff]
        %v1635 = vld [vmem:[%s1408 + $0x518] sm:$0xff]
        %v1636 = vld [vmem:[%s1408 + $0x520] sm:$0xff]
        %v1637 = vld [vmem:[%s1408 + $0x528] sm:$0xff]
        %v1638 = vld [vmem:[%s1408 + $0x530] sm:$0xff]
        %v1639 = vld [vmem:[%s1408 + $0x538] sm:$0xff]
        %v1640 = vld [vmem:[%s1408 + $0x540] sm:$0xff]
        %v1641 = vld [vmem:[%s1408 + $0x548] sm:$0xff]
        %v1642 = vld [vmem:[%s1408 + $0x550] sm:$0xff]
        %v1643 = vld [vmem:[%s1408 + $0x558] sm:$0xff]
        %v1644 = vld [vmem:[%s1408 + $0x560] sm:$0xff]
        %v1645 = vld [vmem:[%s1408 + $0x568] sm:$0xff]
        %v1646 = vld [vmem:[%s1408 + $0x570] sm:$0xff]
        %v1647 = vld [vmem:[%s1408 + $0x578] sm:$0xff]
        %v1648 = vld [vmem:[%s1408 + $0x580] sm:$0xff]
        %v1649 = vld [vmem:[%s1408 + $0x588] sm:$0xff]
        %v1650 = vld [vmem:[%s1408 + $0x590] sm:$0xff]
        %v1651 = vld [vmem:[%s1408 + $0x598] sm:$0xff]
        %v1652 = vld [vmem:[%s1408 + $0x5a0] sm:$0xff]
        %v1653 = vld [vmem:[%s1408 + $0x5a8] sm:$0xff]
        %v1654 = vld [vmem:[%s1408 + $0x5b0] sm:$0xff]
        %v1655 = vld [vmem:[%s1408 + $0x5b8] sm:$0xff]
        %v1656 = vld [vmem:[%s1408 + $0x5c0] sm:$0xff]
        %v1657 = vld [vmem:[%s1408 + $0x5c8] sm:$0xff]
        %v1658 = vld [vmem:[%s1408 + $0x5d0] sm:$0xff]
        %v1659 = vld [vmem:[%s1408 + $0x5d8] sm:$0xff]
        %v1660 = vld [vmem:[%s1408 + $0x5e0] sm:$0xff]
        %v1661 = vld [vmem:[%s1408 + $0x5e8] sm:$0xff]
        %v1662 = vld [vmem:[%s1408 + $0x5f0] sm:$0xff]
        %v1663 = vld [vmem:[%s1408 + $0x5f8] sm:$0xff]
        %v1664 = vld [vmem:[%s1408 + $0x600] sm:$0xff]
        %v1665 = vld [vmem:[%s1408 + $0x608] sm:$0xff]
        %v1666 = vld [vmem:[%s1408 + $0x610] sm:$0xff]
        %v1667 = vld [vmem:[%s1408 + $0x618] sm:$0xff]
        %v1668 = vld [vmem:[%s1408 + $0x620] sm:$0xff]
        %v1669 = vld [vmem:[%s1408 + $0x628] sm:$0xff]
        %v1670 = vld [vmem:[%s1408 + $0x630] sm:$0xff]
        %v1671 = vld [vmem:[%s1408 + $0x638] sm:$0xff]
        %v1672 = vld [vmem:[%s1408 + $0x640] sm:$0xff]
        %v1673 = vld [vmem:[%s1408 + $0x648] sm:$0xff]
        %v1674 = vld [vmem:[%s1408 + $0x650] sm:$0xff]
        %v1675 = vld [vmem:[%s1408 + $0x658] sm:$0xff]
        %v1676 = vld [vmem:[%s1408 + $0x660] sm:$0xff]
        %v1677 = vld [vmem:[%s1408 + $0x668] sm:$0xff]
        %v1678 = vld [vmem:[%s1408 + $0x670] sm:$0xff]
        %v1679 = vld [vmem:[%s1408 + $0x678] sm:$0xff]
        %v1680 = vld [vmem:[%s1408 + $0x680] sm:$0xff]
        %v1681 = vld [vmem:[%s1408 + $0x688] sm:$0xff]
        %v1682 = vld [vmem:[%s1408 + $0x690] sm:$0xff]
        %v1683 = vld [vmem:[%s1408 + $0x698] sm:$0xff]
        %v1684 = vld [vmem:[%s1408 + $0x6a0] sm:$0xff]
        %v1685 = vld [vmem:[%s1408 + $0x6a8] sm:$0xff]
        %v1686 = vld [vmem:[%s1408 + $0x6b0] sm:$0xff]
        %v1687 = vld [vmem:[%s1408 + $0x6b8] sm:$0xff]
        %v1688 = vld [vmem:[%s1408 + $0x6c0] sm:$0xff]
        %v1689 = vld [vmem:[%s1408 + $0x6c8] sm:$0xff]
        %v1690 = vld [vmem:[%s1408 + $0x6d0] sm:$0xff]
        %v1691 = vld [vmem:[%s1408 + $0x6d8] sm:$0xff]
        %v1692 = vld [vmem:[%s1408 + $0x6e0] sm:$0xff]
        %v1693 = vld [vmem:[%s1408 + $0x6e8] sm:$0xff]
        %v1694 = vld [vmem:[%s1408 + $0x6f0] sm:$0xff]
        %v1695 = vld [vmem:[%s1408 + $0x6f8] sm:$0xff]
        %v1696 = vld [vmem:[%s1408 + $0x700] sm:$0xff]
        %v1697 = vld [vmem:[%s1408 + $0x708] sm:$0xff]
        %v1698 = vld [vmem:[%s1408 + $0x710] sm:$0xff]
        %v1699 = vld [vmem:[%s1408 + $0x718] sm:$0xff]
        %v1700 = vld [vmem:[%s1408 + $0x720] sm:$0xff]
        %v1701 = vld [vmem:[%s1408 + $0x728] sm:$0xff]
        %v1702 = vld [vmem:[%s1408 + $0x730] sm:$0xff]
        %v1703 = vld [vmem:[%s1408 + $0x738] sm:$0xff]
        %v1704 = vld [vmem:[%s1408 + $0x740] sm:$0xff]
        %v1705 = vld [vmem:[%s1408 + $0x748] sm:$0xff]
        %v1706 = vld [vmem:[%s1408 + $0x750] sm:$0xff]
        %v1707 = vld [vmem:[%s1408 + $0x758] sm:$0xff]
        %v1708 = vld [vmem:[%s1408 + $0x760] sm:$0xff]
        %v1709 = vld [vmem:[%s1408 + $0x768] sm:$0xff]
        %v1710 = vld [vmem:[%s1408 + $0x770] sm:$0xff]
        %v1711 = vld [vmem:[%s1408 + $0x778] sm:$0xff]
        %v1712 = vld [vmem:[%s1408 + $0x780] sm:$0xff]
        %v1713 = vld [vmem:[%s1408 + $0x788] sm:$0xff]
        %v1714 = vld [vmem:[%s1408 + $0x790] sm:$0xff]
        %v1715 = vld [vmem:[%s1408 + $0x798] sm:$0xff]
        %v1716 = vld [vmem:[%s1408 + $0x7a0] sm:$0xff]
        %v1717 = vld [vmem:[%s1408 + $0x7a8] sm:$0xff]
        %v1718 = vld [vmem:[%s1408 + $0x7b0] sm:$0xff]
        %v1719 = vld [vmem:[%s1408 + $0x7b8] sm:$0xff]
        %v1720 = vld [vmem:[%s1408 + $0x7c0] sm:$0xff]
        %v1721 = vld [vmem:[%s1408 + $0x7c8] sm:$0xff]
        %v1722 = vld [vmem:[%s1408 + $0x7d0] sm:$0xff]
        %v1723 = vld [vmem:[%s1408 + $0x7d8] sm:$0xff]
        %v1724 = vld [vmem:[%s1408 + $0x7e0] sm:$0xff]
        %v1725 = vld [vmem:[%s1408 + $0x7e8] sm:$0xff]
        %v1726 = vld [vmem:[%s1408 + $0x7f0] sm:$0xff]
        %v1727 = vld [vmem:[%s1408 + $0x7f8] sm:$0xff]
        %v1728 = vld [vmem:[%s1408 + $0x800] sm:$0xff]
        %v1729 = vld [vmem:[%s1408 + $0x808] sm:$0xff]
        %v1730 = vld [vmem:[%s1408 + $0x810] sm:$0xff]
        %v1731 = vld [vmem:[%s1408 + $0x818] sm:$0xff]
        %v1732 = vld [vmem:[%s1408 + $0x820] sm:$0xff]
        %v1733 = vld [vmem:[%s1408 + $0x828] sm:$0xff]
        %v1734 = vld [vmem:[%s1408 + $0x830] sm:$0xff]
        %v1735 = vld [vmem:[%s1408 + $0x838] sm:$0xff]
        %v1736 = vld [vmem:[%s1408 + $0x840] sm:$0xff]
        %v1737 = vld [vmem:[%s1408 + $0x848] sm:$0xff]
        %v1738 = vld [vmem:[%s1408 + $0x850] sm:$0xff]
        %v1739 = vld [vmem:[%s1408 + $0x858] sm:$0xff]
        %v1740 = vld [vmem:[%s1408 + $0x860] sm:$0xff]
        %v1741 = vld [vmem:[%s1408 + $0x868] sm:$0xff]
        %v1742 = vld [vmem:[%s1408 + $0x870] sm:$0xff]
        %v1743 = vld [vmem:[%s1408 + $0x878] sm:$0xff]
        %v1744 = vld [vmem:[%s1408 + $0x880] sm:$0xff]
        %v1745 = vld [vmem:[%s1408 + $0x888] sm:$0xff]
        %v1746 = vld [vmem:[%s1408 + $0x890] sm:$0xff]
        %v1747 = vld [vmem:[%s1408 + $0x898] sm:$0xff]
        %v1748 = vld [vmem:[%s1408 + $0x8a0] sm:$0xff]
        %v1749 = vld [vmem:[%s1408 + $0x8a8] sm:$0xff]
        %v1750 = vld [vmem:[%s1408 + $0x8b0] sm:$0xff]
        %v1751 = vld [vmem:[%s1408 + $0x8b8] sm:$0xff]
        %v1752 = vld [vmem:[%s1408 + $0x8c0] sm:$0xff]
        %v1753 = vld [vmem:[%s1408 + $0x8c8] sm:$0xff]
        %v1754 = vld [vmem:[%s1408 + $0x8d0] sm:$0xff]
        %v1755 = vld [vmem:[%s1408 + $0x8d8] sm:$0xff]
        %v1756 = vld [vmem:[%s1408 + $0x8e0] sm:$0xff]
        %v1757 = vld [vmem:[%s1408 + $0x8e8] sm:$0xff]
        %v1758 = vld [vmem:[%s1408 + $0x8f0] sm:$0xff]
        %v1759 = vld [vmem:[%s1408 + $0x8f8] sm:$0xff]
        %v1760 = vld [vmem:[%s1408 + $0x900] sm:$0xff]
        %v1761 = vld [vmem:[%s1408 + $0x908] sm:$0xff]
        %v1762 = vld [vmem:[%s1408 + $0x910] sm:$0xff]
        %v1763 = vld [vmem:[%s1408 + $0x918] sm:$0xff]
        %v1764 = vld [vmem:[%s1408 + $0x920] sm:$0xff]
        %v1765 = vld [vmem:[%s1408 + $0x928] sm:$0xff]
        %v1766 = vld [vmem:[%s1408 + $0x930] sm:$0xff]
        %v1767 = vld [vmem:[%s1408 + $0x938] sm:$0xff]
        %v1768 = vld [vmem:[%s1408 + $0x940] sm:$0xff]
        %v1769 = vld [vmem:[%s1408 + $0x948] sm:$0xff]
        %v1770 = vld [vmem:[%s1408 + $0x950] sm:$0xff]
        %v1771 = vld [vmem:[%s1408 + $0x958] sm:$0xff]
        %v1772 = vld [vmem:[%s1408 + $0x960] sm:$0xff]
        %v1773 = vld [vmem:[%s1408 + $0x968] sm:$0xff]
        %v1774 = vld [vmem:[%s1408 + $0x970] sm:$0xff]
        %v1775 = vld [vmem:[%s1408 + $0x978] sm:$0xff]
        %v1776 = vld [vmem:[%s1408 + $0x980] sm:$0xff]
        %v1777 = vld [vmem:[%s1408 + $0x988] sm:$0xff]
        %v1778 = vld [vmem:[%s1408 + $0x990] sm:$0xff]
        %v1779 = vld [vmem:[%s1408 + $0x998] sm:$0xff]
        %v1780 = vld [vmem:[%s1408 + $0x9a0] sm:$0xff]
        %v1781 = vld [vmem:[%s1408 + $0x9a8] sm:$0xff]
        %v1782 = vld [vmem:[%s1408 + $0x9b0] sm:$0xff]
        %v1783 = vld [vmem:[%s1408 + $0x9b8] sm:$0xff]
        %v1784 = vld [vmem:[%s1408 + $0x9c0] sm:$0xff]
        %v1785 = vld [vmem:[%s1408 + $0x9c8] sm:$0xff]
        %v1786 = vld [vmem:[%s1408 + $0x9d0] sm:$0xff]
        %v1787 = vld [vmem:[%s1408 + $0x9d8] sm:$0xff]
        %v1788 = vld [vmem:[%s1408 + $0x9e0] sm:$0xff]
        %v1789 = vld [vmem:[%s1408 + $0x9e8] sm:$0xff]
        %v1790 = vld [vmem:[%s1408 + $0x9f0] sm:$0xff]
        %v1791 = vld [vmem:[%s1408 + $0x9f8] sm:$0xff]
        %v1792 = vld [vmem:[%s1408 + $0xa00] sm:$0xff]
        %v1793 = vld [vmem:[%s1408 + $0xa08] sm:$0xff]
        %v1794 = vld [vmem:[%s1408 + $0xa10] sm:$0xff]
        %v1795 = vld [vmem:[%s1408 + $0xa18] sm:$0xff]
        %v1796 = vld [vmem:[%s1408 + $0xa20] sm:$0xff]
        %v1797 = vld [vmem:[%s1408 + $0xa28] sm:$0xff]
        %v1798 = vld [vmem:[%s1408 + $0xa30] sm:$0xff]
        %v1799 = vld [vmem:[%s1408 + $0xa38] sm:$0xff]
        %v1800 = vld [vmem:[%s1408 + $0xa40] sm:$0xff]
        %v1801 = vld [vmem:[%s1408 + $0xa48] sm:$0xff]
        %v1802 = vld [vmem:[%s1408 + $0xa50] sm:$0xff]
        %v1803 = vld [vmem:[%s1408 + $0xa58] sm:$0xff]
        %v1804 = vld [vmem:[%s1408 + $0xa60] sm:$0xff]
        %v1805 = vld [vmem:[%s1408 + $0xa68] sm:$0xff]
        %v1806 = vld [vmem:[%s1408 + $0xa70] sm:$0xff]
        %v1807 = vld [vmem:[%s1408 + $0xa78] sm:$0xff]
        %v1808 = vld [vmem:[%s1408 + $0xa80] sm:$0xff]
        %v1809 = vld [vmem:[%s1408 + $0xa88] sm:$0xff]
        %v1810 = vld [vmem:[%s1408 + $0xa90] sm:$0xff]
        %v1811 = vld [vmem:[%s1408 + $0xa98] sm:$0xff]
        %v1812 = vld [vmem:[%s1408 + $0xaa0] sm:$0xff]
        %v1813 = vld [vmem:[%s1408 + $0xaa8] sm:$0xff]
        %v1814 = vld [vmem:[%s1408 + $0xab0] sm:$0xff]
        %v1815 = vld [vmem:[%s1408 + $0xab8] sm:$0xff]
        %v1816 = vld [vmem:[%s1408 + $0xac0] sm:$0xff]
        %v1817 = vld [vmem:[%s1408 + $0xac8] sm:$0xff]
        %v1818 = vld [vmem:[%s1408 + $0xad0] sm:$0xff]
        %v1819 = vld [vmem:[%s1408 + $0xad8] sm:$0xff]
        %v1820 = vld [vmem:[%s1408 + $0xae0] sm:$0xff]
        %v1821 = vld [vmem:[%s1408 + $0xae8] sm:$0xff]
        %v1822 = vld [vmem:[%s1408 + $0xaf0] sm:$0xff]
        %v1823 = vld [vmem:[%s1408 + $0xaf8] sm:$0xff]
        %v1824 = vld [vmem:[%s1408 + $0xb00] sm:$0xff]
        %v1825 = vld [vmem:[%s1408 + $0xb08] sm:$0xff]
        %v1826 = vld [vmem:[%s1408 + $0xb10] sm:$0xff]
        %v1827 = vld [vmem:[%s1408 + $0xb18] sm:$0xff]
        %v1828 = vld [vmem:[%s1408 + $0xb20] sm:$0xff]
        %v1829 = vld [vmem:[%s1408 + $0xb28] sm:$0xff]
        %v1830 = vld [vmem:[%s1408 + $0xb30] sm:$0xff]
        %v1831 = vld [vmem:[%s1408 + $0xb38] sm:$0xff]
        %v1832 = vld [vmem:[%s1408 + $0xb40] sm:$0xff]
        %v1833 = vld [vmem:[%s1408 + $0xb48] sm:$0xff]
        %v1834 = vld [vmem:[%s1408 + $0xb50] sm:$0xff]
        %v1835 = vld [vmem:[%s1408 + $0xb58] sm:$0xff]
        %v1836 = vld [vmem:[%s1408 + $0xb60] sm:$0xff]
        %v1837 = vld [vmem:[%s1408 + $0xb68] sm:$0xff]
        %v1838 = vld [vmem:[%s1408 + $0xb70] sm:$0xff]
        %v1839 = vld [vmem:[%s1408 + $0xb78] sm:$0xff]
        %v1840 = vld [vmem:[%s1408 + $0xb80] sm:$0xff]
        %v1841 = vld [vmem:[%s1408 + $0xb88] sm:$0xff]
        %v1842 = vld [vmem:[%s1408 + $0xb90] sm:$0xff]
        %v1843 = vld [vmem:[%s1408 + $0xb98] sm:$0xff]
        %v1844 = vld [vmem:[%s1408 + $0xba0] sm:$0xff]
        %v1845 = vld [vmem:[%s1408 + $0xba8] sm:$0xff]
        %v1846 = vld [vmem:[%s1408 + $0xbb0] sm:$0xff]
        %v1847 = vld [vmem:[%s1408 + $0xbb8] sm:$0xff]
        %v1848 = vld [vmem:[%s1408 + $0xbc0] sm:$0xff]
        %v1849 = vld [vmem:[%s1408 + $0xbc8] sm:$0xff]
        %v1850 = vld [vmem:[%s1408 + $0xbd0] sm:$0xff]
        %v1851 = vld [vmem:[%s1408 + $0xbd8] sm:$0xff]
        %v1852 = vld [vmem:[%s1408 + $0xbe0] sm:$0xff]
        %v1853 = vld [vmem:[%s1408 + $0xbe8] sm:$0xff]
        %v1854 = vld [vmem:[%s1408 + $0xbf0] sm:$0xff]
        %v1855 = vld [vmem:[%s1408 + $0xbf8] sm:$0xff]
        %v1856 = vld [vmem:[%s1408 + $0xc00] sm:$0xff]
        %v1857 = vld [vmem:[%s1408 + $0xc08] sm:$0xff]
        %v1858 = vld [vmem:[%s1408 + $0xc10] sm:$0xff]
        %v1859 = vld [vmem:[%s1408 + $0xc18] sm:$0xff]
        %v1860 = vld [vmem:[%s1408 + $0xc20] sm:$0xff]
        %v1861 = vld [vmem:[%s1408 + $0xc28] sm:$0xff]
        %v1862 = vld [vmem:[%s1408 + $0xc30] sm:$0xff]
        %v1863 = vld [vmem:[%s1408 + $0xc38] sm:$0xff]
        %v1864 = vld [vmem:[%s1408 + $0xc40] sm:$0xff]
        %v1865 = vld [vmem:[%s1408 + $0xc48] sm:$0xff]
        %v1866 = vld [vmem:[%s1408 + $0xc50] sm:$0xff]
        %v1867 = vld [vmem:[%s1408 + $0xc58] sm:$0xff]
        %v1868 = vld [vmem:[%s1408 + $0xc60] sm:$0xff]
        %v1869 = vld [vmem:[%s1408 + $0xc68] sm:$0xff]
        %v1870 = vld [vmem:[%s1408 + $0xc70] sm:$0xff]
        %v1871 = vld [vmem:[%s1408 + $0xc78] sm:$0xff]
        %v1872 = vld [vmem:[%s1408 + $0xc80] sm:$0xff]
        %v1873 = vld [vmem:[%s1408 + $0xc88] sm:$0xff]
        %v1874 = vld [vmem:[%s1408 + $0xc90] sm:$0xff]
        %v1875 = vld [vmem:[%s1408 + $0xc98] sm:$0xff]
        %v1876 = vld [vmem:[%s1408 + $0xca0] sm:$0xff]
        %v1877 = vld [vmem:[%s1408 + $0xca8] sm:$0xff]
        %v1878 = vld [vmem:[%s1408 + $0xcb0] sm:$0xff]
        %v1879 = vld [vmem:[%s1408 + $0xcb8] sm:$0xff]
        %v1880 = vld [vmem:[%s1408 + $0xcc0] sm:$0xff]
        %v1881 = vld [vmem:[%s1408 + $0xcc8] sm:$0xff]
        %v1882 = vld [vmem:[%s1408 + $0xcd0] sm:$0xff]
        %v1883 = vld [vmem:[%s1408 + $0xcd8] sm:$0xff]
        %v1884 = vld [vmem:[%s1408 + $0xce0] sm:$0xff]
        %v1885 = vld [vmem:[%s1408 + $0xce8] sm:$0xff]
        %v1886 = vld [vmem:[%s1408 + $0xcf0] sm:$0xff]
        %v1887 = vld [vmem:[%s1408 + $0xcf8] sm:$0xff]
        %v1888 = vld [vmem:[%s1408 + $0xd00] sm:$0xff]
        %v1889 = vld [vmem:[%s1408 + $0xd08] sm:$0xff]
        %v1890 = vld [vmem:[%s1408 + $0xd10] sm:$0xff]
        %v1891 = vld [vmem:[%s1408 + $0xd18] sm:$0xff]
        %v1892 = vld [vmem:[%s1408 + $0xd20] sm:$0xff]
        %v1893 = vld [vmem:[%s1408 + $0xd28] sm:$0xff]
        %v1894 = vld [vmem:[%s1408 + $0xd30] sm:$0xff]
        %v1895 = vld [vmem:[%s1408 + $0xd38] sm:$0xff]
        %v1896 = vld [vmem:[%s1408 + $0xd40] sm:$0xff]
        %v1897 = vld [vmem:[%s1408 + $0xd48] sm:$0xff]
        %v1898 = vld [vmem:[%s1408 + $0xd50] sm:$0xff]
        %v1899 = vld [vmem:[%s1408 + $0xd58] sm:$0xff]
        %v1900 = vld [vmem:[%s1408 + $0xd60] sm:$0xff]
        %v1901 = vld [vmem:[%s1408 + $0xd68] sm:$0xff]
        %v1902 = vld [vmem:[%s1408 + $0xd70] sm:$0xff]
        %v1903 = vld [vmem:[%s1408 + $0xd78] sm:$0xff]
        %v1904 = vld [vmem:[%s1408 + $0xd80] sm:$0xff]
        %v1905 = vld [vmem:[%s1408 + $0xd88] sm:$0xff]
        %v1906 = vld [vmem:[%s1408 + $0xd90] sm:$0xff]
        %v1907 = vld [vmem:[%s1408 + $0xd98] sm:$0xff]
        %v1908 = vld [vmem:[%s1408 + $0xda0] sm:$0xff]
        %v1909 = vld [vmem:[%s1408 + $0xda8] sm:$0xff]
        %v1910 = vld [vmem:[%s1408 + $0xdb0] sm:$0xff]
        %v1911 = vld [vmem:[%s1408 + $0xdb8] sm:$0xff]
        %v1912 = vld [vmem:[%s1408 + $0xdc0] sm:$0xff]
        %v1913 = vld [vmem:[%s1408 + $0xdc8] sm:$0xff]
        %v1914 = vld [vmem:[%s1408 + $0xdd0] sm:$0xff]
        %v1915 = vld [vmem:[%s1408 + $0xdd8] sm:$0xff]
        %v1916 = vld [vmem:[%s1408 + $0xde0] sm:$0xff]
        %v1917 = vld [vmem:[%s1408 + $0xde8] sm:$0xff]
        %v1918 = vld [vmem:[%s1408 + $0xdf0] sm:$0xff]
        %v1919 = vld [vmem:[%s1408 + $0xdf8] sm:$0xff]
        %v1920 = vld [vmem:[%s1408 + $0xe00] sm:$0xff]
        %v1921 = vld [vmem:[%s1408 + $0xe08] sm:$0xff]
        %v1922 = vld [vmem:[%s1408 + $0xe10] sm:$0xff]
        %v1923 = vld [vmem:[%s1408 + $0xe18] sm:$0xff]
        %v1924 = vld [vmem:[%s1408 + $0xe20] sm:$0xff]
        %v1925 = vld [vmem:[%s1408 + $0xe28] sm:$0xff]
        %v1926 = vld [vmem:[%s1408 + $0xe30] sm:$0xff]
        %v1927 = vld [vmem:[%s1408 + $0xe38] sm:$0xff]
        %v1928 = vld [vmem:[%s1408 + $0xe40] sm:$0xff]
        %v1929 = vld [vmem:[%s1408 + $0xe48] sm:$0xff]
        %v1930 = vld [vmem:[%s1408 + $0xe50] sm:$0xff]
        %v1931 = vld [vmem:[%s1408 + $0xe58] sm:$0xff]
        %v1932 = vld [vmem:[%s1408 + $0xe60] sm:$0xff]
        %v1933 = vld [vmem:[%s1408 + $0xe68] sm:$0xff]
        %v1934 = vld [vmem:[%s1408 + $0xe70] sm:$0xff]
        %v1935 = vld [vmem:[%s1408 + $0xe78] sm:$0xff]
        %v1936 = vld [vmem:[%s1408 + $0xe80] sm:$0xff]
        %v1937 = vld [vmem:[%s1408 + $0xe88] sm:$0xff]
        %v1938 = vld [vmem:[%s1408 + $0xe90] sm:$0xff]
        %v1939 = vld [vmem:[%s1408 + $0xe98] sm:$0xff]
        %v1940 = vld [vmem:[%s1408 + $0xea0] sm:$0xff]
        %v1941 = vld [vmem:[%s1408 + $0xea8] sm:$0xff]
        %v1942 = vld [vmem:[%s1408 + $0xeb0] sm:$0xff]
        %v1943 = vld [vmem:[%s1408 + $0xeb8] sm:$0xff]
        %v1944 = vld [vmem:[%s1408 + $0xec0] sm:$0xff]
        %v1945 = vld [vmem:[%s1408 + $0xec8] sm:$0xff]
        %v1946 = vld [vmem:[%s1408 + $0xed0] sm:$0xff]
        %v1947 = vld [vmem:[%s1408 + $0xed8] sm:$0xff]
        %v1948 = vld [vmem:[%s1408 + $0xee0] sm:$0xff]
        %v1949 = vld [vmem:[%s1408 + $0xee8] sm:$0xff]
        %v1950 = vld [vmem:[%s1408 + $0xef0] sm:$0xff]
        %v1951 = vld [vmem:[%s1408 + $0xef8] sm:$0xff]
        %v1952 = vld [vmem:[%s1408 + $0xf00] sm:$0xff]
        %v1953 = vld [vmem:[%s1408 + $0xf08] sm:$0xff]
        %v1954 = vld [vmem:[%s1408 + $0xf10] sm:$0xff]
        %v1955 = vld [vmem:[%s1408 + $0xf18] sm:$0xff]
        %v1956 = vld [vmem:[%s1408 + $0xf20] sm:$0xff]
        %v1957 = vld [vmem:[%s1408 + $0xf28] sm:$0xff]
        %v1958 = vld [vmem:[%s1408 + $0xf30] sm:$0xff]
        %v1959 = vld [vmem:[%s1408 + $0xf38] sm:$0xff]
        %v1960 = vld [vmem:[%s1408 + $0xf40] sm:$0xff]
        %v1961 = vld [vmem:[%s1408 + $0xf48] sm:$0xff]
        %v1962 = vld [vmem:[%s1408 + $0xf50] sm:$0xff]
        %v1963 = vld [vmem:[%s1408 + $0xf58] sm:$0xff]
        %v1964 = vld [vmem:[%s1408 + $0xf60] sm:$0xff]
        %v1965 = vld [vmem:[%s1408 + $0xf68] sm:$0xff]
        %v1966 = vld [vmem:[%s1408 + $0xf70] sm:$0xff]
        %v1967 = vld [vmem:[%s1408 + $0xf78] sm:$0xff]
        %v1968 = vld [vmem:[%s1408 + $0xf80] sm:$0xff]
        %v1969 = vld [vmem:[%s1408 + $0xf88] sm:$0xff]
        %v1970 = vld [vmem:[%s1408 + $0xf90] sm:$0xff]
        %v1971 = vld [vmem:[%s1408 + $0xf98] sm:$0xff]
        %v1972 = vld [vmem:[%s1408 + $0xfa0] sm:$0xff]
        %v1973 = vld [vmem:[%s1408 + $0xfa8] sm:$0xff]
        %v1974 = vld [vmem:[%s1408 + $0xfb0] sm:$0xff]
        %v1975 = vld [vmem:[%s1408 + $0xfb8] sm:$0xff]
        %v1976 = vld [vmem:[%s1408 + $0xfc0] sm:$0xff]
        %v1977 = vld [vmem:[%s1408 + $0xfc8] sm:$0xff]
        %v1978 = vld [vmem:[%s1408 + $0xfd0] sm:$0xff]
        %v1979 = vld [vmem:[%s1408 + $0xfd8] sm:$0xff]
        %v1980 = vld [vmem:[%s1408 + $0xfe0] sm:$0xff]
        %v1981 = vld [vmem:[%s1408 + $0xfe8] sm:$0xff]
        %v1982 = vld [vmem:[%s1408 + $0xff0] sm:$0xff]
        %v1983 = vld [vmem:[%s1408 + $0xff8] sm:$0xff]
        %v1984 = vld [vmem:[%s1408 + $0x1000] sm:$0xff]
        %v1985 = vld [vmem:[%s1408 + $0x1008] sm:$0xff]
        %v1986 = vld [vmem:[%s1408 + $0x1010] sm:$0xff]
        %v1987 = vld [vmem:[%s1408 + $0x1018] sm:$0xff]
        %v1988 = vld [vmem:[%s1408 + $0x1020] sm:$0xff]
        %v1989 = vld [vmem:[%s1408 + $0x1028] sm:$0xff]
        %v1990 = vld [vmem:[%s1408 + $0x1030] sm:$0xff]
        %v1991 = vld [vmem:[%s1408 + $0x1038] sm:$0xff]
        %v1992 = vld [vmem:[%s1408 + $0x1040] sm:$0xff]
        %v1993 = vld [vmem:[%s1408 + $0x1048] sm:$0xff]
        %v1994 = vld [vmem:[%s1408 + $0x1050] sm:$0xff]
        %v1995 = vld [vmem:[%s1408 + $0x1058] sm:$0xff]
        %v1996 = vld [vmem:[%s1408 + $0x1060] sm:$0xff]
        %v1997 = vld [vmem:[%s1408 + $0x1068] sm:$0xff]
        %v1998 = vld [vmem:[%s1408 + $0x1070] sm:$0xff]
        %v1999 = vld [vmem:[%s1408 + $0x1078] sm:$0xff]
        %v2000 = vld [vmem:[%s1408 + $0x1080] sm:$0xff]
        %v2001 = vld [vmem:[%s1408 + $0x1088] sm:$0xff]
        %v2002 = vld [vmem:[%s1408 + $0x1090] sm:$0xff]
        %v2003 = vld [vmem:[%s1408 + $0x1098] sm:$0xff]
        %v2004 = vld [vmem:[%s1408 + $0x10a0] sm:$0xff]
        %v2005 = vld [vmem:[%s1408 + $0x10a8] sm:$0xff]
        %v2006 = vld [vmem:[%s1408 + $0x10b0] sm:$0xff]
        %v2007 = vld [vmem:[%s1408 + $0x10b8] sm:$0xff]
        %v2008 = vld [vmem:[%s1408 + $0x10c0] sm:$0xff]
        %v2009 = vld [vmem:[%s1408 + $0x10c8] sm:$0xff]
        %v2010 = vld [vmem:[%s1408 + $0x10d0] sm:$0xff]
        %v2011 = vld [vmem:[%s1408 + $0x10d8] sm:$0xff]
        %v2012 = vld [vmem:[%s1408 + $0x10e0] sm:$0xff]
        %v2013 = vld [vmem:[%s1408 + $0x10e8] sm:$0xff]
        %v2014 = vld [vmem:[%s1408 + $0x10f0] sm:$0xff]
        %v2015 = vld [vmem:[%s1408 + $0x10f8] sm:$0xff]
        %v2016 = vld [vmem:[%s1408 + $0x1100] sm:$0xff]
        %v2017 = vld [vmem:[%s1408 + $0x1108] sm:$0xff]
        %v2018 = vld [vmem:[%s1408 + $0x1110] sm:$0xff]
        %v2019 = vld [vmem:[%s1408 + $0x1118] sm:$0xff]
        %v2020 = vld [vmem:[%s1408 + $0x1120] sm:$0xff]
        %v2021 = vld [vmem:[%s1408 + $0x1128] sm:$0xff]
        %v2022 = vld [vmem:[%s1408 + $0x1130] sm:$0xff]
        %v2023 = vld [vmem:[%s1408 + $0x1138] sm:$0xff]
        %v2024 = vld [vmem:[%s1408 + $0x1140] sm:$0xff]
        %v2025 = vld [vmem:[%s1408 + $0x1148] sm:$0xff]
        %v2026 = vld [vmem:[%s1408 + $0x1150] sm:$0xff]
        %v2027 = vld [vmem:[%s1408 + $0x1158] sm:$0xff]
        %v2028 = vld [vmem:[%s1408 + $0x1160] sm:$0xff]
        %v2029 = vld [vmem:[%s1408 + $0x1168] sm:$0xff]
        %v2030 = vld [vmem:[%s1408 + $0x1170] sm:$0xff]
        %v2031 = vld [vmem:[%s1408 + $0x1178] sm:$0xff]
        %v2032 = vld [vmem:[%s1408 + $0x1180] sm:$0xff]
        %v2033 = vld [vmem:[%s1408 + $0x1188] sm:$0xff]
        %v2034 = vld [vmem:[%s1408 + $0x1190] sm:$0xff]
        %v2035 = vld [vmem:[%s1408 + $0x1198] sm:$0xff]
        %v2036 = vld [vmem:[%s1408 + $0x11a0] sm:$0xff]
        %v2037 = vld [vmem:[%s1408 + $0x11a8] sm:$0xff]
        %v2038 = vld [vmem:[%s1408 + $0x11b0] sm:$0xff]
        %v2039 = vld [vmem:[%s1408 + $0x11b8] sm:$0xff]
        %v2040 = vld [vmem:[%s1408 + $0x11c0] sm:$0xff]
        %v2041 = vld [vmem:[%s1408 + $0x11c8] sm:$0xff]
        %v2042 = vld [vmem:[%s1408 + $0x11d0] sm:$0xff]
        %v2043 = vld [vmem:[%s1408 + $0x11d8] sm:$0xff]
        %v2044 = vld [vmem:[%s1408 + $0x11e0] sm:$0xff]
        %v2045 = vld [vmem:[%s1408 + $0x11e8] sm:$0xff]
        %v2046 = vld [vmem:[%s1408 + $0x11f0] sm:$0xff]
        %v2047 = vld [vmem:[%s1408 + $0x11f8] sm:$0xff]
        %v2048 = vld [vmem:[%s1452] sm:$0xf]
        %v2050 = vlaneseq
        %v2051 = vshrl.u32 %v2050, 7
        %v2052 = vsub.s32 0, %v2051
        %v2053 = vrot.slane %v2048, %v2052
        %v2054 = vlaneseq
        %v2055 = vshrl.u32 %v2054, 7
        %v2056 = vsub.s32 1, %v2055
        %v2057 = vrot.slane %v2048, %v2056
        %v2058 = vlaneseq
        %v2059 = vshrl.u32 %v2058, 7
        %v2060 = vsub.s32 2, %v2059
        %v2061 = vrot.slane %v2048, %v2060
        %v2062 = vlaneseq
        %v2063 = vshrl.u32 %v2062, 7
        %v2064 = vsub.s32 3, %v2063
        %v2065 = vrot.slane %v2048, %v2064
        %v2073 = vcombine.high %v1469, %v1469
        %v2075 = vunpack.c.l.s4 1966171168
        %v2076 = vunpack.c.0.s8 %v2075
        %v2077 = vlaneseq
        %v2078 = vshrl.u32 %v2077, 7
        %v2079 = vsub.s32 %v2076, %v2078
        %v2080 = vrot.slane %v1469, %v2079
        %v2082 = vunpack.c.l.s4 1966171168
        %v2083 = vunpack.c.0.s8 %v2082
        %v2084 = vlaneseq
        %v2085 = vshrl.u32 %v2084, 7
        %v2086 = vsub.s32 %v2083, %v2085
        %v2087 = vrot.slane %v2073, %v2086
        %v2088 = vcombine.high %v2080, %v2080
        %v2089 = vcombine.high %v2087, %v2087
        %v2091 = vunpack.c.l.s4 1966171168
        %v2092 = vunpack.c.0.s8 %v2091
        %v2093 = vlaneseq
        %v2094 = vshrl.u32 %v2093, 7
        %v2095 = vsub.s32 %v2092, %v2094
        %v2096 = vrot.slane %v2080, %v2095
        %v2098 = vunpack.c.l.s4 1966171168
        %v2099 = vunpack.c.0.s8 %v2098
        %v2100 = vlaneseq
        %v2101 = vshrl.u32 %v2100, 7
        %v2102 = vsub.s32 %v2099, %v2101
        %v2103 = vrot.slane %v2087, %v2102
        %v2105 = vunpack.c.l.s4 1966171168
        %v2106 = vunpack.c.0.s8 %v2105
        %v2107 = vlaneseq
        %v2108 = vshrl.u32 %v2107, 7
        %v2109 = vsub.s32 %v2106, %v2108
        %v2110 = vrot.slane %v2088, %v2109
        %v2112 = vunpack.c.l.s4 1966171168
        %v2113 = vunpack.c.0.s8 %v2112
        %v2114 = vlaneseq
        %v2115 = vshrl.u32 %v2114, 7
        %v2116 = vsub.s32 %v2113, %v2115
        %v2117 = vrot.slane %v2089, %v2116
        %v2118 = vcombine.high %v2096, %v2096
        %v2119 = vcombine.high %v2103, %v2103
        %v2120 = vcombine.high %v2110, %v2110
        %v2121 = vcombine.high %v2117, %v2117
        %v2122 = vcombine.high %v1470, %v1470
        %v2124 = vunpack.c.l.s4 1966171168
        %v2125 = vunpack.c.0.s8 %v2124
        %v2126 = vlaneseq
        %v2127 = vshrl.u32 %v2126, 7
        %v2128 = vsub.s32 %v2125, %v2127
        %v2129 = vrot.slane %v1470, %v2128
        %v2131 = vunpack.c.l.s4 1966171168
        %v2132 = vunpack.c.0.s8 %v2131
        %v2133 = vlaneseq
        %v2134 = vshrl.u32 %v2133, 7
        %v2135 = vsub.s32 %v2132, %v2134
        %v2136 = vrot.slane %v2122, %v2135
        %v2137 = vcombine.high %v2129, %v2129
        %v2138 = vcombine.high %v2136, %v2136
        %v2140 = vunpack.c.l.s4 1966171168
        %v2141 = vunpack.c.0.s8 %v2140
        %v2142 = vlaneseq
        %v2143 = vshrl.u32 %v2142, 7
        %v2144 = vsub.s32 %v2141, %v2143
        %v2145 = vrot.slane %v2129, %v2144
        %v2147 = vunpack.c.l.s4 1966171168
        %v2148 = vunpack.c.0.s8 %v2147
        %v2149 = vlaneseq
        %v2150 = vshrl.u32 %v2149, 7
        %v2151 = vsub.s32 %v2148, %v2150
        %v2152 = vrot.slane %v2136, %v2151
        %v2154 = vunpack.c.l.s4 1966171168
        %v2155 = vunpack.c.0.s8 %v2154
        %v2156 = vlaneseq
        %v2157 = vshrl.u32 %v2156, 7
        %v2158 = vsub.s32 %v2155, %v2157
        %v2159 = vrot.slane %v2137, %v2158
        %v2161 = vunpack.c.l.s4 1966171168
        %v2162 = vunpack.c.0.s8 %v2161
        %v2163 = vlaneseq
        %v2164 = vshrl.u32 %v2163, 7
        %v2165 = vsub.s32 %v2162, %v2164
        %v2166 = vrot.slane %v2138, %v2165
        %v2167 = vcombine.high %v2145, %v2145
        %v2168 = vcombine.high %v2152, %v2152
        %v2169 = vcombine.high %v2159, %v2159
        %v2170 = vcombine.high %v2166, %v2166
        %v2172 = vunpack.c.l.s4 1966171168
        %v2173 = vunpack.c.0.s8 %v2172
        %v2174 = vlaneseq
        %v2175 = vshrl.u32 %v2174, 7
        %v2176 = vsub.s32 %v2173, %v2175
        %v2177 = vrot.slane %v1471, %v2176
        %v2178 = vcombine.high %v2177, %v2177
        %v2180 = vunpack.c.l.s4 1966171168
        %v2181 = vunpack.c.0.s8 %v2180
        %v2182 = vlaneseq
        %v2183 = vshrl.u32 %v2182, 7
        %v2184 = vsub.s32 %v2181, %v2183
        %v2185 = vrot.slane %v2177, %v2184
        %v2187 = vunpack.c.l.s4 1966171168
        %v2188 = vunpack.c.0.s8 %v2187
        %v2189 = vlaneseq
        %v2190 = vshrl.u32 %v2189, 7
        %v2191 = vsub.s32 %v2188, %v2190
        %v2192 = vrot.slane %v2178, %v2191
        %v2787 = vunpack.c.l.b16 %v1472
        %v2788 = vunpack.c.h.b16 %v1472
        %v2789 = vunpack.c.l.b16 %v1473
        %v2790 = vunpack.c.h.b16 %v1473
        %v2791 = vunpack.c.l.b16 %v1474
        %v2792 = vunpack.c.h.b16 %v1474
        %v2793 = vunpack.c.l.b16 %v1475
        %v2794 = vunpack.c.h.b16 %v1475
        %v2795 = vunpack.c.l.b16 %v1476
        %v2796 = vunpack.c.h.b16 %v1476
        %v2797 = vunpack.c.l.b16 %v1477
        %v2798 = vunpack.c.h.b16 %v1477
        %v2799 = vunpack.c.l.b16 %v1478
        %v2800 = vunpack.c.h.b16 %v1478
        %v2801 = vunpack.c.l.b16 %v1479
        %v2802 = vunpack.c.h.b16 %v1479
        %v2803 = vunpack.c.l.b16 %v1480
        %v2804 = vunpack.c.h.b16 %v1480
        %v2805 = vunpack.c.l.b16 %v1481
        %v2806 = vunpack.c.h.b16 %v1481
        %v2807 = vunpack.c.l.b16 %v1482
        %v2808 = vunpack.c.h.b16 %v1482
        %v2809 = vunpack.c.l.b16 %v1483
        %v2810 = vunpack.c.h.b16 %v1483
        %v2811 = vunpack.c.l.b16 %v1484
        %v2812 = vunpack.c.h.b16 %v1484
        %v2813 = vunpack.c.l.b16 %v1485
        %v2814 = vunpack.c.h.b16 %v1485
        %v2815 = vunpack.c.l.b16 %v1486
        %v2816 = vunpack.c.h.b16 %v1486
        %v2817 = vunpack.c.l.b16 %v1487
        %v2818 = vunpack.c.h.b16 %v1487
        %v2819 = vunpack.c.l.b16 %v1488
        %v2820 = vunpack.c.h.b16 %v1488
        %v2821 = vunpack.c.l.b16 %v1489
        %v2822 = vunpack.c.h.b16 %v1489
        %v2823 = vunpack.c.l.b16 %v1490
        %v2824 = vunpack.c.h.b16 %v1490
        %v2825 = vunpack.c.l.b16 %v1491
        %v2826 = vunpack.c.h.b16 %v1491
        %v2827 = vunpack.c.l.b16 %v1492
        %v2828 = vunpack.c.h.b16 %v1492
        %v2829 = vunpack.c.l.b16 %v1493
        %v2830 = vunpack.c.h.b16 %v1493
        %v2831 = vunpack.c.l.b16 %v1494
        %v2832 = vunpack.c.h.b16 %v1494
        %v2833 = vunpack.c.l.b16 %v1495
        %v2834 = vunpack.c.h.b16 %v1495
        %v2835 = vunpack.c.l.b16 %v1496
        %v2836 = vunpack.c.h.b16 %v1496
        %v2837 = vunpack.c.l.b16 %v1497
        %v2838 = vunpack.c.h.b16 %v1497
        %v2839 = vunpack.c.l.b16 %v1498
        %v2840 = vunpack.c.h.b16 %v1498
        %v2841 = vunpack.c.l.b16 %v1499
        %v2842 = vunpack.c.h.b16 %v1499
        %v2843 = vunpack.c.l.b16 %v1500
        %v2844 = vunpack.c.h.b16 %v1500
        %v2845 = vunpack.c.l.b16 %v1501
        %v2846 = vunpack.c.h.b16 %v1501
        %v2847 = vunpack.c.l.b16 %v1502
        %v2848 = vunpack.c.h.b16 %v1502
        %v2849 = vunpack.c.l.b16 %v1503
        %v2850 = vunpack.c.h.b16 %v1503
        %v2851 = vunpack.c.l.b16 %v1504
        %v2852 = vunpack.c.h.b16 %v1504
        %v2853 = vunpack.c.l.b16 %v1505
        %v2854 = vunpack.c.h.b16 %v1505
        %v2855 = vunpack.c.l.b16 %v1506
        %v2856 = vunpack.c.h.b16 %v1506
        %v2857 = vunpack.c.l.b16 %v1507
        %v2858 = vunpack.c.h.b16 %v1507
        %v2859 = vunpack.c.l.b16 %v1508
        %v2860 = vunpack.c.h.b16 %v1508
        %v2861 = vunpack.c.l.b16 %v1509
        %v2862 = vunpack.c.h.b16 %v1509
        %v2863 = vunpack.c.l.b16 %v1510
        %v2864 = vunpack.c.h.b16 %v1510
        %v2865 = vunpack.c.l.b16 %v1511
        %v2866 = vunpack.c.h.b16 %v1511
        %v2867 = vunpack.c.l.b16 %v1512
        %v2868 = vunpack.c.h.b16 %v1512
        %v2869 = vunpack.c.l.b16 %v1513
        %v2870 = vunpack.c.h.b16 %v1513
        %v2871 = vunpack.c.l.b16 %v1514
        %v2872 = vunpack.c.h.b16 %v1514
        %v2873 = vunpack.c.l.b16 %v1515
        %v2874 = vunpack.c.h.b16 %v1515
        %v2875 = vunpack.c.l.b16 %v1516
        %v2876 = vunpack.c.h.b16 %v1516
        %v2877 = vunpack.c.l.b16 %v1517
        %v2878 = vunpack.c.h.b16 %v1517
        %v2879 = vunpack.c.l.b16 %v1518
        %v2880 = vunpack.c.h.b16 %v1518
        %v2881 = vunpack.c.l.b16 %v1519
        %v2882 = vunpack.c.h.b16 %v1519
        %v2883 = vunpack.c.l.b16 %v1520
        %v2884 = vunpack.c.h.b16 %v1520
        %v2885 = vunpack.c.l.b16 %v1521
        %v2886 = vunpack.c.h.b16 %v1521
        %v2887 = vunpack.c.l.b16 %v1522
        %v2888 = vunpack.c.h.b16 %v1522
        %v2889 = vunpack.c.l.b16 %v1523
        %v2890 = vunpack.c.h.b16 %v1523
        %v2891 = vunpack.c.l.b16 %v1524
        %v2892 = vunpack.c.h.b16 %v1524
        %v2893 = vunpack.c.l.b16 %v1525
        %v2894 = vunpack.c.h.b16 %v1525
        %v2895 = vunpack.c.l.b16 %v1526
        %v2896 = vunpack.c.h.b16 %v1526
        %v2897 = vunpack.c.l.b16 %v1527
        %v2898 = vunpack.c.h.b16 %v1527
        %v2899 = vunpack.c.l.b16 %v1528
        %v2900 = vunpack.c.h.b16 %v1528
        %v2901 = vunpack.c.l.b16 %v1529
        %v2902 = vunpack.c.h.b16 %v1529
        %v2903 = vunpack.c.l.b16 %v1530
        %v2904 = vunpack.c.h.b16 %v1530
        %v2905 = vunpack.c.l.b16 %v1531
        %v2906 = vunpack.c.h.b16 %v1531
        %v2907 = vunpack.c.l.b16 %v1532
        %v2908 = vunpack.c.h.b16 %v1532
        %v2909 = vunpack.c.l.b16 %v1533
        %v2910 = vunpack.c.h.b16 %v1533
        %v2911 = vunpack.c.l.b16 %v1534
        %v2912 = vunpack.c.h.b16 %v1534
        %v2913 = vunpack.c.l.b16 %v1535
        %v2914 = vunpack.c.h.b16 %v1535
        %v2915 = vunpack.c.l.b16 %v1536
        %v2916 = vunpack.c.h.b16 %v1536
        %v2917 = vunpack.c.l.b16 %v1537
        %v2918 = vunpack.c.h.b16 %v1537
        %v2919 = vunpack.c.l.b16 %v1538
        %v2920 = vunpack.c.h.b16 %v1538
        %v2921 = vunpack.c.l.b16 %v1539
        %v2922 = vunpack.c.h.b16 %v1539
        %v2923 = vunpack.c.l.b16 %v1540
        %v2924 = vunpack.c.h.b16 %v1540
        %v2925 = vunpack.c.l.b16 %v1541
        %v2926 = vunpack.c.h.b16 %v1541
        %v2927 = vunpack.c.l.b16 %v1542
        %v2928 = vunpack.c.h.b16 %v1542
        %v2929 = vunpack.c.l.b16 %v1543
        %v2930 = vunpack.c.h.b16 %v1543
        %v2931 = vunpack.c.l.b16 %v1544
        %v2932 = vunpack.c.h.b16 %v1544
        %v2933 = vunpack.c.l.b16 %v1545
        %v2934 = vunpack.c.h.b16 %v1545
        %v2935 = vunpack.c.l.b16 %v1546
        %v2936 = vunpack.c.h.b16 %v1546
        %v2937 = vunpack.c.l.b16 %v1547
        %v2938 = vunpack.c.h.b16 %v1547
        %v2939 = vunpack.c.l.b16 %v1548
        %v2940 = vunpack.c.h.b16 %v1548
        %v2941 = vunpack.c.l.b16 %v1549
        %v2942 = vunpack.c.h.b16 %v1549
        %v2943 = vunpack.c.l.b16 %v1550
        %v2944 = vunpack.c.h.b16 %v1550
        %v2945 = vunpack.c.l.b16 %v1551
        %v2946 = vunpack.c.h.b16 %v1551
        %v2947 = vunpack.c.l.b16 %v1552
        %v2948 = vunpack.c.h.b16 %v1552
        %v2949 = vunpack.c.l.b16 %v1553
        %v2950 = vunpack.c.h.b16 %v1553
        %v2951 = vunpack.c.l.b16 %v1554
        %v2952 = vunpack.c.h.b16 %v1554
        %v2953 = vunpack.c.l.b16 %v1555
        %v2954 = vunpack.c.h.b16 %v1555
        %v2955 = vunpack.c.l.b16 %v1556
        %v2956 = vunpack.c.h.b16 %v1556
        %v2957 = vunpack.c.l.b16 %v1557
        %v2958 = vunpack.c.h.b16 %v1557
        %v2959 = vunpack.c.l.b16 %v1558
        %v2960 = vunpack.c.h.b16 %v1558
        %v2961 = vunpack.c.l.b16 %v1559
        %v2962 = vunpack.c.h.b16 %v1559
        %v2963 = vunpack.c.l.b16 %v1560
        %v2964 = vunpack.c.h.b16 %v1560
        %v2965 = vunpack.c.l.b16 %v1561
        %v2966 = vunpack.c.h.b16 %v1561
        %v2967 = vunpack.c.l.b16 %v1562
        %v2968 = vunpack.c.h.b16 %v1562
        %v2969 = vunpack.c.l.b16 %v1563
        %v2970 = vunpack.c.h.b16 %v1563
        %v2971 = vunpack.c.l.b16 %v1564
        %v2972 = vunpack.c.h.b16 %v1564
        %v2973 = vunpack.c.l.b16 %v1565
        %v2974 = vunpack.c.h.b16 %v1565
        %v2975 = vunpack.c.l.b16 %v1566
        %v2976 = vunpack.c.h.b16 %v1566
        %v2977 = vunpack.c.l.b16 %v1567
        %v2978 = vunpack.c.h.b16 %v1567
        %v2979 = vunpack.c.l.b16 %v1568
        %v2980 = vunpack.c.h.b16 %v1568
        %v2981 = vunpack.c.l.b16 %v1569
        %v2982 = vunpack.c.h.b16 %v1569
        %v2983 = vunpack.c.l.b16 %v1570
        %v2984 = vunpack.c.h.b16 %v1570
        %v2985 = vunpack.c.l.b16 %v1571
        %v2986 = vunpack.c.h.b16 %v1571
        %v2987 = vunpack.c.l.b16 %v1572
        %v2988 = vunpack.c.h.b16 %v1572
        %v2989 = vunpack.c.l.b16 %v1573
        %v2990 = vunpack.c.h.b16 %v1573
        %v2991 = vunpack.c.l.b16 %v1574
        %v2992 = vunpack.c.h.b16 %v1574
        %v2993 = vunpack.c.l.b16 %v1575
        %v2994 = vunpack.c.h.b16 %v1575
        %v2995 = vunpack.c.l.b16 %v1576
        %v2996 = vunpack.c.h.b16 %v1576
        %v2997 = vunpack.c.l.b16 %v1577
        %v2998 = vunpack.c.h.b16 %v1577
        %v2999 = vunpack.c.l.b16 %v1578
        %v3000 = vunpack.c.h.b16 %v1578
        %v3001 = vunpack.c.l.b16 %v1579
        %v3002 = vunpack.c.h.b16 %v1579
        %v3003 = vunpack.c.l.b16 %v1580
        %v3004 = vunpack.c.h.b16 %v1580
        %v3005 = vunpack.c.l.b16 %v1581
        %v3006 = vunpack.c.h.b16 %v1581
        %v3007 = vunpack.c.l.b16 %v1582
        %v3008 = vunpack.c.h.b16 %v1582
        %v3009 = vunpack.c.l.b16 %v1583
        %v3010 = vunpack.c.h.b16 %v1583
        %v3011 = vunpack.c.l.b16 %v1584
        %v3012 = vunpack.c.h.b16 %v1584
        %v3013 = vunpack.c.l.b16 %v1585
        %v3014 = vunpack.c.h.b16 %v1585
        %v3015 = vunpack.c.l.b16 %v1586
        %v3016 = vunpack.c.h.b16 %v1586
        %v3017 = vunpack.c.l.b16 %v1587
        %v3018 = vunpack.c.h.b16 %v1587
        %v3019 = vunpack.c.l.b16 %v1588
        %v3020 = vunpack.c.h.b16 %v1588
        %v3021 = vunpack.c.l.b16 %v1589
        %v3022 = vunpack.c.h.b16 %v1589
        %v3023 = vunpack.c.l.b16 %v1590
        %v3024 = vunpack.c.h.b16 %v1590
        %v3025 = vunpack.c.l.b16 %v1591
        %v3026 = vunpack.c.h.b16 %v1591
        %v3027 = vunpack.c.l.b16 %v1592
        %v3028 = vunpack.c.h.b16 %v1592
        %v3029 = vunpack.c.l.b16 %v1593
        %v3030 = vunpack.c.h.b16 %v1593
        %v3031 = vunpack.c.l.b16 %v1594
        %v3032 = vunpack.c.h.b16 %v1594
        %v3033 = vunpack.c.l.b16 %v1595
        %v3034 = vunpack.c.h.b16 %v1595
        %v3035 = vunpack.c.l.b16 %v1596
        %v3036 = vunpack.c.h.b16 %v1596
        %v3037 = vunpack.c.l.b16 %v1597
        %v3038 = vunpack.c.h.b16 %v1597
        %v3039 = vunpack.c.l.b16 %v1598
        %v3040 = vunpack.c.h.b16 %v1598
        %v3041 = vunpack.c.l.b16 %v1599
        %v3042 = vunpack.c.h.b16 %v1599
        %v3043 = vunpack.c.l.b16 %v1600
        %v3044 = vunpack.c.h.b16 %v1600
        %v3045 = vunpack.c.l.b16 %v1601
        %v3046 = vunpack.c.h.b16 %v1601
        %v3047 = vunpack.c.l.b16 %v1602
        %v3048 = vunpack.c.h.b16 %v1602
        %v3049 = vunpack.c.l.b16 %v1603
        %v3050 = vunpack.c.h.b16 %v1603
        %v3051 = vunpack.c.l.b16 %v1604
        %v3052 = vunpack.c.h.b16 %v1604
        %v3053 = vunpack.c.l.b16 %v1605
        %v3054 = vunpack.c.h.b16 %v1605
        %v3055 = vunpack.c.l.b16 %v1606
        %v3056 = vunpack.c.h.b16 %v1606
        %v3057 = vunpack.c.l.b16 %v1607
        %v3058 = vunpack.c.h.b16 %v1607
        %v3059 = vunpack.c.l.b16 %v1608
        %v3060 = vunpack.c.h.b16 %v1608
        %v3061 = vunpack.c.l.b16 %v1609
        %v3062 = vunpack.c.h.b16 %v1609
        %v3063 = vunpack.c.l.b16 %v1610
        %v3064 = vunpack.c.h.b16 %v1610
        %v3065 = vunpack.c.l.b16 %v1611
        %v3066 = vunpack.c.h.b16 %v1611
        %v3067 = vunpack.c.l.b16 %v1612
        %v3068 = vunpack.c.h.b16 %v1612
        %v3069 = vunpack.c.l.b16 %v1613
        %v3070 = vunpack.c.h.b16 %v1613
        %v3071 = vunpack.c.l.b16 %v1614
        %v3072 = vunpack.c.h.b16 %v1614
        %v3073 = vunpack.c.l.b16 %v1615
        %v3074 = vunpack.c.h.b16 %v1615
        %v3075 = vunpack.c.l.b16 %v1616
        %v3076 = vunpack.c.h.b16 %v1616
        %v3077 = vunpack.c.l.b16 %v1617
        %v3078 = vunpack.c.h.b16 %v1617
        %v3079 = vunpack.c.l.b16 %v1618
        %v3080 = vunpack.c.h.b16 %v1618
        %v3081 = vunpack.c.l.b16 %v1619
        %v3082 = vunpack.c.h.b16 %v1619
        %v3083 = vunpack.c.l.b16 %v1620
        %v3084 = vunpack.c.h.b16 %v1620
        %v3085 = vunpack.c.l.b16 %v1621
        %v3086 = vunpack.c.h.b16 %v1621
        %v3087 = vunpack.c.l.b16 %v1622
        %v3088 = vunpack.c.h.b16 %v1622
        %v3089 = vunpack.c.l.b16 %v1623
        %v3090 = vunpack.c.h.b16 %v1623
        %v3091 = vunpack.c.l.b16 %v1624
        %v3092 = vunpack.c.h.b16 %v1624
        %v3093 = vunpack.c.l.b16 %v1625
        %v3094 = vunpack.c.h.b16 %v1625
        %v3095 = vunpack.c.l.b16 %v1626
        %v3096 = vunpack.c.h.b16 %v1626
        %v3097 = vunpack.c.l.b16 %v1627
        %v3098 = vunpack.c.h.b16 %v1627
        %v3099 = vunpack.c.l.b16 %v1628
        %v3100 = vunpack.c.h.b16 %v1628
        %v3101 = vunpack.c.l.b16 %v1629
        %v3102 = vunpack.c.h.b16 %v1629
        %v3103 = vunpack.c.l.b16 %v1630
        %v3104 = vunpack.c.h.b16 %v1630
        %v3105 = vunpack.c.l.b16 %v1631
        %v3106 = vunpack.c.h.b16 %v1631
        %v3107 = vunpack.c.l.b16 %v1632
        %v3108 = vunpack.c.h.b16 %v1632
        %v3109 = vunpack.c.l.b16 %v1633
        %v3110 = vunpack.c.h.b16 %v1633
        %v3111 = vunpack.c.l.b16 %v1634
        %v3112 = vunpack.c.h.b16 %v1634
        %v3113 = vunpack.c.l.b16 %v1635
        %v3114 = vunpack.c.h.b16 %v1635
        %v3115 = vunpack.c.l.b16 %v1636
        %v3116 = vunpack.c.h.b16 %v1636
        %v3117 = vunpack.c.l.b16 %v1637
        %v3118 = vunpack.c.h.b16 %v1637
        %v3119 = vunpack.c.l.b16 %v1638
        %v3120 = vunpack.c.h.b16 %v1638
        %v3121 = vunpack.c.l.b16 %v1639
        %v3122 = vunpack.c.h.b16 %v1639
        %v3123 = vunpack.c.l.b16 %v1640
        %v3124 = vunpack.c.h.b16 %v1640
        %v3125 = vunpack.c.l.b16 %v1641
        %v3126 = vunpack.c.h.b16 %v1641
        %v3127 = vunpack.c.l.b16 %v1642
        %v3128 = vunpack.c.h.b16 %v1642
        %v3129 = vunpack.c.l.b16 %v1643
        %v3130 = vunpack.c.h.b16 %v1643
        %v3131 = vunpack.c.l.b16 %v1644
        %v3132 = vunpack.c.h.b16 %v1644
        %v3133 = vunpack.c.l.b16 %v1645
        %v3134 = vunpack.c.h.b16 %v1645
        %v3135 = vunpack.c.l.b16 %v1646
        %v3136 = vunpack.c.h.b16 %v1646
        %v3137 = vunpack.c.l.b16 %v1647
        %v3138 = vunpack.c.h.b16 %v1647
        %v3139 = vunpack.c.l.b16 %v1648
        %v3140 = vunpack.c.h.b16 %v1648
        %v3141 = vunpack.c.l.b16 %v1649
        %v3142 = vunpack.c.h.b16 %v1649
        %v3143 = vunpack.c.l.b16 %v1650
        %v3144 = vunpack.c.h.b16 %v1650
        %v3145 = vunpack.c.l.b16 %v1651
        %v3146 = vunpack.c.h.b16 %v1651
        %v3147 = vunpack.c.l.b16 %v1652
        %v3148 = vunpack.c.h.b16 %v1652
        %v3149 = vunpack.c.l.b16 %v1653
        %v3150 = vunpack.c.h.b16 %v1653
        %v3151 = vunpack.c.l.b16 %v1654
        %v3152 = vunpack.c.h.b16 %v1654
        %v3153 = vunpack.c.l.b16 %v1655
        %v3154 = vunpack.c.h.b16 %v1655
        %v3155 = vunpack.c.l.b16 %v1656
        %v3156 = vunpack.c.h.b16 %v1656
        %v3157 = vunpack.c.l.b16 %v1657
        %v3158 = vunpack.c.h.b16 %v1657
        %v3159 = vunpack.c.l.b16 %v1658
        %v3160 = vunpack.c.h.b16 %v1658
        %v3161 = vunpack.c.l.b16 %v1659
        %v3162 = vunpack.c.h.b16 %v1659
        %v3163 = vunpack.c.l.b16 %v1660
        %v3164 = vunpack.c.h.b16 %v1660
        %v3165 = vunpack.c.l.b16 %v1661
        %v3166 = vunpack.c.h.b16 %v1661
        %v3167 = vunpack.c.l.b16 %v1662
        %v3168 = vunpack.c.h.b16 %v1662
        %v3169 = vunpack.c.l.b16 %v1663
        %v3170 = vunpack.c.h.b16 %v1663
        %v3171 = vunpack.c.l.b16 %v1664
        %v3172 = vunpack.c.h.b16 %v1664
        %v3173 = vunpack.c.l.b16 %v1665
        %v3174 = vunpack.c.h.b16 %v1665
        %v3175 = vunpack.c.l.b16 %v1666
        %v3176 = vunpack.c.h.b16 %v1666
        %v3177 = vunpack.c.l.b16 %v1667
        %v3178 = vunpack.c.h.b16 %v1667
        %v3179 = vunpack.c.l.b16 %v1668
        %v3180 = vunpack.c.h.b16 %v1668
        %v3181 = vunpack.c.l.b16 %v1669
        %v3182 = vunpack.c.h.b16 %v1669
        %v3183 = vunpack.c.l.b16 %v1670
        %v3184 = vunpack.c.h.b16 %v1670
        %v3185 = vunpack.c.l.b16 %v1671
        %v3186 = vunpack.c.h.b16 %v1671
        %v3187 = vunpack.c.l.b16 %v1672
        %v3188 = vunpack.c.h.b16 %v1672
        %v3189 = vunpack.c.l.b16 %v1673
        %v3190 = vunpack.c.h.b16 %v1673
        %v3191 = vunpack.c.l.b16 %v1674
        %v3192 = vunpack.c.h.b16 %v1674
        %v3193 = vunpack.c.l.b16 %v1675
        %v3194 = vunpack.c.h.b16 %v1675
        %v3195 = vunpack.c.l.b16 %v1676
        %v3196 = vunpack.c.h.b16 %v1676
        %v3197 = vunpack.c.l.b16 %v1677
        %v3198 = vunpack.c.h.b16 %v1677
        %v3199 = vunpack.c.l.b16 %v1678
        %v3200 = vunpack.c.h.b16 %v1678
        %v3201 = vunpack.c.l.b16 %v1679
        %v3202 = vunpack.c.h.b16 %v1679
        %v3203 = vunpack.c.l.b16 %v1680
        %v3204 = vunpack.c.h.b16 %v1680
        %v3205 = vunpack.c.l.b16 %v1681
        %v3206 = vunpack.c.h.b16 %v1681
        %v3207 = vunpack.c.l.b16 %v1682
        %v3208 = vunpack.c.h.b16 %v1682
        %v3209 = vunpack.c.l.b16 %v1683
        %v3210 = vunpack.c.h.b16 %v1683
        %v3211 = vunpack.c.l.b16 %v1684
        %v3212 = vunpack.c.h.b16 %v1684
        %v3213 = vunpack.c.l.b16 %v1685
        %v3214 = vunpack.c.h.b16 %v1685
        %v3215 = vunpack.c.l.b16 %v1686
        %v3216 = vunpack.c.h.b16 %v1686
        %v3217 = vunpack.c.l.b16 %v1687
        %v3218 = vunpack.c.h.b16 %v1687
        %v3219 = vunpack.c.l.b16 %v1688
        %v3220 = vunpack.c.h.b16 %v1688
        %v3221 = vunpack.c.l.b16 %v1689
        %v3222 = vunpack.c.h.b16 %v1689
        %v3223 = vunpack.c.l.b16 %v1690
        %v3224 = vunpack.c.h.b16 %v1690
        %v3225 = vunpack.c.l.b16 %v1691
        %v3226 = vunpack.c.h.b16 %v1691
        %v3227 = vunpack.c.l.b16 %v1692
        %v3228 = vunpack.c.h.b16 %v1692
        %v3229 = vunpack.c.l.b16 %v1693
        %v3230 = vunpack.c.h.b16 %v1693
        %v3231 = vunpack.c.l.b16 %v1694
        %v3232 = vunpack.c.h.b16 %v1694
        %v3233 = vunpack.c.l.b16 %v1695
        %v3234 = vunpack.c.h.b16 %v1695
        %v3235 = vunpack.c.l.b16 %v1696
        %v3236 = vunpack.c.h.b16 %v1696
        %v3237 = vunpack.c.l.b16 %v1697
        %v3238 = vunpack.c.h.b16 %v1697
        %v3239 = vunpack.c.l.b16 %v1698
        %v3240 = vunpack.c.h.b16 %v1698
        %v3241 = vunpack.c.l.b16 %v1699
        %v3242 = vunpack.c.h.b16 %v1699
        %v3243 = vunpack.c.l.b16 %v1700
        %v3244 = vunpack.c.h.b16 %v1700
        %v3245 = vunpack.c.l.b16 %v1701
        %v3246 = vunpack.c.h.b16 %v1701
        %v3247 = vunpack.c.l.b16 %v1702
        %v3248 = vunpack.c.h.b16 %v1702
        %v3249 = vunpack.c.l.b16 %v1703
        %v3250 = vunpack.c.h.b16 %v1703
        %v3251 = vunpack.c.l.b16 %v1704
        %v3252 = vunpack.c.h.b16 %v1704
        %v3253 = vunpack.c.l.b16 %v1705
        %v3254 = vunpack.c.h.b16 %v1705
        %v3255 = vunpack.c.l.b16 %v1706
        %v3256 = vunpack.c.h.b16 %v1706
        %v3257 = vunpack.c.l.b16 %v1707
        %v3258 = vunpack.c.h.b16 %v1707
        %v3259 = vunpack.c.l.b16 %v1708
        %v3260 = vunpack.c.h.b16 %v1708
        %v3261 = vunpack.c.l.b16 %v1709
        %v3262 = vunpack.c.h.b16 %v1709
        %v3263 = vunpack.c.l.b16 %v1710
        %v3264 = vunpack.c.h.b16 %v1710
        %v3265 = vunpack.c.l.b16 %v1711
        %v3266 = vunpack.c.h.b16 %v1711
        %v3267 = vunpack.c.l.b16 %v1712
        %v3268 = vunpack.c.h.b16 %v1712
        %v3269 = vunpack.c.l.b16 %v1713
        %v3270 = vunpack.c.h.b16 %v1713
        %v3271 = vunpack.c.l.b16 %v1714
        %v3272 = vunpack.c.h.b16 %v1714
        %v3273 = vunpack.c.l.b16 %v1715
        %v3274 = vunpack.c.h.b16 %v1715
        %v3275 = vunpack.c.l.b16 %v1716
        %v3276 = vunpack.c.h.b16 %v1716
        %v3277 = vunpack.c.l.b16 %v1717
        %v3278 = vunpack.c.h.b16 %v1717
        %v3279 = vunpack.c.l.b16 %v1718
        %v3280 = vunpack.c.h.b16 %v1718
        %v3281 = vunpack.c.l.b16 %v1719
        %v3282 = vunpack.c.h.b16 %v1719
        %v3283 = vunpack.c.l.b16 %v1720
        %v3284 = vunpack.c.h.b16 %v1720
        %v3285 = vunpack.c.l.b16 %v1721
        %v3286 = vunpack.c.h.b16 %v1721
        %v3287 = vunpack.c.l.b16 %v1722
        %v3288 = vunpack.c.h.b16 %v1722
        %v3289 = vunpack.c.l.b16 %v1723
        %v3290 = vunpack.c.h.b16 %v1723
        %v3291 = vunpack.c.l.b16 %v1724
        %v3292 = vunpack.c.h.b16 %v1724
        %v3293 = vunpack.c.l.b16 %v1725
        %v3294 = vunpack.c.h.b16 %v1725
        %v3295 = vunpack.c.l.b16 %v1726
        %v3296 = vunpack.c.h.b16 %v1726
        %v3297 = vunpack.c.l.b16 %v1727
        %v3298 = vunpack.c.h.b16 %v1727
        %v3299 = vunpack.c.l.b16 %v1728
        %v3300 = vunpack.c.h.b16 %v1728
        %v3301 = vunpack.c.l.b16 %v1729
        %v3302 = vunpack.c.h.b16 %v1729
        %v3303 = vunpack.c.l.b16 %v1730
        %v3304 = vunpack.c.h.b16 %v1730
        %v3305 = vunpack.c.l.b16 %v1731
        %v3306 = vunpack.c.h.b16 %v1731
        %v3307 = vunpack.c.l.b16 %v1732
        %v3308 = vunpack.c.h.b16 %v1732
        %v3309 = vunpack.c.l.b16 %v1733
        %v3310 = vunpack.c.h.b16 %v1733
        %v3311 = vunpack.c.l.b16 %v1734
        %v3312 = vunpack.c.h.b16 %v1734
        %v3313 = vunpack.c.l.b16 %v1735
        %v3314 = vunpack.c.h.b16 %v1735
        %v3315 = vunpack.c.l.b16 %v1736
        %v3316 = vunpack.c.h.b16 %v1736
        %v3317 = vunpack.c.l.b16 %v1737
        %v3318 = vunpack.c.h.b16 %v1737
        %v3319 = vunpack.c.l.b16 %v1738
        %v3320 = vunpack.c.h.b16 %v1738
        %v3321 = vunpack.c.l.b16 %v1739
        %v3322 = vunpack.c.h.b16 %v1739
        %v3323 = vunpack.c.l.b16 %v1740
        %v3324 = vunpack.c.h.b16 %v1740
        %v3325 = vunpack.c.l.b16 %v1741
        %v3326 = vunpack.c.h.b16 %v1741
        %v3327 = vunpack.c.l.b16 %v1742
        %v3328 = vunpack.c.h.b16 %v1742
        %v3329 = vunpack.c.l.b16 %v1743
        %v3330 = vunpack.c.h.b16 %v1743
        %v3331 = vunpack.c.l.b16 %v1744
        %v3332 = vunpack.c.h.b16 %v1744
        %v3333 = vunpack.c.l.b16 %v1745
        %v3334 = vunpack.c.h.b16 %v1745
        %v3335 = vunpack.c.l.b16 %v1746
        %v3336 = vunpack.c.h.b16 %v1746
        %v3337 = vunpack.c.l.b16 %v1747
        %v3338 = vunpack.c.h.b16 %v1747
        %v3339 = vunpack.c.l.b16 %v1748
        %v3340 = vunpack.c.h.b16 %v1748
        %v3341 = vunpack.c.l.b16 %v1749
        %v3342 = vunpack.c.h.b16 %v1749
        %v3343 = vunpack.c.l.b16 %v1750
        %v3344 = vunpack.c.h.b16 %v1750
        %v3345 = vunpack.c.l.b16 %v1751
        %v3346 = vunpack.c.h.b16 %v1751
        %v3347 = vunpack.c.l.b16 %v1752
        %v3348 = vunpack.c.h.b16 %v1752
        %v3349 = vunpack.c.l.b16 %v1753
        %v3350 = vunpack.c.h.b16 %v1753
        %v3351 = vunpack.c.l.b16 %v1754
        %v3352 = vunpack.c.h.b16 %v1754
        %v3353 = vunpack.c.l.b16 %v1755
        %v3354 = vunpack.c.h.b16 %v1755
        %v3355 = vunpack.c.l.b16 %v1756
        %v3356 = vunpack.c.h.b16 %v1756
        %v3357 = vunpack.c.l.b16 %v1757
        %v3358 = vunpack.c.h.b16 %v1757
        %v3359 = vunpack.c.l.b16 %v1758
        %v3360 = vunpack.c.h.b16 %v1758
        %v3361 = vunpack.c.l.b16 %v1759
        %v3362 = vunpack.c.h.b16 %v1759
        %v3363 = vunpack.c.l.b16 %v1760
        %v3364 = vunpack.c.h.b16 %v1760
        %v3365 = vunpack.c.l.b16 %v1761
        %v3366 = vunpack.c.h.b16 %v1761
        %v3367 = vunpack.c.l.b16 %v1762
        %v3368 = vunpack.c.h.b16 %v1762
        %v3369 = vunpack.c.l.b16 %v1763
        %v3370 = vunpack.c.h.b16 %v1763
        %v3371 = vunpack.c.l.b16 %v1764
        %v3372 = vunpack.c.h.b16 %v1764
        %v3373 = vunpack.c.l.b16 %v1765
        %v3374 = vunpack.c.h.b16 %v1765
        %v3375 = vunpack.c.l.b16 %v1766
        %v3376 = vunpack.c.h.b16 %v1766
        %v3377 = vunpack.c.l.b16 %v1767
        %v3378 = vunpack.c.h.b16 %v1767
        %v3379 = vunpack.c.l.b16 %v1768
        %v3380 = vunpack.c.h.b16 %v1768
        %v3381 = vunpack.c.l.b16 %v1769
        %v3382 = vunpack.c.h.b16 %v1769
        %v3383 = vunpack.c.l.b16 %v1770
        %v3384 = vunpack.c.h.b16 %v1770
        %v3385 = vunpack.c.l.b16 %v1771
        %v3386 = vunpack.c.h.b16 %v1771
        %v3387 = vunpack.c.l.b16 %v1772
        %v3388 = vunpack.c.h.b16 %v1772
        %v3389 = vunpack.c.l.b16 %v1773
        %v3390 = vunpack.c.h.b16 %v1773
        %v3391 = vunpack.c.l.b16 %v1774
        %v3392 = vunpack.c.h.b16 %v1774
        %v3393 = vunpack.c.l.b16 %v1775
        %v3394 = vunpack.c.h.b16 %v1775
        %v3395 = vunpack.c.l.b16 %v1776
        %v3396 = vunpack.c.h.b16 %v1776
        %v3397 = vunpack.c.l.b16 %v1777
        %v3398 = vunpack.c.h.b16 %v1777
        %v3399 = vunpack.c.l.b16 %v1778
        %v3400 = vunpack.c.h.b16 %v1778
        %v3401 = vunpack.c.l.b16 %v1779
        %v3402 = vunpack.c.h.b16 %v1779
        %v3403 = vunpack.c.l.b16 %v1780
        %v3404 = vunpack.c.h.b16 %v1780
        %v3405 = vunpack.c.l.b16 %v1781
        %v3406 = vunpack.c.h.b16 %v1781
        %v3407 = vunpack.c.l.b16 %v1782
        %v3408 = vunpack.c.h.b16 %v1782
        %v3409 = vunpack.c.l.b16 %v1783
        %v3410 = vunpack.c.h.b16 %v1783
        %v3411 = vunpack.c.l.b16 %v1784
        %v3412 = vunpack.c.h.b16 %v1784
        %v3413 = vunpack.c.l.b16 %v1785
        %v3414 = vunpack.c.h.b16 %v1785
        %v3415 = vunpack.c.l.b16 %v1786
        %v3416 = vunpack.c.h.b16 %v1786
        %v3417 = vunpack.c.l.b16 %v1787
        %v3418 = vunpack.c.h.b16 %v1787
        %v3419 = vunpack.c.l.b16 %v1788
        %v3420 = vunpack.c.h.b16 %v1788
        %v3421 = vunpack.c.l.b16 %v1789
        %v3422 = vunpack.c.h.b16 %v1789
        %v3423 = vunpack.c.l.b16 %v1790
        %v3424 = vunpack.c.h.b16 %v1790
        %v3425 = vunpack.c.l.b16 %v1791
        %v3426 = vunpack.c.h.b16 %v1791
        %v3427 = vunpack.c.l.b16 %v1792
        %v3428 = vunpack.c.h.b16 %v1792
        %v3429 = vunpack.c.l.b16 %v1793
        %v3430 = vunpack.c.h.b16 %v1793
        %v3431 = vunpack.c.l.b16 %v1794
        %v3432 = vunpack.c.h.b16 %v1794
        %v3433 = vunpack.c.l.b16 %v1795
        %v3434 = vunpack.c.h.b16 %v1795
        %v3435 = vunpack.c.l.b16 %v1796
        %v3436 = vunpack.c.h.b16 %v1796
        %v3437 = vunpack.c.l.b16 %v1797
        %v3438 = vunpack.c.h.b16 %v1797
        %v3439 = vunpack.c.l.b16 %v1798
        %v3440 = vunpack.c.h.b16 %v1798
        %v3441 = vunpack.c.l.b16 %v1799
        %v3442 = vunpack.c.h.b16 %v1799
        %v3443 = vunpack.c.l.b16 %v1800
        %v3444 = vunpack.c.h.b16 %v1800
        %v3445 = vunpack.c.l.b16 %v1801
        %v3446 = vunpack.c.h.b16 %v1801
        %v3447 = vunpack.c.l.b16 %v1802
        %v3448 = vunpack.c.h.b16 %v1802
        %v3449 = vunpack.c.l.b16 %v1803
        %v3450 = vunpack.c.h.b16 %v1803
        %v3451 = vunpack.c.l.b16 %v1804
        %v3452 = vunpack.c.h.b16 %v1804
        %v3453 = vunpack.c.l.b16 %v1805
        %v3454 = vunpack.c.h.b16 %v1805
        %v3455 = vunpack.c.l.b16 %v1806
        %v3456 = vunpack.c.h.b16 %v1806
        %v3457 = vunpack.c.l.b16 %v1807
        %v3458 = vunpack.c.h.b16 %v1807
        %v3459 = vunpack.c.l.b16 %v1808
        %v3460 = vunpack.c.h.b16 %v1808
        %v3461 = vunpack.c.l.b16 %v1809
        %v3462 = vunpack.c.h.b16 %v1809
        %v3463 = vunpack.c.l.b16 %v1810
        %v3464 = vunpack.c.h.b16 %v1810
        %v3465 = vunpack.c.l.b16 %v1811
        %v3466 = vunpack.c.h.b16 %v1811
        %v3467 = vunpack.c.l.b16 %v1812
        %v3468 = vunpack.c.h.b16 %v1812
        %v3469 = vunpack.c.l.b16 %v1813
        %v3470 = vunpack.c.h.b16 %v1813
        %v3471 = vunpack.c.l.b16 %v1814
        %v3472 = vunpack.c.h.b16 %v1814
        %v3473 = vunpack.c.l.b16 %v1815
        %v3474 = vunpack.c.h.b16 %v1815
        %v3475 = vunpack.c.l.b16 %v1816
        %v3476 = vunpack.c.h.b16 %v1816
        %v3477 = vunpack.c.l.b16 %v1817
        %v3478 = vunpack.c.h.b16 %v1817
        %v3479 = vunpack.c.l.b16 %v1818
        %v3480 = vunpack.c.h.b16 %v1818
        %v3481 = vunpack.c.l.b16 %v1819
        %v3482 = vunpack.c.h.b16 %v1819
        %v3483 = vunpack.c.l.b16 %v1820
        %v3484 = vunpack.c.h.b16 %v1820
        %v3485 = vunpack.c.l.b16 %v1821
        %v3486 = vunpack.c.h.b16 %v1821
        %v3487 = vunpack.c.l.b16 %v1822
        %v3488 = vunpack.c.h.b16 %v1822
        %v3489 = vunpack.c.l.b16 %v1823
        %v3490 = vunpack.c.h.b16 %v1823
        %v3491 = vunpack.c.l.b16 %v1824
        %v3492 = vunpack.c.h.b16 %v1824
        %v3493 = vunpack.c.l.b16 %v1825
        %v3494 = vunpack.c.h.b16 %v1825
        %v3495 = vunpack.c.l.b16 %v1826
        %v3496 = vunpack.c.h.b16 %v1826
        %v3497 = vunpack.c.l.b16 %v1827
        %v3498 = vunpack.c.h.b16 %v1827
        %v3499 = vunpack.c.l.b16 %v1828
        %v3500 = vunpack.c.h.b16 %v1828
        %v3501 = vunpack.c.l.b16 %v1829
        %v3502 = vunpack.c.h.b16 %v1829
        %v3503 = vunpack.c.l.b16 %v1830
        %v3504 = vunpack.c.h.b16 %v1830
        %v3505 = vunpack.c.l.b16 %v1831
        %v3506 = vunpack.c.h.b16 %v1831
        %v3507 = vunpack.c.l.b16 %v1832
        %v3508 = vunpack.c.h.b16 %v1832
        %v3509 = vunpack.c.l.b16 %v1833
        %v3510 = vunpack.c.h.b16 %v1833
        %v3511 = vunpack.c.l.b16 %v1834
        %v3512 = vunpack.c.h.b16 %v1834
        %v3513 = vunpack.c.l.b16 %v1835
        %v3514 = vunpack.c.h.b16 %v1835
        %v3515 = vunpack.c.l.b16 %v1836
        %v3516 = vunpack.c.h.b16 %v1836
        %v3517 = vunpack.c.l.b16 %v1837
        %v3518 = vunpack.c.h.b16 %v1837
        %v3519 = vunpack.c.l.b16 %v1838
        %v3520 = vunpack.c.h.b16 %v1838
        %v3521 = vunpack.c.l.b16 %v1839
        %v3522 = vunpack.c.h.b16 %v1839
        %v3523 = vunpack.c.l.b16 %v1840
        %v3524 = vunpack.c.h.b16 %v1840
        %v3525 = vunpack.c.l.b16 %v1841
        %v3526 = vunpack.c.h.b16 %v1841
        %v3527 = vunpack.c.l.b16 %v1842
        %v3528 = vunpack.c.h.b16 %v1842
        %v3529 = vunpack.c.l.b16 %v1843
        %v3530 = vunpack.c.h.b16 %v1843
        %v3531 = vunpack.c.l.b16 %v1844
        %v3532 = vunpack.c.h.b16 %v1844
        %v3533 = vunpack.c.l.b16 %v1845
        %v3534 = vunpack.c.h.b16 %v1845
        %v3535 = vunpack.c.l.b16 %v1846
        %v3536 = vunpack.c.h.b16 %v1846
        %v3537 = vunpack.c.l.b16 %v1847
        %v3538 = vunpack.c.h.b16 %v1847
        %v3539 = vunpack.c.l.b16 %v1848
        %v3540 = vunpack.c.h.b16 %v1848
        %v3541 = vunpack.c.l.b16 %v1849
        %v3542 = vunpack.c.h.b16 %v1849
        %v3543 = vunpack.c.l.b16 %v1850
        %v3544 = vunpack.c.h.b16 %v1850
        %v3545 = vunpack.c.l.b16 %v1851
        %v3546 = vunpack.c.h.b16 %v1851
        %v3547 = vunpack.c.l.b16 %v1852
        %v3548 = vunpack.c.h.b16 %v1852
        %v3549 = vunpack.c.l.b16 %v1853
        %v3550 = vunpack.c.h.b16 %v1853
        %v3551 = vunpack.c.l.b16 %v1854
        %v3552 = vunpack.c.h.b16 %v1854
        %v3553 = vunpack.c.l.b16 %v1855
        %v3554 = vunpack.c.h.b16 %v1855
        %v3555 = vunpack.c.l.b16 %v1856
        %v3556 = vunpack.c.h.b16 %v1856
        %v3557 = vunpack.c.l.b16 %v1857
        %v3558 = vunpack.c.h.b16 %v1857
        %v3559 = vunpack.c.l.b16 %v1858
        %v3560 = vunpack.c.h.b16 %v1858
        %v3561 = vunpack.c.l.b16 %v1859
        %v3562 = vunpack.c.h.b16 %v1859
        %v3563 = vunpack.c.l.b16 %v1860
        %v3564 = vunpack.c.h.b16 %v1860
        %v3565 = vunpack.c.l.b16 %v1861
        %v3566 = vunpack.c.h.b16 %v1861
        %v3567 = vunpack.c.l.b16 %v1862
        %v3568 = vunpack.c.h.b16 %v1862
        %v3569 = vunpack.c.l.b16 %v1863
        %v3570 = vunpack.c.h.b16 %v1863
        %v3571 = vunpack.c.l.b16 %v1864
        %v3572 = vunpack.c.h.b16 %v1864
        %v3573 = vunpack.c.l.b16 %v1865
        %v3574 = vunpack.c.h.b16 %v1865
        %v3575 = vunpack.c.l.b16 %v1866
        %v3576 = vunpack.c.h.b16 %v1866
        %v3577 = vunpack.c.l.b16 %v1867
        %v3578 = vunpack.c.h.b16 %v1867
        %v3579 = vunpack.c.l.b16 %v1868
        %v3580 = vunpack.c.h.b16 %v1868
        %v3581 = vunpack.c.l.b16 %v1869
        %v3582 = vunpack.c.h.b16 %v1869
        %v3583 = vunpack.c.l.b16 %v1870
        %v3584 = vunpack.c.h.b16 %v1870
        %v3585 = vunpack.c.l.b16 %v1871
        %v3586 = vunpack.c.h.b16 %v1871
        %v3587 = vunpack.c.l.b16 %v1872
        %v3588 = vunpack.c.h.b16 %v1872
        %v3589 = vunpack.c.l.b16 %v1873
        %v3590 = vunpack.c.h.b16 %v1873
        %v3591 = vunpack.c.l.b16 %v1874
        %v3592 = vunpack.c.h.b16 %v1874
        %v3593 = vunpack.c.l.b16 %v1875
        %v3594 = vunpack.c.h.b16 %v1875
        %v3595 = vunpack.c.l.b16 %v1876
        %v3596 = vunpack.c.h.b16 %v1876
        %v3597 = vunpack.c.l.b16 %v1877
        %v3598 = vunpack.c.h.b16 %v1877
        %v3599 = vunpack.c.l.b16 %v1878
        %v3600 = vunpack.c.h.b16 %v1878
        %v3601 = vunpack.c.l.b16 %v1879
        %v3602 = vunpack.c.h.b16 %v1879
        %v3603 = vunpack.c.l.b16 %v1880
        %v3604 = vunpack.c.h.b16 %v1880
        %v3605 = vunpack.c.l.b16 %v1881
        %v3606 = vunpack.c.h.b16 %v1881
        %v3607 = vunpack.c.l.b16 %v1882
        %v3608 = vunpack.c.h.b16 %v1882
        %v3609 = vunpack.c.l.b16 %v1883
        %v3610 = vunpack.c.h.b16 %v1883
        %v3611 = vunpack.c.l.b16 %v1884
        %v3612 = vunpack.c.h.b16 %v1884
        %v3613 = vunpack.c.l.b16 %v1885
        %v3614 = vunpack.c.h.b16 %v1885
        %v3615 = vunpack.c.l.b16 %v1886
        %v3616 = vunpack.c.h.b16 %v1886
        %v3617 = vunpack.c.l.b16 %v1887
        %v3618 = vunpack.c.h.b16 %v1887
        %v3619 = vunpack.c.l.b16 %v1888
        %v3620 = vunpack.c.h.b16 %v1888
        %v3621 = vunpack.c.l.b16 %v1889
        %v3622 = vunpack.c.h.b16 %v1889
        %v3623 = vunpack.c.l.b16 %v1890
        %v3624 = vunpack.c.h.b16 %v1890
        %v3625 = vunpack.c.l.b16 %v1891
        %v3626 = vunpack.c.h.b16 %v1891
        %v3627 = vunpack.c.l.b16 %v1892
        %v3628 = vunpack.c.h.b16 %v1892
        %v3629 = vunpack.c.l.b16 %v1893
        %v3630 = vunpack.c.h.b16 %v1893
        %v3631 = vunpack.c.l.b16 %v1894
        %v3632 = vunpack.c.h.b16 %v1894
        %v3633 = vunpack.c.l.b16 %v1895
        %v3634 = vunpack.c.h.b16 %v1895
        %v3635 = vunpack.c.l.b16 %v1896
        %v3636 = vunpack.c.h.b16 %v1896
        %v3637 = vunpack.c.l.b16 %v1897
        %v3638 = vunpack.c.h.b16 %v1897
        %v3639 = vunpack.c.l.b16 %v1898
        %v3640 = vunpack.c.h.b16 %v1898
        %v3641 = vunpack.c.l.b16 %v1899
        %v3642 = vunpack.c.h.b16 %v1899
        %v3643 = vunpack.c.l.b16 %v1900
        %v3644 = vunpack.c.h.b16 %v1900
        %v3645 = vunpack.c.l.b16 %v1901
        %v3646 = vunpack.c.h.b16 %v1901
        %v3647 = vunpack.c.l.b16 %v1902
        %v3648 = vunpack.c.h.b16 %v1902
        %v3649 = vunpack.c.l.b16 %v1903
        %v3650 = vunpack.c.h.b16 %v1903
        %v3651 = vunpack.c.l.b16 %v1904
        %v3652 = vunpack.c.h.b16 %v1904
        %v3653 = vunpack.c.l.b16 %v1905
        %v3654 = vunpack.c.h.b16 %v1905
        %v3655 = vunpack.c.l.b16 %v1906
        %v3656 = vunpack.c.h.b16 %v1906
        %v3657 = vunpack.c.l.b16 %v1907
        %v3658 = vunpack.c.h.b16 %v1907
        %v3659 = vunpack.c.l.b16 %v1908
        %v3660 = vunpack.c.h.b16 %v1908
        %v3661 = vunpack.c.l.b16 %v1909
        %v3662 = vunpack.c.h.b16 %v1909
        %v3663 = vunpack.c.l.b16 %v1910
        %v3664 = vunpack.c.h.b16 %v1910
        %v3665 = vunpack.c.l.b16 %v1911
        %v3666 = vunpack.c.h.b16 %v1911
        %v3667 = vunpack.c.l.b16 %v1912
        %v3668 = vunpack.c.h.b16 %v1912
        %v3669 = vunpack.c.l.b16 %v1913
        %v3670 = vunpack.c.h.b16 %v1913
        %v3671 = vunpack.c.l.b16 %v1914
        %v3672 = vunpack.c.h.b16 %v1914
        %v3673 = vunpack.c.l.b16 %v1915
        %v3674 = vunpack.c.h.b16 %v1915
        %v3675 = vunpack.c.l.b16 %v1916
        %v3676 = vunpack.c.h.b16 %v1916
        %v3677 = vunpack.c.l.b16 %v1917
        %v3678 = vunpack.c.h.b16 %v1917
        %v3679 = vunpack.c.l.b16 %v1918
        %v3680 = vunpack.c.h.b16 %v1918
        %v3681 = vunpack.c.l.b16 %v1919
        %v3682 = vunpack.c.h.b16 %v1919
        %v3683 = vunpack.c.l.b16 %v1920
        %v3684 = vunpack.c.h.b16 %v1920
        %v3685 = vunpack.c.l.b16 %v1921
        %v3686 = vunpack.c.h.b16 %v1921
        %v3687 = vunpack.c.l.b16 %v1922
        %v3688 = vunpack.c.h.b16 %v1922
        %v3689 = vunpack.c.l.b16 %v1923
        %v3690 = vunpack.c.h.b16 %v1923
        %v3691 = vunpack.c.l.b16 %v1924
        %v3692 = vunpack.c.h.b16 %v1924
        %v3693 = vunpack.c.l.b16 %v1925
        %v3694 = vunpack.c.h.b16 %v1925
        %v3695 = vunpack.c.l.b16 %v1926
        %v3696 = vunpack.c.h.b16 %v1926
        %v3697 = vunpack.c.l.b16 %v1927
        %v3698 = vunpack.c.h.b16 %v1927
        %v3699 = vunpack.c.l.b16 %v1928
        %v3700 = vunpack.c.h.b16 %v1928
        %v3701 = vunpack.c.l.b16 %v1929
        %v3702 = vunpack.c.h.b16 %v1929
        %v3703 = vunpack.c.l.b16 %v1930
        %v3704 = vunpack.c.h.b16 %v1930
        %v3705 = vunpack.c.l.b16 %v1931
        %v3706 = vunpack.c.h.b16 %v1931
        %v3707 = vunpack.c.l.b16 %v1932
        %v3708 = vunpack.c.h.b16 %v1932
        %v3709 = vunpack.c.l.b16 %v1933
        %v3710 = vunpack.c.h.b16 %v1933
        %v3711 = vunpack.c.l.b16 %v1934
        %v3712 = vunpack.c.h.b16 %v1934
        %v3713 = vunpack.c.l.b16 %v1935
        %v3714 = vunpack.c.h.b16 %v1935
        %v3715 = vunpack.c.l.b16 %v1936
        %v3716 = vunpack.c.h.b16 %v1936
        %v3717 = vunpack.c.l.b16 %v1937
        %v3718 = vunpack.c.h.b16 %v1937
        %v3719 = vunpack.c.l.b16 %v1938
        %v3720 = vunpack.c.h.b16 %v1938
        %v3721 = vunpack.c.l.b16 %v1939
        %v3722 = vunpack.c.h.b16 %v1939
        %v3723 = vunpack.c.l.b16 %v1940
        %v3724 = vunpack.c.h.b16 %v1940
        %v3725 = vunpack.c.l.b16 %v1941
        %v3726 = vunpack.c.h.b16 %v1941
        %v3727 = vunpack.c.l.b16 %v1942
        %v3728 = vunpack.c.h.b16 %v1942
        %v3729 = vunpack.c.l.b16 %v1943
        %v3730 = vunpack.c.h.b16 %v1943
        %v3731 = vunpack.c.l.b16 %v1944
        %v3732 = vunpack.c.h.b16 %v1944
        %v3733 = vunpack.c.l.b16 %v1945
        %v3734 = vunpack.c.h.b16 %v1945
        %v3735 = vunpack.c.l.b16 %v1946
        %v3736 = vunpack.c.h.b16 %v1946
        %v3737 = vunpack.c.l.b16 %v1947
        %v3738 = vunpack.c.h.b16 %v1947
        %v3739 = vunpack.c.l.b16 %v1948
        %v3740 = vunpack.c.h.b16 %v1948
        %v3741 = vunpack.c.l.b16 %v1949
        %v3742 = vunpack.c.h.b16 %v1949
        %v3743 = vunpack.c.l.b16 %v1950
        %v3744 = vunpack.c.h.b16 %v1950
        %v3745 = vunpack.c.l.b16 %v1951
        %v3746 = vunpack.c.h.b16 %v1951
        %v3747 = vunpack.c.l.b16 %v1952
        %v3748 = vunpack.c.h.b16 %v1952
        %v3749 = vunpack.c.l.b16 %v1953
        %v3750 = vunpack.c.h.b16 %v1953
        %v3751 = vunpack.c.l.b16 %v1954
        %v3752 = vunpack.c.h.b16 %v1954
        %v3753 = vunpack.c.l.b16 %v1955
        %v3754 = vunpack.c.h.b16 %v1955
        %v3755 = vunpack.c.l.b16 %v1956
        %v3756 = vunpack.c.h.b16 %v1956
        %v3757 = vunpack.c.l.b16 %v1957
        %v3758 = vunpack.c.h.b16 %v1957
        %v3759 = vunpack.c.l.b16 %v1958
        %v3760 = vunpack.c.h.b16 %v1958
        %v3761 = vunpack.c.l.b16 %v1959
        %v3762 = vunpack.c.h.b16 %v1959
        %v3763 = vunpack.c.l.b16 %v1960
        %v3764 = vunpack.c.h.b16 %v1960
        %v3765 = vunpack.c.l.b16 %v1961
        %v3766 = vunpack.c.h.b16 %v1961
        %v3767 = vunpack.c.l.b16 %v1962
        %v3768 = vunpack.c.h.b16 %v1962
        %v3769 = vunpack.c.l.b16 %v1963
        %v3770 = vunpack.c.h.b16 %v1963
        %v3771 = vunpack.c.l.b16 %v1964
        %v3772 = vunpack.c.h.b16 %v1964
        %v3773 = vunpack.c.l.b16 %v1965
        %v3774 = vunpack.c.h.b16 %v1965
        %v3775 = vunpack.c.l.b16 %v1966
        %v3776 = vunpack.c.h.b16 %v1966
        %v3777 = vunpack.c.l.b16 %v1967
        %v3778 = vunpack.c.h.b16 %v1967
        %v3779 = vunpack.c.l.b16 %v1968
        %v3780 = vunpack.c.h.b16 %v1968
        %v3781 = vunpack.c.l.b16 %v1969
        %v3782 = vunpack.c.h.b16 %v1969
        %v3783 = vunpack.c.l.b16 %v1970
        %v3784 = vunpack.c.h.b16 %v1970
        %v3785 = vunpack.c.l.b16 %v1971
        %v3786 = vunpack.c.h.b16 %v1971
        %v3787 = vunpack.c.l.b16 %v1972
        %v3788 = vunpack.c.h.b16 %v1972
        %v3789 = vunpack.c.l.b16 %v1973
        %v3790 = vunpack.c.h.b16 %v1973
        %v3791 = vunpack.c.l.b16 %v1974
        %v3792 = vunpack.c.h.b16 %v1974
        %v3793 = vunpack.c.l.b16 %v1975
        %v3794 = vunpack.c.h.b16 %v1975
        %v3795 = vunpack.c.l.b16 %v1976
        %v3796 = vunpack.c.h.b16 %v1976
        %v3797 = vunpack.c.l.b16 %v1977
        %v3798 = vunpack.c.h.b16 %v1977
        %v3799 = vunpack.c.l.b16 %v1978
        %v3800 = vunpack.c.h.b16 %v1978
        %v3801 = vunpack.c.l.b16 %v1979
        %v3802 = vunpack.c.h.b16 %v1979
        %v3803 = vunpack.c.l.b16 %v1980
        %v3804 = vunpack.c.h.b16 %v1980
        %v3805 = vunpack.c.l.b16 %v1981
        %v3806 = vunpack.c.h.b16 %v1981
        %v3807 = vunpack.c.l.b16 %v1982
        %v3808 = vunpack.c.h.b16 %v1982
        %v3809 = vunpack.c.l.b16 %v1983
        %v3810 = vunpack.c.h.b16 %v1983
        %v3811 = vunpack.c.l.b16 %v1984
        %v3812 = vunpack.c.h.b16 %v1984
        %v3813 = vunpack.c.l.b16 %v1985
        %v3814 = vunpack.c.h.b16 %v1985
        %v3815 = vunpack.c.l.b16 %v1986
        %v3816 = vunpack.c.h.b16 %v1986
        %v3817 = vunpack.c.l.b16 %v1987
        %v3818 = vunpack.c.h.b16 %v1987
        %v3819 = vunpack.c.l.b16 %v1988
        %v3820 = vunpack.c.h.b16 %v1988
        %v3821 = vunpack.c.l.b16 %v1989
        %v3822 = vunpack.c.h.b16 %v1989
        %v3823 = vunpack.c.l.b16 %v1990
        %v3824 = vunpack.c.h.b16 %v1990
        %v3825 = vunpack.c.l.b16 %v1991
        %v3826 = vunpack.c.h.b16 %v1991
        %v3827 = vunpack.c.l.b16 %v1992
        %v3828 = vunpack.c.h.b16 %v1992
        %v3829 = vunpack.c.l.b16 %v1993
        %v3830 = vunpack.c.h.b16 %v1993
        %v3831 = vunpack.c.l.b16 %v1994
        %v3832 = vunpack.c.h.b16 %v1994
        %v3833 = vunpack.c.l.b16 %v1995
        %v3834 = vunpack.c.h.b16 %v1995
        %v3835 = vunpack.c.l.b16 %v1996
        %v3836 = vunpack.c.h.b16 %v1996
        %v3837 = vunpack.c.l.b16 %v1997
        %v3838 = vunpack.c.h.b16 %v1997
        %v3839 = vunpack.c.l.b16 %v1998
        %v3840 = vunpack.c.h.b16 %v1998
        %v3841 = vunpack.c.l.b16 %v1999
        %v3842 = vunpack.c.h.b16 %v1999
        %v3843 = vunpack.c.l.b16 %v2000
        %v3844 = vunpack.c.h.b16 %v2000
        %v3845 = vunpack.c.l.b16 %v2001
        %v3846 = vunpack.c.h.b16 %v2001
        %v3847 = vunpack.c.l.b16 %v2002
        %v3848 = vunpack.c.h.b16 %v2002
        %v3849 = vunpack.c.l.b16 %v2003
        %v3850 = vunpack.c.h.b16 %v2003
        %v3851 = vunpack.c.l.b16 %v2004
        %v3852 = vunpack.c.h.b16 %v2004
        %v3853 = vunpack.c.l.b16 %v2005
        %v3854 = vunpack.c.h.b16 %v2005
        %v3855 = vunpack.c.l.b16 %v2006
        %v3856 = vunpack.c.h.b16 %v2006
        %v3857 = vunpack.c.l.b16 %v2007
        %v3858 = vunpack.c.h.b16 %v2007
        %v3859 = vunpack.c.l.b16 %v2008
        %v3860 = vunpack.c.h.b16 %v2008
        %v3861 = vunpack.c.l.b16 %v2009
        %v3862 = vunpack.c.h.b16 %v2009
        %v3863 = vunpack.c.l.b16 %v2010
        %v3864 = vunpack.c.h.b16 %v2010
        %v3865 = vunpack.c.l.b16 %v2011
        %v3866 = vunpack.c.h.b16 %v2011
        %v3867 = vunpack.c.l.b16 %v2012
        %v3868 = vunpack.c.h.b16 %v2012
        %v3869 = vunpack.c.l.b16 %v2013
        %v3870 = vunpack.c.h.b16 %v2013
        %v3871 = vunpack.c.l.b16 %v2014
        %v3872 = vunpack.c.h.b16 %v2014
        %v3873 = vunpack.c.l.b16 %v2015
        %v3874 = vunpack.c.h.b16 %v2015
        %v3875 = vunpack.c.l.b16 %v2016
        %v3876 = vunpack.c.h.b16 %v2016
        %v3877 = vunpack.c.l.b16 %v2017
        %v3878 = vunpack.c.h.b16 %v2017
        %v3879 = vunpack.c.l.b16 %v2018
        %v3880 = vunpack.c.h.b16 %v2018
        %v3881 = vunpack.c.l.b16 %v2019
        %v3882 = vunpack.c.h.b16 %v2019
        %v3883 = vunpack.c.l.b16 %v2020
        %v3884 = vunpack.c.h.b16 %v2020
        %v3885 = vunpack.c.l.b16 %v2021
        %v3886 = vunpack.c.h.b16 %v2021
        %v3887 = vunpack.c.l.b16 %v2022
        %v3888 = vunpack.c.h.b16 %v2022
        %v3889 = vunpack.c.l.b16 %v2023
        %v3890 = vunpack.c.h.b16 %v2023
        %v3891 = vunpack.c.l.b16 %v2024
        %v3892 = vunpack.c.h.b16 %v2024
        %v3893 = vunpack.c.l.b16 %v2025
        %v3894 = vunpack.c.h.b16 %v2025
        %v3895 = vunpack.c.l.b16 %v2026
        %v3896 = vunpack.c.h.b16 %v2026
        %v3897 = vunpack.c.l.b16 %v2027
        %v3898 = vunpack.c.h.b16 %v2027
        %v3899 = vunpack.c.l.b16 %v2028
        %v3900 = vunpack.c.h.b16 %v2028
        %v3901 = vunpack.c.l.b16 %v2029
        %v3902 = vunpack.c.h.b16 %v2029
        %v3903 = vunpack.c.l.b16 %v2030
        %v3904 = vunpack.c.h.b16 %v2030
        %v3905 = vunpack.c.l.b16 %v2031
        %v3906 = vunpack.c.h.b16 %v2031
        %v3907 = vunpack.c.l.b16 %v2032
        %v3908 = vunpack.c.h.b16 %v2032
        %v3909 = vunpack.c.l.b16 %v2033
        %v3910 = vunpack.c.h.b16 %v2033
        %v3911 = vunpack.c.l.b16 %v2034
        %v3912 = vunpack.c.h.b16 %v2034
        %v3913 = vunpack.c.l.b16 %v2035
        %v3914 = vunpack.c.h.b16 %v2035
        %v3915 = vunpack.c.l.b16 %v2036
        %v3916 = vunpack.c.h.b16 %v2036
        %v3917 = vunpack.c.l.b16 %v2037
        %v3918 = vunpack.c.h.b16 %v2037
        %v3919 = vunpack.c.l.b16 %v2038
        %v3920 = vunpack.c.h.b16 %v2038
        %v3921 = vunpack.c.l.b16 %v2039
        %v3922 = vunpack.c.h.b16 %v2039
        %v3923 = vunpack.c.l.b16 %v2040
        %v3924 = vunpack.c.h.b16 %v2040
        %v3925 = vunpack.c.l.b16 %v2041
        %v3926 = vunpack.c.h.b16 %v2041
        %v3927 = vunpack.c.l.b16 %v2042
        %v3928 = vunpack.c.h.b16 %v2042
        %v3929 = vunpack.c.l.b16 %v2043
        %v3930 = vunpack.c.h.b16 %v2043
        %v3931 = vunpack.c.l.b16 %v2044
        %v3932 = vunpack.c.h.b16 %v2044
        %v3933 = vunpack.c.l.b16 %v2045
        %v3934 = vunpack.c.h.b16 %v2045
        %v3935 = vunpack.c.l.b16 %v2046
        %v3936 = vunpack.c.h.b16 %v2046
        %v3937 = vunpack.c.l.b16 %v2047
        %v3938 = vunpack.c.h.b16 %v2047
        %v3939 = vpack.c.b16 %v2791, %v2787
        %v3940 = vpack.c.b16 %v2792, %v2788
        %v3941 = vpack.c.b16 %v2793, %v2789
        %v3942 = vpack.c.b16 %v2794, %v2790
        %v3943 = vpack.c.b16 %v2799, %v2795
        %v3944 = vpack.c.b16 %v2800, %v2796
        %v3945 = vpack.c.b16 %v2801, %v2797
        %v3946 = vpack.c.b16 %v2802, %v2798
        %v3947 = vpack.c.b16 %v2807, %v2803
        %v3948 = vpack.c.b16 %v2808, %v2804
        %v3949 = vpack.c.b16 %v2809, %v2805
        %v3950 = vpack.c.b16 %v2810, %v2806
        %v3951 = vpack.c.b16 %v2815, %v2811
        %v3952 = vpack.c.b16 %v2816, %v2812
        %v3953 = vpack.c.b16 %v2817, %v2813
        %v3954 = vpack.c.b16 %v2818, %v2814
        %v3955 = vpack.c.b16 %v2823, %v2819
        %v3956 = vpack.c.b16 %v2824, %v2820
        %v3957 = vpack.c.b16 %v2825, %v2821
        %v3958 = vpack.c.b16 %v2826, %v2822
        %v3959 = vpack.c.b16 %v2831, %v2827
        %v3960 = vpack.c.b16 %v2832, %v2828
        %v3961 = vpack.c.b16 %v2833, %v2829
        %v3962 = vpack.c.b16 %v2834, %v2830
        %v3963 = vpack.c.b16 %v2839, %v2835
        %v3964 = vpack.c.b16 %v2840, %v2836
        %v3965 = vpack.c.b16 %v2841, %v2837
        %v3966 = vpack.c.b16 %v2842, %v2838
        %v3967 = vpack.c.b16 %v2847, %v2843
        %v3968 = vpack.c.b16 %v2848, %v2844
        %v3969 = vpack.c.b16 %v2849, %v2845
        %v3970 = vpack.c.b16 %v2850, %v2846
        %v3971 = vpack.c.b16 %v2855, %v2851
        %v3972 = vpack.c.b16 %v2856, %v2852
        %v3973 = vpack.c.b16 %v2857, %v2853
        %v3974 = vpack.c.b16 %v2858, %v2854
        %v3975 = vpack.c.b16 %v2863, %v2859
        %v3976 = vpack.c.b16 %v2864, %v2860
        %v3977 = vpack.c.b16 %v2865, %v2861
        %v3978 = vpack.c.b16 %v2866, %v2862
        %v3979 = vpack.c.b16 %v2871, %v2867
        %v3980 = vpack.c.b16 %v2872, %v2868
        %v3981 = vpack.c.b16 %v2873, %v2869
        %v3982 = vpack.c.b16 %v2874, %v2870
        %v3983 = vpack.c.b16 %v2879, %v2875
        %v3984 = vpack.c.b16 %v2880, %v2876
        %v3985 = vpack.c.b16 %v2881, %v2877
        %v3986 = vpack.c.b16 %v2882, %v2878
        %v3987 = vpack.c.b16 %v2887, %v2883
        %v3988 = vpack.c.b16 %v2888, %v2884
        %v3989 = vpack.c.b16 %v2889, %v2885
        %v3990 = vpack.c.b16 %v2890, %v2886
        %v3991 = vpack.c.b16 %v2895, %v2891
        %v3992 = vpack.c.b16 %v2896, %v2892
        %v3993 = vpack.c.b16 %v2897, %v2893
        %v3994 = vpack.c.b16 %v2898, %v2894
        %v3995 = vpack.c.b16 %v2903, %v2899
        %v3996 = vpack.c.b16 %v2904, %v2900
        %v3997 = vpack.c.b16 %v2905, %v2901
        %v3998 = vpack.c.b16 %v2906, %v2902
        %v3999 = vpack.c.b16 %v2911, %v2907
        %v4000 = vpack.c.b16 %v2912, %v2908
        %v4001 = vpack.c.b16 %v2913, %v2909
        %v4002 = vpack.c.b16 %v2914, %v2910
        %v4003 = vpack.c.b16 %v2919, %v2915
        %v4004 = vpack.c.b16 %v2920, %v2916
        %v4005 = vpack.c.b16 %v2921, %v2917
        %v4006 = vpack.c.b16 %v2922, %v2918
        %v4007 = vpack.c.b16 %v2927, %v2923
        %v4008 = vpack.c.b16 %v2928, %v2924
        %v4009 = vpack.c.b16 %v2929, %v2925
        %v4010 = vpack.c.b16 %v2930, %v2926
        %v4011 = vpack.c.b16 %v2935, %v2931
        %v4012 = vpack.c.b16 %v2936, %v2932
        %v4013 = vpack.c.b16 %v2937, %v2933
        %v4014 = vpack.c.b16 %v2938, %v2934
        %v4015 = vpack.c.b16 %v2943, %v2939
        %v4016 = vpack.c.b16 %v2944, %v2940
        %v4017 = vpack.c.b16 %v2945, %v2941
        %v4018 = vpack.c.b16 %v2946, %v2942
        %v4019 = vpack.c.b16 %v2951, %v2947
        %v4020 = vpack.c.b16 %v2952, %v2948
        %v4021 = vpack.c.b16 %v2953, %v2949
        %v4022 = vpack.c.b16 %v2954, %v2950
        %v4023 = vpack.c.b16 %v2959, %v2955
        %v4024 = vpack.c.b16 %v2960, %v2956
        %v4025 = vpack.c.b16 %v2961, %v2957
        %v4026 = vpack.c.b16 %v2962, %v2958
        %v4027 = vpack.c.b16 %v2967, %v2963
        %v4028 = vpack.c.b16 %v2968, %v2964
        %v4029 = vpack.c.b16 %v2969, %v2965
        %v4030 = vpack.c.b16 %v2970, %v2966
        %v4031 = vpack.c.b16 %v2975, %v2971
        %v4032 = vpack.c.b16 %v2976, %v2972
        %v4033 = vpack.c.b16 %v2977, %v2973
        %v4034 = vpack.c.b16 %v2978, %v2974
        %v4035 = vpack.c.b16 %v2983, %v2979
        %v4036 = vpack.c.b16 %v2984, %v2980
        %v4037 = vpack.c.b16 %v2985, %v2981
        %v4038 = vpack.c.b16 %v2986, %v2982
        %v4039 = vpack.c.b16 %v2991, %v2987
        %v4040 = vpack.c.b16 %v2992, %v2988
        %v4041 = vpack.c.b16 %v2993, %v2989
        %v4042 = vpack.c.b16 %v2994, %v2990
        %v4043 = vpack.c.b16 %v2999, %v2995
        %v4044 = vpack.c.b16 %v3000, %v2996
        %v4045 = vpack.c.b16 %v3001, %v2997
        %v4046 = vpack.c.b16 %v3002, %v2998
        %v4047 = vpack.c.b16 %v3007, %v3003
        %v4048 = vpack.c.b16 %v3008, %v3004
        %v4049 = vpack.c.b16 %v3009, %v3005
        %v4050 = vpack.c.b16 %v3010, %v3006
        %v4051 = vpack.c.b16 %v3015, %v3011
        %v4052 = vpack.c.b16 %v3016, %v3012
        %v4053 = vpack.c.b16 %v3017, %v3013
        %v4054 = vpack.c.b16 %v3018, %v3014
        %v4055 = vpack.c.b16 %v3023, %v3019
        %v4056 = vpack.c.b16 %v3024, %v3020
        %v4057 = vpack.c.b16 %v3025, %v3021
        %v4058 = vpack.c.b16 %v3026, %v3022
        %v4059 = vpack.c.b16 %v3031, %v3027
        %v4060 = vpack.c.b16 %v3032, %v3028
        %v4061 = vpack.c.b16 %v3033, %v3029
        %v4062 = vpack.c.b16 %v3034, %v3030
        %v4063 = vpack.c.b16 %v3039, %v3035
        %v4064 = vpack.c.b16 %v3040, %v3036
        %v4065 = vpack.c.b16 %v3041, %v3037
        %v4066 = vpack.c.b16 %v3042, %v3038
        %v4067 = vpack.c.b16 %v3047, %v3043
        %v4068 = vpack.c.b16 %v3048, %v3044
        %v4069 = vpack.c.b16 %v3049, %v3045
        %v4070 = vpack.c.b16 %v3050, %v3046
        %v4071 = vpack.c.b16 %v3055, %v3051
        %v4072 = vpack.c.b16 %v3056, %v3052
        %v4073 = vpack.c.b16 %v3057, %v3053
        %v4074 = vpack.c.b16 %v3058, %v3054
        %v4075 = vpack.c.b16 %v3063, %v3059
        %v4076 = vpack.c.b16 %v3064, %v3060
        %v4077 = vpack.c.b16 %v3065, %v3061
        %v4078 = vpack.c.b16 %v3066, %v3062
        %v4079 = vpack.c.b16 %v3071, %v3067
        %v4080 = vpack.c.b16 %v3072, %v3068
        %v4081 = vpack.c.b16 %v3073, %v3069
        %v4082 = vpack.c.b16 %v3074, %v3070
        %v4083 = vpack.c.b16 %v3079, %v3075
        %v4084 = vpack.c.b16 %v3080, %v3076
        %v4085 = vpack.c.b16 %v3081, %v3077
        %v4086 = vpack.c.b16 %v3082, %v3078
        %v4087 = vpack.c.b16 %v3087, %v3083
        %v4088 = vpack.c.b16 %v3088, %v3084
        %v4089 = vpack.c.b16 %v3089, %v3085
        %v4090 = vpack.c.b16 %v3090, %v3086
        %v4091 = vpack.c.b16 %v3095, %v3091
        %v4092 = vpack.c.b16 %v3096, %v3092
        %v4093 = vpack.c.b16 %v3097, %v3093
        %v4094 = vpack.c.b16 %v3098, %v3094
        %v4095 = vpack.c.b16 %v3103, %v3099
        %v4096 = vpack.c.b16 %v3104, %v3100
        %v4097 = vpack.c.b16 %v3105, %v3101
        %v4098 = vpack.c.b16 %v3106, %v3102
        %v4099 = vpack.c.b16 %v3111, %v3107
        %v4100 = vpack.c.b16 %v3112, %v3108
        %v4101 = vpack.c.b16 %v3113, %v3109
        %v4102 = vpack.c.b16 %v3114, %v3110
        %v4103 = vpack.c.b16 %v3119, %v3115
        %v4104 = vpack.c.b16 %v3120, %v3116
        %v4105 = vpack.c.b16 %v3121, %v3117
        %v4106 = vpack.c.b16 %v3122, %v3118
        %v4107 = vpack.c.b16 %v3127, %v3123
        %v4108 = vpack.c.b16 %v3128, %v3124
        %v4109 = vpack.c.b16 %v3129, %v3125
        %v4110 = vpack.c.b16 %v3130, %v3126
        %v4111 = vpack.c.b16 %v3135, %v3131
        %v4112 = vpack.c.b16 %v3136, %v3132
        %v4113 = vpack.c.b16 %v3137, %v3133
        %v4114 = vpack.c.b16 %v3138, %v3134
        %v4115 = vpack.c.b16 %v3143, %v3139
        %v4116 = vpack.c.b16 %v3144, %v3140
        %v4117 = vpack.c.b16 %v3145, %v3141
        %v4118 = vpack.c.b16 %v3146, %v3142
        %v4119 = vpack.c.b16 %v3151, %v3147
        %v4120 = vpack.c.b16 %v3152, %v3148
        %v4121 = vpack.c.b16 %v3153, %v3149
        %v4122 = vpack.c.b16 %v3154, %v3150
        %v4123 = vpack.c.b16 %v3159, %v3155
        %v4124 = vpack.c.b16 %v3160, %v3156
        %v4125 = vpack.c.b16 %v3161, %v3157
        %v4126 = vpack.c.b16 %v3162, %v3158
        %v4127 = vpack.c.b16 %v3167, %v3163
        %v4128 = vpack.c.b16 %v3168, %v3164
        %v4129 = vpack.c.b16 %v3169, %v3165
        %v4130 = vpack.c.b16 %v3170, %v3166
        %v4131 = vpack.c.b16 %v3175, %v3171
        %v4132 = vpack.c.b16 %v3176, %v3172
        %v4133 = vpack.c.b16 %v3177, %v3173
        %v4134 = vpack.c.b16 %v3178, %v3174
        %v4135 = vpack.c.b16 %v3183, %v3179
        %v4136 = vpack.c.b16 %v3184, %v3180
        %v4137 = vpack.c.b16 %v3185, %v3181
        %v4138 = vpack.c.b16 %v3186, %v3182
        %v4139 = vpack.c.b16 %v3191, %v3187
        %v4140 = vpack.c.b16 %v3192, %v3188
        %v4141 = vpack.c.b16 %v3193, %v3189
        %v4142 = vpack.c.b16 %v3194, %v3190
        %v4143 = vpack.c.b16 %v3199, %v3195
        %v4144 = vpack.c.b16 %v3200, %v3196
        %v4145 = vpack.c.b16 %v3201, %v3197
        %v4146 = vpack.c.b16 %v3202, %v3198
        %v4147 = vpack.c.b16 %v3207, %v3203
        %v4148 = vpack.c.b16 %v3208, %v3204
        %v4149 = vpack.c.b16 %v3209, %v3205
        %v4150 = vpack.c.b16 %v3210, %v3206
        %v4151 = vpack.c.b16 %v3215, %v3211
        %v4152 = vpack.c.b16 %v3216, %v3212
        %v4153 = vpack.c.b16 %v3217, %v3213
        %v4154 = vpack.c.b16 %v3218, %v3214
        %v4155 = vpack.c.b16 %v3223, %v3219
        %v4156 = vpack.c.b16 %v3224, %v3220
        %v4157 = vpack.c.b16 %v3225, %v3221
        %v4158 = vpack.c.b16 %v3226, %v3222
        %v4159 = vpack.c.b16 %v3231, %v3227
        %v4160 = vpack.c.b16 %v3232, %v3228
        %v4161 = vpack.c.b16 %v3233, %v3229
        %v4162 = vpack.c.b16 %v3234, %v3230
        %v4163 = vpack.c.b16 %v3239, %v3235
        %v4164 = vpack.c.b16 %v3240, %v3236
        %v4165 = vpack.c.b16 %v3241, %v3237
        %v4166 = vpack.c.b16 %v3242, %v3238
        %v4167 = vpack.c.b16 %v3247, %v3243
        %v4168 = vpack.c.b16 %v3248, %v3244
        %v4169 = vpack.c.b16 %v3249, %v3245
        %v4170 = vpack.c.b16 %v3250, %v3246
        %v4171 = vpack.c.b16 %v3255, %v3251
        %v4172 = vpack.c.b16 %v3256, %v3252
        %v4173 = vpack.c.b16 %v3257, %v3253
        %v4174 = vpack.c.b16 %v3258, %v3254
        %v4175 = vpack.c.b16 %v3263, %v3259
        %v4176 = vpack.c.b16 %v3264, %v3260
        %v4177 = vpack.c.b16 %v3265, %v3261
        %v4178 = vpack.c.b16 %v3266, %v3262
        %v4179 = vpack.c.b16 %v3271, %v3267
        %v4180 = vpack.c.b16 %v3272, %v3268
        %v4181 = vpack.c.b16 %v3273, %v3269
        %v4182 = vpack.c.b16 %v3274, %v3270
        %v4183 = vpack.c.b16 %v3279, %v3275
        %v4184 = vpack.c.b16 %v3280, %v3276
        %v4185 = vpack.c.b16 %v3281, %v3277
        %v4186 = vpack.c.b16 %v3282, %v3278
        %v4187 = vpack.c.b16 %v3287, %v3283
        %v4188 = vpack.c.b16 %v3288, %v3284
        %v4189 = vpack.c.b16 %v3289, %v3285
        %v4190 = vpack.c.b16 %v3290, %v3286
        %v4191 = vpack.c.b16 %v3295, %v3291
        %v4192 = vpack.c.b16 %v3296, %v3292
        %v4193 = vpack.c.b16 %v3297, %v3293
        %v4194 = vpack.c.b16 %v3298, %v3294
        %v4195 = vpack.c.b16 %v3303, %v3299
        %v4196 = vpack.c.b16 %v3304, %v3300
        %v4197 = vpack.c.b16 %v3305, %v3301
        %v4198 = vpack.c.b16 %v3306, %v3302
        %v4199 = vpack.c.b16 %v3311, %v3307
        %v4200 = vpack.c.b16 %v3312, %v3308
        %v4201 = vpack.c.b16 %v3313, %v3309
        %v4202 = vpack.c.b16 %v3314, %v3310
        %v4203 = vpack.c.b16 %v3319, %v3315
        %v4204 = vpack.c.b16 %v3320, %v3316
        %v4205 = vpack.c.b16 %v3321, %v3317
        %v4206 = vpack.c.b16 %v3322, %v3318
        %v4207 = vpack.c.b16 %v3327, %v3323
        %v4208 = vpack.c.b16 %v3328, %v3324
        %v4209 = vpack.c.b16 %v3329, %v3325
        %v4210 = vpack.c.b16 %v3330, %v3326
        %v4211 = vpack.c.b16 %v3335, %v3331
        %v4212 = vpack.c.b16 %v3336, %v3332
        %v4213 = vpack.c.b16 %v3337, %v3333
        %v4214 = vpack.c.b16 %v3338, %v3334
        %v4215 = vpack.c.b16 %v3343, %v3339
        %v4216 = vpack.c.b16 %v3344, %v3340
        %v4217 = vpack.c.b16 %v3345, %v3341
        %v4218 = vpack.c.b16 %v3346, %v3342
        %v4219 = vpack.c.b16 %v3351, %v3347
        %v4220 = vpack.c.b16 %v3352, %v3348
        %v4221 = vpack.c.b16 %v3353, %v3349
        %v4222 = vpack.c.b16 %v3354, %v3350
        %v4223 = vpack.c.b16 %v3359, %v3355
        %v4224 = vpack.c.b16 %v3360, %v3356
        %v4225 = vpack.c.b16 %v3361, %v3357
        %v4226 = vpack.c.b16 %v3362, %v3358
        %v4227 = vpack.c.b16 %v3367, %v3363
        %v4228 = vpack.c.b16 %v3368, %v3364
        %v4229 = vpack.c.b16 %v3369, %v3365
        %v4230 = vpack.c.b16 %v3370, %v3366
        %v4231 = vpack.c.b16 %v3375, %v3371
        %v4232 = vpack.c.b16 %v3376, %v3372
        %v4233 = vpack.c.b16 %v3377, %v3373
        %v4234 = vpack.c.b16 %v3378, %v3374
        %v4235 = vpack.c.b16 %v3383, %v3379
        %v4236 = vpack.c.b16 %v3384, %v3380
        %v4237 = vpack.c.b16 %v3385, %v3381
        %v4238 = vpack.c.b16 %v3386, %v3382
        %v4239 = vpack.c.b16 %v3391, %v3387
        %v4240 = vpack.c.b16 %v3392, %v3388
        %v4241 = vpack.c.b16 %v3393, %v3389
        %v4242 = vpack.c.b16 %v3394, %v3390
        %v4243 = vpack.c.b16 %v3399, %v3395
        %v4244 = vpack.c.b16 %v3400, %v3396
        %v4245 = vpack.c.b16 %v3401, %v3397
        %v4246 = vpack.c.b16 %v3402, %v3398
        %v4247 = vpack.c.b16 %v3407, %v3403
        %v4248 = vpack.c.b16 %v3408, %v3404
        %v4249 = vpack.c.b16 %v3409, %v3405
        %v4250 = vpack.c.b16 %v3410, %v3406
        %v4251 = vpack.c.b16 %v3415, %v3411
        %v4252 = vpack.c.b16 %v3416, %v3412
        %v4253 = vpack.c.b16 %v3417, %v3413
        %v4254 = vpack.c.b16 %v3418, %v3414
        %v4255 = vpack.c.b16 %v3423, %v3419
        %v4256 = vpack.c.b16 %v3424, %v3420
        %v4257 = vpack.c.b16 %v3425, %v3421
        %v4258 = vpack.c.b16 %v3426, %v3422
        %v4259 = vpack.c.b16 %v3431, %v3427
        %v4260 = vpack.c.b16 %v3432, %v3428
        %v4261 = vpack.c.b16 %v3433, %v3429
        %v4262 = vpack.c.b16 %v3434, %v3430
        %v4263 = vpack.c.b16 %v3439, %v3435
        %v4264 = vpack.c.b16 %v3440, %v3436
        %v4265 = vpack.c.b16 %v3441, %v3437
        %v4266 = vpack.c.b16 %v3442, %v3438
        %v4267 = vpack.c.b16 %v3447, %v3443
        %v4268 = vpack.c.b16 %v3448, %v3444
        %v4269 = vpack.c.b16 %v3449, %v3445
        %v4270 = vpack.c.b16 %v3450, %v3446
        %v4271 = vpack.c.b16 %v3455, %v3451
        %v4272 = vpack.c.b16 %v3456, %v3452
        %v4273 = vpack.c.b16 %v3457, %v3453
        %v4274 = vpack.c.b16 %v3458, %v3454
        %v4275 = vpack.c.b16 %v3463, %v3459
        %v4276 = vpack.c.b16 %v3464, %v3460
        %v4277 = vpack.c.b16 %v3465, %v3461
        %v4278 = vpack.c.b16 %v3466, %v3462
        %v4279 = vpack.c.b16 %v3471, %v3467
        %v4280 = vpack.c.b16 %v3472, %v3468
        %v4281 = vpack.c.b16 %v3473, %v3469
        %v4282 = vpack.c.b16 %v3474, %v3470
        %v4283 = vpack.c.b16 %v3479, %v3475
        %v4284 = vpack.c.b16 %v3480, %v3476
        %v4285 = vpack.c.b16 %v3481, %v3477
        %v4286 = vpack.c.b16 %v3482, %v3478
        %v4287 = vpack.c.b16 %v3487, %v3483
        %v4288 = vpack.c.b16 %v3488, %v3484
        %v4289 = vpack.c.b16 %v3489, %v3485
        %v4290 = vpack.c.b16 %v3490, %v3486
        %v4291 = vpack.c.b16 %v3495, %v3491
        %v4292 = vpack.c.b16 %v3496, %v3492
        %v4293 = vpack.c.b16 %v3497, %v3493
        %v4294 = vpack.c.b16 %v3498, %v3494
        %v4295 = vpack.c.b16 %v3503, %v3499
        %v4296 = vpack.c.b16 %v3504, %v3500
        %v4297 = vpack.c.b16 %v3505, %v3501
        %v4298 = vpack.c.b16 %v3506, %v3502
        %v4299 = vpack.c.b16 %v3511, %v3507
        %v4300 = vpack.c.b16 %v3512, %v3508
        %v4301 = vpack.c.b16 %v3513, %v3509
        %v4302 = vpack.c.b16 %v3514, %v3510
        %v4303 = vpack.c.b16 %v3519, %v3515
        %v4304 = vpack.c.b16 %v3520, %v3516
        %v4305 = vpack.c.b16 %v3521, %v3517
        %v4306 = vpack.c.b16 %v3522, %v3518
        %v4307 = vpack.c.b16 %v3527, %v3523
        %v4308 = vpack.c.b16 %v3528, %v3524
        %v4309 = vpack.c.b16 %v3529, %v3525
        %v4310 = vpack.c.b16 %v3530, %v3526
        %v4311 = vpack.c.b16 %v3535, %v3531
        %v4312 = vpack.c.b16 %v3536, %v3532
        %v4313 = vpack.c.b16 %v3537, %v3533
        %v4314 = vpack.c.b16 %v3538, %v3534
        %v4315 = vpack.c.b16 %v3543, %v3539
        %v4316 = vpack.c.b16 %v3544, %v3540
        %v4317 = vpack.c.b16 %v3545, %v3541
        %v4318 = vpack.c.b16 %v3546, %v3542
        %v4319 = vpack.c.b16 %v3551, %v3547
        %v4320 = vpack.c.b16 %v3552, %v3548
        %v4321 = vpack.c.b16 %v3553, %v3549
        %v4322 = vpack.c.b16 %v3554, %v3550
        %v4323 = vpack.c.b16 %v3559, %v3555
        %v4324 = vpack.c.b16 %v3560, %v3556
        %v4325 = vpack.c.b16 %v3561, %v3557
        %v4326 = vpack.c.b16 %v3562, %v3558
        %v4327 = vpack.c.b16 %v3567, %v3563
        %v4328 = vpack.c.b16 %v3568, %v3564
        %v4329 = vpack.c.b16 %v3569, %v3565
        %v4330 = vpack.c.b16 %v3570, %v3566
        %v4331 = vpack.c.b16 %v3575, %v3571
        %v4332 = vpack.c.b16 %v3576, %v3572
        %v4333 = vpack.c.b16 %v3577, %v3573
        %v4334 = vpack.c.b16 %v3578, %v3574
        %v4335 = vpack.c.b16 %v3583, %v3579
        %v4336 = vpack.c.b16 %v3584, %v3580
        %v4337 = vpack.c.b16 %v3585, %v3581
        %v4338 = vpack.c.b16 %v3586, %v3582
        %v4339 = vpack.c.b16 %v3591, %v3587
        %v4340 = vpack.c.b16 %v3592, %v3588
        %v4341 = vpack.c.b16 %v3593, %v3589
        %v4342 = vpack.c.b16 %v3594, %v3590
        %v4343 = vpack.c.b16 %v3599, %v3595
        %v4344 = vpack.c.b16 %v3600, %v3596
        %v4345 = vpack.c.b16 %v3601, %v3597
        %v4346 = vpack.c.b16 %v3602, %v3598
        %v4347 = vpack.c.b16 %v3607, %v3603
        %v4348 = vpack.c.b16 %v3608, %v3604
        %v4349 = vpack.c.b16 %v3609, %v3605
        %v4350 = vpack.c.b16 %v3610, %v3606
        %v4351 = vpack.c.b16 %v3615, %v3611
        %v4352 = vpack.c.b16 %v3616, %v3612
        %v4353 = vpack.c.b16 %v3617, %v3613
        %v4354 = vpack.c.b16 %v3618, %v3614
        %v4355 = vpack.c.b16 %v3623, %v3619
        %v4356 = vpack.c.b16 %v3624, %v3620
        %v4357 = vpack.c.b16 %v3625, %v3621
        %v4358 = vpack.c.b16 %v3626, %v3622
        %v4359 = vpack.c.b16 %v3631, %v3627
        %v4360 = vpack.c.b16 %v3632, %v3628
        %v4361 = vpack.c.b16 %v3633, %v3629
        %v4362 = vpack.c.b16 %v3634, %v3630
        %v4363 = vpack.c.b16 %v3639, %v3635
        %v4364 = vpack.c.b16 %v3640, %v3636
        %v4365 = vpack.c.b16 %v3641, %v3637
        %v4366 = vpack.c.b16 %v3642, %v3638
        %v4367 = vpack.c.b16 %v3647, %v3643
        %v4368 = vpack.c.b16 %v3648, %v3644
        %v4369 = vpack.c.b16 %v3649, %v3645
        %v4370 = vpack.c.b16 %v3650, %v3646
        %v4371 = vpack.c.b16 %v3655, %v3651
        %v4372 = vpack.c.b16 %v3656, %v3652
        %v4373 = vpack.c.b16 %v3657, %v3653
        %v4374 = vpack.c.b16 %v3658, %v3654
        %v4375 = vpack.c.b16 %v3663, %v3659
        %v4376 = vpack.c.b16 %v3664, %v3660
        %v4377 = vpack.c.b16 %v3665, %v3661
        %v4378 = vpack.c.b16 %v3666, %v3662
        %v4379 = vpack.c.b16 %v3671, %v3667
        %v4380 = vpack.c.b16 %v3672, %v3668
        %v4381 = vpack.c.b16 %v3673, %v3669
        %v4382 = vpack.c.b16 %v3674, %v3670
        %v4383 = vpack.c.b16 %v3679, %v3675
        %v4384 = vpack.c.b16 %v3680, %v3676
        %v4385 = vpack.c.b16 %v3681, %v3677
        %v4386 = vpack.c.b16 %v3682, %v3678
        %v4387 = vpack.c.b16 %v3687, %v3683
        %v4388 = vpack.c.b16 %v3688, %v3684
        %v4389 = vpack.c.b16 %v3689, %v3685
        %v4390 = vpack.c.b16 %v3690, %v3686
        %v4391 = vpack.c.b16 %v3695, %v3691
        %v4392 = vpack.c.b16 %v3696, %v3692
        %v4393 = vpack.c.b16 %v3697, %v3693
        %v4394 = vpack.c.b16 %v3698, %v3694
        %v4395 = vpack.c.b16 %v3703, %v3699
        %v4396 = vpack.c.b16 %v3704, %v3700
        %v4397 = vpack.c.b16 %v3705, %v3701
        %v4398 = vpack.c.b16 %v3706, %v3702
        %v4399 = vpack.c.b16 %v3711, %v3707
        %v4400 = vpack.c.b16 %v3712, %v3708
        %v4401 = vpack.c.b16 %v3713, %v3709
        %v4402 = vpack.c.b16 %v3714, %v3710
        %v4403 = vpack.c.b16 %v3719, %v3715
        %v4404 = vpack.c.b16 %v3720, %v3716
        %v4405 = vpack.c.b16 %v3721, %v3717
        %v4406 = vpack.c.b16 %v3722, %v3718
        %v4407 = vpack.c.b16 %v3727, %v3723
        %v4408 = vpack.c.b16 %v3728, %v3724
        %v4409 = vpack.c.b16 %v3729, %v3725
        %v4410 = vpack.c.b16 %v3730, %v3726
        %v4411 = vpack.c.b16 %v3735, %v3731
        %v4412 = vpack.c.b16 %v3736, %v3732
        %v4413 = vpack.c.b16 %v3737, %v3733
        %v4414 = vpack.c.b16 %v3738, %v3734
        %v4415 = vpack.c.b16 %v3743, %v3739
        %v4416 = vpack.c.b16 %v3744, %v3740
        %v4417 = vpack.c.b16 %v3745, %v3741
        %v4418 = vpack.c.b16 %v3746, %v3742
        %v4419 = vpack.c.b16 %v3751, %v3747
        %v4420 = vpack.c.b16 %v3752, %v3748
        %v4421 = vpack.c.b16 %v3753, %v3749
        %v4422 = vpack.c.b16 %v3754, %v3750
        %v4423 = vpack.c.b16 %v3759, %v3755
        %v4424 = vpack.c.b16 %v3760, %v3756
        %v4425 = vpack.c.b16 %v3761, %v3757
        %v4426 = vpack.c.b16 %v3762, %v3758
        %v4427 = vpack.c.b16 %v3767, %v3763
        %v4428 = vpack.c.b16 %v3768, %v3764
        %v4429 = vpack.c.b16 %v3769, %v3765
        %v4430 = vpack.c.b16 %v3770, %v3766
        %v4431 = vpack.c.b16 %v3775, %v3771
        %v4432 = vpack.c.b16 %v3776, %v3772
        %v4433 = vpack.c.b16 %v3777, %v3773
        %v4434 = vpack.c.b16 %v3778, %v3774
        %v4435 = vpack.c.b16 %v3783, %v3779
        %v4436 = vpack.c.b16 %v3784, %v3780
        %v4437 = vpack.c.b16 %v3785, %v3781
        %v4438 = vpack.c.b16 %v3786, %v3782
        %v4439 = vpack.c.b16 %v3791, %v3787
        %v4440 = vpack.c.b16 %v3792, %v3788
        %v4441 = vpack.c.b16 %v3793, %v3789
        %v4442 = vpack.c.b16 %v3794, %v3790
        %v4443 = vpack.c.b16 %v3799, %v3795
        %v4444 = vpack.c.b16 %v3800, %v3796
        %v4445 = vpack.c.b16 %v3801, %v3797
        %v4446 = vpack.c.b16 %v3802, %v3798
        %v4447 = vpack.c.b16 %v3807, %v3803
        %v4448 = vpack.c.b16 %v3808, %v3804
        %v4449 = vpack.c.b16 %v3809, %v3805
        %v4450 = vpack.c.b16 %v3810, %v3806
        %v4451 = vpack.c.b16 %v3815, %v3811
        %v4452 = vpack.c.b16 %v3816, %v3812
        %v4453 = vpack.c.b16 %v3817, %v3813
        %v4454 = vpack.c.b16 %v3818, %v3814
        %v4455 = vpack.c.b16 %v3823, %v3819
        %v4456 = vpack.c.b16 %v3824, %v3820
        %v4457 = vpack.c.b16 %v3825, %v3821
        %v4458 = vpack.c.b16 %v3826, %v3822
        %v4459 = vpack.c.b16 %v3831, %v3827
        %v4460 = vpack.c.b16 %v3832, %v3828
        %v4461 = vpack.c.b16 %v3833, %v3829
        %v4462 = vpack.c.b16 %v3834, %v3830
        %v4463 = vpack.c.b16 %v3839, %v3835
        %v4464 = vpack.c.b16 %v3840, %v3836
        %v4465 = vpack.c.b16 %v3841, %v3837
        %v4466 = vpack.c.b16 %v3842, %v3838
        %v4467 = vpack.c.b16 %v3847, %v3843
        %v4468 = vpack.c.b16 %v3848, %v3844
        %v4469 = vpack.c.b16 %v3849, %v3845
        %v4470 = vpack.c.b16 %v3850, %v3846
        %v4471 = vpack.c.b16 %v3855, %v3851
        %v4472 = vpack.c.b16 %v3856, %v3852
        %v4473 = vpack.c.b16 %v3857, %v3853
        %v4474 = vpack.c.b16 %v3858, %v3854
        %v4475 = vpack.c.b16 %v3863, %v3859
        %v4476 = vpack.c.b16 %v3864, %v3860
        %v4477 = vpack.c.b16 %v3865, %v3861
        %v4478 = vpack.c.b16 %v3866, %v3862
        %v4479 = vpack.c.b16 %v3871, %v3867
        %v4480 = vpack.c.b16 %v3872, %v3868
        %v4481 = vpack.c.b16 %v3873, %v3869
        %v4482 = vpack.c.b16 %v3874, %v3870
        %v4483 = vpack.c.b16 %v3879, %v3875
        %v4484 = vpack.c.b16 %v3880, %v3876
        %v4485 = vpack.c.b16 %v3881, %v3877
        %v4486 = vpack.c.b16 %v3882, %v3878
        %v4487 = vpack.c.b16 %v3887, %v3883
        %v4488 = vpack.c.b16 %v3888, %v3884
        %v4489 = vpack.c.b16 %v3889, %v3885
        %v4490 = vpack.c.b16 %v3890, %v3886
        %v4491 = vpack.c.b16 %v3895, %v3891
        %v4492 = vpack.c.b16 %v3896, %v3892
        %v4493 = vpack.c.b16 %v3897, %v3893
        %v4494 = vpack.c.b16 %v3898, %v3894
        %v4495 = vpack.c.b16 %v3903, %v3899
        %v4496 = vpack.c.b16 %v3904, %v3900
        %v4497 = vpack.c.b16 %v3905, %v3901
        %v4498 = vpack.c.b16 %v3906, %v3902
        %v4499 = vpack.c.b16 %v3911, %v3907
        %v4500 = vpack.c.b16 %v3912, %v3908
        %v4501 = vpack.c.b16 %v3913, %v3909
        %v4502 = vpack.c.b16 %v3914, %v3910
        %v4503 = vpack.c.b16 %v3919, %v3915
        %v4504 = vpack.c.b16 %v3920, %v3916
        %v4505 = vpack.c.b16 %v3921, %v3917
        %v4506 = vpack.c.b16 %v3922, %v3918
        %v4507 = vpack.c.b16 %v3927, %v3923
        %v4508 = vpack.c.b16 %v3928, %v3924
        %v4509 = vpack.c.b16 %v3929, %v3925
        %v4510 = vpack.c.b16 %v3930, %v3926
        %v4511 = vpack.c.b16 %v3935, %v3931
        %v4512 = vpack.c.b16 %v3936, %v3932
        %v4513 = vpack.c.b16 %v3937, %v3933
        %v4514 = vpack.c.b16 %v3938, %v3934
        %5091 = vmatprep.subr.bf16.mxu0 %v3940
        %5092 = vmatpush1.bf16.msra.mxu0 %v3939
        %5093 = vmatprep.subr.bf16.mxu0 %v3944
        %5094 = vmatpush1.bf16.msra.mxu0 %v3943
        %5095 = vmatprep.subr.bf16.mxu0 %v3948
        %5096 = vmatpush1.bf16.msra.mxu0 %v3947
        %5097 = vmatprep.subr.bf16.mxu0 %v3952
        %5098 = vmatpush1.bf16.msra.mxu0 %v3951
        %5099 = vmatprep.subr.bf16.mxu0 %v3956
        %5100 = vmatpush1.bf16.msra.mxu0 %v3955
        %5101 = vmatprep.subr.bf16.mxu0 %v3960
        %5102 = vmatpush1.bf16.msra.mxu0 %v3959
        %5103 = vmatprep.subr.bf16.mxu0 %v3964
        %5104 = vmatpush1.bf16.msra.mxu0 %v3963
        %5105 = vmatprep.subr.bf16.mxu0 %v3968
        %5106 = vmatpush1.bf16.msra.mxu0 %v3967
        %5107 = vmatprep.subr.bf16.mxu0 %v3972
        %5108 = vmatpush1.bf16.msra.mxu0 %v3971
        %5109 = vmatprep.subr.bf16.mxu0 %v3976
        %5110 = vmatpush1.bf16.msra.mxu0 %v3975
        %5111 = vmatprep.subr.bf16.mxu0 %v3980
        %5112 = vmatpush1.bf16.msra.mxu0 %v3979
        %5113 = vmatprep.subr.bf16.mxu0 %v3984
        %5114 = vmatpush1.bf16.msra.mxu0 %v3983
        %5115 = vmatprep.subr.bf16.mxu0 %v3988
        %5116 = vmatpush1.bf16.msra.mxu0 %v3987
        %5117 = vmatprep.subr.bf16.mxu0 %v3992
        %5118 = vmatpush1.bf16.msra.mxu0 %v3991
        %5119 = vmatprep.subr.bf16.mxu0 %v3996
        %5120 = vmatpush1.bf16.msra.mxu0 %v3995
        %5121 = vmatprep.subr.bf16.mxu0 %v4000
        %5122 = vmatpush1.bf16.msra.mxu0 %v3999
        %5123 = vmatprep.mubr.bf16.mxu0 %v2110
        %5124 = vmatmul.mubr.bf16.gmra.mrb[0].mxu0 %v2096
        %v5125 = vpop.f32.mrb[0].mxu0
        %v5126 = vadd.f32 %v2053, %v5125
        %v5127 = vpop.f32.mrb[0].mxu0
        %v5128 = vadd.f32 %v2057, %v5127
        %v5129 = vpop.f32.mrb[0].mxu0
        %v5130 = vpop.f32.mrb[0].mxu0
        %5131 = vdwg.mxu0
        %5132 = vmatprep.subr.bf16.mxu0 %v4004
        %5133 = vmatpush1.bf16.msra.mxu0 %v4003
        %5134 = vmatprep.subr.bf16.mxu0 %v4008
        %5135 = vmatpush1.bf16.msra.mxu0 %v4007
        %5136 = vmatprep.subr.bf16.mxu0 %v4012
        %5137 = vmatpush1.bf16.msra.mxu0 %v4011
        %5138 = vmatprep.subr.bf16.mxu0 %v4016
        %5139 = vmatpush1.bf16.msra.mxu0 %v4015
        %5140 = vmatprep.subr.bf16.mxu0 %v4020
        %5141 = vmatpush1.bf16.msra.mxu0 %v4019
        %5142 = vmatprep.subr.bf16.mxu0 %v4024
        %5143 = vmatpush1.bf16.msra.mxu0 %v4023
        %5144 = vmatprep.subr.bf16.mxu0 %v4028
        %5145 = vmatpush1.bf16.msra.mxu0 %v4027
        %5146 = vmatprep.subr.bf16.mxu0 %v4032
        %5147 = vmatpush1.bf16.msra.mxu0 %v4031
        %5148 = vmatprep.subr.bf16.mxu0 %v4036
        %5149 = vmatpush1.bf16.msra.mxu0 %v4035
        %5150 = vmatprep.subr.bf16.mxu0 %v4040
        %5151 = vmatpush1.bf16.msra.mxu0 %v4039
        %5152 = vmatprep.subr.bf16.mxu0 %v4044
        %5153 = vmatpush1.bf16.msra.mxu0 %v4043
        %5154 = vmatprep.subr.bf16.mxu0 %v4048
        %5155 = vmatpush1.bf16.msra.mxu0 %v4047
        %5156 = vmatprep.subr.bf16.mxu0 %v4052
        %5157 = vmatpush1.bf16.msra.mxu0 %v4051
        %5158 = vmatprep.subr.bf16.mxu0 %v4056
        %5159 = vmatpush1.bf16.msra.mxu0 %v4055
        %5160 = vmatprep.subr.bf16.mxu0 %v4060
        %5161 = vmatpush1.bf16.msra.mxu0 %v4059
        %5162 = vmatprep.subr.bf16.mxu0 %v4064
        %5163 = vmatpush1.bf16.msra.mxu0 %v4063
        %5164 = vmatprep.mubr.bf16.mxu0 %v2120
        %5165 = vmatmul.mubr.bf16.gmra.mrb[0].mxu0 %v2118
        %v5166 = vpop.f32.mrb[0].mxu0
        %v5167 = vadd.f32 %v5126, %v5166
        %v5168 = vpop.f32.mrb[0].mxu0
        %v5169 = vadd.f32 %v5128, %v5168
        %v5170 = vpop.f32.mrb[0].mxu0
        %v5171 = vpop.f32.mrb[0].mxu0
        %5172 = vdwg.mxu0
        %5173 = vmatprep.subr.bf16.mxu0 %v4068
        %5174 = vmatpush1.bf16.msra.mxu0 %v4067
        %5175 = vmatprep.subr.bf16.mxu0 %v4072
        %5176 = vmatpush1.bf16.msra.mxu0 %v4071
        %5177 = vmatprep.subr.bf16.mxu0 %v4076
        %5178 = vmatpush1.bf16.msra.mxu0 %v4075
        %5179 = vmatprep.subr.bf16.mxu0 %v4080
        %5180 = vmatpush1.bf16.msra.mxu0 %v4079
        %5181 = vmatprep.subr.bf16.mxu0 %v4084
        %5182 = vmatpush1.bf16.msra.mxu0 %v4083
        %5183 = vmatprep.subr.bf16.mxu0 %v4088
        %5184 = vmatpush1.bf16.msra.mxu0 %v4087
        %5185 = vmatprep.subr.bf16.mxu0 %v4092
        %5186 = vmatpush1.bf16.msra.mxu0 %v4091
        %5187 = vmatprep.subr.bf16.mxu0 %v4096
        %5188 = vmatpush1.bf16.msra.mxu0 %v4095
        %5189 = vmatprep.subr.bf16.mxu0 %v4100
        %5190 = vmatpush1.bf16.msra.mxu0 %v4099
        %5191 = vmatprep.subr.bf16.mxu0 %v4104
        %5192 = vmatpush1.bf16.msra.mxu0 %v4103
        %5193 = vmatprep.subr.bf16.mxu0 %v4108
        %5194 = vmatpush1.bf16.msra.mxu0 %v4107
        %5195 = vmatprep.subr.bf16.mxu0 %v4112
        %5196 = vmatpush1.bf16.msra.mxu0 %v4111
        %5197 = vmatprep.subr.bf16.mxu0 %v4116
        %5198 = vmatpush1.bf16.msra.mxu0 %v4115
        %5199 = vmatprep.subr.bf16.mxu0 %v4120
        %5200 = vmatpush1.bf16.msra.mxu0 %v4119
        %5201 = vmatprep.subr.bf16.mxu0 %v4124
        %5202 = vmatpush1.bf16.msra.mxu0 %v4123
        %5203 = vmatprep.subr.bf16.mxu0 %v4128
        %5204 = vmatpush1.bf16.msra.mxu0 %v4127
        %5205 = vmatprep.mubr.bf16.mxu0 %v2117
        %5206 = vmatmul.mubr.bf16.gmra.mrb[0].mxu0 %v2103
        %v5207 = vpop.f32.mrb[0].mxu0
        %v5208 = vadd.f32 %v5167, %v5207
        %v5209 = vpop.f32.mrb[0].mxu0
        %v5210 = vadd.f32 %v5169, %v5209
        %v5211 = vpop.f32.mrb[0].mxu0
        %v5212 = vpop.f32.mrb[0].mxu0
        %5213 = vdwg.mxu0
        %5214 = vmatprep.subr.bf16.mxu0 %v4132
        %5215 = vmatpush1.bf16.msra.mxu0 %v4131
        %5216 = vmatprep.subr.bf16.mxu0 %v4136
        %5217 = vmatpush1.bf16.msra.mxu0 %v4135
        %5218 = vmatprep.subr.bf16.mxu0 %v4140
        %5219 = vmatpush1.bf16.msra.mxu0 %v4139
        %5220 = vmatprep.subr.bf16.mxu0 %v4144
        %5221 = vmatpush1.bf16.msra.mxu0 %v4143
        %5222 = vmatprep.subr.bf16.mxu0 %v4148
        %5223 = vmatpush1.bf16.msra.mxu0 %v4147
        %5224 = vmatprep.subr.bf16.mxu0 %v4152
        %5225 = vmatpush1.bf16.msra.mxu0 %v4151
        %5226 = vmatprep.subr.bf16.mxu0 %v4156
        %5227 = vmatpush1.bf16.msra.mxu0 %v4155
        %5228 = vmatprep.subr.bf16.mxu0 %v4160
        %5229 = vmatpush1.bf16.msra.mxu0 %v4159
        %5230 = vmatprep.subr.bf16.mxu0 %v4164
        %5231 = vmatpush1.bf16.msra.mxu0 %v4163
        %5232 = vmatprep.subr.bf16.mxu0 %v4168
        %5233 = vmatpush1.bf16.msra.mxu0 %v4167
        %5234 = vmatprep.subr.bf16.mxu0 %v4172
        %5235 = vmatpush1.bf16.msra.mxu0 %v4171
        %5236 = vmatprep.subr.bf16.mxu0 %v4176
        %5237 = vmatpush1.bf16.msra.mxu0 %v4175
        %5238 = vmatprep.subr.bf16.mxu0 %v4180
        %5239 = vmatpush1.bf16.msra.mxu0 %v4179
        %5240 = vmatprep.subr.bf16.mxu0 %v4184
        %5241 = vmatpush1.bf16.msra.mxu0 %v4183
        %5242 = vmatprep.subr.bf16.mxu0 %v4188
        %5243 = vmatpush1.bf16.msra.mxu0 %v4187
        %5244 = vmatprep.subr.bf16.mxu0 %v4192
        %5245 = vmatpush1.bf16.msra.mxu0 %v4191
        %5246 = vmatprep.mubr.bf16.mxu0 %v2121
        %5247 = vmatmul.mubr.bf16.gmra.mrb[0].mxu0 %v2119
        %v5248 = vpop.f32.mrb[0].mxu0
        %v5249 = vadd.f32 %v5208, %v5248
        %v5250 = vpop.f32.mrb[0].mxu0
        %v5251 = vadd.f32 %v5210, %v5250
        %v5252 = vpop.f32.mrb[0].mxu0
        %v5253 = vpop.f32.mrb[0].mxu0
        %5254 = vdwg.mxu0
        %5255 = vmatprep.subr.bf16.mxu0 %v4196
        %5256 = vmatpush1.bf16.msra.mxu0 %v4195
        %5257 = vmatprep.subr.bf16.mxu0 %v4200
        %5258 = vmatpush1.bf16.msra.mxu0 %v4199
        %5259 = vmatprep.subr.bf16.mxu0 %v4204
        %5260 = vmatpush1.bf16.msra.mxu0 %v4203
        %5261 = vmatprep.subr.bf16.mxu0 %v4208
        %5262 = vmatpush1.bf16.msra.mxu0 %v4207
        %5263 = vmatprep.subr.bf16.mxu0 %v4212
        %5264 = vmatpush1.bf16.msra.mxu0 %v4211
        %5265 = vmatprep.subr.bf16.mxu0 %v4216
        %5266 = vmatpush1.bf16.msra.mxu0 %v4215
        %5267 = vmatprep.subr.bf16.mxu0 %v4220
        %5268 = vmatpush1.bf16.msra.mxu0 %v4219
        %5269 = vmatprep.subr.bf16.mxu0 %v4224
        %5270 = vmatpush1.bf16.msra.mxu0 %v4223
        %5271 = vmatprep.subr.bf16.mxu0 %v4228
        %5272 = vmatpush1.bf16.msra.mxu0 %v4227
        %5273 = vmatprep.subr.bf16.mxu0 %v4232
        %5274 = vmatpush1.bf16.msra.mxu0 %v4231
        %5275 = vmatprep.subr.bf16.mxu0 %v4236
        %5276 = vmatpush1.bf16.msra.mxu0 %v4235
        %5277 = vmatprep.subr.bf16.mxu0 %v4240
        %5278 = vmatpush1.bf16.msra.mxu0 %v4239
        %5279 = vmatprep.subr.bf16.mxu0 %v4244
        %5280 = vmatpush1.bf16.msra.mxu0 %v4243
        %5281 = vmatprep.subr.bf16.mxu0 %v4248
        %5282 = vmatpush1.bf16.msra.mxu0 %v4247
        %5283 = vmatprep.subr.bf16.mxu0 %v4252
        %5284 = vmatpush1.bf16.msra.mxu0 %v4251
        %5285 = vmatprep.subr.bf16.mxu0 %v4256
        %5286 = vmatpush1.bf16.msra.mxu0 %v4255
        %5287 = vmatprep.mubr.bf16.mxu0 %v2159
        %5288 = vmatmul.mubr.bf16.gmra.mrb[0].mxu0 %v2145
        %v5289 = vpop.f32.mrb[0].mxu0
        %v5290 = vadd.f32 %v5249, %v5289
        %v5291 = vpop.f32.mrb[0].mxu0
        %v5292 = vadd.f32 %v5251, %v5291
        %v5293 = vpop.f32.mrb[0].mxu0
        %v5294 = vpop.f32.mrb[0].mxu0
        %5295 = vdwg.mxu0
        %5296 = vmatprep.subr.bf16.mxu0 %v4260
        %5297 = vmatpush1.bf16.msra.mxu0 %v4259
        %5298 = vmatprep.subr.bf16.mxu0 %v4264
        %5299 = vmatpush1.bf16.msra.mxu0 %v4263
        %5300 = vmatprep.subr.bf16.mxu0 %v4268
        %5301 = vmatpush1.bf16.msra.mxu0 %v4267
        %5302 = vmatprep.subr.bf16.mxu0 %v4272
        %5303 = vmatpush1.bf16.msra.mxu0 %v4271
        %5304 = vmatprep.subr.bf16.mxu0 %v4276
        %5305 = vmatpush1.bf16.msra.mxu0 %v4275
        %5306 = vmatprep.subr.bf16.mxu0 %v4280
        %5307 = vmatpush1.bf16.msra.mxu0 %v4279
        %5308 = vmatprep.subr.bf16.mxu0 %v4284
        %5309 = vmatpush1.bf16.msra.mxu0 %v4283
        %5310 = vmatprep.subr.bf16.mxu0 %v4288
        %5311 = vmatpush1.bf16.msra.mxu0 %v4287
        %5312 = vmatprep.subr.bf16.mxu0 %v4292
        %5313 = vmatpush1.bf16.msra.mxu0 %v4291
        %5314 = vmatprep.subr.bf16.mxu0 %v4296
        %5315 = vmatpush1.bf16.msra.mxu0 %v4295
        %5316 = vmatprep.subr.bf16.mxu0 %v4300
        %5317 = vmatpush1.bf16.msra.mxu0 %v4299
        %5318 = vmatprep.subr.bf16.mxu0 %v4304
        %5319 = vmatpush1.bf16.msra.mxu0 %v4303
        %5320 = vmatprep.subr.bf16.mxu0 %v4308
        %5321 = vmatpush1.bf16.msra.mxu0 %v4307
        %5322 = vmatprep.subr.bf16.mxu0 %v4312
        %5323 = vmatpush1.bf16.msra.mxu0 %v4311
        %5324 = vmatprep.subr.bf16.mxu0 %v4316
        %5325 = vmatpush1.bf16.msra.mxu0 %v4315
        %5326 = vmatprep.subr.bf16.mxu0 %v4320
        %5327 = vmatpush1.bf16.msra.mxu0 %v4319
        %5328 = vmatprep.mubr.bf16.mxu0 %v2169
        %5329 = vmatmul.mubr.bf16.gmra.mrb[0].mxu0 %v2167
        %v5330 = vpop.f32.mrb[0].mxu0
        %v5331 = vadd.f32 %v5290, %v5330
        %v5332 = vpop.f32.mrb[0].mxu0
        %v5333 = vadd.f32 %v5292, %v5332
        %v5334 = vpop.f32.mrb[0].mxu0
        %v5335 = vpop.f32.mrb[0].mxu0
        %5336 = vdwg.mxu0
        %5337 = vmatprep.subr.bf16.mxu0 %v4324
        %5338 = vmatpush1.bf16.msra.mxu0 %v4323
        %5339 = vmatprep.subr.bf16.mxu0 %v4328
        %5340 = vmatpush1.bf16.msra.mxu0 %v4327
        %5341 = vmatprep.subr.bf16.mxu0 %v4332
        %5342 = vmatpush1.bf16.msra.mxu0 %v4331
        %5343 = vmatprep.subr.bf16.mxu0 %v4336
        %5344 = vmatpush1.bf16.msra.mxu0 %v4335
        %5345 = vmatprep.subr.bf16.mxu0 %v4340
        %5346 = vmatpush1.bf16.msra.mxu0 %v4339
        %5347 = vmatprep.subr.bf16.mxu0 %v4344
        %5348 = vmatpush1.bf16.msra.mxu0 %v4343
        %5349 = vmatprep.subr.bf16.mxu0 %v4348
        %5350 = vmatpush1.bf16.msra.mxu0 %v4347
        %5351 = vmatprep.subr.bf16.mxu0 %v4352
        %5352 = vmatpush1.bf16.msra.mxu0 %v4351
        %5353 = vmatprep.subr.bf16.mxu0 %v4356
        %5354 = vmatpush1.bf16.msra.mxu0 %v4355
        %5355 = vmatprep.subr.bf16.mxu0 %v4360
        %5356 = vmatpush1.bf16.msra.mxu0 %v4359
        %5357 = vmatprep.subr.bf16.mxu0 %v4364
        %5358 = vmatpush1.bf16.msra.mxu0 %v4363
        %5359 = vmatprep.subr.bf16.mxu0 %v4368
        %5360 = vmatpush1.bf16.msra.mxu0 %v4367
        %5361 = vmatprep.subr.bf16.mxu0 %v4372
        %5362 = vmatpush1.bf16.msra.mxu0 %v4371
        %5363 = vmatprep.subr.bf16.mxu0 %v4376
        %5364 = vmatpush1.bf16.msra.mxu0 %v4375
        %5365 = vmatprep.subr.bf16.mxu0 %v4380
        %5366 = vmatpush1.bf16.msra.mxu0 %v4379
        %5367 = vmatprep.subr.bf16.mxu0 %v4384
        %5368 = vmatpush1.bf16.msra.mxu0 %v4383
        %5369 = vmatprep.mubr.bf16.mxu0 %v2166
        %5370 = vmatmul.mubr.bf16.gmra.mrb[0].mxu0 %v2152
        %v5371 = vpop.f32.mrb[0].mxu0
        %v5372 = vadd.f32 %v5331, %v5371
        %v5373 = vpop.f32.mrb[0].mxu0
        %v5374 = vadd.f32 %v5333, %v5373
        %v5375 = vpop.f32.mrb[0].mxu0
        %v5376 = vpop.f32.mrb[0].mxu0
        %5377 = vdwg.mxu0
        %5378 = vmatprep.subr.bf16.mxu0 %v4388
        %5379 = vmatpush1.bf16.msra.mxu0 %v4387
        %5380 = vmatprep.subr.bf16.mxu0 %v4392
        %5381 = vmatpush1.bf16.msra.mxu0 %v4391
        %5382 = vmatprep.subr.bf16.mxu0 %v4396
        %5383 = vmatpush1.bf16.msra.mxu0 %v4395
        %5384 = vmatprep.subr.bf16.mxu0 %v4400
        %5385 = vmatpush1.bf16.msra.mxu0 %v4399
        %5386 = vmatprep.subr.bf16.mxu0 %v4404
        %5387 = vmatpush1.bf16.msra.mxu0 %v4403
        %5388 = vmatprep.subr.bf16.mxu0 %v4408
        %5389 = vmatpush1.bf16.msra.mxu0 %v4407
        %5390 = vmatprep.subr.bf16.mxu0 %v4412
        %5391 = vmatpush1.bf16.msra.mxu0 %v4411
        %5392 = vmatprep.subr.bf16.mxu0 %v4416
        %5393 = vmatpush1.bf16.msra.mxu0 %v4415
        %5394 = vmatprep.subr.bf16.mxu0 %v4420
        %5395 = vmatpush1.bf16.msra.mxu0 %v4419
        %5396 = vmatprep.subr.bf16.mxu0 %v4424
        %5397 = vmatpush1.bf16.msra.mxu0 %v4423
        %5398 = vmatprep.subr.bf16.mxu0 %v4428
        %5399 = vmatpush1.bf16.msra.mxu0 %v4427
        %5400 = vmatprep.subr.bf16.mxu0 %v4432
        %5401 = vmatpush1.bf16.msra.mxu0 %v4431
        %5402 = vmatprep.subr.bf16.mxu0 %v4436
        %5403 = vmatpush1.bf16.msra.mxu0 %v4435
        %5404 = vmatprep.subr.bf16.mxu0 %v4440
        %5405 = vmatpush1.bf16.msra.mxu0 %v4439
        %5406 = vmatprep.subr.bf16.mxu0 %v4444
        %5407 = vmatpush1.bf16.msra.mxu0 %v4443
        %5408 = vmatprep.subr.bf16.mxu0 %v4448
        %5409 = vmatpush1.bf16.msra.mxu0 %v4447
        %5410 = vmatprep.mubr.bf16.mxu0 %v2170
        %5411 = vmatmul.mubr.bf16.gmra.mrb[0].mxu0 %v2168
        %v5412 = vpop.f32.mrb[0].mxu0
        %v5413 = vadd.f32 %v5372, %v5412
        %v5414 = vpop.f32.mrb[0].mxu0
        %v5415 = vadd.f32 %v5374, %v5414
        %v5416 = vpop.f32.mrb[0].mxu0
        %v5417 = vpop.f32.mrb[0].mxu0
        %5418 = vdwg.mxu0
        %5419 = vmatprep.subr.bf16.mxu0 %v4452
        %5420 = vmatpush1.bf16.msra.mxu0 %v4451
        %5421 = vmatprep.subr.bf16.mxu0 %v4456
        %5422 = vmatpush1.bf16.msra.mxu0 %v4455
        %5423 = vmatprep.subr.bf16.mxu0 %v4460
        %5424 = vmatpush1.bf16.msra.mxu0 %v4459
        %5425 = vmatprep.subr.bf16.mxu0 %v4464
        %5426 = vmatpush1.bf16.msra.mxu0 %v4463
        %5427 = vmatprep.subr.bf16.mxu0 %v4468
        %5428 = vmatpush1.bf16.msra.mxu0 %v4467
        %5429 = vmatprep.subr.bf16.mxu0 %v4472
        %5430 = vmatpush1.bf16.msra.mxu0 %v4471
        %5431 = vmatprep.subr.bf16.mxu0 %v4476
        %5432 = vmatpush1.bf16.msra.mxu0 %v4475
        %5433 = vmatprep.subr.bf16.mxu0 %v4480
        %5434 = vmatpush1.bf16.msra.mxu0 %v4479
        %5435 = vmatprep.subr.bf16.mxu0 %v4484
        %5436 = vmatpush1.bf16.msra.mxu0 %v4483
        %5437 = vmatprep.subr.bf16.mxu0 %v4488
        %5438 = vmatpush1.bf16.msra.mxu0 %v4487
        %5439 = vmatprep.subr.bf16.mxu0 %v4492
        %5440 = vmatpush1.bf16.msra.mxu0 %v4491
        %5441 = vmatprep.subr.bf16.mxu0 %v4496
        %5442 = vmatpush1.bf16.msra.mxu0 %v4495
        %5443 = vmatprep.subr.bf16.mxu0 %v4500
        %5444 = vmatpush1.bf16.msra.mxu0 %v4499
        %5445 = vmatprep.subr.bf16.mxu0 %v4504
        %5446 = vmatpush1.bf16.msra.mxu0 %v4503
        %5447 = vmatprep.subr.bf16.mxu0 %v4508
        %5448 = vmatpush1.bf16.msra.mxu0 %v4507
        %5449 = vmatprep.subr.bf16.mxu0 %v4512
        %5450 = vmatpush1.bf16.msra.mxu0 %v4511
        %5451 = vmatprep.mubr.bf16.mxu0 %v2192
        %5452 = vmatmul.mubr.bf16.gmra.mrb[0].mxu0 %v2185
        %v5453 = vpop.f32.mrb[0].mxu0
        %v5454 = vadd.f32 %v5413, %v5453
        %v5455 = vpop.f32.mrb[0].mxu0
        %v5456 = vadd.f32 %v5415, %v5455
        %v5457 = vpop.f32.mrb[0].mxu0
        %v5458 = vpop.f32.mrb[0].mxu0
        %5459 = vdwg.mxu0
        %5460 = vmatprep.subr.bf16.mxu0 %v3942
        %5461 = vmatpush1.bf16.msra.mxu0 %v3941
        %5462 = vmatprep.subr.bf16.mxu0 %v3946
        %5463 = vmatpush1.bf16.msra.mxu0 %v3945
        %5464 = vmatprep.subr.bf16.mxu0 %v3950
        %5465 = vmatpush1.bf16.msra.mxu0 %v3949
        %5466 = vmatprep.subr.bf16.mxu0 %v3954
        %5467 = vmatpush1.bf16.msra.mxu0 %v3953
        %5468 = vmatprep.subr.bf16.mxu0 %v3958
        %5469 = vmatpush1.bf16.msra.mxu0 %v3957
        %5470 = vmatprep.subr.bf16.mxu0 %v3962
        %5471 = vmatpush1.bf16.msra.mxu0 %v3961
        %5472 = vmatprep.subr.bf16.mxu0 %v3966
        %5473 = vmatpush1.bf16.msra.mxu0 %v3965
        %5474 = vmatprep.subr.bf16.mxu0 %v3970
        %5475 = vmatpush1.bf16.msra.mxu0 %v3969
        %5476 = vmatprep.subr.bf16.mxu0 %v3974
        %5477 = vmatpush1.bf16.msra.mxu0 %v3973
        %5478 = vmatprep.subr.bf16.mxu0 %v3978
        %5479 = vmatpush1.bf16.msra.mxu0 %v3977
        %5480 = vmatprep.subr.bf16.mxu0 %v3982
        %5481 = vmatpush1.bf16.msra.mxu0 %v3981
        %5482 = vmatprep.subr.bf16.mxu0 %v3986
        %5483 = vmatpush1.bf16.msra.mxu0 %v3985
        %5484 = vmatprep.subr.bf16.mxu0 %v3990
        %5485 = vmatpush1.bf16.msra.mxu0 %v3989
        %5486 = vmatprep.subr.bf16.mxu0 %v3994
        %5487 = vmatpush1.bf16.msra.mxu0 %v3993
        %5488 = vmatprep.subr.bf16.mxu0 %v3998
        %5489 = vmatpush1.bf16.msra.mxu0 %v3997
        %5490 = vmatprep.subr.bf16.mxu0 %v4002
        %5491 = vmatpush1.bf16.msra.mxu0 %v4001
        %5492 = vmatprep.mubr.bf16.mxu0 %v2110
        %5493 = vmatmul.mubr.bf16.gmra.mrb[0].mxu0 %v2096
        %v5494 = vpop.f32.mrb[0].mxu0
        %v5495 = vadd.f32 %v2061, %v5494
        %v5496 = vpop.f32.mrb[0].mxu0
        %v5497 = vadd.f32 %v2065, %v5496
        %v5498 = vpop.f32.mrb[0].mxu0
        %v5499 = vpop.f32.mrb[0].mxu0
        %5500 = vdwg.mxu0
        %5501 = vmatprep.subr.bf16.mxu0 %v4006
        %5502 = vmatpush1.bf16.msra.mxu0 %v4005
        %5503 = vmatprep.subr.bf16.mxu0 %v4010
        %5504 = vmatpush1.bf16.msra.mxu0 %v4009
        %5505 = vmatprep.subr.bf16.mxu0 %v4014
        %5506 = vmatpush1.bf16.msra.mxu0 %v4013
        %5507 = vmatprep.subr.bf16.mxu0 %v4018
        %5508 = vmatpush1.bf16.msra.mxu0 %v4017
        %5509 = vmatprep.subr.bf16.mxu0 %v4022
        %5510 = vmatpush1.bf16.msra.mxu0 %v4021
        %5511 = vmatprep.subr.bf16.mxu0 %v4026
        %5512 = vmatpush1.bf16.msra.mxu0 %v4025
        %5513 = vmatprep.subr.bf16.mxu0 %v4030
        %5514 = vmatpush1.bf16.msra.mxu0 %v4029
        %5515 = vmatprep.subr.bf16.mxu0 %v4034
        %5516 = vmatpush1.bf16.msra.mxu0 %v4033
        %5517 = vmatprep.subr.bf16.mxu0 %v4038
        %5518 = vmatpush1.bf16.msra.mxu0 %v4037
        %5519 = vmatprep.subr.bf16.mxu0 %v4042
        %5520 = vmatpush1.bf16.msra.mxu0 %v4041
        %5521 = vmatprep.subr.bf16.mxu0 %v4046
        %5522 = vmatpush1.bf16.msra.mxu0 %v4045
        %5523 = vmatprep.subr.bf16.mxu0 %v4050
        %5524 = vmatpush1.bf16.msra.mxu0 %v4049
        %5525 = vmatprep.subr.bf16.mxu0 %v4054
        %5526 = vmatpush1.bf16.msra.mxu0 %v4053
        %5527 = vmatprep.subr.bf16.mxu0 %v4058
        %5528 = vmatpush1.bf16.msra.mxu0 %v4057
        %5529 = vmatprep.subr.bf16.mxu0 %v4062
        %5530 = vmatpush1.bf16.msra.mxu0 %v4061
        %5531 = vmatprep.subr.bf16.mxu0 %v4066
        %5532 = vmatpush1.bf16.msra.mxu0 %v4065
        %5533 = vmatprep.mubr.bf16.mxu0 %v2120
        %5534 = vmatmul.mubr.bf16.gmra.mrb[0].mxu0 %v2118
        %v5535 = vpop.f32.mrb[0].mxu0
        %v5536 = vadd.f32 %v5495, %v5535
        %v5537 = vpop.f32.mrb[0].mxu0
        %v5538 = vadd.f32 %v5497, %v5537
        %v5539 = vpop.f32.mrb[0].mxu0
        %v5540 = vpop.f32.mrb[0].mxu0
        %5541 = vdwg.mxu0
        %5542 = vmatprep.subr.bf16.mxu0 %v4070
        %5543 = vmatpush1.bf16.msra.mxu0 %v4069
        %5544 = vmatprep.subr.bf16.mxu0 %v4074
        %5545 = vmatpush1.bf16.msra.mxu0 %v4073
        %5546 = vmatprep.subr.bf16.mxu0 %v4078
        %5547 = vmatpush1.bf16.msra.mxu0 %v4077
        %5548 = vmatprep.subr.bf16.mxu0 %v4082
        %5549 = vmatpush1.bf16.msra.mxu0 %v4081
        %5550 = vmatprep.subr.bf16.mxu0 %v4086
        %5551 = vmatpush1.bf16.msra.mxu0 %v4085
        %5552 = vmatprep.subr.bf16.mxu0 %v4090
        %5553 = vmatpush1.bf16.msra.mxu0 %v4089
        %5554 = vmatprep.subr.bf16.mxu0 %v4094
        %5555 = vmatpush1.bf16.msra.mxu0 %v4093
        %5556 = vmatprep.subr.bf16.mxu0 %v4098
        %5557 = vmatpush1.bf16.msra.mxu0 %v4097
        %5558 = vmatprep.subr.bf16.mxu0 %v4102
        %5559 = vmatpush1.bf16.msra.mxu0 %v4101
        %5560 = vmatprep.subr.bf16.mxu0 %v4106
        %5561 = vmatpush1.bf16.msra.mxu0 %v4105
        %5562 = vmatprep.subr.bf16.mxu0 %v4110
        %5563 = vmatpush1.bf16.msra.mxu0 %v4109
        %5564 = vmatprep.subr.bf16.mxu0 %v4114
        %5565 = vmatpush1.bf16.msra.mxu0 %v4113
        %5566 = vmatprep.subr.bf16.mxu0 %v4118
        %5567 = vmatpush1.bf16.msra.mxu0 %v4117
        %5568 = vmatprep.subr.bf16.mxu0 %v4122
        %5569 = vmatpush1.bf16.msra.mxu0 %v4121
        %5570 = vmatprep.subr.bf16.mxu0 %v4126
        %5571 = vmatpush1.bf16.msra.mxu0 %v4125
        %5572 = vmatprep.subr.bf16.mxu0 %v4130
        %5573 = vmatpush1.bf16.msra.mxu0 %v4129
        %5574 = vmatprep.mubr.bf16.mxu0 %v2117
        %5575 = vmatmul.mubr.bf16.gmra.mrb[0].mxu0 %v2103
        %v5576 = vpop.f32.mrb[0].mxu0
        %v5577 = vadd.f32 %v5536, %v5576
        %v5578 = vpop.f32.mrb[0].mxu0
        %v5579 = vadd.f32 %v5538, %v5578
        %v5580 = vpop.f32.mrb[0].mxu0
        %v5581 = vpop.f32.mrb[0].mxu0
        %5582 = vdwg.mxu0
        %5583 = vmatprep.subr.bf16.mxu0 %v4134
        %5584 = vmatpush1.bf16.msra.mxu0 %v4133
        %5585 = vmatprep.subr.bf16.mxu0 %v4138
        %5586 = vmatpush1.bf16.msra.mxu0 %v4137
        %5587 = vmatprep.subr.bf16.mxu0 %v4142
        %5588 = vmatpush1.bf16.msra.mxu0 %v4141
        %5589 = vmatprep.subr.bf16.mxu0 %v4146
        %5590 = vmatpush1.bf16.msra.mxu0 %v4145
        %5591 = vmatprep.subr.bf16.mxu0 %v4150
        %5592 = vmatpush1.bf16.msra.mxu0 %v4149
        %5593 = vmatprep.subr.bf16.mxu0 %v4154
        %5594 = vmatpush1.bf16.msra.mxu0 %v4153
        %5595 = vmatprep.subr.bf16.mxu0 %v4158
        %5596 = vmatpush1.bf16.msra.mxu0 %v4157
        %5597 = vmatprep.subr.bf16.mxu0 %v4162
        %5598 = vmatpush1.bf16.msra.mxu0 %v4161
        %5599 = vmatprep.subr.bf16.mxu0 %v4166
        %5600 = vmatpush1.bf16.msra.mxu0 %v4165
        %5601 = vmatprep.subr.bf16.mxu0 %v4170
        %5602 = vmatpush1.bf16.msra.mxu0 %v4169
        %5603 = vmatprep.subr.bf16.mxu0 %v4174
        %5604 = vmatpush1.bf16.msra.mxu0 %v4173
        %5605 = vmatprep.subr.bf16.mxu0 %v4178
        %5606 = vmatpush1.bf16.msra.mxu0 %v4177
        %5607 = vmatprep.subr.bf16.mxu0 %v4182
        %5608 = vmatpush1.bf16.msra.mxu0 %v4181
        %5609 = vmatprep.subr.bf16.mxu0 %v4186
        %5610 = vmatpush1.bf16.msra.mxu0 %v4185
        %5611 = vmatprep.subr.bf16.mxu0 %v4190
        %5612 = vmatpush1.bf16.msra.mxu0 %v4189
        %5613 = vmatprep.subr.bf16.mxu0 %v4194
        %5614 = vmatpush1.bf16.msra.mxu0 %v4193
        %5615 = vmatprep.mubr.bf16.mxu0 %v2121
        %5616 = vmatmul.mubr.bf16.gmra.mrb[0].mxu0 %v2119
        %v5617 = vpop.f32.mrb[0].mxu0
        %v5618 = vadd.f32 %v5577, %v5617
        %v5619 = vpop.f32.mrb[0].mxu0
        %v5620 = vadd.f32 %v5579, %v5619
        %v5621 = vpop.f32.mrb[0].mxu0
        %v5622 = vpop.f32.mrb[0].mxu0
        %5623 = vdwg.mxu0
        %5624 = vmatprep.subr.bf16.mxu0 %v4198
        %5625 = vmatpush1.bf16.msra.mxu0 %v4197
        %5626 = vmatprep.subr.bf16.mxu0 %v4202
        %5627 = vmatpush1.bf16.msra.mxu0 %v4201
        %5628 = vmatprep.subr.bf16.mxu0 %v4206
        %5629 = vmatpush1.bf16.msra.mxu0 %v4205
        %5630 = vmatprep.subr.bf16.mxu0 %v4210
        %5631 = vmatpush1.bf16.msra.mxu0 %v4209
        %5632 = vmatprep.subr.bf16.mxu0 %v4214
        %5633 = vmatpush1.bf16.msra.mxu0 %v4213
        %5634 = vmatprep.subr.bf16.mxu0 %v4218
        %5635 = vmatpush1.bf16.msra.mxu0 %v4217
        %5636 = vmatprep.subr.bf16.mxu0 %v4222
        %5637 = vmatpush1.bf16.msra.mxu0 %v4221
        %5638 = vmatprep.subr.bf16.mxu0 %v4226
        %5639 = vmatpush1.bf16.msra.mxu0 %v4225
        %5640 = vmatprep.subr.bf16.mxu0 %v4230
        %5641 = vmatpush1.bf16.msra.mxu0 %v4229
        %5642 = vmatprep.subr.bf16.mxu0 %v4234
        %5643 = vmatpush1.bf16.msra.mxu0 %v4233
        %5644 = vmatprep.subr.bf16.mxu0 %v4238
        %5645 = vmatpush1.bf16.msra.mxu0 %v4237
        %5646 = vmatprep.subr.bf16.mxu0 %v4242
        %5647 = vmatpush1.bf16.msra.mxu0 %v4241
        %5648 = vmatprep.subr.bf16.mxu0 %v4246
        %5649 = vmatpush1.bf16.msra.mxu0 %v4245
        %5650 = vmatprep.subr.bf16.mxu0 %v4250
        %5651 = vmatpush1.bf16.msra.mxu0 %v4249
        %5652 = vmatprep.subr.bf16.mxu0 %v4254
        %5653 = vmatpush1.bf16.msra.mxu0 %v4253
        %5654 = vmatprep.subr.bf16.mxu0 %v4258
        %5655 = vmatpush1.bf16.msra.mxu0 %v4257
        %5656 = vmatprep.mubr.bf16.mxu0 %v2159
        %5657 = vmatmul.mubr.bf16.gmra.mrb[0].mxu0 %v2145
        %v5658 = vpop.f32.mrb[0].mxu0
        %v5659 = vadd.f32 %v5618, %v5658
        %v5660 = vpop.f32.mrb[0].mxu0
        %v5661 = vadd.f32 %v5620, %v5660
        %v5662 = vpop.f32.mrb[0].mxu0
        %v5663 = vpop.f32.mrb[0].mxu0
        %5664 = vdwg.mxu0
        %5665 = vmatprep.subr.bf16.mxu0 %v4262
        %5666 = vmatpush1.bf16.msra.mxu0 %v4261
        %5667 = vmatprep.subr.bf16.mxu0 %v4266
        %5668 = vmatpush1.bf16.msra.mxu0 %v4265
        %5669 = vmatprep.subr.bf16.mxu0 %v4270
        %5670 = vmatpush1.bf16.msra.mxu0 %v4269
        %5671 = vmatprep.subr.bf16.mxu0 %v4274
        %5672 = vmatpush1.bf16.msra.mxu0 %v4273
        %5673 = vmatprep.subr.bf16.mxu0 %v4278
        %5674 = vmatpush1.bf16.msra.mxu0 %v4277
        %5675 = vmatprep.subr.bf16.mxu0 %v4282
        %5676 = vmatpush1.bf16.msra.mxu0 %v4281
        %5677 = vmatprep.subr.bf16.mxu0 %v4286
        %5678 = vmatpush1.bf16.msra.mxu0 %v4285
        %5679 = vmatprep.subr.bf16.mxu0 %v4290
        %5680 = vmatpush1.bf16.msra.mxu0 %v4289
        %5681 = vmatprep.subr.bf16.mxu0 %v4294
        %5682 = vmatpush1.bf16.msra.mxu0 %v4293
        %5683 = vmatprep.subr.bf16.mxu0 %v4298
        %5684 = vmatpush1.bf16.msra.mxu0 %v4297
        %5685 = vmatprep.subr.bf16.mxu0 %v4302
        %5686 = vmatpush1.bf16.msra.mxu0 %v4301
        %5687 = vmatprep.subr.bf16.mxu0 %v4306
        %5688 = vmatpush1.bf16.msra.mxu0 %v4305
        %5689 = vmatprep.subr.bf16.mxu0 %v4310
        %5690 = vmatpush1.bf16.msra.mxu0 %v4309
        %5691 = vmatprep.subr.bf16.mxu0 %v4314
        %5692 = vmatpush1.bf16.msra.mxu0 %v4313
        %5693 = vmatprep.subr.bf16.mxu0 %v4318
        %5694 = vmatpush1.bf16.msra.mxu0 %v4317
        %5695 = vmatprep.subr.bf16.mxu0 %v4322
        %5696 = vmatpush1.bf16.msra.mxu0 %v4321
        %5697 = vmatprep.mubr.bf16.mxu0 %v2169
        %5698 = vmatmul.mubr.bf16.gmra.mrb[0].mxu0 %v2167
        %v5699 = vpop.f32.mrb[0].mxu0
        %v5700 = vadd.f32 %v5659, %v5699
        %v5701 = vpop.f32.mrb[0].mxu0
        %v5702 = vadd.f32 %v5661, %v5701
        %v5703 = vpop.f32.mrb[0].mxu0
        %v5704 = vpop.f32.mrb[0].mxu0
        %5705 = vdwg.mxu0
        %5706 = vmatprep.subr.bf16.mxu0 %v4326
        %5707 = vmatpush1.bf16.msra.mxu0 %v4325
        %5708 = vmatprep.subr.bf16.mxu0 %v4330
        %5709 = vmatpush1.bf16.msra.mxu0 %v4329
        %5710 = vmatprep.subr.bf16.mxu0 %v4334
        %5711 = vmatpush1.bf16.msra.mxu0 %v4333
        %5712 = vmatprep.subr.bf16.mxu0 %v4338
        %5713 = vmatpush1.bf16.msra.mxu0 %v4337
        %5714 = vmatprep.subr.bf16.mxu0 %v4342
        %5715 = vmatpush1.bf16.msra.mxu0 %v4341
        %5716 = vmatprep.subr.bf16.mxu0 %v4346
        %5717 = vmatpush1.bf16.msra.mxu0 %v4345
        %5718 = vmatprep.subr.bf16.mxu0 %v4350
        %5719 = vmatpush1.bf16.msra.mxu0 %v4349
        %5720 = vmatprep.subr.bf16.mxu0 %v4354
        %5721 = vmatpush1.bf16.msra.mxu0 %v4353
        %5722 = vmatprep.subr.bf16.mxu0 %v4358
        %5723 = vmatpush1.bf16.msra.mxu0 %v4357
        %5724 = vmatprep.subr.bf16.mxu0 %v4362
        %5725 = vmatpush1.bf16.msra.mxu0 %v4361
        %5726 = vmatprep.subr.bf16.mxu0 %v4366
        %5727 = vmatpush1.bf16.msra.mxu0 %v4365
        %5728 = vmatprep.subr.bf16.mxu0 %v4370
        %5729 = vmatpush1.bf16.msra.mxu0 %v4369
        %5730 = vmatprep.subr.bf16.mxu0 %v4374
        %5731 = vmatpush1.bf16.msra.mxu0 %v4373
        %5732 = vmatprep.subr.bf16.mxu0 %v4378
        %5733 = vmatpush1.bf16.msra.mxu0 %v4377
        %5734 = vmatprep.subr.bf16.mxu0 %v4382
        %5735 = vmatpush1.bf16.msra.mxu0 %v4381
        %5736 = vmatprep.subr.bf16.mxu0 %v4386
        %5737 = vmatpush1.bf16.msra.mxu0 %v4385
        %5738 = vmatprep.mubr.bf16.mxu0 %v2166
        %5739 = vmatmul.mubr.bf16.gmra.mrb[0].mxu0 %v2152
        %v5740 = vpop.f32.mrb[0].mxu0
        %v5741 = vadd.f32 %v5700, %v5740
        %v5742 = vpop.f32.mrb[0].mxu0
        %v5743 = vadd.f32 %v5702, %v5742
        %v5744 = vpop.f32.mrb[0].mxu0
        %v5745 = vpop.f32.mrb[0].mxu0
        %5746 = vdwg.mxu0
        %5747 = vmatprep.subr.bf16.mxu0 %v4390
        %5748 = vmatpush1.bf16.msra.mxu0 %v4389
        %5749 = vmatprep.subr.bf16.mxu0 %v4394
        %5750 = vmatpush1.bf16.msra.mxu0 %v4393
        %5751 = vmatprep.subr.bf16.mxu0 %v4398
        %5752 = vmatpush1.bf16.msra.mxu0 %v4397
        %5753 = vmatprep.subr.bf16.mxu0 %v4402
        %5754 = vmatpush1.bf16.msra.mxu0 %v4401
        %5755 = vmatprep.subr.bf16.mxu0 %v4406
        %5756 = vmatpush1.bf16.msra.mxu0 %v4405
        %5757 = vmatprep.subr.bf16.mxu0 %v4410
        %5758 = vmatpush1.bf16.msra.mxu0 %v4409
        %5759 = vmatprep.subr.bf16.mxu0 %v4414
        %5760 = vmatpush1.bf16.msra.mxu0 %v4413
        %5761 = vmatprep.subr.bf16.mxu0 %v4418
        %5762 = vmatpush1.bf16.msra.mxu0 %v4417
        %5763 = vmatprep.subr.bf16.mxu0 %v4422
        %5764 = vmatpush1.bf16.msra.mxu0 %v4421
        %5765 = vmatprep.subr.bf16.mxu0 %v4426
        %5766 = vmatpush1.bf16.msra.mxu0 %v4425
        %5767 = vmatprep.subr.bf16.mxu0 %v4430
        %5768 = vmatpush1.bf16.msra.mxu0 %v4429
        %5769 = vmatprep.subr.bf16.mxu0 %v4434
        %5770 = vmatpush1.bf16.msra.mxu0 %v4433
        %5771 = vmatprep.subr.bf16.mxu0 %v4438
        %5772 = vmatpush1.bf16.msra.mxu0 %v4437
        %5773 = vmatprep.subr.bf16.mxu0 %v4442
        %5774 = vmatpush1.bf16.msra.mxu0 %v4441
        %5775 = vmatprep.subr.bf16.mxu0 %v4446
        %5776 = vmatpush1.bf16.msra.mxu0 %v4445
        %5777 = vmatprep.subr.bf16.mxu0 %v4450
        %5778 = vmatpush1.bf16.msra.mxu0 %v4449
        %5779 = vmatprep.mubr.bf16.mxu0 %v2170
        %5780 = vmatmul.mubr.bf16.gmra.mrb[0].mxu0 %v2168
        %v5781 = vpop.f32.mrb[0].mxu0
        %v5782 = vadd.f32 %v5741, %v5781
        %v5783 = vpop.f32.mrb[0].mxu0
        %v5784 = vadd.f32 %v5743, %v5783
        %v5785 = vpop.f32.mrb[0].mxu0
        %v5786 = vpop.f32.mrb[0].mxu0
        %5787 = vdwg.mxu0
        %5788 = vmatprep.subr.bf16.mxu0 %v4454
        %5789 = vmatpush1.bf16.msra.mxu0 %v4453
        %5790 = vmatprep.subr.bf16.mxu0 %v4458
        %5791 = vmatpush1.bf16.msra.mxu0 %v4457
        %5792 = vmatprep.subr.bf16.mxu0 %v4462
        %5793 = vmatpush1.bf16.msra.mxu0 %v4461
        %5794 = vmatprep.subr.bf16.mxu0 %v4466
        %5795 = vmatpush1.bf16.msra.mxu0 %v4465
        %5796 = vmatprep.subr.bf16.mxu0 %v4470
        %5797 = vmatpush1.bf16.msra.mxu0 %v4469
        %5798 = vmatprep.subr.bf16.mxu0 %v4474
        %5799 = vmatpush1.bf16.msra.mxu0 %v4473
        %5800 = vmatprep.subr.bf16.mxu0 %v4478
        %5801 = vmatpush1.bf16.msra.mxu0 %v4477
        %5802 = vmatprep.subr.bf16.mxu0 %v4482
        %5803 = vmatpush1.bf16.msra.mxu0 %v4481
        %5804 = vmatprep.subr.bf16.mxu0 %v4486
        %5805 = vmatpush1.bf16.msra.mxu0 %v4485
        %5806 = vmatprep.subr.bf16.mxu0 %v4490
        %5807 = vmatpush1.bf16.msra.mxu0 %v4489
        %5808 = vmatprep.subr.bf16.mxu0 %v4494
        %5809 = vmatpush1.bf16.msra.mxu0 %v4493
        %5810 = vmatprep.subr.bf16.mxu0 %v4498
        %5811 = vmatpush1.bf16.msra.mxu0 %v4497
        %5812 = vmatprep.subr.bf16.mxu0 %v4502
        %5813 = vmatpush1.bf16.msra.mxu0 %v4501
        %5814 = vmatprep.subr.bf16.mxu0 %v4506
        %5815 = vmatpush1.bf16.msra.mxu0 %v4505
        %5816 = vmatprep.subr.bf16.mxu0 %v4510
        %5817 = vmatpush1.bf16.msra.mxu0 %v4509
        %5818 = vmatprep.subr.bf16.mxu0 %v4514
        %5819 = vmatpush1.bf16.msra.mxu0 %v4513
        %5820 = vmatprep.mubr.bf16.mxu0 %v2192
        %5821 = vmatmul.mubr.bf16.gmra.mrb[0].mxu0 %v2185
        %v5822 = vpop.f32.mrb[0].mxu0
        %v5823 = vadd.f32 %v5782, %v5822
        %v5824 = vpop.f32.mrb[0].mxu0
        %v5825 = vadd.f32 %v5784, %v5824
        %v5826 = vpop.f32.mrb[0].mxu0
        %v5827 = vpop.f32.mrb[0].mxu0
        %5828 = vdwg.mxu0
        %vm5829 = vcmp.ge.f32.partialorder %v5454, 0.0
        %vm5830 = vcmp.ge.f32.partialorder %v5456, 0.0
        %vm5831 = vcmp.ge.f32.partialorder %v5823, 0.0
        %vm5832 = vcmp.ge.f32.partialorder %v5825, 0.0
        %v5833 = vmul.f32 %v5454, 0.01
        %v5834 = vmul.f32 %v5456, 0.01
        %v5835 = vmul.f32 %v5823, 0.01
        %v5836 = vmul.f32 %v5825, 0.01
        %v5837 = vsel %vm5829, %v5454, %v5833
        %v5838 = vsel %vm5830, %v5456, %v5834
        %v5839 = vsel %vm5831, %v5823, %v5835
        %v5840 = vsel %vm5832, %v5825, %v5836
        %v5841 = vld [vmem:[#allocation2] sm:$0x3]
        %v5842 = vld [vmem:[%s1457] sm:$0xf]
        %v5844 = vlaneseq
        %v5845 = vshrl.u32 %v5844, 7
        %v5846 = vsub.s32 0, %v5845
        %v5847 = vrot.slane %v5842, %v5846
        %v5848 = vlaneseq
        %v5849 = vshrl.u32 %v5848, 7
        %v5850 = vsub.s32 1, %v5849
        %v5851 = vrot.slane %v5842, %v5850
        %v5852 = vlaneseq
        %v5853 = vshrl.u32 %v5852, 7
        %v5854 = vsub.s32 2, %v5853
        %v5855 = vrot.slane %v5842, %v5854
        %v5856 = vlaneseq
        %v5857 = vshrl.u32 %v5856, 7
        %v5858 = vsub.s32 3, %v5857
        %v5859 = vrot.slane %v5842, %v5858
        %v5864 = vmul.f32 %v5837, %v5847
        %v5865 = vmul.f32 %v5838, %v5851
        %v5866 = vmul.f32 %v5839, %v5855
        %v5867 = vmul.f32 %v5840, %v5859
        %vm5868 = vcmask 1041408
        %v5869 = vsel %vm5868, %v5864, 0.0
        %v5870 = vsel %vm5868, %v5865, 0.0
        %v5871 = vadd.f32 %v5869, %v5870
        %v5872 = vsel %vm5868, %v5866, 0.0
        %v5873 = vadd.f32 %v5871, %v5872
        %v5874 = vsel %vm5868, %v5867, 0.0
        %v5875 = vadd.f32 %v5873, %v5874
        %5876 = vadd.xlane.f32.xlu0 %v5875
        %v5877 = vpop.xlane.xlu0 %5876
        %v5878 = vadd.f32 %v5841, %v5877
        %vm5879 = vcmask 1024
        %5880 = vst.msk [vmem:[#allocation2] sm:$0x3] %vm5879, %v5878
        %p5881 = scmp.eq.s32.totalorder %s23, 1
        // Predicated region
        $region68: #{discriminator_image.9} parent=58 // pred_check
          %p5882 = pneg %p5881
        $region69: #{discriminator_image.9} parent=58 // pred_check_branch
          %5884 = sbr.rel (%p5882) target = $region71
        $region70: #{discriminator_image.9} parent=58 // pred_region
          %v5885 = vld [vmem:[#allocation2] sm:$0x3]
          %v5886 = vld [vmem:[#allocation3] sm:$0x1]
          %v5888 = vlaneseq
          %v5889 = vshrl.u32 %v5888, 7
          %v5890 = vsub.s32 0, %v5889
          %v5891 = vrot.slane %v5886, %v5890
          %v5893 = vadd.f32 %v5885, %v5891
          %5894 = vst.msk [vmem:[%s1462] sm:$0x3] %vm5879, %v5893
        $region71: #{discriminator_image.9} parent=58 // pred_fallthru
          _
        %p5895 = scmp.lt.s32.totalorder %s22, 0
        %s5896 = scalar_select %p5895, %s22, 0
        %s5897 = smul.addr %s5896, 2
        %s5898 = scalar_lea.vmem %s5, %s5897
        // Predicated region
        $region72: #{discriminator_image.9} parent=58 // pred_check
          %p5899 = pneg %p173
        $region73: #{discriminator_image.9} parent=58 // pred_check_branch
          %5901 = sbr.rel (%p5899) target = $region75
        $region74: #{discriminator_image.9} parent=58 // pred_region
          _
        $region75: #{discriminator_image.9} parent=58 // pred_fallthru
          _
        // Predicated region
        $region76: #{discriminator_image.9} parent=58 // pred_check
          %p5902 = pneg %p173
        $region77: #{discriminator_image.9} parent=58 // pred_check_branch
          %5904 = sbr.rel (%p5902) target = $region79
        $region78: #{discriminator_image.9} parent=58 // pred_region
          %p5905 = scmp.lt.s32.totalorder %s22, 0
          %s5906 = scalar_select %p5905, %s22, 0
          %s5907 = smul.addr %s5906, 2
          %s5908 = scalar_lea.vmem %s5, %s5907
        $region79: #{discriminator_image.9} parent=58 // pred_fallthru
          _
      $region59: #{discriminator_image.9} parent=5 // pred_fallthru
        _
      %p5909 = scmp.le.s32.totalorder 2, %s13
      // Predicated region
      $region80: #{discriminator_image.9} parent=5 // pred_check
        %p5910 = pneg %p5909
      $region81: #{discriminator_image.9} parent=5 // pred_check_branch
        %5912 = sbr.rel (%p5910) target = $region83
      $region82: #{discriminator_image.9} parent=5 // pred_region
        %s5913 = ssub.s32 %s13, 2
      $region83: #{discriminator_image.9} parent=5 // pred_fallthru
        _
    $region6: #{discriminator_image.9} parent=1 // loop_footer
      %s17 = sadd.s32 1, %s13
    $region7: #{discriminator_image.9} parent=1 // loop_footer_branch
      %12 = sbr.rel target = $region3
    $region8: #{discriminator_image.9} parent=1 // loop_exit
      _

</llo_original>
